<compile_context>
chip_gen: v7x
topology: tpu7x:2x2x1
jax: 0.10.0
libtpu: 0.0.40
codegen_flags: <defaults>
</compile_context>

<pallas_src>
import jax
import jax.numpy as jnp
from jax.experimental import pallas as pl
from jax.experimental.pallas import tpu as pltpu

LANES = 128

# Static architecture config (mirrors the PyTorch constructor):
#   Inception(8, 8, 16, 8, 8)   -> k1=16, c_out=16, maxpool (1,4)
#   Inception(16, 16, 8, 16, 4) -> k1=8,  c_out=32, maxpool (1,4)
#   Inception(32, 32, 4, 32, 2) -> k1=4,  c_out=64, maxpool (1,8)
INCEPTION_CFG = (
    ("inc1", 16, 16, 4),
    ("inc2", 8, 32, 4),
    ("inc3", 4, 64, 8),
)


def _round_up(x, m):
    return ((x + m - 1) // m) * m


# ----------------------------------------------------------------------------
# Pallas kernel: out = relu((patches @ W) * scale + shift), lane-dense N=128,
# bf16 operands, f32 accumulate + affine, bf16 store.
# ----------------------------------------------------------------------------
def _conv_affine_relu_kernel(p_ref, w_ref, scale_ref, shift_ref, o_ref):
    # p_ref: (tile_m, K) bf16, w_ref: (K, Npad) bf16, scale/shift: (1, Npad) f32
    acc = jnp.dot(p_ref[...], w_ref[...], preferred_element_type=jnp.float32)
    out = jnp.maximum(acc * scale_ref[...] + shift_ref[...], 0.0)
    o_ref[...] = out.astype(o_ref.dtype)


def conv_affine_relu_pallas(patches, w_mat, scale, shift, n_real):
    """relu((patches @ w_mat) * scale + shift)[:, :n_real], bf16 in / bf16 out.

    patches: (M, K) bf16, w_mat: (Kpad, Npad) bf16, scale/shift: (1, Npad) f32.
    """
    M, K = patches.shape
    k_pad, n_pad = w_mat.shape
    if K != k_pad:  # no-op for SciCNN (K = k1*Cin = 128 for every block)
        patches = jnp.pad(patches, ((0, 0), (0, k_pad - K)))

    # Exactly 2 balanced row blocks (one per TensorCore on v7x via "parallel");
    # bf16 sublane packing wants tile_m % 16 == 0.
    num_blocks = 2 if M >= 32 else 1
    tile_m = _round_up(pl.cdiv(M, num_blocks), 16)
    m_pad = tile_m * num_blocks
    if m_pad != M:
        patches = jnp.pad(patches, ((0, m_pad - M), (0, 0)))

    cost = pl.CostEstimate(
        flops=2 * m_pad * k_pad * n_pad,
        transcendentals=0,
        bytes_accessed=(2 * m_pad * k_pad + 2 * k_pad * n_pad
                        + 2 * 4 * n_pad + 2 * m_pad * n_pad),
    )

    out = pl.pallas_call(
        _conv_affine_relu_kernel,
        out_shape=jax.ShapeDtypeStruct((m_pad, n_pad), jnp.bfloat16),
        grid_spec=pltpu.PrefetchScalarGridSpec(
            num_scalar_prefetch=0,
            grid=(num_blocks,),
            in_specs=[
                pl.BlockSpec((tile_m, k_pad), lambda i: (i, 0)),
                pl.BlockSpec((k_pad, n_pad), lambda i: (0, 0)),
                pl.BlockSpec((1, n_pad), lambda i: (0, 0)),
                pl.BlockSpec((1, n_pad), lambda i: (0, 0)),
            ],
            out_specs=pl.BlockSpec((tile_m, n_pad), lambda i: (i, 0)),
        ),
        compiler_params=pltpu.CompilerParams(
            dimension_semantics=("parallel",)),
        cost_estimate=cost,
    )(patches, w_mat, scale, shift)
    # Padded rows (zero patches) and padded lanes (scale=shift=0) are sliced
    # off; nothing downstream ever sees them.
    return out[:M, :n_real]


# ----------------------------------------------------------------------------
# One-time weight preprocessing (hoisted out of the jitted forward).
# ----------------------------------------------------------------------------
def _prepare_inception(blk):
    """Fold both conv branches + bias + eval-BN into (w_mat, scale, shift)."""
    br1, br2 = blk["b1"], blk["b2"]
    c1, cin, k1 = br1["w"].shape
    c2, _, k2 = br2["w"].shape
    pad1, pad2 = (k1 - 1) // 2, (k2 - 1) // 2
    assert 2 * pad1 - k1 == 2 * pad2 - k2        # both branches share w_out
    off = pad1 - pad2                            # branch2 taps nest inside branch1's
    c_out = c1 + c2
    K = k1 * cin                                 # == 128 for every SciCNN block

    w_comb = jnp.zeros((k1, cin, c_out), jnp.float32)
    w_comb = w_comb.at[:, :, :c1].set(jnp.transpose(br1["w"], (2, 1, 0)))
    w_comb = w_comb.at[off:off + k2, :, c1:].set(jnp.transpose(br2["w"], (2, 1, 0)))
    w_mat = w_comb.reshape(K, c_out)

    k_pad = _round_up(K, LANES)
    n_pad = _round_up(max(c_out, LANES), LANES)  # lane-dense output
    w_mat = jnp.pad(w_mat, ((0, k_pad - K), (0, n_pad - c_out))).astype(jnp.bfloat16)

    eps = 1e-5
    gamma = jnp.concatenate([br1["gamma"], br2["gamma"]])
    beta = jnp.concatenate([br1["beta"], br2["beta"]])
    mean = jnp.concatenate([br1["mean"], br2["mean"]])
    var = jnp.concatenate([br1["var"], br2["var"]])
    bias = jnp.concatenate([br1["b"], br2["b"]])
    scale = gamma / jnp.sqrt(var + eps)
    shift = (bias - mean) * scale + beta
    scale = jnp.pad(scale, (0, n_pad - c_out)).reshape(1, n_pad).astype(jnp.float32)
    shift = jnp.pad(shift, (0, n_pad - c_out)).reshape(1, n_pad).astype(jnp.float32)

    se = blk["se"]
    return {
        "w_mat": w_mat, "scale": scale, "shift": shift,
        "se_fc1_wT": se["fc1_w"].T, "se_fc1_b": se["fc1_b"],
        "se_fc2_wT": se["fc2_w"].T, "se_fc2_b": se["fc2_b"],
    }


def prepare_scicnn_params(params):
    prep = {name: _prepare_inception(params[name]) for name, *_ in INCEPTION_CFG}
    prep["fc_wT"] = params["fc_w"].T.astype(jnp.float32)
    prep["fc_b"] = params["fc_b"].astype(jnp.float32)
    return prep


# ----------------------------------------------------------------------------
# Forward pieces.
# ----------------------------------------------------------------------------
def fused_inception_conv(x, p, k1, c_out):
    """x: (N, H, W, Cin) bf16 -> (N, H, W_out, c_out) bf16; one K=128 matmul."""
    N, H, W, Cin = x.shape
    pad1 = (k1 - 1) // 2
    w_out = W + 2 * pad1 - k1 + 1
    # im2col along W only (kernel height is 1), in bf16: tap-major, channel-minor.
    # TODO(synk): move the im2col in-kernel (halo DMA + shifted static slices in
    # VMEM) to drop the k1x-expanded patch array's HBM round trip.
    xp = jnp.pad(x, ((0, 0), (0, 0), (pad1, pad1), (0, 0)))
    taps = [xp[:, :, t:t + w_out, :] for t in range(k1)]
    patches = jnp.stack(taps, axis=3).reshape(N * H * w_out, k1 * Cin)
    out = conv_affine_relu_pallas(patches, p["w_mat"], p["scale"], p["shift"], c_out)
    return out.reshape(N, H, w_out, c_out)


def se_module(x, p):
    # PyTorch SEModule pools over (W, C) of the NHWC view and gates per (n, h).
    # TODO(synk): the 22->5->22 FC is too small for a Pallas kernel; fold it
    # (and the maxpool, which commutes with the positive gate) into the conv
    # kernel epilogue as a follow-up fusion.
    m = jnp.mean(x.astype(jnp.float32), axis=(2, 3))                  # (N, H)
    h1 = jnp.maximum(m @ p["se_fc1_wT"] + p["se_fc1_b"], 0.0)
    g = jax.nn.sigmoid(h1 @ p["se_fc2_wT"] + p["se_fc2_b"])           # (N, H)
    return x * g.astype(x.dtype)[:, :, None, None]


def maxpool_w(x, k):
    # MaxPool2d((1,k), stride=(1,k), ceil_mode=True) == pool along W here.
    N, H, W, C = x.shape
    w_out = -(-W // k)
    pad = w_out * k - W
    xp = jnp.pad(x, ((0, 0), (0, 0), (0, pad), (0, 0)),
                 constant_values=-jnp.inf)
    return xp.reshape(N, H, w_out, k, C).max(axis=3)


def scicnn_forward(x, prep):
    # PyTorch does x.permute(0,3,1,2) -> NCHW; our (N, H=22, W, C=8) input IS
    # the NHWC view of that, so activations stay NHWC (no layout transposes).
    # Cast to bf16 BEFORE the im2col so the expanded patches are never f32.
    h = x.astype(jnp.bfloat16)
    for name, k1, c_out, pool_k in INCEPTION_CFG:
        p = prep[name]
        h = fused_inception_conv(h, p, k1, c_out)
        h = se_module(h, p)
        h = maxpool_w(h, pool_k)
    # Flatten in PyTorch NCHW order (C, H, W) to keep the fc semantics.
    n = h.shape[0]
    h = jnp.transpose(h, (0, 3, 1, 2)).reshape(n, -1).astype(jnp.float32)
    # Dropout(0.4) is identity in eval mode; the 2x1408x16 Linear is left to
    # XLA (a standalone pallas_call for a GEMV this small is pure overhead).
    return h @ prep["fc_wT"] + prep["fc_b"]


# ----------------------------------------------------------------------------
# Pure-JAX f32 reference (independent path: lax.conv, NCHW) for correctness.
# ----------------------------------------------------------------------------
def reference_forward(x, params):
    eps = 1e-5

    def conv_bn_relu(h, p):
        k = p["w"].shape[2]
        pad = (k - 1) // 2
        w4 = p["w"][:, :, None, :]
        y = jax.lax.conv_general_dilated(
            h, w4, window_strides=(1, 1),
            padding=[(0, 0), (pad, pad)],
            dimension_numbers=("NCHW", "OIHW", "NCHW"))
        y = y + p["b"][None, :, None, None]
        scale = p["gamma"] / jnp.sqrt(p["var"] + eps)
        y = (y - p["mean"][None, :, None, None]) * scale[None, :, None, None] \
            + p["beta"][None, :, None, None]
        return jnp.maximum(y, 0.0)

    def se(h, p):
        m = jnp.mean(h, axis=(1, 3))                                  # (N, H)
        a = jnp.maximum(m @ p["fc1_w"].T + p["fc1_b"], 0.0)
        g = jax.nn.sigmoid(a @ p["fc2_w"].T + p["fc2_b"])
        return h * g[:, None, :, None]

    def pool(h, k):
        N, C, H, W = h.shape
        w_out = -(-W // k)
        hp = jnp.pad(h, ((0, 0), (0, 0), (0, 0), (0, w_out * k - W)),
                     constant_values=-jnp.inf)
        return hp.reshape(N, C, H, w_out, k).max(axis=4)

    h = jnp.transpose(x, (0, 3, 1, 2))                                # -> NCHW
    for name, pool_k in (("inc1", 4), ("inc2", 4), ("inc3", 8)):
        blk = params[name]
        b1 = conv_bn_relu(h, blk["b1"])
        b2 = conv_bn_relu(h, blk["b2"])
        h = jnp.concatenate([b1, b2], axis=1)
        h = se(h, blk["se"])
        h = pool(h, pool_k)
    h = h.reshape(h.shape[0], -1)
    return h @ params["fc_w"].T + params["fc_b"]


# ----------------------------------------------------------------------------
# Parameter init (xavier for conv/linear weights, matching the PyTorch init).
# ----------------------------------------------------------------------------
def init_scicnn_params(key):
    keys = iter(jax.random.split(key, 64))

    def xavier(shape, fan_in, fan_out):
        bound = (6.0 / (fan_in + fan_out)) ** 0.5
        return jax.random.uniform(next(keys), shape, jnp.float32, -bound, bound)

    def uniform_bias(shape, fan_in):
        bound = 1.0 / (fan_in ** 0.5)
        return jax.random.uniform(next(keys), shape, jnp.float32, -bound, bound)

    def conv_branch(cin, cout, k):
        return {
            "w": xavier((cout, cin, k), cin * k, cout * k),
            "b": uniform_bias((cout,), cin * k),
            "gamma": 1.0 + 0.1 * jax.random.normal(next(keys), (cout,), jnp.float32),
            "beta": 0.1 * jax.random.normal(next(keys), (cout,), jnp.float32),
            "mean": 0.1 * jax.random.normal(next(keys), (cout,), jnp.float32),
            "var": jnp.abs(jax.random.normal(next(keys), (cout,), jnp.float32)) + 0.5,
        }

    def se_params(channels=22, reduction=4):
        hidden = channels // reduction
        return {
            "fc1_w": xavier((hidden, channels), channels, hidden),
            "fc1_b": uniform_bias((hidden,), channels),
            "fc2_w": xavier((channels, hidden), hidden, channels),
            "fc2_b": uniform_bias((channels,), hidden),
        }

    return {
        "inc1": {"b1": conv_branch(8, 8, 16), "b2": conv_branch(8, 8, 8), "se": se_params()},
        "inc2": {"b1": conv_branch(16, 16, 8), "b2": conv_branch(16, 16, 4), "se": se_params()},
        "inc3": {"b1": conv_branch(32, 32, 4), "b2": conv_branch(32, 32, 2), "se": se_params()},
        "fc_w": xavier((16, 22 * 64), 22 * 64, 16),
        "fc_b": uniform_bias((16,), 22 * 64),
        # NOTE: NPC module parameters are unused in SciCNN.forward and omitted.
    }


if __name__ == "__main__":
    key = jax.random.PRNGKey(0)
    kp, kx = jax.random.split(key)
    params = init_scicnn_params(kp)
    prep = prepare_scicnn_params(params)   # one-time weight prep, outside jit

    # SciCNN implies H=22 ("EEG channels", SEModule channels=22), C=8 input
    # feature channels, and W=128 so the three maxpools reduce W to 1 and the
    # flatten produces 22*64 features for the final fc.
    x = jax.random.normal(kx, (2, 22, 128, 8), dtype=jnp.float32)

    fwd = jax.jit(scicnn_forward)
    y = fwd(x, prep)
    jax.block_until_ready(y)

    ref = reference_forward(x, params)
    assert y.shape == (2, 16), y.shape

    diff = jnp.abs(y - ref)
    max_err = float(jnp.max(diff))
    norm_rel = float(jnp.linalg.norm(y - ref) / (jnp.linalg.norm(ref) + 1e-12))
    cos = float(jnp.sum(y * ref) /
                (jnp.linalg.norm(y) * jnp.linalg.norm(ref) + 1e-12))
    # bf16 matmul operands + bf16 activations over three stacked blocks give a
    # small but nonzero error; a wrong branch-2 tap offset or layout bug would
    # be O(1) and fail all three checks.
    assert max_err < 0.25, f"max abs err {max_err}"
    assert norm_rel < 0.08, f"relative (L2) err {norm_rel}"
    assert cos > 0.99, f"cosine similarity {cos}"
    print("KERNEL_OK")
</pallas_src>

<mosaic_0001>
module attributes {stable_mosaic.version = 11 : i64} {
  func.func @_conv_affine_relu_kernel(%arg0: i32, %arg1: memref<2800x128xbf16, #tpu.memory_space<vmem>>, %arg2: memref<128x128xbf16, #tpu.memory_space<vmem>>, %arg3: memref<1x128xf32, #tpu.memory_space<vmem>>, %arg4: memref<1x128xf32, #tpu.memory_space<vmem>>, %arg5: memref<2800x128xbf16, #tpu.memory_space<vmem>>) attributes {dimension_semantics = [#tpu.dimension_semantics<parallel>], iteration_bounds = array<i64: 2>, scalar_prefetch = 0 : i64, scratch_operands = 0 : i64, tpu.core_type = #tpu.core_type<tc>, window_params = [{transform_indices = @transform_0, window_bounds = array<i64: 2800, 128>}, {pipeline_mode = #tpu.pipeline_mode<synchronous>, transform_indices = @transform_1, window_bounds = array<i64: 128, 128>}, {pipeline_mode = #tpu.pipeline_mode<synchronous>, transform_indices = @transform_2, window_bounds = array<i64: 1, 128>}, {pipeline_mode = #tpu.pipeline_mode<synchronous>, transform_indices = @transform_3, window_bounds = array<i64: 1, 128>}, {transform_indices = @transform_4, window_bounds = array<i64: 2800, 128>}]} {
    %c0 = arith.constant 0 : index
    %c0_0 = arith.constant 0 : index
    %0 = vector.load %arg1[%c0, %c0_0] : memref<2800x128xbf16, #tpu.memory_space<vmem>>, vector<2800x128xbf16>
    %c0_1 = arith.constant 0 : index
    %c0_2 = arith.constant 0 : index
    %1 = vector.load %arg2[%c0_1, %c0_2] : memref<128x128xbf16, #tpu.memory_space<vmem>>, vector<128x128xbf16>
    %cst = arith.constant dense<0.000000e+00> : vector<2800x128xf32>
    %2 = tpu.matmul %0, %1, %cst {dimension_numbers = #tpu.dot_dimension_numbers<[1], [0], [0], [1], [0, 0, 1, 1], [], []>} : vector<2800x128xbf16>, vector<128x128xbf16>, vector<2800x128xf32> -> vector<2800x128xf32>
    %c0_3 = arith.constant 0 : index
    %c0_4 = arith.constant 0 : index
    %3 = vector.load %arg3[%c0_3, %c0_4] : memref<1x128xf32, #tpu.memory_space<vmem>>, vector<1x128xf32>
    %4 = vector.broadcast %3 : vector<1x128xf32> to vector<2800x128xf32>
    %5 = arith.mulf %2, %4 : vector<2800x128xf32>
    %c0_5 = arith.constant 0 : index
    %c0_6 = arith.constant 0 : index
    %6 = vector.load %arg4[%c0_5, %c0_6] : memref<1x128xf32, #tpu.memory_space<vmem>>, vector<1x128xf32>
    %7 = vector.broadcast %6 : vector<1x128xf32> to vector<2800x128xf32>
    %8 = arith.addf %5, %7 : vector<2800x128xf32>
    %cst_7 = arith.constant 0.000000e+00 : f32
    %9 = vector.broadcast %cst_7 : f32 to vector<2800x128xf32>
    %10 = arith.maximumf %8, %9 : vector<2800x128xf32>
    %11 = arith.truncf %10 : vector<2800x128xf32> to vector<2800x128xbf16>
    %c0_8 = arith.constant 0 : index
    %c0_9 = arith.constant 0 : index
    %12 = vector.load %arg5[%c0_8, %c0_9] : memref<2800x128xbf16, #tpu.memory_space<vmem>>, vector<2800x128xbf16>
    tpu.vector_store %arg5[%c0_8, %c0_9], %11 {strides = array<i32>} : memref<2800x128xbf16, #tpu.memory_space<vmem>>, vector<2800x128xbf16>,
    return
  }
  func.func @transform_0(%arg0: i32) -> (i32, i32) {
    %c0_i32 = arith.constant 0 : i32
    %c0_i32_0 = arith.constant 0 : i32
    return %arg0, %c0_i32 : i32, i32
  }
  func.func @transform_1(%arg0: i32) -> (i32, i32) {
    %c0_i32 = arith.constant 0 : i32
    %c0_i32_0 = arith.constant 0 : i32
    %c0_i32_1 = arith.constant 0 : i32
    return %c0_i32, %c0_i32_0 : i32, i32
  }
  func.func @transform_2(%arg0: i32) -> (i32, i32) {
    %c0_i32 = arith.constant 0 : i32
    %c0_i32_0 = arith.constant 0 : i32
    %c0_i32_1 = arith.constant 0 : i32
    return %c0_i32, %c0_i32_0 : i32, i32
  }
  func.func @transform_3(%arg0: i32) -> (i32, i32) {
    %c0_i32 = arith.constant 0 : i32
    %c0_i32_0 = arith.constant 0 : i32
    %c0_i32_1 = arith.constant 0 : i32
    return %c0_i32, %c0_i32_0 : i32, i32
  }
  func.func @transform_4(%arg0: i32) -> (i32, i32) {
    %c0_i32 = arith.constant 0 : i32
    %c0_i32_0 = arith.constant 0 : i32
    return %arg0, %c0_i32 : i32, i32
  }
}

module attributes {stable_mosaic.version = 11 : i64} {
  func.func @_conv_affine_relu_kernel(%arg0: i32, %arg1: memref<688x128xbf16, #tpu.memory_space<vmem>>, %arg2: memref<128x128xbf16, #tpu.memory_space<vmem>>, %arg3: memref<1x128xf32, #tpu.memory_space<vmem>>, %arg4: memref<1x128xf32, #tpu.memory_space<vmem>>, %arg5: memref<688x128xbf16, #tpu.memory_space<vmem>>) attributes {dimension_semantics = [#tpu.dimension_semantics<parallel>], iteration_bounds = array<i64: 2>, scalar_prefetch = 0 : i64, scratch_operands = 0 : i64, tpu.core_type = #tpu.core_type<tc>, window_params = [{transform_indices = @transform_0, window_bounds = array<i64: 688, 128>}, {pipeline_mode = #tpu.pipeline_mode<synchronous>, transform_indices = @transform_1, window_bounds = array<i64: 128, 128>}, {pipeline_mode = #tpu.pipeline_mode<synchronous>, transform_indices = @transform_2, window_bounds = array<i64: 1, 128>}, {pipeline_mode = #tpu.pipeline_mode<synchronous>, transform_indices = @transform_3, window_bounds = array<i64: 1, 128>}, {transform_indices = @transform_4, window_bounds = array<i64: 688, 128>}]} {
    %c0 = arith.constant 0 : index
    %c0_0 = arith.constant 0 : index
    %0 = vector.load %arg1[%c0, %c0_0] : memref<688x128xbf16, #tpu.memory_space<vmem>>, vector<688x128xbf16>
    %c0_1 = arith.constant 0 : index
    %c0_2 = arith.constant 0 : index
    %1 = vector.load %arg2[%c0_1, %c0_2] : memref<128x128xbf16, #tpu.memory_space<vmem>>, vector<128x128xbf16>
    %cst = arith.constant dense<0.000000e+00> : vector<688x128xf32>
    %2 = tpu.matmul %0, %1, %cst {dimension_numbers = #tpu.dot_dimension_numbers<[1], [0], [0], [1], [0, 0, 1, 1], [], []>} : vector<688x128xbf16>, vector<128x128xbf16>, vector<688x128xf32> -> vector<688x128xf32>
    %c0_3 = arith.constant 0 : index
    %c0_4 = arith.constant 0 : index
    %3 = vector.load %arg3[%c0_3, %c0_4] : memref<1x128xf32, #tpu.memory_space<vmem>>, vector<1x128xf32>
    %4 = vector.broadcast %3 : vector<1x128xf32> to vector<688x128xf32>
    %5 = arith.mulf %2, %4 : vector<688x128xf32>
    %c0_5 = arith.constant 0 : index
    %c0_6 = arith.constant 0 : index
    %6 = vector.load %arg4[%c0_5, %c0_6] : memref<1x128xf32, #tpu.memory_space<vmem>>, vector<1x128xf32>
    %7 = vector.broadcast %6 : vector<1x128xf32> to vector<688x128xf32>
    %8 = arith.addf %5, %7 : vector<688x128xf32>
    %cst_7 = arith.constant 0.000000e+00 : f32
    %9 = vector.broadcast %cst_7 : f32 to vector<688x128xf32>
    %10 = arith.maximumf %8, %9 : vector<688x128xf32>
    %11 = arith.truncf %10 : vector<688x128xf32> to vector<688x128xbf16>
    %c0_8 = arith.constant 0 : index
    %c0_9 = arith.constant 0 : index
    %12 = vector.load %arg5[%c0_8, %c0_9] : memref<688x128xbf16, #tpu.memory_space<vmem>>, vector<688x128xbf16>
    tpu.vector_store %arg5[%c0_8, %c0_9], %11 {strides = array<i32>} : memref<688x128xbf16, #tpu.memory_space<vmem>>, vector<688x128xbf16>,
    return
  }
  func.func @transform_0(%arg0: i32) -> (i32, i32) {
    %c0_i32 = arith.constant 0 : i32
    %c0_i32_0 = arith.constant 0 : i32
    return %arg0, %c0_i32 : i32, i32
  }
  func.func @transform_1(%arg0: i32) -> (i32, i32) {
    %c0_i32 = arith.constant 0 : i32
    %c0_i32_0 = arith.constant 0 : i32
    %c0_i32_1 = arith.constant 0 : i32
    return %c0_i32, %c0_i32_0 : i32, i32
  }
  func.func @transform_2(%arg0: i32) -> (i32, i32) {
    %c0_i32 = arith.constant 0 : i32
    %c0_i32_0 = arith.constant 0 : i32
    %c0_i32_1 = arith.constant 0 : i32
    return %c0_i32, %c0_i32_0 : i32, i32
  }
  func.func @transform_3(%arg0: i32) -> (i32, i32) {
    %c0_i32 = arith.constant 0 : i32
    %c0_i32_0 = arith.constant 0 : i32
    %c0_i32_1 = arith.constant 0 : i32
    return %c0_i32, %c0_i32_0 : i32, i32
  }
  func.func @transform_4(%arg0: i32) -> (i32, i32) {
    %c0_i32 = arith.constant 0 : i32
    %c0_i32_0 = arith.constant 0 : i32
    return %arg0, %c0_i32 : i32, i32
  }
}

module attributes {stable_mosaic.version = 11 : i64} {
  func.func @_conv_affine_relu_kernel(%arg0: i32, %arg1: memref<160x128xbf16, #tpu.memory_space<vmem>>, %arg2: memref<128x128xbf16, #tpu.memory_space<vmem>>, %arg3: memref<1x128xf32, #tpu.memory_space<vmem>>, %arg4: memref<1x128xf32, #tpu.memory_space<vmem>>, %arg5: memref<160x128xbf16, #tpu.memory_space<vmem>>) attributes {dimension_semantics = [#tpu.dimension_semantics<parallel>], iteration_bounds = array<i64: 2>, scalar_prefetch = 0 : i64, scratch_operands = 0 : i64, tpu.core_type = #tpu.core_type<tc>, window_params = [{transform_indices = @transform_0, window_bounds = array<i64: 160, 128>}, {pipeline_mode = #tpu.pipeline_mode<synchronous>, transform_indices = @transform_1, window_bounds = array<i64: 128, 128>}, {pipeline_mode = #tpu.pipeline_mode<synchronous>, transform_indices = @transform_2, window_bounds = array<i64: 1, 128>}, {pipeline_mode = #tpu.pipeline_mode<synchronous>, transform_indices = @transform_3, window_bounds = array<i64: 1, 128>}, {transform_indices = @transform_4, window_bounds = array<i64: 160, 128>}]} {
    %c0 = arith.constant 0 : index
    %c0_0 = arith.constant 0 : index
    %0 = vector.load %arg1[%c0, %c0_0] : memref<160x128xbf16, #tpu.memory_space<vmem>>, vector<160x128xbf16>
    %c0_1 = arith.constant 0 : index
    %c0_2 = arith.constant 0 : index
    %1 = vector.load %arg2[%c0_1, %c0_2] : memref<128x128xbf16, #tpu.memory_space<vmem>>, vector<128x128xbf16>
    %cst = arith.constant dense<0.000000e+00> : vector<160x128xf32>
    %2 = tpu.matmul %0, %1, %cst {dimension_numbers = #tpu.dot_dimension_numbers<[1], [0], [0], [1], [0, 0, 1, 1], [], []>} : vector<160x128xbf16>, vector<128x128xbf16>, vector<160x128xf32> -> vector<160x128xf32>
    %c0_3 = arith.constant 0 : index
    %c0_4 = arith.constant 0 : index
    %3 = vector.load %arg3[%c0_3, %c0_4] : memref<1x128xf32, #tpu.memory_space<vmem>>, vector<1x128xf32>
    %4 = vector.broadcast %3 : vector<1x128xf32> to vector<160x128xf32>
    %5 = arith.mulf %2, %4 : vector<160x128xf32>
    %c0_5 = arith.constant 0 : index
    %c0_6 = arith.constant 0 : index
    %6 = vector.load %arg4[%c0_5, %c0_6] : memref<1x128xf32, #tpu.memory_space<vmem>>, vector<1x128xf32>
    %7 = vector.broadcast %6 : vector<1x128xf32> to vector<160x128xf32>
    %8 = arith.addf %5, %7 : vector<160x128xf32>
    %cst_7 = arith.constant 0.000000e+00 : f32
    %9 = vector.broadcast %cst_7 : f32 to vector<160x128xf32>
    %10 = arith.maximumf %8, %9 : vector<160x128xf32>
    %11 = arith.truncf %10 : vector<160x128xf32> to vector<160x128xbf16>
    %c0_8 = arith.constant 0 : index
    %c0_9 = arith.constant 0 : index
    %12 = vector.load %arg5[%c0_8, %c0_9] : memref<160x128xbf16, #tpu.memory_space<vmem>>, vector<160x128xbf16>
    tpu.vector_store %arg5[%c0_8, %c0_9], %11 {strides = array<i32>} : memref<160x128xbf16, #tpu.memory_space<vmem>>, vector<160x128xbf16>,
    return
  }
  func.func @transform_0(%arg0: i32) -> (i32, i32) {
    %c0_i32 = arith.constant 0 : i32
    %c0_i32_0 = arith.constant 0 : i32
    return %arg0, %c0_i32 : i32, i32
  }
  func.func @transform_1(%arg0: i32) -> (i32, i32) {
    %c0_i32 = arith.constant 0 : i32
    %c0_i32_0 = arith.constant 0 : i32
    %c0_i32_1 = arith.constant 0 : i32
    return %c0_i32, %c0_i32_0 : i32, i32
  }
  func.func @transform_2(%arg0: i32) -> (i32, i32) {
    %c0_i32 = arith.constant 0 : i32
    %c0_i32_0 = arith.constant 0 : i32
    %c0_i32_1 = arith.constant 0 : i32
    return %c0_i32, %c0_i32_0 : i32, i32
  }
  func.func @transform_3(%arg0: i32) -> (i32, i32) {
    %c0_i32 = arith.constant 0 : i32
    %c0_i32_0 = arith.constant 0 : i32
    %c0_i32_1 = arith.constant 0 : i32
    return %c0_i32, %c0_i32_0 : i32, i32
  }
  func.func @transform_4(%arg0: i32) -> (i32, i32) {
    %c0_i32 = arith.constant 0 : i32
    %c0_i32_0 = arith.constant 0 : i32
    return %arg0, %c0_i32 : i32, i32
  }
}

</mosaic_0001>

<llo_original>
// kernel: scicnn_forward.3
$region0: #{scicnn_forward.3}
  #allocation0 [shape = 'u32[]', space=smem, size = 0x4, offset = 0x4, fixed_abs, tag = 'smem constant byte address 0x4 - core index']
  #allocation1 [shape = 'u32[144,128]{1,0:T(1,128)}', space=vmem, size = 0x12000, scoped, tag = 'internal scratch']
  %s0 = inlined_call_operand.vmem [shape: bf16[5600,128], index: 0, kind: input, shape index: {}]
  %s1 = inlined_call_operand.vmem [shape: bf16[128,128], index: 1, kind: input, shape index: {}]
  %s2 = inlined_call_operand.vmem [shape: f32[1,128], index: 2, kind: input, shape index: {}]
  %s3 = inlined_call_operand.vmem [shape: f32[1,128], index: 3, kind: input, shape index: {}]
  %s4 = inlined_call_operand.vmem [shape: bf16[5600,128], index: 4, kind: output, shape index: {}]
  %s5 = sld [smem:[#allocation0]]
  $region49: #{scicnn_forward.3} parent=0
    _
  %s7 = ssub.s32 1, %s5
  %s8 = scalar_select 0, %s7, %s5
  loop: start=0, step=1, limit=4
  $region2: #{scicnn_forward.3} parent=0 // loop_pre_header
    _
  $region3: #{scicnn_forward.3} parent=0 // loop_header
    %s10 = sphi 0, %s14
    %p11 = scmp.ge.s32.totalorder %s10, 4
    %s20 = sphi 0, %s22
    %s23 = sphi 0, %s20
    %s24 = sphi 0, %s23
    %s40 = sphi 0, %s24
    %s44 = sphi 0, %s44
    %s46 = sphi 0, %s44
    %s47 = sphi 0, %s46
    %s61 = sphi 0, %s47
    %s65 = sphi 0, %s65
    %s67 = sphi 0, %s65
    %s68 = sphi 0, %s67
    %s82 = sphi 0, %s68
    %s86 = sphi 0, %s86
    %s88 = sphi 0, %s86
    %s89 = sphi 0, %s88
    %s103 = sphi 0, %s89
    %s109 = sphi 0, %s111
    %s112 = sphi 0, %s109
    %s113 = sphi 0, %s112
    %s129 = sphi 0, %s113
  $region4: #{scicnn_forward.3} parent=0 // loop_header_branch
    %13 = sbr.rel (%p11) target = $region8
  $region5: #{scicnn_forward.3} parent=0 // loop_body
    %s15 = ssub.s32 %s10, 1
    %s16 = ssub.s32 %s10, 2
    %s17 = sadd.s32 %s10, 1
    %s18 = ssub.s32 %s10, %s17
    %p19 = scmp.eq.s32.totalorder %s18, 0
    %s21 = sadd.s32 %s20, 1
    %s22 = scalar_select %p19, %s20, %s21
    %p25 = pneg %p19
    %p26 = scmp.eq.s32.totalorder %s10, 1
    %p27 = por %p25, %p26
    %p28 = scmp.ne.s32.totalorder %s20, %s23
    %p29 = scmp.eq.s32.totalorder %s10, 0
    %p30 = por %p28, %p29
    %p31 = scmp.ne.s32.totalorder %s20, %s23
    %p32 = scmp.eq.s32.totalorder %s15, 1
    %p33 = por %p31, %p32
    %p34 = scmp.ne.s32.totalorder %s23, %s24
    %p35 = scmp.eq.s32.totalorder %s15, 0
    %p36 = por %p34, %p35
    %p37 = scmp.ne.s32.totalorder %s23, %s24
    %p38 = scmp.eq.s32.totalorder %s16, 1
    %p39 = por %p37, %p38
    %p41 = scmp.ne.s32.totalorder %s24, %s40
    %p42 = scmp.eq.s32.totalorder %s16, 0
    %p43 = por %p41, %p42
    %s45 = sadd.s32 %s44, 1
    %p48 = scmp.eq.s32.totalorder %s10, 1
    %p49 = scmp.ne.s32.totalorder %s44, %s46
    %p50 = scmp.eq.s32.totalorder %s10, 0
    %p51 = por %p49, %p50
    %p52 = scmp.ne.s32.totalorder %s44, %s46
    %p53 = scmp.eq.s32.totalorder %s15, 1
    %p54 = por %p52, %p53
    %p55 = scmp.ne.s32.totalorder %s46, %s47
    %p56 = scmp.eq.s32.totalorder %s15, 0
    %p57 = por %p55, %p56
    %p58 = scmp.ne.s32.totalorder %s46, %s47
    %p59 = scmp.eq.s32.totalorder %s16, 1
    %p60 = por %p58, %p59
    %p62 = scmp.ne.s32.totalorder %s47, %s61
    %p63 = scmp.eq.s32.totalorder %s16, 0
    %p64 = por %p62, %p63
    %s66 = sadd.s32 %s65, 1
    %p69 = scmp.eq.s32.totalorder %s10, 1
    %p70 = scmp.ne.s32.totalorder %s65, %s67
    %p71 = scmp.eq.s32.totalorder %s10, 0
    %p72 = por %p70, %p71
    %p73 = scmp.ne.s32.totalorder %s65, %s67
    %p74 = scmp.eq.s32.totalorder %s15, 1
    %p75 = por %p73, %p74
    %p76 = scmp.ne.s32.totalorder %s67, %s68
    %p77 = scmp.eq.s32.totalorder %s15, 0
    %p78 = por %p76, %p77
    %p79 = scmp.ne.s32.totalorder %s67, %s68
    %p80 = scmp.eq.s32.totalorder %s16, 1
    %p81 = por %p79, %p80
    %p83 = scmp.ne.s32.totalorder %s68, %s82
    %p84 = scmp.eq.s32.totalorder %s16, 0
    %p85 = por %p83, %p84
    %s87 = sadd.s32 %s86, 1
    %p90 = scmp.eq.s32.totalorder %s10, 1
    %p91 = scmp.ne.s32.totalorder %s86, %s88
    %p92 = scmp.eq.s32.totalorder %s10, 0
    %p93 = por %p91, %p92
    %p94 = scmp.ne.s32.totalorder %s86, %s88
    %p95 = scmp.eq.s32.totalorder %s15, 1
    %p96 = por %p94, %p95
    %p97 = scmp.ne.s32.totalorder %s88, %s89
    %p98 = scmp.eq.s32.totalorder %s15, 0
    %p99 = por %p97, %p98
    %p100 = scmp.ne.s32.totalorder %s88, %s89
    %p101 = scmp.eq.s32.totalorder %s16, 1
    %p102 = por %p100, %p101
    %p104 = scmp.ne.s32.totalorder %s89, %s103
    %p105 = scmp.eq.s32.totalorder %s16, 0
    %p106 = por %p104, %p105
    %s107 = ssub.s32 %s10, %s17
    %p108 = scmp.eq.s32.totalorder %s107, 0
    %s110 = sadd.s32 %s109, 1
    %s111 = scalar_select %p108, %s109, %s110
    %p114 = pneg %p108
    %p115 = scmp.eq.s32.totalorder %s10, 1
    %p116 = por %p114, %p115
    %p117 = scmp.ne.s32.totalorder %s109, %s112
    %p118 = scmp.eq.s32.totalorder %s10, 0
    %p119 = por %p117, %p118
    %p120 = scmp.ne.s32.totalorder %s109, %s112
    %p121 = scmp.eq.s32.totalorder %s15, 1
    %p122 = por %p120, %p121
    %p123 = scmp.ne.s32.totalorder %s112, %s113
    %p124 = scmp.eq.s32.totalorder %s15, 0
    %p125 = por %p123, %p124
    %p126 = scmp.ne.s32.totalorder %s112, %s113
    %p127 = scmp.eq.s32.totalorder %s16, 1
    %p128 = por %p126, %p127
    %p130 = scmp.ne.s32.totalorder %s113, %s129
    %p131 = scmp.eq.s32.totalorder %s16, 0
    %p132 = por %p130, %p131
    %p133 = scmp.le.s32.totalorder 1, %s10
    %p134 = scmp.lt.s32.totalorder %s10, 3
    %p135 = pnand %p133, %p134
    %p136 = pneg %p135
    // Predicated region
    $region9: #{scicnn_forward.3} parent=5 // pred_check
      _
    $region10: #{scicnn_forward.3} parent=5 // pred_check_branch
      %138 = sbr.rel (%p135) target = $region12
    $region11: #{scicnn_forward.3} parent=5 // pred_region
      %s139 = ssub.s32 %s10, 1
      // Predicated region
      $region13: #{scicnn_forward.3} parent=11 // pred_check
        %p140 = pneg %p57
      $region14: #{scicnn_forward.3} parent=11 // pred_check_branch
        %142 = sbr.rel (%p140) target = $region16
      $region15: #{scicnn_forward.3} parent=11 // pred_region
        _
      $region16: #{scicnn_forward.3} parent=11 // pred_fallthru
        _
      // Predicated region
      $region17: #{scicnn_forward.3} parent=11 // pred_check
        %p143 = pneg %p78
      $region18: #{scicnn_forward.3} parent=11 // pred_check_branch
        %145 = sbr.rel (%p143) target = $region20
      $region19: #{scicnn_forward.3} parent=11 // pred_region
        _
      $region20: #{scicnn_forward.3} parent=11 // pred_fallthru
        _
      // Predicated region
      $region21: #{scicnn_forward.3} parent=11 // pred_check
        %p146 = pneg %p99
      $region22: #{scicnn_forward.3} parent=11 // pred_check_branch
        %148 = sbr.rel (%p146) target = $region24
      $region23: #{scicnn_forward.3} parent=11 // pred_region
        _
      $region24: #{scicnn_forward.3} parent=11 // pred_fallthru
        _
    $region12: #{scicnn_forward.3} parent=5 // pred_fallthru
      _
    %p149 = scmp.lt.s32.totalorder %s10, 2
    // Predicated region
    $region25: #{scicnn_forward.3} parent=5 // pred_check
      %p150 = pneg %p149
    $region26: #{scicnn_forward.3} parent=5 // pred_check_branch
      %152 = sbr.rel (%p150) target = $region28
    $region27: #{scicnn_forward.3} parent=5 // pred_region
      // Predicated region
      $region29: #{scicnn_forward.3} parent=27 // pred_check
        %p153 = pneg %p30
      $region30: #{scicnn_forward.3} parent=27 // pred_check_branch
        %155 = sbr.rel (%p153) target = $region32
      $region31: #{scicnn_forward.3} parent=27 // pred_region
        %s156 = smul.u32 350, %s10
        %p157 = scmp.lt.s32.totalorder %s156, 699
        %s158 = scalar_select %p157, %s156, 699
        %s159 = smul.addr %s158, 4
        %s160 = scalar_lea.vmem %s0, %s159
        %s161 = smul.u32 350, %s10
      $region32: #{scicnn_forward.3} parent=27 // pred_fallthru
        _
    $region28: #{scicnn_forward.3} parent=5 // pred_fallthru
      _
    %p162 = scmp.le.s32.totalorder 1, %s10
    %p163 = scmp.lt.s32.totalorder %s10, 3
    %p164 = pnand %p162, %p163
    %p165 = pneg %p164
    // Predicated region
    $region33: #{scicnn_forward.3} parent=5 // pred_check
      _
    $region34: #{scicnn_forward.3} parent=5 // pred_check_branch
      %167 = sbr.rel (%p164) target = $region36
    $region35: #{scicnn_forward.3} parent=5 // pred_region
      %s168 = ssub.s32 %s10, 1
      %s169 = smul.u32 350, %s15
      %p170 = scmp.lt.s32.totalorder %s169, 699
      %s171 = scalar_select %p170, %s169, 699
      %s172 = smul.addr %s171, 4
      %s173 = scalar_lea.vmem %s0, %s172
      %p174 = pneg %p36
      %p175 = pneg %p33
      %p176 = pneg %p57
      %p177 = pneg %p54
      %p178 = pneg %p78
      %p179 = pneg %p75
      %p180 = pneg %p99
      %p181 = pneg %p96
      %p182 = pneg %p125
      %p183 = pneg %p122
      %s184 = smul.u32 350, %s15
      %p185 = scmp.lt.s32.totalorder %s184, 699
      %s186 = scalar_select %p185, %s184, 699
      %s187 = smul.addr %s186, 4
      %s188 = scalar_lea.vmem %s4, %s187
      %s189 = smul.u32 350, %s15
      %p190 = scmp.lt.s32.totalorder %s189, 699
      %s191 = scalar_select %p190, %s189, 699
      %s192 = smul.addr %s191, 4
      %s193 = scalar_lea.vmem %s0, %s192
      %s194 = smul.u32 350, %s15
      %s195 = smul.u32 350, %s15
      %p196 = scmp.lt.s32.totalorder %s195, 699
      %s197 = scalar_select %p196, %s195, 699
      %s198 = smul.addr %s197, 4
      %s199 = scalar_lea.vmem %s4, %s198
      %s200 = smul.u32 350, %s15
      %v202 = vld [vmem:[%s193] sm:$0xf]
      %v203 = vld [vmem:[%s193 + $0x4] sm:$0xf]
      %v204 = vld [vmem:[%s193 + $0x8] sm:$0xf]
      %v205 = vld [vmem:[%s193 + $0xc] sm:$0xf]
      %v206 = vld [vmem:[%s193 + $0x10] sm:$0xf]
      %v207 = vld [vmem:[%s193 + $0x14] sm:$0xf]
      %v208 = vld [vmem:[%s193 + $0x18] sm:$0xf]
      %v209 = vld [vmem:[%s193 + $0x1c] sm:$0xf]
      %v210 = vld [vmem:[%s193 + $0x20] sm:$0xf]
      %v211 = vld [vmem:[%s193 + $0x24] sm:$0xf]
      %v212 = vld [vmem:[%s193 + $0x28] sm:$0xf]
      %v213 = vld [vmem:[%s193 + $0x2c] sm:$0xf]
      %v214 = vld [vmem:[%s193 + $0x30] sm:$0xf]
      %v215 = vld [vmem:[%s193 + $0x34] sm:$0xf]
      %v216 = vld [vmem:[%s193 + $0x38] sm:$0xf]
      %v217 = vld [vmem:[%s193 + $0x3c] sm:$0xf]
      %v218 = vld [vmem:[%s193 + $0x40] sm:$0xf]
      %v219 = vld [vmem:[%s193 + $0x44] sm:$0xf]
      %v220 = vld [vmem:[%s193 + $0x48] sm:$0xf]
      %v221 = vld [vmem:[%s193 + $0x4c] sm:$0xf]
      %v222 = vld [vmem:[%s193 + $0x50] sm:$0xf]
      %v223 = vld [vmem:[%s193 + $0x54] sm:$0xf]
      %v224 = vld [vmem:[%s193 + $0x58] sm:$0xf]
      %v225 = vld [vmem:[%s193 + $0x5c] sm:$0xf]
      %v226 = vld [vmem:[%s193 + $0x60] sm:$0xf]
      %v227 = vld [vmem:[%s193 + $0x64] sm:$0xf]
      %v228 = vld [vmem:[%s193 + $0x68] sm:$0xf]
      %v229 = vld [vmem:[%s193 + $0x6c] sm:$0xf]
      %v230 = vld [vmem:[%s193 + $0x70] sm:$0xf]
      %v231 = vld [vmem:[%s193 + $0x74] sm:$0xf]
      %v232 = vld [vmem:[%s193 + $0x78] sm:$0xf]
      %v233 = vld [vmem:[%s193 + $0x7c] sm:$0xf]
      %v234 = vld [vmem:[%s193 + $0x80] sm:$0xf]
      %v235 = vld [vmem:[%s193 + $0x84] sm:$0xf]
      %v236 = vld [vmem:[%s193 + $0x88] sm:$0xf]
      %v237 = vld [vmem:[%s193 + $0x8c] sm:$0xf]
      %v238 = vld [vmem:[%s193 + $0x90] sm:$0xf]
      %v239 = vld [vmem:[%s193 + $0x94] sm:$0xf]
      %v240 = vld [vmem:[%s193 + $0x98] sm:$0xf]
      %v241 = vld [vmem:[%s193 + $0x9c] sm:$0xf]
      %v242 = vld [vmem:[%s193 + $0xa0] sm:$0xf]
      %v243 = vld [vmem:[%s193 + $0xa4] sm:$0xf]
      %v244 = vld [vmem:[%s193 + $0xa8] sm:$0xf]
      %v245 = vld [vmem:[%s193 + $0xac] sm:$0xf]
      %v246 = vld [vmem:[%s193 + $0xb0] sm:$0xf]
      %v247 = vld [vmem:[%s193 + $0xb4] sm:$0xf]
      %v248 = vld [vmem:[%s193 + $0xb8] sm:$0xf]
      %v249 = vld [vmem:[%s193 + $0xbc] sm:$0xf]
      %v250 = vld [vmem:[%s193 + $0xc0] sm:$0xf]
      %v251 = vld [vmem:[%s193 + $0xc4] sm:$0xf]
      %v252 = vld [vmem:[%s193 + $0xc8] sm:$0xf]
      %v253 = vld [vmem:[%s193 + $0xcc] sm:$0xf]
      %v254 = vld [vmem:[%s193 + $0xd0] sm:$0xf]
      %v255 = vld [vmem:[%s193 + $0xd4] sm:$0xf]
      %v256 = vld [vmem:[%s193 + $0xd8] sm:$0xf]
      %v257 = vld [vmem:[%s193 + $0xdc] sm:$0xf]
      %v258 = vld [vmem:[%s193 + $0xe0] sm:$0xf]
      %v259 = vld [vmem:[%s193 + $0xe4] sm:$0xf]
      %v260 = vld [vmem:[%s193 + $0xe8] sm:$0xf]
      %v261 = vld [vmem:[%s193 + $0xec] sm:$0xf]
      %v262 = vld [vmem:[%s193 + $0xf0] sm:$0xf]
      %v263 = vld [vmem:[%s193 + $0xf4] sm:$0xf]
      %v264 = vld [vmem:[%s193 + $0xf8] sm:$0xf]
      %v265 = vld [vmem:[%s193 + $0xfc] sm:$0xf]
      %v266 = vld [vmem:[%s193 + $0x100] sm:$0xf]
      %v267 = vld [vmem:[%s193 + $0x104] sm:$0xf]
      %v268 = vld [vmem:[%s193 + $0x108] sm:$0xf]
      %v269 = vld [vmem:[%s193 + $0x10c] sm:$0xf]
      %v270 = vld [vmem:[%s193 + $0x110] sm:$0xf]
      %v271 = vld [vmem:[%s193 + $0x114] sm:$0xf]
      %v272 = vld [vmem:[%s193 + $0x118] sm:$0xf]
      %v273 = vld [vmem:[%s193 + $0x11c] sm:$0xf]
      %v274 = vld [vmem:[%s193 + $0x120] sm:$0xf]
      %v275 = vld [vmem:[%s193 + $0x124] sm:$0xf]
      %v276 = vld [vmem:[%s193 + $0x128] sm:$0xf]
      %v277 = vld [vmem:[%s193 + $0x12c] sm:$0xf]
      %v278 = vld [vmem:[%s193 + $0x130] sm:$0xf]
      %v279 = vld [vmem:[%s193 + $0x134] sm:$0xf]
      %v280 = vld [vmem:[%s193 + $0x138] sm:$0xf]
      %v281 = vld [vmem:[%s193 + $0x13c] sm:$0xf]
      %v282 = vld [vmem:[%s193 + $0x140] sm:$0xf]
      %v283 = vld [vmem:[%s193 + $0x144] sm:$0xf]
      %v284 = vld [vmem:[%s193 + $0x148] sm:$0xf]
      %v285 = vld [vmem:[%s193 + $0x14c] sm:$0xf]
      %v286 = vld [vmem:[%s193 + $0x150] sm:$0xf]
      %v287 = vld [vmem:[%s193 + $0x154] sm:$0xf]
      %v288 = vld [vmem:[%s193 + $0x158] sm:$0xf]
      %v289 = vld [vmem:[%s193 + $0x15c] sm:$0xf]
      %v290 = vld [vmem:[%s193 + $0x160] sm:$0xf]
      %v291 = vld [vmem:[%s193 + $0x164] sm:$0xf]
      %v292 = vld [vmem:[%s193 + $0x168] sm:$0xf]
      %v293 = vld [vmem:[%s193 + $0x16c] sm:$0xf]
      %v294 = vld [vmem:[%s193 + $0x170] sm:$0xf]
      %v295 = vld [vmem:[%s193 + $0x174] sm:$0xf]
      %v296 = vld [vmem:[%s193 + $0x178] sm:$0xf]
      %v297 = vld [vmem:[%s193 + $0x17c] sm:$0xf]
      %v298 = vld [vmem:[%s193 + $0x180] sm:$0xf]
      %v299 = vld [vmem:[%s193 + $0x184] sm:$0xf]
      %v300 = vld [vmem:[%s193 + $0x188] sm:$0xf]
      %v301 = vld [vmem:[%s193 + $0x18c] sm:$0xf]
      %v302 = vld [vmem:[%s193 + $0x190] sm:$0xf]
      %v303 = vld [vmem:[%s193 + $0x194] sm:$0xf]
      %v304 = vld [vmem:[%s193 + $0x198] sm:$0xf]
      %v305 = vld [vmem:[%s193 + $0x19c] sm:$0xf]
      %v306 = vld [vmem:[%s193 + $0x1a0] sm:$0xf]
      %v307 = vld [vmem:[%s193 + $0x1a4] sm:$0xf]
      %v308 = vld [vmem:[%s193 + $0x1a8] sm:$0xf]
      %v309 = vld [vmem:[%s193 + $0x1ac] sm:$0xf]
      %v310 = vld [vmem:[%s193 + $0x1b0] sm:$0xf]
      %v311 = vld [vmem:[%s193 + $0x1b4] sm:$0xf]
      %v312 = vld [vmem:[%s193 + $0x1b8] sm:$0xf]
      %v313 = vld [vmem:[%s193 + $0x1bc] sm:$0xf]
      %v314 = vld [vmem:[%s193 + $0x1c0] sm:$0xf]
      %v315 = vld [vmem:[%s193 + $0x1c4] sm:$0xf]
      %v316 = vld [vmem:[%s193 + $0x1c8] sm:$0xf]
      %v317 = vld [vmem:[%s193 + $0x1cc] sm:$0xf]
      %v318 = vld [vmem:[%s193 + $0x1d0] sm:$0xf]
      %v319 = vld [vmem:[%s193 + $0x1d4] sm:$0xf]
      %v320 = vld [vmem:[%s193 + $0x1d8] sm:$0xf]
      %v321 = vld [vmem:[%s193 + $0x1dc] sm:$0xf]
      %v322 = vld [vmem:[%s193 + $0x1e0] sm:$0xf]
      %v323 = vld [vmem:[%s193 + $0x1e4] sm:$0xf]
      %v324 = vld [vmem:[%s193 + $0x1e8] sm:$0xf]
      %v325 = vld [vmem:[%s193 + $0x1ec] sm:$0xf]
      %v326 = vld [vmem:[%s193 + $0x1f0] sm:$0xf]
      %v327 = vld [vmem:[%s193 + $0x1f4] sm:$0xf]
      %v328 = vld [vmem:[%s193 + $0x1f8] sm:$0xf]
      %v329 = vld [vmem:[%s193 + $0x1fc] sm:$0xf]
      %v330 = vld [vmem:[%s193 + $0x200] sm:$0xf]
      %v331 = vld [vmem:[%s193 + $0x204] sm:$0xf]
      %v332 = vld [vmem:[%s193 + $0x208] sm:$0xf]
      %v333 = vld [vmem:[%s193 + $0x20c] sm:$0xf]
      %v334 = vld [vmem:[%s193 + $0x210] sm:$0xf]
      %v335 = vld [vmem:[%s193 + $0x214] sm:$0xf]
      %v336 = vld [vmem:[%s193 + $0x218] sm:$0xf]
      %v337 = vld [vmem:[%s193 + $0x21c] sm:$0xf]
      %v338 = vld [vmem:[%s193 + $0x220] sm:$0xf]
      %v339 = vld [vmem:[%s193 + $0x224] sm:$0xf]
      %v340 = vld [vmem:[%s193 + $0x228] sm:$0xf]
      %v341 = vld [vmem:[%s193 + $0x22c] sm:$0xf]
      %v342 = vld [vmem:[%s193 + $0x230] sm:$0xf]
      %v343 = vld [vmem:[%s193 + $0x234] sm:$0xf]
      %v344 = vld [vmem:[%s193 + $0x238] sm:$0xf]
      %v345 = vld [vmem:[%s193 + $0x23c] sm:$0xf]
      %v346 = vld [vmem:[%s193 + $0x240] sm:$0xf]
      %v347 = vld [vmem:[%s193 + $0x244] sm:$0xf]
      %v348 = vld [vmem:[%s193 + $0x248] sm:$0xf]
      %v349 = vld [vmem:[%s193 + $0x24c] sm:$0xf]
      %v350 = vld [vmem:[%s193 + $0x250] sm:$0xf]
      %v351 = vld [vmem:[%s193 + $0x254] sm:$0xf]
      %v352 = vld [vmem:[%s193 + $0x258] sm:$0xf]
      %v353 = vld [vmem:[%s193 + $0x25c] sm:$0xf]
      %v354 = vld [vmem:[%s193 + $0x260] sm:$0xf]
      %v355 = vld [vmem:[%s193 + $0x264] sm:$0xf]
      %v356 = vld [vmem:[%s193 + $0x268] sm:$0xf]
      %v357 = vld [vmem:[%s193 + $0x26c] sm:$0xf]
      %v358 = vld [vmem:[%s193 + $0x270] sm:$0xf]
      %v359 = vld [vmem:[%s193 + $0x274] sm:$0xf]
      %v360 = vld [vmem:[%s193 + $0x278] sm:$0xf]
      %v361 = vld [vmem:[%s193 + $0x27c] sm:$0xf]
      %v362 = vld [vmem:[%s193 + $0x280] sm:$0xf]
      %v363 = vld [vmem:[%s193 + $0x284] sm:$0xf]
      %v364 = vld [vmem:[%s193 + $0x288] sm:$0xf]
      %v365 = vld [vmem:[%s193 + $0x28c] sm:$0xf]
      %v366 = vld [vmem:[%s193 + $0x290] sm:$0xf]
      %v367 = vld [vmem:[%s193 + $0x294] sm:$0xf]
      %v368 = vld [vmem:[%s193 + $0x298] sm:$0xf]
      %v369 = vld [vmem:[%s193 + $0x29c] sm:$0xf]
      %v370 = vld [vmem:[%s193 + $0x2a0] sm:$0xf]
      %v371 = vld [vmem:[%s193 + $0x2a4] sm:$0xf]
      %v372 = vld [vmem:[%s193 + $0x2a8] sm:$0xf]
      %v373 = vld [vmem:[%s193 + $0x2ac] sm:$0xf]
      %v374 = vld [vmem:[%s193 + $0x2b0] sm:$0xf]
      %v375 = vld [vmem:[%s193 + $0x2b4] sm:$0xf]
      %v376 = vld [vmem:[%s193 + $0x2b8] sm:$0xf]
      %v377 = vld [vmem:[%s193 + $0x2bc] sm:$0xf]
      %v378 = vld [vmem:[%s193 + $0x2c0] sm:$0xf]
      %v379 = vld [vmem:[%s193 + $0x2c4] sm:$0xf]
      %v380 = vld [vmem:[%s193 + $0x2c8] sm:$0xf]
      %v381 = vld [vmem:[%s193 + $0x2cc] sm:$0xf]
      %v382 = vld [vmem:[%s193 + $0x2d0] sm:$0xf]
      %v383 = vld [vmem:[%s193 + $0x2d4] sm:$0xf]
      %v384 = vld [vmem:[%s193 + $0x2d8] sm:$0xf]
      %v385 = vld [vmem:[%s193 + $0x2dc] sm:$0xf]
      %v386 = vld [vmem:[%s193 + $0x2e0] sm:$0xf]
      %v387 = vld [vmem:[%s193 + $0x2e4] sm:$0xf]
      %v388 = vld [vmem:[%s193 + $0x2e8] sm:$0xf]
      %v389 = vld [vmem:[%s193 + $0x2ec] sm:$0xf]
      %v390 = vld [vmem:[%s193 + $0x2f0] sm:$0xf]
      %v391 = vld [vmem:[%s193 + $0x2f4] sm:$0xf]
      %v392 = vld [vmem:[%s193 + $0x2f8] sm:$0xf]
      %v393 = vld [vmem:[%s193 + $0x2fc] sm:$0xf]
      %v394 = vld [vmem:[%s193 + $0x300] sm:$0xf]
      %v395 = vld [vmem:[%s193 + $0x304] sm:$0xf]
      %v396 = vld [vmem:[%s193 + $0x308] sm:$0xf]
      %v397 = vld [vmem:[%s193 + $0x30c] sm:$0xf]
      %v398 = vld [vmem:[%s193 + $0x310] sm:$0xf]
      %v399 = vld [vmem:[%s193 + $0x314] sm:$0xf]
      %v400 = vld [vmem:[%s193 + $0x318] sm:$0xf]
      %v401 = vld [vmem:[%s193 + $0x31c] sm:$0xf]
      %v402 = vld [vmem:[%s193 + $0x320] sm:$0xf]
      %v403 = vld [vmem:[%s193 + $0x324] sm:$0xf]
      %v404 = vld [vmem:[%s193 + $0x328] sm:$0xf]
      %v405 = vld [vmem:[%s193 + $0x32c] sm:$0xf]
      %v406 = vld [vmem:[%s193 + $0x330] sm:$0xf]
      %v407 = vld [vmem:[%s193 + $0x334] sm:$0xf]
      %v408 = vld [vmem:[%s193 + $0x338] sm:$0xf]
      %v409 = vld [vmem:[%s193 + $0x33c] sm:$0xf]
      %v410 = vld [vmem:[%s193 + $0x340] sm:$0xf]
      %v411 = vld [vmem:[%s193 + $0x344] sm:$0xf]
      %v412 = vld [vmem:[%s193 + $0x348] sm:$0xf]
      %v413 = vld [vmem:[%s193 + $0x34c] sm:$0xf]
      %v414 = vld [vmem:[%s193 + $0x350] sm:$0xf]
      %v415 = vld [vmem:[%s193 + $0x354] sm:$0xf]
      %v416 = vld [vmem:[%s193 + $0x358] sm:$0xf]
      %v417 = vld [vmem:[%s193 + $0x35c] sm:$0xf]
      %v418 = vld [vmem:[%s193 + $0x360] sm:$0xf]
      %v419 = vld [vmem:[%s193 + $0x364] sm:$0xf]
      %v420 = vld [vmem:[%s193 + $0x368] sm:$0xf]
      %v421 = vld [vmem:[%s193 + $0x36c] sm:$0xf]
      %v422 = vld [vmem:[%s193 + $0x370] sm:$0xf]
      %v423 = vld [vmem:[%s193 + $0x374] sm:$0xf]
      %v424 = vld [vmem:[%s193 + $0x378] sm:$0xf]
      %v425 = vld [vmem:[%s193 + $0x37c] sm:$0xf]
      %v426 = vld [vmem:[%s193 + $0x380] sm:$0xf]
      %v427 = vld [vmem:[%s193 + $0x384] sm:$0xf]
      %v428 = vld [vmem:[%s193 + $0x388] sm:$0xf]
      %v429 = vld [vmem:[%s193 + $0x38c] sm:$0xf]
      %v430 = vld [vmem:[%s193 + $0x390] sm:$0xf]
      %v431 = vld [vmem:[%s193 + $0x394] sm:$0xf]
      %v432 = vld [vmem:[%s193 + $0x398] sm:$0xf]
      %v433 = vld [vmem:[%s193 + $0x39c] sm:$0xf]
      %v434 = vld [vmem:[%s193 + $0x3a0] sm:$0xf]
      %v435 = vld [vmem:[%s193 + $0x3a4] sm:$0xf]
      %v436 = vld [vmem:[%s193 + $0x3a8] sm:$0xf]
      %v437 = vld [vmem:[%s193 + $0x3ac] sm:$0xf]
      %v438 = vld [vmem:[%s193 + $0x3b0] sm:$0xf]
      %v439 = vld [vmem:[%s193 + $0x3b4] sm:$0xf]
      %v440 = vld [vmem:[%s193 + $0x3b8] sm:$0xf]
      %v441 = vld [vmem:[%s193 + $0x3bc] sm:$0xf]
      %v442 = vld [vmem:[%s193 + $0x3c0] sm:$0xf]
      %v443 = vld [vmem:[%s193 + $0x3c4] sm:$0xf]
      %v444 = vld [vmem:[%s193 + $0x3c8] sm:$0xf]
      %v445 = vld [vmem:[%s193 + $0x3cc] sm:$0xf]
      %v446 = vld [vmem:[%s193 + $0x3d0] sm:$0xf]
      %v447 = vld [vmem:[%s193 + $0x3d4] sm:$0xf]
      %v448 = vld [vmem:[%s193 + $0x3d8] sm:$0xf]
      %v449 = vld [vmem:[%s193 + $0x3dc] sm:$0xf]
      %v450 = vld [vmem:[%s193 + $0x3e0] sm:$0xf]
      %v451 = vld [vmem:[%s193 + $0x3e4] sm:$0xf]
      %v452 = vld [vmem:[%s193 + $0x3e8] sm:$0xf]
      %v453 = vld [vmem:[%s193 + $0x3ec] sm:$0xf]
      %v454 = vld [vmem:[%s193 + $0x3f0] sm:$0xf]
      %v455 = vld [vmem:[%s193 + $0x3f4] sm:$0xf]
      %v456 = vld [vmem:[%s193 + $0x3f8] sm:$0xf]
      %v457 = vld [vmem:[%s193 + $0x3fc] sm:$0xf]
      %v458 = vld [vmem:[%s193 + $0x400] sm:$0xf]
      %v459 = vld [vmem:[%s193 + $0x404] sm:$0xf]
      %v460 = vld [vmem:[%s193 + $0x408] sm:$0xf]
      %v461 = vld [vmem:[%s193 + $0x40c] sm:$0xf]
      %v462 = vld [vmem:[%s193 + $0x410] sm:$0xf]
      %v463 = vld [vmem:[%s193 + $0x414] sm:$0xf]
      %v464 = vld [vmem:[%s193 + $0x418] sm:$0xf]
      %v465 = vld [vmem:[%s193 + $0x41c] sm:$0xf]
      %v466 = vld [vmem:[%s193 + $0x420] sm:$0xf]
      %v467 = vld [vmem:[%s193 + $0x424] sm:$0xf]
      %v468 = vld [vmem:[%s193 + $0x428] sm:$0xf]
      %v469 = vld [vmem:[%s193 + $0x42c] sm:$0xf]
      %v470 = vld [vmem:[%s193 + $0x430] sm:$0xf]
      %v471 = vld [vmem:[%s193 + $0x434] sm:$0xf]
      %v472 = vld [vmem:[%s193 + $0x438] sm:$0xf]
      %v473 = vld [vmem:[%s193 + $0x43c] sm:$0xf]
      %v474 = vld [vmem:[%s193 + $0x440] sm:$0xf]
      %v475 = vld [vmem:[%s193 + $0x444] sm:$0xf]
      %v476 = vld [vmem:[%s193 + $0x448] sm:$0xf]
      %v477 = vld [vmem:[%s193 + $0x44c] sm:$0xf]
      %v478 = vld [vmem:[%s193 + $0x450] sm:$0xf]
      %v479 = vld [vmem:[%s193 + $0x454] sm:$0xf]
      %v480 = vld [vmem:[%s193 + $0x458] sm:$0xf]
      %v481 = vld [vmem:[%s193 + $0x45c] sm:$0xf]
      %v482 = vld [vmem:[%s193 + $0x460] sm:$0xf]
      %v483 = vld [vmem:[%s193 + $0x464] sm:$0xf]
      %v484 = vld [vmem:[%s193 + $0x468] sm:$0xf]
      %v485 = vld [vmem:[%s193 + $0x46c] sm:$0xf]
      %v486 = vld [vmem:[%s193 + $0x470] sm:$0xf]
      %v487 = vld [vmem:[%s193 + $0x474] sm:$0xf]
      %v488 = vld [vmem:[%s193 + $0x478] sm:$0xf]
      %v489 = vld [vmem:[%s193 + $0x47c] sm:$0xf]
      %v490 = vld [vmem:[%s193 + $0x480] sm:$0xf]
      %v491 = vld [vmem:[%s193 + $0x484] sm:$0xf]
      %v492 = vld [vmem:[%s193 + $0x488] sm:$0xf]
      %v493 = vld [vmem:[%s193 + $0x48c] sm:$0xf]
      %v494 = vld [vmem:[%s193 + $0x490] sm:$0xf]
      %v495 = vld [vmem:[%s193 + $0x494] sm:$0xf]
      %v496 = vld [vmem:[%s193 + $0x498] sm:$0xf]
      %v497 = vld [vmem:[%s193 + $0x49c] sm:$0xf]
      %v498 = vld [vmem:[%s193 + $0x4a0] sm:$0xf]
      %v499 = vld [vmem:[%s193 + $0x4a4] sm:$0xf]
      %v500 = vld [vmem:[%s193 + $0x4a8] sm:$0xf]
      %v501 = vld [vmem:[%s193 + $0x4ac] sm:$0xf]
      %v502 = vld [vmem:[%s193 + $0x4b0] sm:$0xf]
      %v503 = vld [vmem:[%s193 + $0x4b4] sm:$0xf]
      %v504 = vld [vmem:[%s193 + $0x4b8] sm:$0xf]
      %v505 = vld [vmem:[%s193 + $0x4bc] sm:$0xf]
      %v506 = vld [vmem:[%s193 + $0x4c0] sm:$0xf]
      %v507 = vld [vmem:[%s193 + $0x4c4] sm:$0xf]
      %v508 = vld [vmem:[%s193 + $0x4c8] sm:$0xf]
      %v509 = vld [vmem:[%s193 + $0x4cc] sm:$0xf]
      %v510 = vld [vmem:[%s193 + $0x4d0] sm:$0xf]
      %v511 = vld [vmem:[%s193 + $0x4d4] sm:$0xf]
      %v512 = vld [vmem:[%s193 + $0x4d8] sm:$0xf]
      %v513 = vld [vmem:[%s193 + $0x4dc] sm:$0xf]
      %v514 = vld [vmem:[%s193 + $0x4e0] sm:$0xf]
      %v515 = vld [vmem:[%s193 + $0x4e4] sm:$0xf]
      %v516 = vld [vmem:[%s193 + $0x4e8] sm:$0xf]
      %v517 = vld [vmem:[%s193 + $0x4ec] sm:$0xf]
      %v518 = vld [vmem:[%s193 + $0x4f0] sm:$0xf]
      %v519 = vld [vmem:[%s193 + $0x4f4] sm:$0xf]
      %v520 = vld [vmem:[%s193 + $0x4f8] sm:$0xf]
      %v521 = vld [vmem:[%s193 + $0x4fc] sm:$0xf]
      %v522 = vld [vmem:[%s193 + $0x500] sm:$0xf]
      %v523 = vld [vmem:[%s193 + $0x504] sm:$0xf]
      %v524 = vld [vmem:[%s193 + $0x508] sm:$0xf]
      %v525 = vld [vmem:[%s193 + $0x50c] sm:$0xf]
      %v526 = vld [vmem:[%s193 + $0x510] sm:$0xf]
      %v527 = vld [vmem:[%s193 + $0x514] sm:$0xf]
      %v528 = vld [vmem:[%s193 + $0x518] sm:$0xf]
      %v529 = vld [vmem:[%s193 + $0x51c] sm:$0xf]
      %v530 = vld [vmem:[%s193 + $0x520] sm:$0xf]
      %v531 = vld [vmem:[%s193 + $0x524] sm:$0xf]
      %v532 = vld [vmem:[%s193 + $0x528] sm:$0xf]
      %v533 = vld [vmem:[%s193 + $0x52c] sm:$0xf]
      %v534 = vld [vmem:[%s193 + $0x530] sm:$0xf]
      %v535 = vld [vmem:[%s193 + $0x534] sm:$0xf]
      %v536 = vld [vmem:[%s193 + $0x538] sm:$0xf]
      %v537 = vld [vmem:[%s193 + $0x53c] sm:$0xf]
      %v538 = vld [vmem:[%s193 + $0x540] sm:$0xf]
      %v539 = vld [vmem:[%s193 + $0x544] sm:$0xf]
      %v540 = vld [vmem:[%s193 + $0x548] sm:$0xf]
      %v541 = vld [vmem:[%s193 + $0x54c] sm:$0xf]
      %v542 = vld [vmem:[%s193 + $0x550] sm:$0xf]
      %v543 = vld [vmem:[%s193 + $0x554] sm:$0xf]
      %v544 = vld [vmem:[%s193 + $0x558] sm:$0xf]
      %v545 = vld [vmem:[%s193 + $0x55c] sm:$0xf]
      %v546 = vld [vmem:[%s193 + $0x560] sm:$0xf]
      %v547 = vld [vmem:[%s193 + $0x564] sm:$0xf]
      %v548 = vld [vmem:[%s193 + $0x568] sm:$0xf]
      %v549 = vld [vmem:[%s193 + $0x56c] sm:$0xf]
      %v550 = vld [vmem:[%s193 + $0x570] sm:$0xf]
      %v551 = vld [vmem:[%s193 + $0x574] sm:$0xf]
      %v552 = vld [vmem:[%s1] sm:$0xf]
      %v553 = vld [vmem:[%s1 + $0x4] sm:$0xf]
      %v554 = vld [vmem:[%s1 + $0x8] sm:$0xf]
      %v555 = vld [vmem:[%s1 + $0xc] sm:$0xf]
      %v556 = vld [vmem:[%s1 + $0x10] sm:$0xf]
      %v557 = vld [vmem:[%s1 + $0x14] sm:$0xf]
      %v558 = vld [vmem:[%s1 + $0x18] sm:$0xf]
      %v559 = vld [vmem:[%s1 + $0x1c] sm:$0xf]
      %v560 = vld [vmem:[%s1 + $0x20] sm:$0xf]
      %v561 = vld [vmem:[%s1 + $0x24] sm:$0xf]
      %v562 = vld [vmem:[%s1 + $0x28] sm:$0xf]
      %v563 = vld [vmem:[%s1 + $0x2c] sm:$0xf]
      %v564 = vld [vmem:[%s1 + $0x30] sm:$0xf]
      %v565 = vld [vmem:[%s1 + $0x34] sm:$0xf]
      %v566 = vld [vmem:[%s1 + $0x38] sm:$0xf]
      %v567 = vld [vmem:[%s1 + $0x3c] sm:$0xf]
      %v918 = vunpack.c.l.b16 %v202
      %v919 = vunpack.c.l.b16 %v203
      %v920 = vunpack.c.l.b16 %v204
      %v921 = vunpack.c.l.b16 %v205
      %v922 = vunpack.c.l.b16 %v206
      %v923 = vunpack.c.l.b16 %v207
      %v924 = vunpack.c.l.b16 %v208
      %v925 = vunpack.c.l.b16 %v209
      %v926 = vunpack.c.l.b16 %v210
      %v927 = vunpack.c.l.b16 %v211
      %v928 = vunpack.c.l.b16 %v212
      %v929 = vunpack.c.l.b16 %v213
      %v930 = vunpack.c.l.b16 %v214
      %v931 = vunpack.c.l.b16 %v215
      %v932 = vunpack.c.l.b16 %v216
      %v933 = vunpack.c.l.b16 %v217
      %v934 = vunpack.c.l.b16 %v218
      %v935 = vunpack.c.l.b16 %v219
      %v936 = vunpack.c.l.b16 %v220
      %v937 = vunpack.c.l.b16 %v221
      %v938 = vunpack.c.l.b16 %v222
      %v939 = vunpack.c.l.b16 %v223
      %v940 = vunpack.c.l.b16 %v224
      %v941 = vunpack.c.l.b16 %v225
      %v942 = vunpack.c.l.b16 %v226
      %v943 = vunpack.c.l.b16 %v227
      %v944 = vunpack.c.l.b16 %v228
      %v945 = vunpack.c.l.b16 %v229
      %v946 = vunpack.c.l.b16 %v230
      %v947 = vunpack.c.l.b16 %v231
      %v948 = vunpack.c.l.b16 %v232
      %v949 = vunpack.c.l.b16 %v233
      %v950 = vunpack.c.l.b16 %v234
      %v951 = vunpack.c.l.b16 %v235
      %v952 = vunpack.c.l.b16 %v236
      %v953 = vunpack.c.l.b16 %v237
      %v954 = vunpack.c.l.b16 %v238
      %v955 = vunpack.c.l.b16 %v239
      %v956 = vunpack.c.l.b16 %v240
      %v957 = vunpack.c.l.b16 %v241
      %v958 = vunpack.c.l.b16 %v242
      %v959 = vunpack.c.l.b16 %v243
      %v960 = vunpack.c.l.b16 %v244
      %v961 = vunpack.c.l.b16 %v245
      %v962 = vunpack.c.l.b16 %v246
      %v963 = vunpack.c.l.b16 %v247
      %v964 = vunpack.c.l.b16 %v248
      %v965 = vunpack.c.l.b16 %v249
      %v966 = vunpack.c.l.b16 %v250
      %v967 = vunpack.c.l.b16 %v251
      %v968 = vunpack.c.l.b16 %v252
      %v969 = vunpack.c.l.b16 %v253
      %v970 = vunpack.c.l.b16 %v254
      %v971 = vunpack.c.l.b16 %v255
      %v972 = vunpack.c.l.b16 %v256
      %v973 = vunpack.c.l.b16 %v257
      %v974 = vunpack.c.l.b16 %v258
      %v975 = vunpack.c.l.b16 %v259
      %v976 = vunpack.c.l.b16 %v260
      %v977 = vunpack.c.l.b16 %v261
      %v978 = vunpack.c.l.b16 %v262
      %v979 = vunpack.c.l.b16 %v263
      %v980 = vunpack.c.l.b16 %v264
      %v981 = vunpack.c.l.b16 %v265
      %v982 = vunpack.c.l.b16 %v266
      %v983 = vunpack.c.l.b16 %v267
      %v984 = vunpack.c.l.b16 %v268
      %v985 = vunpack.c.l.b16 %v269
      %v986 = vunpack.c.l.b16 %v270
      %v987 = vunpack.c.l.b16 %v271
      %v988 = vunpack.c.l.b16 %v272
      %v989 = vunpack.c.l.b16 %v273
      %v990 = vunpack.c.l.b16 %v274
      %v991 = vunpack.c.l.b16 %v275
      %v992 = vunpack.c.l.b16 %v276
      %v993 = vunpack.c.l.b16 %v277
      %v994 = vunpack.c.l.b16 %v278
      %v995 = vunpack.c.l.b16 %v279
      %v996 = vunpack.c.l.b16 %v280
      %v997 = vunpack.c.l.b16 %v281
      %v998 = vunpack.c.l.b16 %v282
      %v999 = vunpack.c.l.b16 %v283
      %v1000 = vunpack.c.l.b16 %v284
      %v1001 = vunpack.c.l.b16 %v285
      %v1002 = vunpack.c.l.b16 %v286
      %v1003 = vunpack.c.l.b16 %v287
      %v1004 = vunpack.c.l.b16 %v288
      %v1005 = vunpack.c.l.b16 %v289
      %v1006 = vunpack.c.l.b16 %v290
      %v1007 = vunpack.c.l.b16 %v291
      %v1008 = vunpack.c.l.b16 %v292
      %v1009 = vunpack.c.l.b16 %v293
      %v1010 = vunpack.c.l.b16 %v294
      %v1011 = vunpack.c.l.b16 %v295
      %v1012 = vunpack.c.l.b16 %v296
      %v1013 = vunpack.c.l.b16 %v297
      %v1014 = vunpack.c.l.b16 %v298
      %v1015 = vunpack.c.l.b16 %v299
      %v1016 = vunpack.c.l.b16 %v300
      %v1017 = vunpack.c.l.b16 %v301
      %v1018 = vunpack.c.l.b16 %v302
      %v1019 = vunpack.c.l.b16 %v303
      %v1020 = vunpack.c.l.b16 %v304
      %v1021 = vunpack.c.l.b16 %v305
      %v1022 = vunpack.c.l.b16 %v306
      %v1023 = vunpack.c.l.b16 %v307
      %v1024 = vunpack.c.l.b16 %v308
      %v1025 = vunpack.c.l.b16 %v309
      %v1026 = vunpack.c.l.b16 %v310
      %v1027 = vunpack.c.l.b16 %v311
      %v1028 = vunpack.c.l.b16 %v312
      %v1029 = vunpack.c.l.b16 %v313
      %v1030 = vunpack.c.l.b16 %v314
      %v1031 = vunpack.c.l.b16 %v315
      %v1032 = vunpack.c.l.b16 %v316
      %v1033 = vunpack.c.l.b16 %v317
      %v1034 = vunpack.c.l.b16 %v318
      %v1035 = vunpack.c.l.b16 %v319
      %v1036 = vunpack.c.l.b16 %v320
      %v1037 = vunpack.c.l.b16 %v321
      %v1038 = vunpack.c.l.b16 %v322
      %v1039 = vunpack.c.l.b16 %v323
      %v1040 = vunpack.c.l.b16 %v324
      %v1041 = vunpack.c.l.b16 %v325
      %v1042 = vunpack.c.l.b16 %v326
      %v1043 = vunpack.c.l.b16 %v327
      %v1044 = vunpack.c.l.b16 %v328
      %v1045 = vunpack.c.l.b16 %v329
      %v1046 = vunpack.c.l.b16 %v330
      %v1047 = vunpack.c.l.b16 %v331
      %v1048 = vunpack.c.l.b16 %v332
      %v1049 = vunpack.c.l.b16 %v333
      %v1050 = vunpack.c.l.b16 %v334
      %v1051 = vunpack.c.l.b16 %v335
      %v1052 = vunpack.c.l.b16 %v336
      %v1053 = vunpack.c.l.b16 %v337
      %v1054 = vunpack.c.l.b16 %v338
      %v1055 = vunpack.c.l.b16 %v339
      %v1056 = vunpack.c.l.b16 %v340
      %v1057 = vunpack.c.l.b16 %v341
      %v1058 = vunpack.c.l.b16 %v342
      %v1059 = vunpack.c.l.b16 %v343
      %v1060 = vunpack.c.l.b16 %v344
      %v1061 = vunpack.c.l.b16 %v345
      %v1062 = vunpack.c.l.b16 %v346
      %v1063 = vunpack.c.l.b16 %v347
      %v1064 = vunpack.c.l.b16 %v348
      %v1065 = vunpack.c.l.b16 %v349
      %v1066 = vunpack.c.l.b16 %v350
      %v1067 = vunpack.c.l.b16 %v351
      %v1068 = vunpack.c.l.b16 %v352
      %v1069 = vunpack.c.l.b16 %v353
      %v1070 = vunpack.c.l.b16 %v354
      %v1071 = vunpack.c.l.b16 %v355
      %v1072 = vunpack.c.l.b16 %v356
      %v1073 = vunpack.c.l.b16 %v357
      %v1074 = vunpack.c.l.b16 %v358
      %v1075 = vunpack.c.l.b16 %v359
      %v1076 = vunpack.c.l.b16 %v360
      %v1077 = vunpack.c.l.b16 %v361
      %v1078 = vunpack.c.l.b16 %v362
      %v1079 = vunpack.c.l.b16 %v363
      %v1080 = vunpack.c.l.b16 %v364
      %v1081 = vunpack.c.l.b16 %v365
      %v1082 = vunpack.c.l.b16 %v366
      %v1083 = vunpack.c.l.b16 %v367
      %v1084 = vunpack.c.l.b16 %v368
      %v1085 = vunpack.c.l.b16 %v369
      %v1086 = vunpack.c.l.b16 %v370
      %v1087 = vunpack.c.l.b16 %v371
      %v1088 = vunpack.c.l.b16 %v372
      %v1089 = vunpack.c.l.b16 %v373
      %v1090 = vunpack.c.l.b16 %v374
      %v1091 = vunpack.c.l.b16 %v375
      %v1092 = vunpack.c.l.b16 %v376
      %v1093 = vunpack.c.l.b16 %v377
      %v1094 = vunpack.c.l.b16 %v378
      %v1095 = vunpack.c.l.b16 %v379
      %v1096 = vunpack.c.l.b16 %v380
      %v1097 = vunpack.c.l.b16 %v381
      %v1098 = vunpack.c.l.b16 %v382
      %v1099 = vunpack.c.l.b16 %v383
      %v1100 = vunpack.c.l.b16 %v384
      %v1101 = vunpack.c.l.b16 %v385
      %v1102 = vunpack.c.l.b16 %v386
      %v1103 = vunpack.c.l.b16 %v387
      %v1104 = vunpack.c.l.b16 %v388
      %v1105 = vunpack.c.l.b16 %v389
      %v1106 = vunpack.c.l.b16 %v390
      %v1107 = vunpack.c.l.b16 %v391
      %v1108 = vunpack.c.l.b16 %v392
      %v1109 = vunpack.c.l.b16 %v393
      %v1110 = vunpack.c.l.b16 %v394
      %v1111 = vunpack.c.l.b16 %v395
      %v1112 = vunpack.c.l.b16 %v396
      %v1113 = vunpack.c.l.b16 %v397
      %v1114 = vunpack.c.l.b16 %v398
      %v1115 = vunpack.c.l.b16 %v399
      %v1116 = vunpack.c.l.b16 %v400
      %v1117 = vunpack.c.l.b16 %v401
      %v1118 = vunpack.c.l.b16 %v402
      %v1119 = vunpack.c.l.b16 %v403
      %v1120 = vunpack.c.l.b16 %v404
      %v1121 = vunpack.c.l.b16 %v405
      %v1122 = vunpack.c.l.b16 %v406
      %v1123 = vunpack.c.l.b16 %v407
      %v1124 = vunpack.c.l.b16 %v408
      %v1125 = vunpack.c.l.b16 %v409
      %v1126 = vunpack.c.l.b16 %v410
      %v1127 = vunpack.c.l.b16 %v411
      %v1128 = vunpack.c.l.b16 %v412
      %v1129 = vunpack.c.l.b16 %v413
      %v1130 = vunpack.c.l.b16 %v414
      %v1131 = vunpack.c.l.b16 %v415
      %v1132 = vunpack.c.l.b16 %v416
      %v1133 = vunpack.c.l.b16 %v417
      %v1134 = vunpack.c.l.b16 %v418
      %v1135 = vunpack.c.l.b16 %v419
      %v1136 = vunpack.c.l.b16 %v420
      %v1137 = vunpack.c.l.b16 %v421
      %v1138 = vunpack.c.l.b16 %v422
      %v1139 = vunpack.c.l.b16 %v423
      %v1140 = vunpack.c.l.b16 %v424
      %v1141 = vunpack.c.l.b16 %v425
      %v1142 = vunpack.c.l.b16 %v426
      %v1143 = vunpack.c.l.b16 %v427
      %v1144 = vunpack.c.l.b16 %v428
      %v1145 = vunpack.c.l.b16 %v429
      %v1146 = vunpack.c.l.b16 %v430
      %v1147 = vunpack.c.l.b16 %v431
      %v1148 = vunpack.c.l.b16 %v432
      %v1149 = vunpack.c.l.b16 %v433
      %v1150 = vunpack.c.l.b16 %v434
      %v1151 = vunpack.c.l.b16 %v435
      %v1152 = vunpack.c.l.b16 %v436
      %v1153 = vunpack.c.l.b16 %v437
      %v1154 = vunpack.c.l.b16 %v438
      %v1155 = vunpack.c.l.b16 %v439
      %v1156 = vunpack.c.l.b16 %v440
      %v1157 = vunpack.c.l.b16 %v441
      %v1158 = vunpack.c.l.b16 %v442
      %v1159 = vunpack.c.l.b16 %v443
      %v1160 = vunpack.c.l.b16 %v444
      %v1161 = vunpack.c.l.b16 %v445
      %v1162 = vunpack.c.l.b16 %v446
      %v1163 = vunpack.c.l.b16 %v447
      %v1164 = vunpack.c.l.b16 %v448
      %v1165 = vunpack.c.l.b16 %v449
      %v1166 = vunpack.c.l.b16 %v450
      %v1167 = vunpack.c.l.b16 %v451
      %v1168 = vunpack.c.l.b16 %v452
      %v1169 = vunpack.c.l.b16 %v453
      %v1170 = vunpack.c.l.b16 %v454
      %v1171 = vunpack.c.l.b16 %v455
      %v1172 = vunpack.c.l.b16 %v456
      %v1173 = vunpack.c.l.b16 %v457
      %v1174 = vunpack.c.l.b16 %v458
      %v1175 = vunpack.c.l.b16 %v459
      %v1176 = vunpack.c.l.b16 %v460
      %v1177 = vunpack.c.l.b16 %v461
      %v1178 = vunpack.c.l.b16 %v462
      %v1179 = vunpack.c.l.b16 %v463
      %v1180 = vunpack.c.l.b16 %v464
      %v1181 = vunpack.c.l.b16 %v465
      %v1182 = vunpack.c.l.b16 %v466
      %v1183 = vunpack.c.l.b16 %v467
      %v1184 = vunpack.c.l.b16 %v468
      %v1185 = vunpack.c.l.b16 %v469
      %v1186 = vunpack.c.l.b16 %v470
      %v1187 = vunpack.c.l.b16 %v471
      %v1188 = vunpack.c.l.b16 %v472
      %v1189 = vunpack.c.l.b16 %v473
      %v1190 = vunpack.c.l.b16 %v474
      %v1191 = vunpack.c.l.b16 %v475
      %v1192 = vunpack.c.l.b16 %v476
      %v1193 = vunpack.c.l.b16 %v477
      %v1194 = vunpack.c.l.b16 %v478
      %v1195 = vunpack.c.l.b16 %v479
      %v1196 = vunpack.c.l.b16 %v480
      %v1197 = vunpack.c.l.b16 %v481
      %v1198 = vunpack.c.l.b16 %v482
      %v1199 = vunpack.c.l.b16 %v483
      %v1200 = vunpack.c.l.b16 %v484
      %v1201 = vunpack.c.l.b16 %v485
      %v1202 = vunpack.c.l.b16 %v486
      %v1203 = vunpack.c.l.b16 %v487
      %v1204 = vunpack.c.l.b16 %v488
      %v1205 = vunpack.c.l.b16 %v489
      %v1206 = vunpack.c.l.b16 %v490
      %v1207 = vunpack.c.l.b16 %v491
      %v1208 = vunpack.c.l.b16 %v492
      %v1209 = vunpack.c.l.b16 %v493
      %v1210 = vunpack.c.l.b16 %v494
      %v1211 = vunpack.c.l.b16 %v495
      %v1212 = vunpack.c.l.b16 %v496
      %v1213 = vunpack.c.l.b16 %v497
      %v1214 = vunpack.c.l.b16 %v498
      %v1215 = vunpack.c.l.b16 %v499
      %v1216 = vunpack.c.l.b16 %v500
      %v1217 = vunpack.c.l.b16 %v501
      %v1218 = vunpack.c.l.b16 %v502
      %v1219 = vunpack.c.l.b16 %v503
      %v1220 = vunpack.c.l.b16 %v504
      %v1221 = vunpack.c.l.b16 %v505
      %v1222 = vunpack.c.l.b16 %v506
      %v1223 = vunpack.c.l.b16 %v507
      %v1224 = vunpack.c.l.b16 %v508
      %v1225 = vunpack.c.l.b16 %v509
      %v1226 = vunpack.c.l.b16 %v510
      %v1227 = vunpack.c.l.b16 %v511
      %v1228 = vunpack.c.l.b16 %v512
      %v1229 = vunpack.c.l.b16 %v513
      %v1230 = vunpack.c.l.b16 %v514
      %v1231 = vunpack.c.l.b16 %v515
      %v1232 = vunpack.c.l.b16 %v516
      %v1233 = vunpack.c.l.b16 %v517
      %v1234 = vunpack.c.l.b16 %v518
      %v1235 = vunpack.c.l.b16 %v519
      %v1236 = vunpack.c.l.b16 %v520
      %v1237 = vunpack.c.l.b16 %v521
      %v1238 = vunpack.c.l.b16 %v522
      %v1239 = vunpack.c.l.b16 %v523
      %v1240 = vunpack.c.l.b16 %v524
      %v1241 = vunpack.c.l.b16 %v525
      %v1242 = vunpack.c.l.b16 %v526
      %v1243 = vunpack.c.l.b16 %v527
      %v1244 = vunpack.c.l.b16 %v528
      %v1245 = vunpack.c.l.b16 %v529
      %v1246 = vunpack.c.l.b16 %v530
      %v1247 = vunpack.c.l.b16 %v531
      %v1248 = vunpack.c.l.b16 %v532
      %v1249 = vunpack.c.l.b16 %v533
      %v1250 = vunpack.c.l.b16 %v534
      %v1251 = vunpack.c.l.b16 %v535
      %v1252 = vunpack.c.l.b16 %v536
      %v1253 = vunpack.c.l.b16 %v537
      %v1254 = vunpack.c.l.b16 %v538
      %v1255 = vunpack.c.l.b16 %v539
      %v1256 = vunpack.c.l.b16 %v540
      %v1257 = vunpack.c.l.b16 %v541
      %v1258 = vunpack.c.l.b16 %v542
      %v1259 = vunpack.c.l.b16 %v543
      %v1260 = vunpack.c.l.b16 %v544
      %v1261 = vunpack.c.l.b16 %v545
      %v1262 = vunpack.c.l.b16 %v546
      %v1263 = vunpack.c.l.b16 %v547
      %v1264 = vunpack.c.l.b16 %v548
      %v1265 = vunpack.c.l.b16 %v549
      %v1266 = vunpack.c.l.b16 %v550
      %v1267 = vunpack.c.l.b16 %v551
      %v1268 = vpack.c.b16 %v919, %v918
      %v1269 = vpack.c.b16 %v921, %v920
      %v1270 = vpack.c.b16 %v923, %v922
      %v1271 = vpack.c.b16 %v925, %v924
      %v1272 = vpack.c.b16 %v927, %v926
      %v1273 = vpack.c.b16 %v929, %v928
      %v1274 = vpack.c.b16 %v931, %v930
      %v1275 = vpack.c.b16 %v933, %v932
      %v1276 = vpack.c.b16 %v935, %v934
      %v1277 = vpack.c.b16 %v937, %v936
      %v1278 = vpack.c.b16 %v939, %v938
      %v1279 = vpack.c.b16 %v941, %v940
      %v1280 = vpack.c.b16 %v943, %v942
      %v1281 = vpack.c.b16 %v945, %v944
      %v1282 = vpack.c.b16 %v947, %v946
      %v1283 = vpack.c.b16 %v949, %v948
      %v1284 = vpack.c.b16 %v951, %v950
      %v1285 = vpack.c.b16 %v953, %v952
      %v1286 = vpack.c.b16 %v955, %v954
      %v1287 = vpack.c.b16 %v957, %v956
      %v1288 = vpack.c.b16 %v959, %v958
      %v1289 = vpack.c.b16 %v961, %v960
      %v1290 = vpack.c.b16 %v963, %v962
      %v1291 = vpack.c.b16 %v965, %v964
      %v1292 = vpack.c.b16 %v967, %v966
      %v1293 = vpack.c.b16 %v969, %v968
      %v1294 = vpack.c.b16 %v971, %v970
      %v1295 = vpack.c.b16 %v973, %v972
      %v1296 = vpack.c.b16 %v975, %v974
      %v1297 = vpack.c.b16 %v977, %v976
      %v1298 = vpack.c.b16 %v979, %v978
      %v1299 = vpack.c.b16 %v981, %v980
      %v1300 = vpack.c.b16 %v983, %v982
      %v1301 = vpack.c.b16 %v985, %v984
      %v1302 = vpack.c.b16 %v987, %v986
      %v1303 = vpack.c.b16 %v989, %v988
      %v1304 = vpack.c.b16 %v991, %v990
      %v1305 = vpack.c.b16 %v993, %v992
      %v1306 = vpack.c.b16 %v995, %v994
      %v1307 = vpack.c.b16 %v997, %v996
      %v1308 = vpack.c.b16 %v999, %v998
      %v1309 = vpack.c.b16 %v1001, %v1000
      %v1310 = vpack.c.b16 %v1003, %v1002
      %v1311 = vpack.c.b16 %v1005, %v1004
      %v1312 = vpack.c.b16 %v1007, %v1006
      %v1313 = vpack.c.b16 %v1009, %v1008
      %v1314 = vpack.c.b16 %v1011, %v1010
      %v1315 = vpack.c.b16 %v1013, %v1012
      %v1316 = vpack.c.b16 %v1015, %v1014
      %v1317 = vpack.c.b16 %v1017, %v1016
      %v1318 = vpack.c.b16 %v1019, %v1018
      %v1319 = vpack.c.b16 %v1021, %v1020
      %v1320 = vpack.c.b16 %v1023, %v1022
      %v1321 = vpack.c.b16 %v1025, %v1024
      %v1322 = vpack.c.b16 %v1027, %v1026
      %v1323 = vpack.c.b16 %v1029, %v1028
      %v1324 = vpack.c.b16 %v1031, %v1030
      %v1325 = vpack.c.b16 %v1033, %v1032
      %v1326 = vpack.c.b16 %v1035, %v1034
      %v1327 = vpack.c.b16 %v1037, %v1036
      %v1328 = vpack.c.b16 %v1039, %v1038
      %v1329 = vpack.c.b16 %v1041, %v1040
      %v1330 = vpack.c.b16 %v1043, %v1042
      %v1331 = vpack.c.b16 %v1045, %v1044
      %v1332 = vpack.c.b16 %v1047, %v1046
      %v1333 = vpack.c.b16 %v1049, %v1048
      %v1334 = vpack.c.b16 %v1051, %v1050
      %v1335 = vpack.c.b16 %v1053, %v1052
      %v1336 = vpack.c.b16 %v1055, %v1054
      %v1337 = vpack.c.b16 %v1057, %v1056
      %v1338 = vpack.c.b16 %v1059, %v1058
      %v1339 = vpack.c.b16 %v1061, %v1060
      %v1340 = vpack.c.b16 %v1063, %v1062
      %v1341 = vpack.c.b16 %v1065, %v1064
      %v1342 = vpack.c.b16 %v1067, %v1066
      %v1343 = vpack.c.b16 %v1069, %v1068
      %v1344 = vpack.c.b16 %v1071, %v1070
      %v1345 = vpack.c.b16 %v1073, %v1072
      %v1346 = vpack.c.b16 %v1075, %v1074
      %v1347 = vpack.c.b16 %v1077, %v1076
      %v1348 = vpack.c.b16 %v1079, %v1078
      %v1349 = vpack.c.b16 %v1081, %v1080
      %v1350 = vpack.c.b16 %v1083, %v1082
      %v1351 = vpack.c.b16 %v1085, %v1084
      %v1352 = vpack.c.b16 %v1087, %v1086
      %v1353 = vpack.c.b16 %v1089, %v1088
      %v1354 = vpack.c.b16 %v1091, %v1090
      %v1355 = vpack.c.b16 %v1093, %v1092
      %v1356 = vpack.c.b16 %v1095, %v1094
      %v1357 = vpack.c.b16 %v1097, %v1096
      %v1358 = vpack.c.b16 %v1099, %v1098
      %v1359 = vpack.c.b16 %v1101, %v1100
      %v1360 = vpack.c.b16 %v1103, %v1102
      %v1361 = vpack.c.b16 %v1105, %v1104
      %v1362 = vpack.c.b16 %v1107, %v1106
      %v1363 = vpack.c.b16 %v1109, %v1108
      %v1364 = vpack.c.b16 %v1111, %v1110
      %v1365 = vpack.c.b16 %v1113, %v1112
      %v1366 = vpack.c.b16 %v1115, %v1114
      %v1367 = vpack.c.b16 %v1117, %v1116
      %v1368 = vpack.c.b16 %v1119, %v1118
      %v1369 = vpack.c.b16 %v1121, %v1120
      %v1370 = vpack.c.b16 %v1123, %v1122
      %v1371 = vpack.c.b16 %v1125, %v1124
      %v1372 = vpack.c.b16 %v1127, %v1126
      %v1373 = vpack.c.b16 %v1129, %v1128
      %v1374 = vpack.c.b16 %v1131, %v1130
      %v1375 = vpack.c.b16 %v1133, %v1132
      %v1376 = vpack.c.b16 %v1135, %v1134
      %v1377 = vpack.c.b16 %v1137, %v1136
      %v1378 = vpack.c.b16 %v1139, %v1138
      %v1379 = vpack.c.b16 %v1141, %v1140
      %v1380 = vpack.c.b16 %v1143, %v1142
      %v1381 = vpack.c.b16 %v1145, %v1144
      %v1382 = vpack.c.b16 %v1147, %v1146
      %v1383 = vpack.c.b16 %v1149, %v1148
      %v1384 = vpack.c.b16 %v1151, %v1150
      %v1385 = vpack.c.b16 %v1153, %v1152
      %v1386 = vpack.c.b16 %v1155, %v1154
      %v1387 = vpack.c.b16 %v1157, %v1156
      %v1388 = vpack.c.b16 %v1159, %v1158
      %v1389 = vpack.c.b16 %v1161, %v1160
      %v1390 = vpack.c.b16 %v1163, %v1162
      %v1391 = vpack.c.b16 %v1165, %v1164
      %v1392 = vpack.c.b16 %v1167, %v1166
      %v1393 = vpack.c.b16 %v1169, %v1168
      %v1394 = vpack.c.b16 %v1171, %v1170
      %v1395 = vpack.c.b16 %v1173, %v1172
      %v1396 = vpack.c.b16 %v1175, %v1174
      %v1397 = vpack.c.b16 %v1177, %v1176
      %v1398 = vpack.c.b16 %v1179, %v1178
      %v1399 = vpack.c.b16 %v1181, %v1180
      %v1400 = vpack.c.b16 %v1183, %v1182
      %v1401 = vpack.c.b16 %v1185, %v1184
      %v1402 = vpack.c.b16 %v1187, %v1186
      %v1403 = vpack.c.b16 %v1189, %v1188
      %v1404 = vpack.c.b16 %v1191, %v1190
      %v1405 = vpack.c.b16 %v1193, %v1192
      %v1406 = vpack.c.b16 %v1195, %v1194
      %v1407 = vpack.c.b16 %v1197, %v1196
      %v1408 = vpack.c.b16 %v1199, %v1198
      %v1409 = vpack.c.b16 %v1201, %v1200
      %v1410 = vpack.c.b16 %v1203, %v1202
      %v1411 = vpack.c.b16 %v1205, %v1204
      %v1412 = vpack.c.b16 %v1207, %v1206
      %v1413 = vpack.c.b16 %v1209, %v1208
      %v1414 = vpack.c.b16 %v1211, %v1210
      %v1415 = vpack.c.b16 %v1213, %v1212
      %v1416 = vpack.c.b16 %v1215, %v1214
      %v1417 = vpack.c.b16 %v1217, %v1216
      %v1418 = vpack.c.b16 %v1219, %v1218
      %v1419 = vpack.c.b16 %v1221, %v1220
      %v1420 = vpack.c.b16 %v1223, %v1222
      %v1421 = vpack.c.b16 %v1225, %v1224
      %v1422 = vpack.c.b16 %v1227, %v1226
      %v1423 = vpack.c.b16 %v1229, %v1228
      %v1424 = vpack.c.b16 %v1231, %v1230
      %v1425 = vpack.c.b16 %v1233, %v1232
      %v1426 = vpack.c.b16 %v1235, %v1234
      %v1427 = vpack.c.b16 %v1237, %v1236
      %v1428 = vpack.c.b16 %v1239, %v1238
      %v1429 = vpack.c.b16 %v1241, %v1240
      %v1430 = vpack.c.b16 %v1243, %v1242
      %v1431 = vpack.c.b16 %v1245, %v1244
      %v1432 = vpack.c.b16 %v1247, %v1246
      %v1433 = vpack.c.b16 %v1249, %v1248
      %v1434 = vpack.c.b16 %v1251, %v1250
      %v1435 = vpack.c.b16 %v1253, %v1252
      %v1436 = vpack.c.b16 %v1255, %v1254
      %v1437 = vpack.c.b16 %v1257, %v1256
      %v1438 = vpack.c.b16 %v1259, %v1258
      %v1439 = vpack.c.b16 %v1261, %v1260
      %v1440 = vpack.c.b16 %v1263, %v1262
      %v1441 = vpack.c.b16 %v1265, %v1264
      %v1442 = vpack.c.b16 %v1267, %v1266
      %v1634 = vunpack.c.l.b16 %v552
      %v1635 = vunpack.c.l.b16 %v553
      %v1636 = vunpack.c.l.b16 %v554
      %v1637 = vunpack.c.l.b16 %v555
      %v1638 = vunpack.c.l.b16 %v556
      %v1639 = vunpack.c.l.b16 %v557
      %v1640 = vunpack.c.l.b16 %v558
      %v1641 = vunpack.c.l.b16 %v559
      %v1642 = vunpack.c.l.b16 %v560
      %v1643 = vunpack.c.l.b16 %v561
      %v1644 = vunpack.c.l.b16 %v562
      %v1645 = vunpack.c.l.b16 %v563
      %v1646 = vunpack.c.l.b16 %v564
      %v1647 = vunpack.c.l.b16 %v565
      %v1648 = vunpack.c.l.b16 %v566
      %v1649 = vunpack.c.l.b16 %v567
      %v1650 = vpack.c.b16 %v1635, %v1634
      %v1651 = vpack.c.b16 %v1637, %v1636
      %v1652 = vpack.c.b16 %v1639, %v1638
      %v1653 = vpack.c.b16 %v1641, %v1640
      %v1654 = vpack.c.b16 %v1643, %v1642
      %v1655 = vpack.c.b16 %v1645, %v1644
      %v1656 = vpack.c.b16 %v1647, %v1646
      %v1657 = vpack.c.b16 %v1649, %v1648
      %1666 = vmatprep.subr.bf16.mxu0 0
      %1667 = vmatpush1.bf16.msra.mxu0 %v1650
      %1668 = vmatprep.subr.bf16.mxu0 0
      %1669 = vmatpush1.bf16.msra.mxu0 %v1651
      %1670 = vmatprep.subr.bf16.mxu0 0
      %1671 = vmatpush1.bf16.msra.mxu0 %v1652
      %1672 = vmatprep.subr.bf16.mxu0 0
      %1673 = vmatpush1.bf16.msra.mxu0 %v1653
      %1674 = vmatprep.subr.bf16.mxu0 0
      %1675 = vmatpush1.bf16.msra.mxu0 %v1654
      %1676 = vmatprep.subr.bf16.mxu0 0
      %1677 = vmatpush1.bf16.msra.mxu0 %v1655
      %1678 = vmatprep.subr.bf16.mxu0 0
      %1679 = vmatpush1.bf16.msra.mxu0 %v1656
      %1680 = vmatprep.subr.bf16.mxu0 0
      %1681 = vmatpush1.bf16.msra.mxu0 %v1657
      %1682 = vmatprep.subr.bf16.mxu0 0
      %1683 = vmatpush1.bf16.msra.mxu0 0
      %1684 = vmatprep.subr.bf16.mxu0 0
      %1685 = vmatpush1.bf16.msra.mxu0 0
      %1686 = vmatprep.subr.bf16.mxu0 0
      %1687 = vmatpush1.bf16.msra.mxu0 0
      %1688 = vmatprep.subr.bf16.mxu0 0
      %1689 = vmatpush1.bf16.msra.mxu0 0
      %1690 = vmatprep.subr.bf16.mxu0 0
      %1691 = vmatpush1.bf16.msra.mxu0 0
      %1692 = vmatprep.subr.bf16.mxu0 0
      %1693 = vmatpush1.bf16.msra.mxu0 0
      %1694 = vmatprep.subr.bf16.mxu0 0
      %1695 = vmatpush1.bf16.msra.mxu0 0
      %1696 = vmatprep.subr.bf16.mxu0 0
      %1697 = vmatpush1.bf16.msra.mxu0 0
      %1698 = vmatprep.mubr.bf16.mxu0 0
      %1699 = vmatmul.mubr.bf16.gmra.mrb[0].mxu0 %v1268
      %v1700 = vpop.f32.mrb[0].mxu0
      %v1701 = vadd.f32 0.0, %v1700
      %v1702 = vpop.f32.mrb[0].mxu0
      %v1703 = vpop.f32.mrb[0].mxu0
      %v1704 = vadd.f32 0.0, %v1703
      %v1705 = vpop.f32.mrb[0].mxu0
      %1706 = vmatprep.mubr.bf16.mxu0 0
      %1707 = vmatmul.mubr.bf16.gmra.mrb[0].mxu0 %v1269
      %v1708 = vpop.f32.mrb[0].mxu0
      %v1709 = vadd.f32 0.0, %v1708
      %v1710 = vpop.f32.mrb[0].mxu0
      %v1711 = vpop.f32.mrb[0].mxu0
      %v1712 = vadd.f32 0.0, %v1711
      %v1713 = vpop.f32.mrb[0].mxu0
      %1714 = vmatprep.mubr.bf16.mxu0 0
      %1715 = vmatmul.mubr.bf16.gmra.mrb[0].mxu0 %v1270
      %v1716 = vpop.f32.mrb[0].mxu0
      %v1717 = vadd.f32 0.0, %v1716
      %v1718 = vpop.f32.mrb[0].mxu0
      %v1719 = vpop.f32.mrb[0].mxu0
      %v1720 = vadd.f32 0.0, %v1719
      %v1721 = vpop.f32.mrb[0].mxu0
      %1722 = vmatprep.mubr.bf16.mxu0 0
      %1723 = vmatmul.mubr.bf16.gmra.mrb[0].mxu0 %v1271
      %v1724 = vpop.f32.mrb[0].mxu0
      %v1725 = vadd.f32 0.0, %v1724
      %v1726 = vpop.f32.mrb[0].mxu0
      %v1727 = vpop.f32.mrb[0].mxu0
      %v1728 = vadd.f32 0.0, %v1727
      %v1729 = vpop.f32.mrb[0].mxu0
      %1730 = vmatprep.mubr.bf16.mxu0 0
      %1731 = vmatmul.mubr.bf16.gmra.mrb[0].mxu0 %v1272
      %v1732 = vpop.f32.mrb[0].mxu0
      %v1733 = vadd.f32 0.0, %v1732
      %v1734 = vpop.f32.mrb[0].mxu0
      %v1735 = vpop.f32.mrb[0].mxu0
      %v1736 = vadd.f32 0.0, %v1735
      %v1737 = vpop.f32.mrb[0].mxu0
      %1738 = vmatprep.mubr.bf16.mxu0 0
      %1739 = vmatmul.mubr.bf16.gmra.mrb[0].mxu0 %v1273
      %v1740 = vpop.f32.mrb[0].mxu0
      %v1741 = vadd.f32 0.0, %v1740
      %v1742 = vpop.f32.mrb[0].mxu0
      %v1743 = vpop.f32.mrb[0].mxu0
      %v1744 = vadd.f32 0.0, %v1743
      %v1745 = vpop.f32.mrb[0].mxu0
      %1746 = vmatprep.mubr.bf16.mxu0 0
      %1747 = vmatmul.mubr.bf16.gmra.mrb[0].mxu0 %v1274
      %v1748 = vpop.f32.mrb[0].mxu0
      %v1749 = vadd.f32 0.0, %v1748
      %v1750 = vpop.f32.mrb[0].mxu0
      %v1751 = vpop.f32.mrb[0].mxu0
      %v1752 = vadd.f32 0.0, %v1751
      %v1753 = vpop.f32.mrb[0].mxu0
      %1754 = vmatprep.mubr.bf16.mxu0 0
      %1755 = vmatmul.mubr.bf16.gmra.mrb[0].mxu0 %v1275
      %v1756 = vpop.f32.mrb[0].mxu0
      %v1757 = vadd.f32 0.0, %v1756
      %v1758 = vpop.f32.mrb[0].mxu0
      %v1759 = vpop.f32.mrb[0].mxu0
      %v1760 = vadd.f32 0.0, %v1759
      %v1761 = vpop.f32.mrb[0].mxu0
      %1762 = vmatprep.mubr.bf16.mxu0 0
      %1763 = vmatmul.mubr.bf16.gmra.mrb[0].mxu0 %v1276
      %v1764 = vpop.f32.mrb[0].mxu0
      %v1765 = vadd.f32 0.0, %v1764
      %v1766 = vpop.f32.mrb[0].mxu0
      %v1767 = vpop.f32.mrb[0].mxu0
      %v1768 = vadd.f32 0.0, %v1767
      %v1769 = vpop.f32.mrb[0].mxu0
      %1770 = vmatprep.mubr.bf16.mxu0 0
      %1771 = vmatmul.mubr.bf16.gmra.mrb[0].mxu0 %v1277
      %v1772 = vpop.f32.mrb[0].mxu0
      %v1773 = vadd.f32 0.0, %v1772
      %v1774 = vpop.f32.mrb[0].mxu0
      %v1775 = vpop.f32.mrb[0].mxu0
      %v1776 = vadd.f32 0.0, %v1775
      %v1777 = vpop.f32.mrb[0].mxu0
      %1778 = vmatprep.mubr.bf16.mxu0 0
      %1779 = vmatmul.mubr.bf16.gmra.mrb[0].mxu0 %v1278
      %v1780 = vpop.f32.mrb[0].mxu0
      %v1781 = vadd.f32 0.0, %v1780
      %v1782 = vpop.f32.mrb[0].mxu0
      %v1783 = vpop.f32.mrb[0].mxu0
      %v1784 = vadd.f32 0.0, %v1783
      %v1785 = vpop.f32.mrb[0].mxu0
      %1786 = vmatprep.mubr.bf16.mxu0 0
      %1787 = vmatmul.mubr.bf16.gmra.mrb[0].mxu0 %v1279
      %v1788 = vpop.f32.mrb[0].mxu0
      %v1789 = vadd.f32 0.0, %v1788
      %v1790 = vpop.f32.mrb[0].mxu0
      %v1791 = vpop.f32.mrb[0].mxu0
      %v1792 = vadd.f32 0.0, %v1791
      %v1793 = vpop.f32.mrb[0].mxu0
      %1794 = vmatprep.mubr.bf16.mxu0 0
      %1795 = vmatmul.mubr.bf16.gmra.mrb[0].mxu0 %v1280
      %v1796 = vpop.f32.mrb[0].mxu0
      %v1797 = vadd.f32 0.0, %v1796
      %v1798 = vpop.f32.mrb[0].mxu0
      %v1799 = vpop.f32.mrb[0].mxu0
      %v1800 = vadd.f32 0.0, %v1799
      %v1801 = vpop.f32.mrb[0].mxu0
      %1802 = vmatprep.mubr.bf16.mxu0 0
      %1803 = vmatmul.mubr.bf16.gmra.mrb[0].mxu0 %v1281
      %v1804 = vpop.f32.mrb[0].mxu0
      %v1805 = vadd.f32 0.0, %v1804
      %v1806 = vpop.f32.mrb[0].mxu0
      %v1807 = vpop.f32.mrb[0].mxu0
      %v1808 = vadd.f32 0.0, %v1807
      %v1809 = vpop.f32.mrb[0].mxu0
      %1810 = vmatprep.mubr.bf16.mxu0 0
      %1811 = vmatmul.mubr.bf16.gmra.mrb[0].mxu0 %v1282
      %v1812 = vpop.f32.mrb[0].mxu0
      %v1813 = vadd.f32 0.0, %v1812
      %v1814 = vpop.f32.mrb[0].mxu0
      %v1815 = vpop.f32.mrb[0].mxu0
      %v1816 = vadd.f32 0.0, %v1815
      %v1817 = vpop.f32.mrb[0].mxu0
      %1818 = vmatprep.mubr.bf16.mxu0 0
      %1819 = vmatmul.mubr.bf16.gmra.mrb[0].mxu0 %v1283
      %v1820 = vpop.f32.mrb[0].mxu0
      %v1821 = vadd.f32 0.0, %v1820
      %v1822 = vpop.f32.mrb[0].mxu0
      %v1823 = vpop.f32.mrb[0].mxu0
      %v1824 = vadd.f32 0.0, %v1823
      %v1825 = vpop.f32.mrb[0].mxu0
      %1826 = vmatprep.mubr.bf16.mxu0 0
      %1827 = vmatmul.mubr.bf16.gmra.mrb[0].mxu0 %v1284
      %v1828 = vpop.f32.mrb[0].mxu0
      %v1829 = vadd.f32 0.0, %v1828
      %v1830 = vpop.f32.mrb[0].mxu0
      %v1831 = vpop.f32.mrb[0].mxu0
      %v1832 = vadd.f32 0.0, %v1831
      %v1833 = vpop.f32.mrb[0].mxu0
      %1834 = vmatprep.mubr.bf16.mxu0 0
      %1835 = vmatmul.mubr.bf16.gmra.mrb[0].mxu0 %v1285
      %v1836 = vpop.f32.mrb[0].mxu0
      %v1837 = vadd.f32 0.0, %v1836
      %v1838 = vpop.f32.mrb[0].mxu0
      %v1839 = vpop.f32.mrb[0].mxu0
      %v1840 = vadd.f32 0.0, %v1839
      %v1841 = vpop.f32.mrb[0].mxu0
      %1842 = vmatprep.mubr.bf16.mxu0 0
      %1843 = vmatmul.mubr.bf16.gmra.mrb[0].mxu0 %v1286
      %v1844 = vpop.f32.mrb[0].mxu0
      %v1845 = vadd.f32 0.0, %v1844
      %v1846 = vpop.f32.mrb[0].mxu0
      %v1847 = vpop.f32.mrb[0].mxu0
      %v1848 = vadd.f32 0.0, %v1847
      %v1849 = vpop.f32.mrb[0].mxu0
      %1850 = vmatprep.mubr.bf16.mxu0 0
      %1851 = vmatmul.mubr.bf16.gmra.mrb[0].mxu0 %v1287
      %v1852 = vpop.f32.mrb[0].mxu0
      %v1853 = vadd.f32 0.0, %v1852
      %v1854 = vpop.f32.mrb[0].mxu0
      %v1855 = vpop.f32.mrb[0].mxu0
      %v1856 = vadd.f32 0.0, %v1855
      %v1857 = vpop.f32.mrb[0].mxu0
      %1858 = vmatprep.mubr.bf16.mxu0 0
      %1859 = vmatmul.mubr.bf16.gmra.mrb[0].mxu0 %v1288
      %v1860 = vpop.f32.mrb[0].mxu0
      %v1861 = vadd.f32 0.0, %v1860
      %v1862 = vpop.f32.mrb[0].mxu0
      %v1863 = vpop.f32.mrb[0].mxu0
      %v1864 = vadd.f32 0.0, %v1863
      %v1865 = vpop.f32.mrb[0].mxu0
      %1866 = vmatprep.mubr.bf16.mxu0 0
      %1867 = vmatmul.mubr.bf16.gmra.mrb[0].mxu0 %v1289
      %v1868 = vpop.f32.mrb[0].mxu0
      %v1869 = vadd.f32 0.0, %v1868
      %v1870 = vpop.f32.mrb[0].mxu0
      %v1871 = vpop.f32.mrb[0].mxu0
      %v1872 = vadd.f32 0.0, %v1871
      %v1873 = vpop.f32.mrb[0].mxu0
      %1874 = vmatprep.mubr.bf16.mxu0 0
      %1875 = vmatmul.mubr.bf16.gmra.mrb[0].mxu0 %v1290
      %v1876 = vpop.f32.mrb[0].mxu0
      %v1877 = vadd.f32 0.0, %v1876
      %v1878 = vpop.f32.mrb[0].mxu0
      %v1879 = vpop.f32.mrb[0].mxu0
      %v1880 = vadd.f32 0.0, %v1879
      %v1881 = vpop.f32.mrb[0].mxu0
      %1882 = vmatprep.mubr.bf16.mxu0 0
      %1883 = vmatmul.mubr.bf16.gmra.mrb[0].mxu0 %v1291
      %v1884 = vpop.f32.mrb[0].mxu0
      %v1885 = vadd.f32 0.0, %v1884
      %v1886 = vpop.f32.mrb[0].mxu0
      %v1887 = vpop.f32.mrb[0].mxu0
      %v1888 = vadd.f32 0.0, %v1887
      %v1889 = vpop.f32.mrb[0].mxu0
      %1890 = vmatprep.mubr.bf16.mxu0 0
      %1891 = vmatmul.mubr.bf16.gmra.mrb[0].mxu0 %v1292
      %v1892 = vpop.f32.mrb[0].mxu0
      %v1893 = vadd.f32 0.0, %v1892
      %v1894 = vpop.f32.mrb[0].mxu0
      %v1895 = vpop.f32.mrb[0].mxu0
      %v1896 = vadd.f32 0.0, %v1895
      %v1897 = vpop.f32.mrb[0].mxu0
      %1898 = vmatprep.mubr.bf16.mxu0 0
      %1899 = vmatmul.mubr.bf16.gmra.mrb[0].mxu0 %v1293
      %v1900 = vpop.f32.mrb[0].mxu0
      %v1901 = vadd.f32 0.0, %v1900
      %v1902 = vpop.f32.mrb[0].mxu0
      %v1903 = vpop.f32.mrb[0].mxu0
      %v1904 = vadd.f32 0.0, %v1903
      %v1905 = vpop.f32.mrb[0].mxu0
      %1906 = vmatprep.mubr.bf16.mxu0 0
      %1907 = vmatmul.mubr.bf16.gmra.mrb[0].mxu0 %v1294
      %v1908 = vpop.f32.mrb[0].mxu0
      %v1909 = vadd.f32 0.0, %v1908
      %v1910 = vpop.f32.mrb[0].mxu0
      %v1911 = vpop.f32.mrb[0].mxu0
      %v1912 = vadd.f32 0.0, %v1911
      %v1913 = vpop.f32.mrb[0].mxu0
      %1914 = vmatprep.mubr.bf16.mxu0 0
      %1915 = vmatmul.mubr.bf16.gmra.mrb[0].mxu0 %v1295
      %v1916 = vpop.f32.mrb[0].mxu0
      %v1917 = vadd.f32 0.0, %v1916
      %v1918 = vpop.f32.mrb[0].mxu0
      %v1919 = vpop.f32.mrb[0].mxu0
      %v1920 = vadd.f32 0.0, %v1919
      %v1921 = vpop.f32.mrb[0].mxu0
      %1922 = vmatprep.mubr.bf16.mxu0 0
      %1923 = vmatmul.mubr.bf16.gmra.mrb[0].mxu0 %v1296
      %v1924 = vpop.f32.mrb[0].mxu0
      %v1925 = vadd.f32 0.0, %v1924
      %v1926 = vpop.f32.mrb[0].mxu0
      %v1927 = vpop.f32.mrb[0].mxu0
      %v1928 = vadd.f32 0.0, %v1927
      %v1929 = vpop.f32.mrb[0].mxu0
      %1930 = vmatprep.mubr.bf16.mxu0 0
      %1931 = vmatmul.mubr.bf16.gmra.mrb[0].mxu0 %v1297
      %v1932 = vpop.f32.mrb[0].mxu0
      %v1933 = vadd.f32 0.0, %v1932
      %v1934 = vpop.f32.mrb[0].mxu0
      %v1935 = vpop.f32.mrb[0].mxu0
      %v1936 = vadd.f32 0.0, %v1935
      %v1937 = vpop.f32.mrb[0].mxu0
      %1938 = vmatprep.mubr.bf16.mxu0 0
      %1939 = vmatmul.mubr.bf16.gmra.mrb[0].mxu0 %v1298
      %v1940 = vpop.f32.mrb[0].mxu0
      %v1941 = vadd.f32 0.0, %v1940
      %v1942 = vpop.f32.mrb[0].mxu0
      %v1943 = vpop.f32.mrb[0].mxu0
      %v1944 = vadd.f32 0.0, %v1943
      %v1945 = vpop.f32.mrb[0].mxu0
      %1946 = vmatprep.mubr.bf16.mxu0 0
      %1947 = vmatmul.mubr.bf16.gmra.mrb[0].mxu0 %v1299
      %v1948 = vpop.f32.mrb[0].mxu0
      %v1949 = vadd.f32 0.0, %v1948
      %v1950 = vpop.f32.mrb[0].mxu0
      %v1951 = vpop.f32.mrb[0].mxu0
      %v1952 = vadd.f32 0.0, %v1951
      %v1953 = vpop.f32.mrb[0].mxu0
      %1954 = vmatprep.mubr.bf16.mxu0 0
      %1955 = vmatmul.mubr.bf16.gmra.mrb[0].mxu0 %v1300
      %v1956 = vpop.f32.mrb[0].mxu0
      %v1957 = vadd.f32 0.0, %v1956
      %v1958 = vpop.f32.mrb[0].mxu0
      %v1959 = vpop.f32.mrb[0].mxu0
      %v1960 = vadd.f32 0.0, %v1959
      %v1961 = vpop.f32.mrb[0].mxu0
      %1962 = vmatprep.mubr.bf16.mxu0 0
      %1963 = vmatmul.mubr.bf16.gmra.mrb[0].mxu0 %v1301
      %v1964 = vpop.f32.mrb[0].mxu0
      %v1965 = vadd.f32 0.0, %v1964
      %v1966 = vpop.f32.mrb[0].mxu0
      %v1967 = vpop.f32.mrb[0].mxu0
      %v1968 = vadd.f32 0.0, %v1967
      %v1969 = vpop.f32.mrb[0].mxu0
      %1970 = vmatprep.mubr.bf16.mxu0 0
      %1971 = vmatmul.mubr.bf16.gmra.mrb[0].mxu0 %v1302
      %v1972 = vpop.f32.mrb[0].mxu0
      %v1973 = vadd.f32 0.0, %v1972
      %v1974 = vpop.f32.mrb[0].mxu0
      %v1975 = vpop.f32.mrb[0].mxu0
      %v1976 = vadd.f32 0.0, %v1975
      %v1977 = vpop.f32.mrb[0].mxu0
      %1978 = vmatprep.mubr.bf16.mxu0 0
      %1979 = vmatmul.mubr.bf16.gmra.mrb[0].mxu0 %v1303
      %v1980 = vpop.f32.mrb[0].mxu0
      %v1981 = vadd.f32 0.0, %v1980
      %v1982 = vpop.f32.mrb[0].mxu0
      %v1983 = vpop.f32.mrb[0].mxu0
      %v1984 = vadd.f32 0.0, %v1983
      %v1985 = vpop.f32.mrb[0].mxu0
      %1986 = vmatprep.mubr.bf16.mxu0 0
      %1987 = vmatmul.mubr.bf16.gmra.mrb[0].mxu0 %v1304
      %v1988 = vpop.f32.mrb[0].mxu0
      %v1989 = vadd.f32 0.0, %v1988
      %v1990 = vpop.f32.mrb[0].mxu0
      %v1991 = vpop.f32.mrb[0].mxu0
      %v1992 = vadd.f32 0.0, %v1991
      %v1993 = vpop.f32.mrb[0].mxu0
      %1994 = vmatprep.mubr.bf16.mxu0 0
      %1995 = vmatmul.mubr.bf16.gmra.mrb[0].mxu0 %v1305
      %v1996 = vpop.f32.mrb[0].mxu0
      %v1997 = vadd.f32 0.0, %v1996
      %v1998 = vpop.f32.mrb[0].mxu0
      %v1999 = vpop.f32.mrb[0].mxu0
      %v2000 = vadd.f32 0.0, %v1999
      %v2001 = vpop.f32.mrb[0].mxu0
      %2002 = vmatprep.mubr.bf16.mxu0 0
      %2003 = vmatmul.mubr.bf16.gmra.mrb[0].mxu0 %v1306
      %v2004 = vpop.f32.mrb[0].mxu0
      %v2005 = vadd.f32 0.0, %v2004
      %v2006 = vpop.f32.mrb[0].mxu0
      %v2007 = vpop.f32.mrb[0].mxu0
      %v2008 = vadd.f32 0.0, %v2007
      %v2009 = vpop.f32.mrb[0].mxu0
      %2010 = vmatprep.mubr.bf16.mxu0 0
      %2011 = vmatmul.mubr.bf16.gmra.mrb[0].mxu0 %v1307
      %v2012 = vpop.f32.mrb[0].mxu0
      %v2013 = vadd.f32 0.0, %v2012
      %v2014 = vpop.f32.mrb[0].mxu0
      %v2015 = vpop.f32.mrb[0].mxu0
      %v2016 = vadd.f32 0.0, %v2015
      %v2017 = vpop.f32.mrb[0].mxu0
      %2018 = vmatprep.mubr.bf16.mxu0 0
      %2019 = vmatmul.mubr.bf16.gmra.mrb[0].mxu0 %v1308
      %v2020 = vpop.f32.mrb[0].mxu0
      %v2021 = vadd.f32 0.0, %v2020
      %v2022 = vpop.f32.mrb[0].mxu0
      %v2023 = vpop.f32.mrb[0].mxu0
      %v2024 = vadd.f32 0.0, %v2023
      %v2025 = vpop.f32.mrb[0].mxu0
      %2026 = vmatprep.mubr.bf16.mxu0 0
      %2027 = vmatmul.mubr.bf16.gmra.mrb[0].mxu0 %v1309
      %v2028 = vpop.f32.mrb[0].mxu0
      %v2029 = vadd.f32 0.0, %v2028
      %v2030 = vpop.f32.mrb[0].mxu0
      %v2031 = vpop.f32.mrb[0].mxu0
      %v2032 = vadd.f32 0.0, %v2031
      %v2033 = vpop.f32.mrb[0].mxu0
      %2034 = vmatprep.mubr.bf16.mxu0 0
      %2035 = vmatmul.mubr.bf16.gmra.mrb[0].mxu0 %v1310
      %v2036 = vpop.f32.mrb[0].mxu0
      %v2037 = vadd.f32 0.0, %v2036
      %v2038 = vpop.f32.mrb[0].mxu0
      %v2039 = vpop.f32.mrb[0].mxu0
      %v2040 = vadd.f32 0.0, %v2039
      %v2041 = vpop.f32.mrb[0].mxu0
      %2042 = vmatprep.mubr.bf16.mxu0 0
      %2043 = vmatmul.mubr.bf16.gmra.mrb[0].mxu0 %v1311
      %v2044 = vpop.f32.mrb[0].mxu0
      %v2045 = vadd.f32 0.0, %v2044
      %v2046 = vpop.f32.mrb[0].mxu0
      %v2047 = vpop.f32.mrb[0].mxu0
      %v2048 = vadd.f32 0.0, %v2047
      %v2049 = vpop.f32.mrb[0].mxu0
      %2050 = vmatprep.mubr.bf16.mxu0 0
      %2051 = vmatmul.mubr.bf16.gmra.mrb[0].mxu0 %v1312
      %v2052 = vpop.f32.mrb[0].mxu0
      %v2053 = vadd.f32 0.0, %v2052
      %v2054 = vpop.f32.mrb[0].mxu0
      %v2055 = vpop.f32.mrb[0].mxu0
      %v2056 = vadd.f32 0.0, %v2055
      %v2057 = vpop.f32.mrb[0].mxu0
      %2058 = vmatprep.mubr.bf16.mxu0 0
      %2059 = vmatmul.mubr.bf16.gmra.mrb[0].mxu0 %v1313
      %v2060 = vpop.f32.mrb[0].mxu0
      %v2061 = vadd.f32 0.0, %v2060
      %v2062 = vpop.f32.mrb[0].mxu0
      %v2063 = vpop.f32.mrb[0].mxu0
      %v2064 = vadd.f32 0.0, %v2063
      %v2065 = vpop.f32.mrb[0].mxu0
      %2066 = vmatprep.mubr.bf16.mxu0 0
      %2067 = vmatmul.mubr.bf16.gmra.mrb[0].mxu0 %v1314
      %v2068 = vpop.f32.mrb[0].mxu0
      %v2069 = vadd.f32 0.0, %v2068
      %v2070 = vpop.f32.mrb[0].mxu0
      %v2071 = vpop.f32.mrb[0].mxu0
      %v2072 = vadd.f32 0.0, %v2071
      %v2073 = vpop.f32.mrb[0].mxu0
      %2074 = vmatprep.mubr.bf16.mxu0 0
      %2075 = vmatmul.mubr.bf16.gmra.mrb[0].mxu0 %v1315
      %v2076 = vpop.f32.mrb[0].mxu0
      %v2077 = vadd.f32 0.0, %v2076
      %v2078 = vpop.f32.mrb[0].mxu0
      %v2079 = vpop.f32.mrb[0].mxu0
      %v2080 = vadd.f32 0.0, %v2079
      %v2081 = vpop.f32.mrb[0].mxu0
      %2082 = vmatprep.mubr.bf16.mxu0 0
      %2083 = vmatmul.mubr.bf16.gmra.mrb[0].mxu0 %v1316
      %v2084 = vpop.f32.mrb[0].mxu0
      %v2085 = vadd.f32 0.0, %v2084
      %v2086 = vpop.f32.mrb[0].mxu0
      %v2087 = vpop.f32.mrb[0].mxu0
      %v2088 = vadd.f32 0.0, %v2087
      %v2089 = vpop.f32.mrb[0].mxu0
      %2090 = vmatprep.mubr.bf16.mxu0 0
      %2091 = vmatmul.mubr.bf16.gmra.mrb[0].mxu0 %v1317
      %v2092 = vpop.f32.mrb[0].mxu0
      %v2093 = vadd.f32 0.0, %v2092
      %v2094 = vpop.f32.mrb[0].mxu0
      %v2095 = vpop.f32.mrb[0].mxu0
      %v2096 = vadd.f32 0.0, %v2095
      %v2097 = vpop.f32.mrb[0].mxu0
      %2098 = vmatprep.mubr.bf16.mxu0 0
      %2099 = vmatmul.mubr.bf16.gmra.mrb[0].mxu0 %v1318
      %v2100 = vpop.f32.mrb[0].mxu0
      %v2101 = vadd.f32 0.0, %v2100
      %v2102 = vpop.f32.mrb[0].mxu0
      %v2103 = vpop.f32.mrb[0].mxu0
      %v2104 = vadd.f32 0.0, %v2103
      %v2105 = vpop.f32.mrb[0].mxu0
      %2106 = vmatprep.mubr.bf16.mxu0 0
      %2107 = vmatmul.mubr.bf16.gmra.mrb[0].mxu0 %v1319
      %v2108 = vpop.f32.mrb[0].mxu0
      %v2109 = vadd.f32 0.0, %v2108
      %v2110 = vpop.f32.mrb[0].mxu0
      %v2111 = vpop.f32.mrb[0].mxu0
      %v2112 = vadd.f32 0.0, %v2111
      %v2113 = vpop.f32.mrb[0].mxu0
      %2114 = vmatprep.mubr.bf16.mxu0 0
      %2115 = vmatmul.mubr.bf16.gmra.mrb[0].mxu0 %v1320
      %v2116 = vpop.f32.mrb[0].mxu0
      %v2117 = vadd.f32 0.0, %v2116
      %v2118 = vpop.f32.mrb[0].mxu0
      %v2119 = vpop.f32.mrb[0].mxu0
      %v2120 = vadd.f32 0.0, %v2119
      %v2121 = vpop.f32.mrb[0].mxu0
      %2122 = vmatprep.mubr.bf16.mxu0 0
      %2123 = vmatmul.mubr.bf16.gmra.mrb[0].mxu0 %v1321
      %v2124 = vpop.f32.mrb[0].mxu0
      %v2125 = vadd.f32 0.0, %v2124
      %v2126 = vpop.f32.mrb[0].mxu0
      %v2127 = vpop.f32.mrb[0].mxu0
      %v2128 = vadd.f32 0.0, %v2127
      %v2129 = vpop.f32.mrb[0].mxu0
      %2130 = vmatprep.mubr.bf16.mxu0 0
      %2131 = vmatmul.mubr.bf16.gmra.mrb[0].mxu0 %v1322
      %v2132 = vpop.f32.mrb[0].mxu0
      %v2133 = vadd.f32 0.0, %v2132
      %v2134 = vpop.f32.mrb[0].mxu0
      %v2135 = vpop.f32.mrb[0].mxu0
      %v2136 = vadd.f32 0.0, %v2135
      %v2137 = vpop.f32.mrb[0].mxu0
      %2138 = vmatprep.mubr.bf16.mxu0 0
      %2139 = vmatmul.mubr.bf16.gmra.mrb[0].mxu0 %v1323
      %v2140 = vpop.f32.mrb[0].mxu0
      %v2141 = vadd.f32 0.0, %v2140
      %v2142 = vpop.f32.mrb[0].mxu0
      %v2143 = vpop.f32.mrb[0].mxu0
      %v2144 = vadd.f32 0.0, %v2143
      %v2145 = vpop.f32.mrb[0].mxu0
      %2146 = vmatprep.mubr.bf16.mxu0 0
      %2147 = vmatmul.mubr.bf16.gmra.mrb[0].mxu0 %v1324
      %v2148 = vpop.f32.mrb[0].mxu0
      %v2149 = vadd.f32 0.0, %v2148
      %v2150 = vpop.f32.mrb[0].mxu0
      %v2151 = vpop.f32.mrb[0].mxu0
      %v2152 = vadd.f32 0.0, %v2151
      %v2153 = vpop.f32.mrb[0].mxu0
      %2154 = vmatprep.mubr.bf16.mxu0 0
      %2155 = vmatmul.mubr.bf16.gmra.mrb[0].mxu0 %v1325
      %v2156 = vpop.f32.mrb[0].mxu0
      %v2157 = vadd.f32 0.0, %v2156
      %v2158 = vpop.f32.mrb[0].mxu0
      %v2159 = vpop.f32.mrb[0].mxu0
      %v2160 = vadd.f32 0.0, %v2159
      %v2161 = vpop.f32.mrb[0].mxu0
      %2162 = vmatprep.mubr.bf16.mxu0 0
      %2163 = vmatmul.mubr.bf16.gmra.mrb[0].mxu0 %v1326
      %v2164 = vpop.f32.mrb[0].mxu0
      %v2165 = vadd.f32 0.0, %v2164
      %v2166 = vpop.f32.mrb[0].mxu0
      %v2167 = vpop.f32.mrb[0].mxu0
      %v2168 = vadd.f32 0.0, %v2167
      %v2169 = vpop.f32.mrb[0].mxu0
      %2170 = vmatprep.mubr.bf16.mxu0 0
      %2171 = vmatmul.mubr.bf16.gmra.mrb[0].mxu0 %v1327
      %v2172 = vpop.f32.mrb[0].mxu0
      %v2173 = vadd.f32 0.0, %v2172
      %v2174 = vpop.f32.mrb[0].mxu0
      %v2175 = vpop.f32.mrb[0].mxu0
      %v2176 = vadd.f32 0.0, %v2175
      %v2177 = vpop.f32.mrb[0].mxu0
      %2178 = vmatprep.mubr.bf16.mxu0 0
      %2179 = vmatmul.mubr.bf16.gmra.mrb[0].mxu0 %v1328
      %v2180 = vpop.f32.mrb[0].mxu0
      %v2181 = vadd.f32 0.0, %v2180
      %v2182 = vpop.f32.mrb[0].mxu0
      %v2183 = vpop.f32.mrb[0].mxu0
      %v2184 = vadd.f32 0.0, %v2183
      %v2185 = vpop.f32.mrb[0].mxu0
      %2186 = vmatprep.mubr.bf16.mxu0 0
      %2187 = vmatmul.mubr.bf16.gmra.mrb[0].mxu0 %v1329
      %v2188 = vpop.f32.mrb[0].mxu0
      %v2189 = vadd.f32 0.0, %v2188
      %v2190 = vpop.f32.mrb[0].mxu0
      %v2191 = vpop.f32.mrb[0].mxu0
      %v2192 = vadd.f32 0.0, %v2191
      %v2193 = vpop.f32.mrb[0].mxu0
      %2194 = vmatprep.mubr.bf16.mxu0 0
      %2195 = vmatmul.mubr.bf16.gmra.mrb[0].mxu0 %v1330
      %v2196 = vpop.f32.mrb[0].mxu0
      %v2197 = vadd.f32 0.0, %v2196
      %v2198 = vpop.f32.mrb[0].mxu0
      %v2199 = vpop.f32.mrb[0].mxu0
      %v2200 = vadd.f32 0.0, %v2199
      %v2201 = vpop.f32.mrb[0].mxu0
      %2202 = vmatprep.mubr.bf16.mxu0 0
      %2203 = vmatmul.mubr.bf16.gmra.mrb[0].mxu0 %v1331
      %v2204 = vpop.f32.mrb[0].mxu0
      %v2205 = vadd.f32 0.0, %v2204
      %v2206 = vpop.f32.mrb[0].mxu0
      %v2207 = vpop.f32.mrb[0].mxu0
      %v2208 = vadd.f32 0.0, %v2207
      %v2209 = vpop.f32.mrb[0].mxu0
      %2210 = vmatprep.mubr.bf16.mxu0 0
      %2211 = vmatmul.mubr.bf16.gmra.mrb[0].mxu0 %v1332
      %v2212 = vpop.f32.mrb[0].mxu0
      %v2213 = vadd.f32 0.0, %v2212
      %v2214 = vpop.f32.mrb[0].mxu0
      %v2215 = vpop.f32.mrb[0].mxu0
      %v2216 = vadd.f32 0.0, %v2215
      %v2217 = vpop.f32.mrb[0].mxu0
      %2218 = vmatprep.mubr.bf16.mxu0 0
      %2219 = vmatmul.mubr.bf16.gmra.mrb[0].mxu0 %v1333
      %v2220 = vpop.f32.mrb[0].mxu0
      %v2221 = vadd.f32 0.0, %v2220
      %v2222 = vpop.f32.mrb[0].mxu0
      %v2223 = vpop.f32.mrb[0].mxu0
      %v2224 = vadd.f32 0.0, %v2223
      %v2225 = vpop.f32.mrb[0].mxu0
      %2226 = vmatprep.mubr.bf16.mxu0 0
      %2227 = vmatmul.mubr.bf16.gmra.mrb[0].mxu0 %v1334
      %v2228 = vpop.f32.mrb[0].mxu0
      %v2229 = vadd.f32 0.0, %v2228
      %v2230 = vpop.f32.mrb[0].mxu0
      %v2231 = vpop.f32.mrb[0].mxu0
      %v2232 = vadd.f32 0.0, %v2231
      %v2233 = vpop.f32.mrb[0].mxu0
      %2234 = vmatprep.mubr.bf16.mxu0 0
      %2235 = vmatmul.mubr.bf16.gmra.mrb[0].mxu0 %v1335
      %v2236 = vpop.f32.mrb[0].mxu0
      %v2237 = vadd.f32 0.0, %v2236
      %v2238 = vpop.f32.mrb[0].mxu0
      %v2239 = vpop.f32.mrb[0].mxu0
      %v2240 = vadd.f32 0.0, %v2239
      %v2241 = vpop.f32.mrb[0].mxu0
      %2242 = vmatprep.mubr.bf16.mxu0 0
      %2243 = vmatmul.mubr.bf16.gmra.mrb[0].mxu0 %v1336
      %v2244 = vpop.f32.mrb[0].mxu0
      %v2245 = vadd.f32 0.0, %v2244
      %v2246 = vpop.f32.mrb[0].mxu0
      %v2247 = vpop.f32.mrb[0].mxu0
      %v2248 = vadd.f32 0.0, %v2247
      %v2249 = vpop.f32.mrb[0].mxu0
      %2250 = vmatprep.mubr.bf16.mxu0 0
      %2251 = vmatmul.mubr.bf16.gmra.mrb[0].mxu0 %v1337
      %v2252 = vpop.f32.mrb[0].mxu0
      %v2253 = vadd.f32 0.0, %v2252
      %v2254 = vpop.f32.mrb[0].mxu0
      %v2255 = vpop.f32.mrb[0].mxu0
      %v2256 = vadd.f32 0.0, %v2255
      %v2257 = vpop.f32.mrb[0].mxu0
      %2258 = vmatprep.mubr.bf16.mxu0 0
      %2259 = vmatmul.mubr.bf16.gmra.mrb[0].mxu0 %v1338
      %v2260 = vpop.f32.mrb[0].mxu0
      %v2261 = vadd.f32 0.0, %v2260
      %v2262 = vpop.f32.mrb[0].mxu0
      %v2263 = vpop.f32.mrb[0].mxu0
      %v2264 = vadd.f32 0.0, %v2263
      %v2265 = vpop.f32.mrb[0].mxu0
      %2266 = vmatprep.mubr.bf16.mxu0 0
      %2267 = vmatmul.mubr.bf16.gmra.mrb[0].mxu0 %v1339
      %v2268 = vpop.f32.mrb[0].mxu0
      %v2269 = vadd.f32 0.0, %v2268
      %v2270 = vpop.f32.mrb[0].mxu0
      %v2271 = vpop.f32.mrb[0].mxu0
      %v2272 = vadd.f32 0.0, %v2271
      %v2273 = vpop.f32.mrb[0].mxu0
      %2274 = vmatprep.mubr.bf16.mxu0 0
      %2275 = vmatmul.mubr.bf16.gmra.mrb[0].mxu0 %v1340
      %v2276 = vpop.f32.mrb[0].mxu0
      %v2277 = vadd.f32 0.0, %v2276
      %v2278 = vpop.f32.mrb[0].mxu0
      %v2279 = vpop.f32.mrb[0].mxu0
      %v2280 = vadd.f32 0.0, %v2279
      %v2281 = vpop.f32.mrb[0].mxu0
      %2282 = vmatprep.mubr.bf16.mxu0 0
      %2283 = vmatmul.mubr.bf16.gmra.mrb[0].mxu0 %v1341
      %v2284 = vpop.f32.mrb[0].mxu0
      %v2285 = vadd.f32 0.0, %v2284
      %v2286 = vpop.f32.mrb[0].mxu0
      %v2287 = vpop.f32.mrb[0].mxu0
      %v2288 = vadd.f32 0.0, %v2287
      %v2289 = vpop.f32.mrb[0].mxu0
      %2290 = vmatprep.mubr.bf16.mxu0 0
      %2291 = vmatmul.mubr.bf16.gmra.mrb[0].mxu0 %v1342
      %v2292 = vpop.f32.mrb[0].mxu0
      %v2293 = vadd.f32 0.0, %v2292
      %v2294 = vpop.f32.mrb[0].mxu0
      %v2295 = vpop.f32.mrb[0].mxu0
      %v2296 = vadd.f32 0.0, %v2295
      %v2297 = vpop.f32.mrb[0].mxu0
      %2298 = vmatprep.mubr.bf16.mxu0 0
      %2299 = vmatmul.mubr.bf16.gmra.mrb[0].mxu0 %v1343
      %v2300 = vpop.f32.mrb[0].mxu0
      %v2301 = vadd.f32 0.0, %v2300
      %v2302 = vpop.f32.mrb[0].mxu0
      %v2303 = vpop.f32.mrb[0].mxu0
      %v2304 = vadd.f32 0.0, %v2303
      %v2305 = vpop.f32.mrb[0].mxu0
      %2306 = vmatprep.mubr.bf16.mxu0 0
      %2307 = vmatmul.mubr.bf16.gmra.mrb[0].mxu0 %v1344
      %v2308 = vpop.f32.mrb[0].mxu0
      %v2309 = vadd.f32 0.0, %v2308
      %v2310 = vpop.f32.mrb[0].mxu0
      %v2311 = vpop.f32.mrb[0].mxu0
      %v2312 = vadd.f32 0.0, %v2311
      %v2313 = vpop.f32.mrb[0].mxu0
      %2314 = vmatprep.mubr.bf16.mxu0 0
      %2315 = vmatmul.mubr.bf16.gmra.mrb[0].mxu0 %v1345
      %v2316 = vpop.f32.mrb[0].mxu0
      %v2317 = vadd.f32 0.0, %v2316
      %v2318 = vpop.f32.mrb[0].mxu0
      %v2319 = vpop.f32.mrb[0].mxu0
      %v2320 = vadd.f32 0.0, %v2319
      %v2321 = vpop.f32.mrb[0].mxu0
      %2322 = vmatprep.mubr.bf16.mxu0 0
      %2323 = vmatmul.mubr.bf16.gmra.mrb[0].mxu0 %v1346
      %v2324 = vpop.f32.mrb[0].mxu0
      %v2325 = vadd.f32 0.0, %v2324
      %v2326 = vpop.f32.mrb[0].mxu0
      %v2327 = vpop.f32.mrb[0].mxu0
      %v2328 = vadd.f32 0.0, %v2327
      %v2329 = vpop.f32.mrb[0].mxu0
      %2330 = vmatprep.mubr.bf16.mxu0 0
      %2331 = vmatmul.mubr.bf16.gmra.mrb[0].mxu0 %v1347
      %v2332 = vpop.f32.mrb[0].mxu0
      %v2333 = vadd.f32 0.0, %v2332
      %v2334 = vpop.f32.mrb[0].mxu0
      %v2335 = vpop.f32.mrb[0].mxu0
      %v2336 = vadd.f32 0.0, %v2335
      %v2337 = vpop.f32.mrb[0].mxu0
      %2338 = vmatprep.mubr.bf16.mxu0 0
      %2339 = vmatmul.mubr.bf16.gmra.mrb[0].mxu0 %v1348
      %v2340 = vpop.f32.mrb[0].mxu0
      %v2341 = vadd.f32 0.0, %v2340
      %v2342 = vpop.f32.mrb[0].mxu0
      %v2343 = vpop.f32.mrb[0].mxu0
      %v2344 = vadd.f32 0.0, %v2343
      %v2345 = vpop.f32.mrb[0].mxu0
      %2346 = vmatprep.mubr.bf16.mxu0 0
      %2347 = vmatmul.mubr.bf16.gmra.mrb[0].mxu0 %v1349
      %v2348 = vpop.f32.mrb[0].mxu0
      %v2349 = vadd.f32 0.0, %v2348
      %v2350 = vpop.f32.mrb[0].mxu0
      %v2351 = vpop.f32.mrb[0].mxu0
      %v2352 = vadd.f32 0.0, %v2351
      %v2353 = vpop.f32.mrb[0].mxu0
      %2354 = vmatprep.mubr.bf16.mxu0 0
      %2355 = vmatmul.mubr.bf16.gmra.mrb[0].mxu0 %v1350
      %v2356 = vpop.f32.mrb[0].mxu0
      %v2357 = vadd.f32 0.0, %v2356
      %v2358 = vpop.f32.mrb[0].mxu0
      %v2359 = vpop.f32.mrb[0].mxu0
      %v2360 = vadd.f32 0.0, %v2359
      %v2361 = vpop.f32.mrb[0].mxu0
      %2362 = vmatprep.mubr.bf16.mxu0 0
      %2363 = vmatmul.mubr.bf16.gmra.mrb[0].mxu0 %v1351
      %v2364 = vpop.f32.mrb[0].mxu0
      %v2365 = vadd.f32 0.0, %v2364
      %v2366 = vpop.f32.mrb[0].mxu0
      %v2367 = vpop.f32.mrb[0].mxu0
      %v2368 = vadd.f32 0.0, %v2367
      %v2369 = vpop.f32.mrb[0].mxu0
      %2370 = vmatprep.mubr.bf16.mxu0 0
      %2371 = vmatmul.mubr.bf16.gmra.mrb[0].mxu0 %v1352
      %v2372 = vpop.f32.mrb[0].mxu0
      %v2373 = vadd.f32 0.0, %v2372
      %v2374 = vpop.f32.mrb[0].mxu0
      %v2375 = vpop.f32.mrb[0].mxu0
      %v2376 = vadd.f32 0.0, %v2375
      %v2377 = vpop.f32.mrb[0].mxu0
      %2378 = vmatprep.mubr.bf16.mxu0 0
      %2379 = vmatmul.mubr.bf16.gmra.mrb[0].mxu0 %v1353
      %v2380 = vpop.f32.mrb[0].mxu0
      %v2381 = vadd.f32 0.0, %v2380
      %v2382 = vpop.f32.mrb[0].mxu0
      %v2383 = vpop.f32.mrb[0].mxu0
      %v2384 = vadd.f32 0.0, %v2383
      %v2385 = vpop.f32.mrb[0].mxu0
      %2386 = vmatprep.mubr.bf16.mxu0 0
      %2387 = vmatmul.mubr.bf16.gmra.mrb[0].mxu0 %v1354
      %v2388 = vpop.f32.mrb[0].mxu0
      %v2389 = vadd.f32 0.0, %v2388
      %v2390 = vpop.f32.mrb[0].mxu0
      %v2391 = vpop.f32.mrb[0].mxu0
      %v2392 = vadd.f32 0.0, %v2391
      %v2393 = vpop.f32.mrb[0].mxu0
      %2394 = vmatprep.mubr.bf16.mxu0 0
      %2395 = vmatmul.mubr.bf16.gmra.mrb[0].mxu0 %v1355
      %v2396 = vpop.f32.mrb[0].mxu0
      %v2397 = vadd.f32 0.0, %v2396
      %v2398 = vpop.f32.mrb[0].mxu0
      %v2399 = vpop.f32.mrb[0].mxu0
      %v2400 = vadd.f32 0.0, %v2399
      %v2401 = vpop.f32.mrb[0].mxu0
      %2402 = vmatprep.mubr.bf16.mxu0 0
      %2403 = vmatmul.mubr.bf16.gmra.mrb[0].mxu0 %v1356
      %v2404 = vpop.f32.mrb[0].mxu0
      %v2405 = vadd.f32 0.0, %v2404
      %v2406 = vpop.f32.mrb[0].mxu0
      %v2407 = vpop.f32.mrb[0].mxu0
      %v2408 = vadd.f32 0.0, %v2407
      %v2409 = vpop.f32.mrb[0].mxu0
      %2410 = vmatprep.mubr.bf16.mxu0 0
      %2411 = vmatmul.mubr.bf16.gmra.mrb[0].mxu0 %v1357
      %v2412 = vpop.f32.mrb[0].mxu0
      %v2413 = vadd.f32 0.0, %v2412
      %v2414 = vpop.f32.mrb[0].mxu0
      %v2415 = vpop.f32.mrb[0].mxu0
      %v2416 = vadd.f32 0.0, %v2415
      %v2417 = vpop.f32.mrb[0].mxu0
      %2418 = vmatprep.mubr.bf16.mxu0 0
      %2419 = vmatmul.mubr.bf16.gmra.mrb[0].mxu0 %v1358
      %v2420 = vpop.f32.mrb[0].mxu0
      %v2421 = vadd.f32 0.0, %v2420
      %v2422 = vpop.f32.mrb[0].mxu0
      %v2423 = vpop.f32.mrb[0].mxu0
      %v2424 = vadd.f32 0.0, %v2423
      %v2425 = vpop.f32.mrb[0].mxu0
      %2426 = vmatprep.mubr.bf16.mxu0 0
      %2427 = vmatmul.mubr.bf16.gmra.mrb[0].mxu0 %v1359
      %v2428 = vpop.f32.mrb[0].mxu0
      %v2429 = vadd.f32 0.0, %v2428
      %v2430 = vpop.f32.mrb[0].mxu0
      %v2431 = vpop.f32.mrb[0].mxu0
      %v2432 = vadd.f32 0.0, %v2431
      %v2433 = vpop.f32.mrb[0].mxu0
      %2434 = vmatprep.mubr.bf16.mxu0 0
      %2435 = vmatmul.mubr.bf16.gmra.mrb[0].mxu0 %v1360
      %v2436 = vpop.f32.mrb[0].mxu0
      %v2437 = vadd.f32 0.0, %v2436
      %v2438 = vpop.f32.mrb[0].mxu0
      %v2439 = vpop.f32.mrb[0].mxu0
      %v2440 = vadd.f32 0.0, %v2439
      %v2441 = vpop.f32.mrb[0].mxu0
      %2442 = vmatprep.mubr.bf16.mxu0 0
      %2443 = vmatmul.mubr.bf16.gmra.mrb[0].mxu0 %v1361
      %v2444 = vpop.f32.mrb[0].mxu0
      %v2445 = vadd.f32 0.0, %v2444
      %v2446 = vpop.f32.mrb[0].mxu0
      %v2447 = vpop.f32.mrb[0].mxu0
      %v2448 = vadd.f32 0.0, %v2447
      %v2449 = vpop.f32.mrb[0].mxu0
      %2450 = vmatprep.mubr.bf16.mxu0 0
      %2451 = vmatmul.mubr.bf16.gmra.mrb[0].mxu0 %v1362
      %v2452 = vpop.f32.mrb[0].mxu0
      %v2453 = vadd.f32 0.0, %v2452
      %v2454 = vpop.f32.mrb[0].mxu0
      %v2455 = vpop.f32.mrb[0].mxu0
      %v2456 = vadd.f32 0.0, %v2455
      %v2457 = vpop.f32.mrb[0].mxu0
      %2458 = vmatprep.mubr.bf16.mxu0 0
      %2459 = vmatmul.mubr.bf16.gmra.mrb[0].mxu0 %v1363
      %v2460 = vpop.f32.mrb[0].mxu0
      %v2461 = vadd.f32 0.0, %v2460
      %v2462 = vpop.f32.mrb[0].mxu0
      %v2463 = vpop.f32.mrb[0].mxu0
      %v2464 = vadd.f32 0.0, %v2463
      %v2465 = vpop.f32.mrb[0].mxu0
      %2466 = vmatprep.mubr.bf16.mxu0 0
      %2467 = vmatmul.mubr.bf16.gmra.mrb[0].mxu0 %v1364
      %v2468 = vpop.f32.mrb[0].mxu0
      %v2469 = vadd.f32 0.0, %v2468
      %v2470 = vpop.f32.mrb[0].mxu0
      %v2471 = vpop.f32.mrb[0].mxu0
      %v2472 = vadd.f32 0.0, %v2471
      %v2473 = vpop.f32.mrb[0].mxu0
      %2474 = vmatprep.mubr.bf16.mxu0 0
      %2475 = vmatmul.mubr.bf16.gmra.mrb[0].mxu0 %v1365
      %v2476 = vpop.f32.mrb[0].mxu0
      %v2477 = vadd.f32 0.0, %v2476
      %v2478 = vpop.f32.mrb[0].mxu0
      %v2479 = vpop.f32.mrb[0].mxu0
      %v2480 = vadd.f32 0.0, %v2479
      %v2481 = vpop.f32.mrb[0].mxu0
      %2482 = vmatprep.mubr.bf16.mxu0 0
      %2483 = vmatmul.mubr.bf16.gmra.mrb[0].mxu0 %v1366
      %v2484 = vpop.f32.mrb[0].mxu0
      %v2485 = vadd.f32 0.0, %v2484
      %v2486 = vpop.f32.mrb[0].mxu0
      %v2487 = vpop.f32.mrb[0].mxu0
      %v2488 = vadd.f32 0.0, %v2487
      %v2489 = vpop.f32.mrb[0].mxu0
      %2490 = vmatprep.mubr.bf16.mxu0 0
      %2491 = vmatmul.mubr.bf16.gmra.mrb[0].mxu0 %v1367
      %v2492 = vpop.f32.mrb[0].mxu0
      %v2493 = vadd.f32 0.0, %v2492
      %v2494 = vpop.f32.mrb[0].mxu0
      %v2495 = vpop.f32.mrb[0].mxu0
      %v2496 = vadd.f32 0.0, %v2495
      %v2497 = vpop.f32.mrb[0].mxu0
      %2498 = vmatprep.mubr.bf16.mxu0 0
      %2499 = vmatmul.mubr.bf16.gmra.mrb[0].mxu0 %v1368
      %v2500 = vpop.f32.mrb[0].mxu0
      %v2501 = vadd.f32 0.0, %v2500
      %v2502 = vpop.f32.mrb[0].mxu0
      %v2503 = vpop.f32.mrb[0].mxu0
      %v2504 = vadd.f32 0.0, %v2503
      %v2505 = vpop.f32.mrb[0].mxu0
      %2506 = vmatprep.mubr.bf16.mxu0 0
      %2507 = vmatmul.mubr.bf16.gmra.mrb[0].mxu0 %v1369
      %v2508 = vpop.f32.mrb[0].mxu0
      %v2509 = vadd.f32 0.0, %v2508
      %v2510 = vpop.f32.mrb[0].mxu0
      %v2511 = vpop.f32.mrb[0].mxu0
      %v2512 = vadd.f32 0.0, %v2511
      %v2513 = vpop.f32.mrb[0].mxu0
      %2514 = vmatprep.mubr.bf16.mxu0 0
      %2515 = vmatmul.mubr.bf16.gmra.mrb[0].mxu0 %v1370
      %v2516 = vpop.f32.mrb[0].mxu0
      %v2517 = vadd.f32 0.0, %v2516
      %v2518 = vpop.f32.mrb[0].mxu0
      %v2519 = vpop.f32.mrb[0].mxu0
      %v2520 = vadd.f32 0.0, %v2519
      %v2521 = vpop.f32.mrb[0].mxu0
      %2522 = vmatprep.mubr.bf16.mxu0 0
      %2523 = vmatmul.mubr.bf16.gmra.mrb[0].mxu0 %v1371
      %v2524 = vpop.f32.mrb[0].mxu0
      %v2525 = vadd.f32 0.0, %v2524
      %v2526 = vpop.f32.mrb[0].mxu0
      %v2527 = vpop.f32.mrb[0].mxu0
      %v2528 = vadd.f32 0.0, %v2527
      %v2529 = vpop.f32.mrb[0].mxu0
      %2530 = vmatprep.mubr.bf16.mxu0 0
      %2531 = vmatmul.mubr.bf16.gmra.mrb[0].mxu0 %v1372
      %v2532 = vpop.f32.mrb[0].mxu0
      %v2533 = vadd.f32 0.0, %v2532
      %v2534 = vpop.f32.mrb[0].mxu0
      %v2535 = vpop.f32.mrb[0].mxu0
      %v2536 = vadd.f32 0.0, %v2535
      %v2537 = vpop.f32.mrb[0].mxu0
      %2538 = vmatprep.mubr.bf16.mxu0 0
      %2539 = vmatmul.mubr.bf16.gmra.mrb[0].mxu0 %v1373
      %v2540 = vpop.f32.mrb[0].mxu0
      %v2541 = vadd.f32 0.0, %v2540
      %v2542 = vpop.f32.mrb[0].mxu0
      %v2543 = vpop.f32.mrb[0].mxu0
      %v2544 = vadd.f32 0.0, %v2543
      %v2545 = vpop.f32.mrb[0].mxu0
      %2546 = vmatprep.mubr.bf16.mxu0 0
      %2547 = vmatmul.mubr.bf16.gmra.mrb[0].mxu0 %v1374
      %v2548 = vpop.f32.mrb[0].mxu0
      %v2549 = vadd.f32 0.0, %v2548
      %v2550 = vpop.f32.mrb[0].mxu0
      %v2551 = vpop.f32.mrb[0].mxu0
      %v2552 = vadd.f32 0.0, %v2551
      %v2553 = vpop.f32.mrb[0].mxu0
      %2554 = vmatprep.mubr.bf16.mxu0 0
      %2555 = vmatmul.mubr.bf16.gmra.mrb[0].mxu0 %v1375
      %v2556 = vpop.f32.mrb[0].mxu0
      %v2557 = vadd.f32 0.0, %v2556
      %v2558 = vpop.f32.mrb[0].mxu0
      %v2559 = vpop.f32.mrb[0].mxu0
      %v2560 = vadd.f32 0.0, %v2559
      %v2561 = vpop.f32.mrb[0].mxu0
      %2562 = vmatprep.mubr.bf16.mxu0 0
      %2563 = vmatmul.mubr.bf16.gmra.mrb[0].mxu0 %v1376
      %v2564 = vpop.f32.mrb[0].mxu0
      %v2565 = vadd.f32 0.0, %v2564
      %v2566 = vpop.f32.mrb[0].mxu0
      %v2567 = vpop.f32.mrb[0].mxu0
      %v2568 = vadd.f32 0.0, %v2567
      %v2569 = vpop.f32.mrb[0].mxu0
      %2570 = vmatprep.mubr.bf16.mxu0 0
      %2571 = vmatmul.mubr.bf16.gmra.mrb[0].mxu0 %v1377
      %v2572 = vpop.f32.mrb[0].mxu0
      %v2573 = vadd.f32 0.0, %v2572
      %v2574 = vpop.f32.mrb[0].mxu0
      %v2575 = vpop.f32.mrb[0].mxu0
      %v2576 = vadd.f32 0.0, %v2575
      %v2577 = vpop.f32.mrb[0].mxu0
      %2578 = vmatprep.mubr.bf16.mxu0 0
      %2579 = vmatmul.mubr.bf16.gmra.mrb[0].mxu0 %v1378
      %v2580 = vpop.f32.mrb[0].mxu0
      %v2581 = vadd.f32 0.0, %v2580
      %v2582 = vpop.f32.mrb[0].mxu0
      %v2583 = vpop.f32.mrb[0].mxu0
      %v2584 = vadd.f32 0.0, %v2583
      %v2585 = vpop.f32.mrb[0].mxu0
      %2586 = vmatprep.mubr.bf16.mxu0 0
      %2587 = vmatmul.mubr.bf16.gmra.mrb[0].mxu0 %v1379
      %v2588 = vpop.f32.mrb[0].mxu0
      %v2589 = vadd.f32 0.0, %v2588
      %v2590 = vpop.f32.mrb[0].mxu0
      %v2591 = vpop.f32.mrb[0].mxu0
      %v2592 = vadd.f32 0.0, %v2591
      %v2593 = vpop.f32.mrb[0].mxu0
      %2594 = vmatprep.mubr.bf16.mxu0 0
      %2595 = vmatmul.mubr.bf16.gmra.mrb[0].mxu0 %v1380
      %v2596 = vpop.f32.mrb[0].mxu0
      %v2597 = vadd.f32 0.0, %v2596
      %v2598 = vpop.f32.mrb[0].mxu0
      %v2599 = vpop.f32.mrb[0].mxu0
      %v2600 = vadd.f32 0.0, %v2599
      %v2601 = vpop.f32.mrb[0].mxu0
      %2602 = vmatprep.mubr.bf16.mxu0 0
      %2603 = vmatmul.mubr.bf16.gmra.mrb[0].mxu0 %v1381
      %v2604 = vpop.f32.mrb[0].mxu0
      %v2605 = vadd.f32 0.0, %v2604
      %v2606 = vpop.f32.mrb[0].mxu0
      %v2607 = vpop.f32.mrb[0].mxu0
      %v2608 = vadd.f32 0.0, %v2607
      %v2609 = vpop.f32.mrb[0].mxu0
      %2610 = vmatprep.mubr.bf16.mxu0 0
      %2611 = vmatmul.mubr.bf16.gmra.mrb[0].mxu0 %v1382
      %v2612 = vpop.f32.mrb[0].mxu0
      %v2613 = vadd.f32 0.0, %v2612
      %v2614 = vpop.f32.mrb[0].mxu0
      %v2615 = vpop.f32.mrb[0].mxu0
      %v2616 = vadd.f32 0.0, %v2615
      %v2617 = vpop.f32.mrb[0].mxu0
      %2618 = vmatprep.mubr.bf16.mxu0 0
      %2619 = vmatmul.mubr.bf16.gmra.mrb[0].mxu0 %v1383
      %v2620 = vpop.f32.mrb[0].mxu0
      %v2621 = vadd.f32 0.0, %v2620
      %v2622 = vpop.f32.mrb[0].mxu0
      %v2623 = vpop.f32.mrb[0].mxu0
      %v2624 = vadd.f32 0.0, %v2623
      %v2625 = vpop.f32.mrb[0].mxu0
      %2626 = vmatprep.mubr.bf16.mxu0 0
      %2627 = vmatmul.mubr.bf16.gmra.mrb[0].mxu0 %v1384
      %v2628 = vpop.f32.mrb[0].mxu0
      %v2629 = vadd.f32 0.0, %v2628
      %v2630 = vpop.f32.mrb[0].mxu0
      %v2631 = vpop.f32.mrb[0].mxu0
      %v2632 = vadd.f32 0.0, %v2631
      %v2633 = vpop.f32.mrb[0].mxu0
      %2634 = vmatprep.mubr.bf16.mxu0 0
      %2635 = vmatmul.mubr.bf16.gmra.mrb[0].mxu0 %v1385
      %v2636 = vpop.f32.mrb[0].mxu0
      %v2637 = vadd.f32 0.0, %v2636
      %v2638 = vpop.f32.mrb[0].mxu0
      %v2639 = vpop.f32.mrb[0].mxu0
      %v2640 = vadd.f32 0.0, %v2639
      %v2641 = vpop.f32.mrb[0].mxu0
      %2642 = vmatprep.mubr.bf16.mxu0 0
      %2643 = vmatmul.mubr.bf16.gmra.mrb[0].mxu0 %v1386
      %v2644 = vpop.f32.mrb[0].mxu0
      %v2645 = vadd.f32 0.0, %v2644
      %v2646 = vpop.f32.mrb[0].mxu0
      %v2647 = vpop.f32.mrb[0].mxu0
      %v2648 = vadd.f32 0.0, %v2647
      %v2649 = vpop.f32.mrb[0].mxu0
      %2650 = vmatprep.mubr.bf16.mxu0 0
      %2651 = vmatmul.mubr.bf16.gmra.mrb[0].mxu0 %v1387
      %v2652 = vpop.f32.mrb[0].mxu0
      %v2653 = vadd.f32 0.0, %v2652
      %v2654 = vpop.f32.mrb[0].mxu0
      %v2655 = vpop.f32.mrb[0].mxu0
      %v2656 = vadd.f32 0.0, %v2655
      %v2657 = vpop.f32.mrb[0].mxu0
      %2658 = vmatprep.mubr.bf16.mxu0 0
      %2659 = vmatmul.mubr.bf16.gmra.mrb[0].mxu0 %v1388
      %v2660 = vpop.f32.mrb[0].mxu0
      %v2661 = vadd.f32 0.0, %v2660
      %v2662 = vpop.f32.mrb[0].mxu0
      %v2663 = vpop.f32.mrb[0].mxu0
      %v2664 = vadd.f32 0.0, %v2663
      %v2665 = vpop.f32.mrb[0].mxu0
      %2666 = vmatprep.mubr.bf16.mxu0 0
      %2667 = vmatmul.mubr.bf16.gmra.mrb[0].mxu0 %v1389
      %v2668 = vpop.f32.mrb[0].mxu0
      %v2669 = vadd.f32 0.0, %v2668
      %v2670 = vpop.f32.mrb[0].mxu0
      %v2671 = vpop.f32.mrb[0].mxu0
      %v2672 = vadd.f32 0.0, %v2671
      %v2673 = vpop.f32.mrb[0].mxu0
      %2674 = vmatprep.mubr.bf16.mxu0 0
      %2675 = vmatmul.mubr.bf16.gmra.mrb[0].mxu0 %v1390
      %v2676 = vpop.f32.mrb[0].mxu0
      %v2677 = vadd.f32 0.0, %v2676
      %v2678 = vpop.f32.mrb[0].mxu0
      %v2679 = vpop.f32.mrb[0].mxu0
      %v2680 = vadd.f32 0.0, %v2679
      %v2681 = vpop.f32.mrb[0].mxu0
      %2682 = vmatprep.mubr.bf16.mxu0 0
      %2683 = vmatmul.mubr.bf16.gmra.mrb[0].mxu0 %v1391
      %v2684 = vpop.f32.mrb[0].mxu0
      %v2685 = vadd.f32 0.0, %v2684
      %v2686 = vpop.f32.mrb[0].mxu0
      %v2687 = vpop.f32.mrb[0].mxu0
      %v2688 = vadd.f32 0.0, %v2687
      %v2689 = vpop.f32.mrb[0].mxu0
      %2690 = vmatprep.mubr.bf16.mxu0 0
      %2691 = vmatmul.mubr.bf16.gmra.mrb[0].mxu0 %v1392
      %v2692 = vpop.f32.mrb[0].mxu0
      %v2693 = vadd.f32 0.0, %v2692
      %v2694 = vpop.f32.mrb[0].mxu0
      %v2695 = vpop.f32.mrb[0].mxu0
      %v2696 = vadd.f32 0.0, %v2695
      %v2697 = vpop.f32.mrb[0].mxu0
      %2698 = vmatprep.mubr.bf16.mxu0 0
      %2699 = vmatmul.mubr.bf16.gmra.mrb[0].mxu0 %v1393
      %v2700 = vpop.f32.mrb[0].mxu0
      %v2701 = vadd.f32 0.0, %v2700
      %v2702 = vpop.f32.mrb[0].mxu0
      %v2703 = vpop.f32.mrb[0].mxu0
      %v2704 = vadd.f32 0.0, %v2703
      %v2705 = vpop.f32.mrb[0].mxu0
      %2706 = vmatprep.mubr.bf16.mxu0 0
      %2707 = vmatmul.mubr.bf16.gmra.mrb[0].mxu0 %v1394
      %v2708 = vpop.f32.mrb[0].mxu0
      %v2709 = vadd.f32 0.0, %v2708
      %v2710 = vpop.f32.mrb[0].mxu0
      %v2711 = vpop.f32.mrb[0].mxu0
      %v2712 = vadd.f32 0.0, %v2711
      %v2713 = vpop.f32.mrb[0].mxu0
      %2714 = vmatprep.mubr.bf16.mxu0 0
      %2715 = vmatmul.mubr.bf16.gmra.mrb[0].mxu0 %v1395
      %v2716 = vpop.f32.mrb[0].mxu0
      %v2717 = vadd.f32 0.0, %v2716
      %v2718 = vpop.f32.mrb[0].mxu0
      %v2719 = vpop.f32.mrb[0].mxu0
      %v2720 = vadd.f32 0.0, %v2719
      %v2721 = vpop.f32.mrb[0].mxu0
      %2722 = vmatprep.mubr.bf16.mxu0 0
      %2723 = vmatmul.mubr.bf16.gmra.mrb[0].mxu0 %v1396
      %v2724 = vpop.f32.mrb[0].mxu0
      %v2725 = vadd.f32 0.0, %v2724
      %v2726 = vpop.f32.mrb[0].mxu0
      %v2727 = vpop.f32.mrb[0].mxu0
      %v2728 = vadd.f32 0.0, %v2727
      %v2729 = vpop.f32.mrb[0].mxu0
      %2730 = vmatprep.mubr.bf16.mxu0 0
      %2731 = vmatmul.mubr.bf16.gmra.mrb[0].mxu0 %v1397
      %v2732 = vpop.f32.mrb[0].mxu0
      %v2733 = vadd.f32 0.0, %v2732
      %v2734 = vpop.f32.mrb[0].mxu0
      %v2735 = vpop.f32.mrb[0].mxu0
      %v2736 = vadd.f32 0.0, %v2735
      %v2737 = vpop.f32.mrb[0].mxu0
      %2738 = vmatprep.mubr.bf16.mxu0 0
      %2739 = vmatmul.mubr.bf16.gmra.mrb[0].mxu0 %v1398
      %v2740 = vpop.f32.mrb[0].mxu0
      %v2741 = vadd.f32 0.0, %v2740
      %v2742 = vpop.f32.mrb[0].mxu0
      %v2743 = vpop.f32.mrb[0].mxu0
      %v2744 = vadd.f32 0.0, %v2743
      %v2745 = vpop.f32.mrb[0].mxu0
      %2746 = vmatprep.mubr.bf16.mxu0 0
      %2747 = vmatmul.mubr.bf16.gmra.mrb[0].mxu0 %v1399
      %v2748 = vpop.f32.mrb[0].mxu0
      %v2749 = vadd.f32 0.0, %v2748
      %v2750 = vpop.f32.mrb[0].mxu0
      %v2751 = vpop.f32.mrb[0].mxu0
      %v2752 = vadd.f32 0.0, %v2751
      %v2753 = vpop.f32.mrb[0].mxu0
      %2754 = vmatprep.mubr.bf16.mxu0 0
      %2755 = vmatmul.mubr.bf16.gmra.mrb[0].mxu0 %v1400
      %v2756 = vpop.f32.mrb[0].mxu0
      %v2757 = vadd.f32 0.0, %v2756
      %v2758 = vpop.f32.mrb[0].mxu0
      %v2759 = vpop.f32.mrb[0].mxu0
      %v2760 = vadd.f32 0.0, %v2759
      %v2761 = vpop.f32.mrb[0].mxu0
      %2762 = vmatprep.mubr.bf16.mxu0 0
      %2763 = vmatmul.mubr.bf16.gmra.mrb[0].mxu0 %v1401
      %v2764 = vpop.f32.mrb[0].mxu0
      %v2765 = vadd.f32 0.0, %v2764
      %v2766 = vpop.f32.mrb[0].mxu0
      %v2767 = vpop.f32.mrb[0].mxu0
      %v2768 = vadd.f32 0.0, %v2767
      %v2769 = vpop.f32.mrb[0].mxu0
      %2770 = vmatprep.mubr.bf16.mxu0 0
      %2771 = vmatmul.mubr.bf16.gmra.mrb[0].mxu0 %v1402
      %v2772 = vpop.f32.mrb[0].mxu0
      %v2773 = vadd.f32 0.0, %v2772
      %v2774 = vpop.f32.mrb[0].mxu0
      %v2775 = vpop.f32.mrb[0].mxu0
      %v2776 = vadd.f32 0.0, %v2775
      %v2777 = vpop.f32.mrb[0].mxu0
      %2778 = vmatprep.mubr.bf16.mxu0 0
      %2779 = vmatmul.mubr.bf16.gmra.mrb[0].mxu0 %v1403
      %v2780 = vpop.f32.mrb[0].mxu0
      %v2781 = vadd.f32 0.0, %v2780
      %v2782 = vpop.f32.mrb[0].mxu0
      %v2783 = vpop.f32.mrb[0].mxu0
      %v2784 = vadd.f32 0.0, %v2783
      %v2785 = vpop.f32.mrb[0].mxu0
      %2786 = vmatprep.mubr.bf16.mxu0 0
      %2787 = vmatmul.mubr.bf16.gmra.mrb[0].mxu0 %v1404
      %v2788 = vpop.f32.mrb[0].mxu0
      %v2789 = vadd.f32 0.0, %v2788
      %v2790 = vpop.f32.mrb[0].mxu0
      %v2791 = vpop.f32.mrb[0].mxu0
      %v2792 = vadd.f32 0.0, %v2791
      %v2793 = vpop.f32.mrb[0].mxu0
      %2794 = vmatprep.mubr.bf16.mxu0 0
      %2795 = vmatmul.mubr.bf16.gmra.mrb[0].mxu0 %v1405
      %v2796 = vpop.f32.mrb[0].mxu0
      %v2797 = vadd.f32 0.0, %v2796
      %v2798 = vpop.f32.mrb[0].mxu0
      %v2799 = vpop.f32.mrb[0].mxu0
      %v2800 = vadd.f32 0.0, %v2799
      %v2801 = vpop.f32.mrb[0].mxu0
      %2802 = vmatprep.mubr.bf16.mxu0 0
      %2803 = vmatmul.mubr.bf16.gmra.mrb[0].mxu0 %v1406
      %v2804 = vpop.f32.mrb[0].mxu0
      %v2805 = vadd.f32 0.0, %v2804
      %v2806 = vpop.f32.mrb[0].mxu0
      %v2807 = vpop.f32.mrb[0].mxu0
      %v2808 = vadd.f32 0.0, %v2807
      %v2809 = vpop.f32.mrb[0].mxu0
      %2810 = vmatprep.mubr.bf16.mxu0 0
      %2811 = vmatmul.mubr.bf16.gmra.mrb[0].mxu0 %v1407
      %v2812 = vpop.f32.mrb[0].mxu0
      %v2813 = vadd.f32 0.0, %v2812
      %v2814 = vpop.f32.mrb[0].mxu0
      %v2815 = vpop.f32.mrb[0].mxu0
      %v2816 = vadd.f32 0.0, %v2815
      %v2817 = vpop.f32.mrb[0].mxu0
      %2818 = vmatprep.mubr.bf16.mxu0 0
      %2819 = vmatmul.mubr.bf16.gmra.mrb[0].mxu0 %v1408
      %v2820 = vpop.f32.mrb[0].mxu0
      %v2821 = vadd.f32 0.0, %v2820
      %v2822 = vpop.f32.mrb[0].mxu0
      %v2823 = vpop.f32.mrb[0].mxu0
      %v2824 = vadd.f32 0.0, %v2823
      %v2825 = vpop.f32.mrb[0].mxu0
      %2826 = vmatprep.mubr.bf16.mxu0 0
      %2827 = vmatmul.mubr.bf16.gmra.mrb[0].mxu0 %v1409
      %v2828 = vpop.f32.mrb[0].mxu0
      %v2829 = vadd.f32 0.0, %v2828
      %v2830 = vpop.f32.mrb[0].mxu0
      %v2831 = vpop.f32.mrb[0].mxu0
      %v2832 = vadd.f32 0.0, %v2831
      %v2833 = vpop.f32.mrb[0].mxu0
      %2834 = vmatprep.mubr.bf16.mxu0 0
      %2835 = vmatmul.mubr.bf16.gmra.mrb[0].mxu0 %v1410
      %v2836 = vpop.f32.mrb[0].mxu0
      %v2837 = vadd.f32 0.0, %v2836
      %v2838 = vpop.f32.mrb[0].mxu0
      %v2839 = vpop.f32.mrb[0].mxu0
      %v2840 = vadd.f32 0.0, %v2839
      %v2841 = vpop.f32.mrb[0].mxu0
      %2842 = vmatprep.mubr.bf16.mxu0 0
      %2843 = vmatmul.mubr.bf16.gmra.mrb[0].mxu0 %v1411
      %v2844 = vpop.f32.mrb[0].mxu0
      %v2845 = vadd.f32 0.0, %v2844
      %v2846 = vpop.f32.mrb[0].mxu0
      %v2847 = vpop.f32.mrb[0].mxu0
      %v2848 = vadd.f32 0.0, %v2847
      %v2849 = vpop.f32.mrb[0].mxu0
      %2850 = vmatprep.mubr.bf16.mxu0 0
      %2851 = vmatmul.mubr.bf16.gmra.mrb[0].mxu0 %v1412
      %v2852 = vpop.f32.mrb[0].mxu0
      %v2853 = vadd.f32 0.0, %v2852
      %v2854 = vpop.f32.mrb[0].mxu0
      %v2855 = vpop.f32.mrb[0].mxu0
      %v2856 = vadd.f32 0.0, %v2855
      %v2857 = vpop.f32.mrb[0].mxu0
      %2858 = vmatprep.mubr.bf16.mxu0 0
      %2859 = vmatmul.mubr.bf16.gmra.mrb[0].mxu0 %v1413
      %v2860 = vpop.f32.mrb[0].mxu0
      %v2861 = vadd.f32 0.0, %v2860
      %v2862 = vpop.f32.mrb[0].mxu0
      %v2863 = vpop.f32.mrb[0].mxu0
      %v2864 = vadd.f32 0.0, %v2863
      %v2865 = vpop.f32.mrb[0].mxu0
      %2866 = vmatprep.mubr.bf16.mxu0 0
      %2867 = vmatmul.mubr.bf16.gmra.mrb[0].mxu0 %v1414
      %v2868 = vpop.f32.mrb[0].mxu0
      %v2869 = vadd.f32 0.0, %v2868
      %v2870 = vpop.f32.mrb[0].mxu0
      %v2871 = vpop.f32.mrb[0].mxu0
      %v2872 = vadd.f32 0.0, %v2871
      %v2873 = vpop.f32.mrb[0].mxu0
      %2874 = vmatprep.mubr.bf16.mxu0 0
      %2875 = vmatmul.mubr.bf16.gmra.mrb[0].mxu0 %v1415
      %v2876 = vpop.f32.mrb[0].mxu0
      %v2877 = vadd.f32 0.0, %v2876
      %v2878 = vpop.f32.mrb[0].mxu0
      %v2879 = vpop.f32.mrb[0].mxu0
      %v2880 = vadd.f32 0.0, %v2879
      %v2881 = vpop.f32.mrb[0].mxu0
      %2882 = vmatprep.mubr.bf16.mxu0 0
      %2883 = vmatmul.mubr.bf16.gmra.mrb[0].mxu0 %v1416
      %v2884 = vpop.f32.mrb[0].mxu0
      %v2885 = vadd.f32 0.0, %v2884
      %v2886 = vpop.f32.mrb[0].mxu0
      %v2887 = vpop.f32.mrb[0].mxu0
      %v2888 = vadd.f32 0.0, %v2887
      %v2889 = vpop.f32.mrb[0].mxu0
      %2890 = vmatprep.mubr.bf16.mxu0 0
      %2891 = vmatmul.mubr.bf16.gmra.mrb[0].mxu0 %v1417
      %v2892 = vpop.f32.mrb[0].mxu0
      %v2893 = vadd.f32 0.0, %v2892
      %v2894 = vpop.f32.mrb[0].mxu0
      %v2895 = vpop.f32.mrb[0].mxu0
      %v2896 = vadd.f32 0.0, %v2895
      %v2897 = vpop.f32.mrb[0].mxu0
      %2898 = vmatprep.mubr.bf16.mxu0 0
      %2899 = vmatmul.mubr.bf16.gmra.mrb[0].mxu0 %v1418
      %v2900 = vpop.f32.mrb[0].mxu0
      %v2901 = vadd.f32 0.0, %v2900
      %v2902 = vpop.f32.mrb[0].mxu0
      %v2903 = vpop.f32.mrb[0].mxu0
      %v2904 = vadd.f32 0.0, %v2903
      %v2905 = vpop.f32.mrb[0].mxu0
      %2906 = vmatprep.mubr.bf16.mxu0 0
      %2907 = vmatmul.mubr.bf16.gmra.mrb[0].mxu0 %v1419
      %v2908 = vpop.f32.mrb[0].mxu0
      %v2909 = vadd.f32 0.0, %v2908
      %v2910 = vpop.f32.mrb[0].mxu0
      %v2911 = vpop.f32.mrb[0].mxu0
      %v2912 = vadd.f32 0.0, %v2911
      %v2913 = vpop.f32.mrb[0].mxu0
      %2914 = vmatprep.mubr.bf16.mxu0 0
      %2915 = vmatmul.mubr.bf16.gmra.mrb[0].mxu0 %v1420
      %v2916 = vpop.f32.mrb[0].mxu0
      %v2917 = vadd.f32 0.0, %v2916
      %v2918 = vpop.f32.mrb[0].mxu0
      %v2919 = vpop.f32.mrb[0].mxu0
      %v2920 = vadd.f32 0.0, %v2919
      %v2921 = vpop.f32.mrb[0].mxu0
      %2922 = vmatprep.mubr.bf16.mxu0 0
      %2923 = vmatmul.mubr.bf16.gmra.mrb[0].mxu0 %v1421
      %v2924 = vpop.f32.mrb[0].mxu0
      %v2925 = vadd.f32 0.0, %v2924
      %v2926 = vpop.f32.mrb[0].mxu0
      %v2927 = vpop.f32.mrb[0].mxu0
      %v2928 = vadd.f32 0.0, %v2927
      %v2929 = vpop.f32.mrb[0].mxu0
      %2930 = vmatprep.mubr.bf16.mxu0 0
      %2931 = vmatmul.mubr.bf16.gmra.mrb[0].mxu0 %v1422
      %v2932 = vpop.f32.mrb[0].mxu0
      %v2933 = vadd.f32 0.0, %v2932
      %v2934 = vpop.f32.mrb[0].mxu0
      %v2935 = vpop.f32.mrb[0].mxu0
      %v2936 = vadd.f32 0.0, %v2935
      %v2937 = vpop.f32.mrb[0].mxu0
      %2938 = vmatprep.mubr.bf16.mxu0 0
      %2939 = vmatmul.mubr.bf16.gmra.mrb[0].mxu0 %v1423
      %v2940 = vpop.f32.mrb[0].mxu0
      %v2941 = vadd.f32 0.0, %v2940
      %v2942 = vpop.f32.mrb[0].mxu0
      %v2943 = vpop.f32.mrb[0].mxu0
      %v2944 = vadd.f32 0.0, %v2943
      %v2945 = vpop.f32.mrb[0].mxu0
      %2946 = vmatprep.mubr.bf16.mxu0 0
      %2947 = vmatmul.mubr.bf16.gmra.mrb[0].mxu0 %v1424
      %v2948 = vpop.f32.mrb[0].mxu0
      %v2949 = vadd.f32 0.0, %v2948
      %v2950 = vpop.f32.mrb[0].mxu0
      %v2951 = vpop.f32.mrb[0].mxu0
      %v2952 = vadd.f32 0.0, %v2951
      %v2953 = vpop.f32.mrb[0].mxu0
      %2954 = vmatprep.mubr.bf16.mxu0 0
      %2955 = vmatmul.mubr.bf16.gmra.mrb[0].mxu0 %v1425
      %v2956 = vpop.f32.mrb[0].mxu0
      %v2957 = vadd.f32 0.0, %v2956
      %v2958 = vpop.f32.mrb[0].mxu0
      %v2959 = vpop.f32.mrb[0].mxu0
      %v2960 = vadd.f32 0.0, %v2959
      %v2961 = vpop.f32.mrb[0].mxu0
      %2962 = vmatprep.mubr.bf16.mxu0 0
      %2963 = vmatmul.mubr.bf16.gmra.mrb[0].mxu0 %v1426
      %v2964 = vpop.f32.mrb[0].mxu0
      %v2965 = vadd.f32 0.0, %v2964
      %v2966 = vpop.f32.mrb[0].mxu0
      %v2967 = vpop.f32.mrb[0].mxu0
      %v2968 = vadd.f32 0.0, %v2967
      %v2969 = vpop.f32.mrb[0].mxu0
      %2970 = vmatprep.mubr.bf16.mxu0 0
      %2971 = vmatmul.mubr.bf16.gmra.mrb[0].mxu0 %v1427
      %v2972 = vpop.f32.mrb[0].mxu0
      %v2973 = vadd.f32 0.0, %v2972
      %v2974 = vpop.f32.mrb[0].mxu0
      %v2975 = vpop.f32.mrb[0].mxu0
      %v2976 = vadd.f32 0.0, %v2975
      %v2977 = vpop.f32.mrb[0].mxu0
      %2978 = vmatprep.mubr.bf16.mxu0 0
      %2979 = vmatmul.mubr.bf16.gmra.mrb[0].mxu0 %v1428
      %v2980 = vpop.f32.mrb[0].mxu0
      %v2981 = vadd.f32 0.0, %v2980
      %v2982 = vpop.f32.mrb[0].mxu0
      %v2983 = vpop.f32.mrb[0].mxu0
      %v2984 = vadd.f32 0.0, %v2983
      %v2985 = vpop.f32.mrb[0].mxu0
      %2986 = vmatprep.mubr.bf16.mxu0 0
      %2987 = vmatmul.mubr.bf16.gmra.mrb[0].mxu0 %v1429
      %v2988 = vpop.f32.mrb[0].mxu0
      %v2989 = vadd.f32 0.0, %v2988
      %v2990 = vpop.f32.mrb[0].mxu0
      %v2991 = vpop.f32.mrb[0].mxu0
      %v2992 = vadd.f32 0.0, %v2991
      %v2993 = vpop.f32.mrb[0].mxu0
      %2994 = vmatprep.mubr.bf16.mxu0 0
      %2995 = vmatmul.mubr.bf16.gmra.mrb[0].mxu0 %v1430
      %v2996 = vpop.f32.mrb[0].mxu0
      %v2997 = vadd.f32 0.0, %v2996
      %v2998 = vpop.f32.mrb[0].mxu0
      %v2999 = vpop.f32.mrb[0].mxu0
      %v3000 = vadd.f32 0.0, %v2999
      %v3001 = vpop.f32.mrb[0].mxu0
      %3002 = vmatprep.mubr.bf16.mxu0 0
      %3003 = vmatmul.mubr.bf16.gmra.mrb[0].mxu0 %v1431
      %v3004 = vpop.f32.mrb[0].mxu0
      %v3005 = vadd.f32 0.0, %v3004
      %v3006 = vpop.f32.mrb[0].mxu0
      %v3007 = vpop.f32.mrb[0].mxu0
      %v3008 = vadd.f32 0.0, %v3007
      %v3009 = vpop.f32.mrb[0].mxu0
      %3010 = vmatprep.mubr.bf16.mxu0 0
      %3011 = vmatmul.mubr.bf16.gmra.mrb[0].mxu0 %v1432
      %v3012 = vpop.f32.mrb[0].mxu0
      %v3013 = vadd.f32 0.0, %v3012
      %v3014 = vpop.f32.mrb[0].mxu0
      %v3015 = vpop.f32.mrb[0].mxu0
      %v3016 = vadd.f32 0.0, %v3015
      %v3017 = vpop.f32.mrb[0].mxu0
      %3018 = vmatprep.mubr.bf16.mxu0 0
      %3019 = vmatmul.mubr.bf16.gmra.mrb[0].mxu0 %v1433
      %v3020 = vpop.f32.mrb[0].mxu0
      %v3021 = vadd.f32 0.0, %v3020
      %v3022 = vpop.f32.mrb[0].mxu0
      %v3023 = vpop.f32.mrb[0].mxu0
      %v3024 = vadd.f32 0.0, %v3023
      %v3025 = vpop.f32.mrb[0].mxu0
      %3026 = vmatprep.mubr.bf16.mxu0 0
      %3027 = vmatmul.mubr.bf16.gmra.mrb[0].mxu0 %v1434
      %v3028 = vpop.f32.mrb[0].mxu0
      %v3029 = vadd.f32 0.0, %v3028
      %v3030 = vpop.f32.mrb[0].mxu0
      %v3031 = vpop.f32.mrb[0].mxu0
      %v3032 = vadd.f32 0.0, %v3031
      %v3033 = vpop.f32.mrb[0].mxu0
      %3034 = vmatprep.mubr.bf16.mxu0 0
      %3035 = vmatmul.mubr.bf16.gmra.mrb[0].mxu0 %v1435
      %v3036 = vpop.f32.mrb[0].mxu0
      %v3037 = vadd.f32 0.0, %v3036
      %v3038 = vpop.f32.mrb[0].mxu0
      %v3039 = vpop.f32.mrb[0].mxu0
      %v3040 = vadd.f32 0.0, %v3039
      %v3041 = vpop.f32.mrb[0].mxu0
      %3042 = vmatprep.mubr.bf16.mxu0 0
      %3043 = vmatmul.mubr.bf16.gmra.mrb[0].mxu0 %v1436
      %v3044 = vpop.f32.mrb[0].mxu0
      %v3045 = vadd.f32 0.0, %v3044
      %v3046 = vpop.f32.mrb[0].mxu0
      %v3047 = vpop.f32.mrb[0].mxu0
      %v3048 = vadd.f32 0.0, %v3047
      %v3049 = vpop.f32.mrb[0].mxu0
      %3050 = vmatprep.mubr.bf16.mxu0 0
      %3051 = vmatmul.mubr.bf16.gmra.mrb[0].mxu0 %v1437
      %v3052 = vpop.f32.mrb[0].mxu0
      %v3053 = vadd.f32 0.0, %v3052
      %v3054 = vpop.f32.mrb[0].mxu0
      %v3055 = vpop.f32.mrb[0].mxu0
      %v3056 = vadd.f32 0.0, %v3055
      %v3057 = vpop.f32.mrb[0].mxu0
      %3058 = vmatprep.mubr.bf16.mxu0 0
      %3059 = vmatmul.mubr.bf16.gmra.mrb[0].mxu0 %v1438
      %v3060 = vpop.f32.mrb[0].mxu0
      %v3061 = vadd.f32 0.0, %v3060
      %v3062 = vpop.f32.mrb[0].mxu0
      %v3063 = vpop.f32.mrb[0].mxu0
      %v3064 = vadd.f32 0.0, %v3063
      %v3065 = vpop.f32.mrb[0].mxu0
      %3066 = vmatprep.mubr.bf16.mxu0 0
      %3067 = vmatmul.mubr.bf16.gmra.mrb[0].mxu0 %v1439
      %v3068 = vpop.f32.mrb[0].mxu0
      %v3069 = vadd.f32 0.0, %v3068
      %v3070 = vpop.f32.mrb[0].mxu0
      %v3071 = vpop.f32.mrb[0].mxu0
      %v3072 = vadd.f32 0.0, %v3071
      %v3073 = vpop.f32.mrb[0].mxu0
      %3074 = vmatprep.mubr.bf16.mxu0 0
      %3075 = vmatmul.mubr.bf16.gmra.mrb[0].mxu0 %v1440
      %v3076 = vpop.f32.mrb[0].mxu0
      %v3077 = vadd.f32 0.0, %v3076
      %v3078 = vpop.f32.mrb[0].mxu0
      %v3079 = vpop.f32.mrb[0].mxu0
      %v3080 = vadd.f32 0.0, %v3079
      %v3081 = vpop.f32.mrb[0].mxu0
      %3082 = vmatprep.mubr.bf16.mxu0 0
      %3083 = vmatmul.mubr.bf16.gmra.mrb[0].mxu0 %v1441
      %v3084 = vpop.f32.mrb[0].mxu0
      %v3085 = vadd.f32 0.0, %v3084
      %v3086 = vpop.f32.mrb[0].mxu0
      %v3087 = vpop.f32.mrb[0].mxu0
      %v3088 = vadd.f32 0.0, %v3087
      %v3089 = vpop.f32.mrb[0].mxu0
      %3090 = vmatprep.mubr.bf16.mxu0 0
      %3091 = vmatmul.mubr.bf16.gmra.mrb[0].mxu0 %v1442
      %v3092 = vpop.f32.mrb[0].mxu0
      %v3093 = vadd.f32 0.0, %v3092
      %v3094 = vpop.f32.mrb[0].mxu0
      %v3095 = vpop.f32.mrb[0].mxu0
      %v3096 = vadd.f32 0.0, %v3095
      %v3097 = vpop.f32.mrb[0].mxu0
      %3098 = vdwg.mxu0
      %v3099 = vld [vmem:[%s2] sm:$0x1]
      %v3101 = vlaneseq
      %v3102 = vshrl.u32 %v3101, 7
      %v3103 = vsub.s32 0, %v3102
      %v3104 = vrot.slane %v3099, %v3103
      %v3106 = vmul.f32 %v1701, %v3104
      %v3107 = vmul.f32 %v1704, %v3104
      %v3108 = vmul.f32 %v1709, %v3104
      %v3109 = vmul.f32 %v1712, %v3104
      %v3110 = vmul.f32 %v1717, %v3104
      %v3111 = vmul.f32 %v1720, %v3104
      %v3112 = vmul.f32 %v1725, %v3104
      %v3113 = vmul.f32 %v1728, %v3104
      %v3114 = vmul.f32 %v1733, %v3104
      %v3115 = vmul.f32 %v1736, %v3104
      %v3116 = vmul.f32 %v1741, %v3104
      %v3117 = vmul.f32 %v1744, %v3104
      %v3118 = vmul.f32 %v1749, %v3104
      %v3119 = vmul.f32 %v1752, %v3104
      %v3120 = vmul.f32 %v1757, %v3104
      %v3121 = vmul.f32 %v1760, %v3104
      %v3122 = vmul.f32 %v1765, %v3104
      %v3123 = vmul.f32 %v1768, %v3104
      %v3124 = vmul.f32 %v1773, %v3104
      %v3125 = vmul.f32 %v1776, %v3104
      %v3126 = vmul.f32 %v1781, %v3104
      %v3127 = vmul.f32 %v1784, %v3104
      %v3128 = vmul.f32 %v1789, %v3104
      %v3129 = vmul.f32 %v1792, %v3104
      %v3130 = vmul.f32 %v1797, %v3104
      %v3131 = vmul.f32 %v1800, %v3104
      %v3132 = vmul.f32 %v1805, %v3104
      %v3133 = vmul.f32 %v1808, %v3104
      %v3134 = vmul.f32 %v1813, %v3104
      %v3135 = vmul.f32 %v1816, %v3104
      %v3136 = vmul.f32 %v1821, %v3104
      %v3137 = vmul.f32 %v1824, %v3104
      %v3138 = vmul.f32 %v1829, %v3104
      %v3139 = vmul.f32 %v1832, %v3104
      %v3140 = vmul.f32 %v1837, %v3104
      %v3141 = vmul.f32 %v1840, %v3104
      %v3142 = vmul.f32 %v1845, %v3104
      %v3143 = vmul.f32 %v1848, %v3104
      %v3144 = vmul.f32 %v1853, %v3104
      %v3145 = vmul.f32 %v1856, %v3104
      %v3146 = vmul.f32 %v1861, %v3104
      %v3147 = vmul.f32 %v1864, %v3104
      %v3148 = vmul.f32 %v1869, %v3104
      %v3149 = vmul.f32 %v1872, %v3104
      %v3150 = vmul.f32 %v1877, %v3104
      %v3151 = vmul.f32 %v1880, %v3104
      %v3152 = vmul.f32 %v1885, %v3104
      %v3153 = vmul.f32 %v1888, %v3104
      %v3154 = vmul.f32 %v1893, %v3104
      %v3155 = vmul.f32 %v1896, %v3104
      %v3156 = vmul.f32 %v1901, %v3104
      %v3157 = vmul.f32 %v1904, %v3104
      %v3158 = vmul.f32 %v1909, %v3104
      %v3159 = vmul.f32 %v1912, %v3104
      %v3160 = vmul.f32 %v1917, %v3104
      %v3161 = vmul.f32 %v1920, %v3104
      %v3162 = vmul.f32 %v1925, %v3104
      %v3163 = vmul.f32 %v1928, %v3104
      %v3164 = vmul.f32 %v1933, %v3104
      %v3165 = vmul.f32 %v1936, %v3104
      %v3166 = vmul.f32 %v1941, %v3104
      %v3167 = vmul.f32 %v1944, %v3104
      %v3168 = vmul.f32 %v1949, %v3104
      %v3169 = vmul.f32 %v1952, %v3104
      %v3170 = vmul.f32 %v1957, %v3104
      %v3171 = vmul.f32 %v1960, %v3104
      %v3172 = vmul.f32 %v1965, %v3104
      %v3173 = vmul.f32 %v1968, %v3104
      %v3174 = vmul.f32 %v1973, %v3104
      %v3175 = vmul.f32 %v1976, %v3104
      %v3176 = vmul.f32 %v1981, %v3104
      %v3177 = vmul.f32 %v1984, %v3104
      %v3178 = vmul.f32 %v1989, %v3104
      %v3179 = vmul.f32 %v1992, %v3104
      %v3180 = vmul.f32 %v1997, %v3104
      %v3181 = vmul.f32 %v2000, %v3104
      %v3182 = vmul.f32 %v2005, %v3104
      %v3183 = vmul.f32 %v2008, %v3104
      %v3184 = vmul.f32 %v2013, %v3104
      %v3185 = vmul.f32 %v2016, %v3104
      %v3186 = vmul.f32 %v2021, %v3104
      %v3187 = vmul.f32 %v2024, %v3104
      %v3188 = vmul.f32 %v2029, %v3104
      %v3189 = vmul.f32 %v2032, %v3104
      %v3190 = vmul.f32 %v2037, %v3104
      %v3191 = vmul.f32 %v2040, %v3104
      %v3192 = vmul.f32 %v2045, %v3104
      %v3193 = vmul.f32 %v2048, %v3104
      %v3194 = vmul.f32 %v2053, %v3104
      %v3195 = vmul.f32 %v2056, %v3104
      %v3196 = vmul.f32 %v2061, %v3104
      %v3197 = vmul.f32 %v2064, %v3104
      %v3198 = vmul.f32 %v2069, %v3104
      %v3199 = vmul.f32 %v2072, %v3104
      %v3200 = vmul.f32 %v2077, %v3104
      %v3201 = vmul.f32 %v2080, %v3104
      %v3202 = vmul.f32 %v2085, %v3104
      %v3203 = vmul.f32 %v2088, %v3104
      %v3204 = vmul.f32 %v2093, %v3104
      %v3205 = vmul.f32 %v2096, %v3104
      %v3206 = vmul.f32 %v2101, %v3104
      %v3207 = vmul.f32 %v2104, %v3104
      %v3208 = vmul.f32 %v2109, %v3104
      %v3209 = vmul.f32 %v2112, %v3104
      %v3210 = vmul.f32 %v2117, %v3104
      %v3211 = vmul.f32 %v2120, %v3104
      %v3212 = vmul.f32 %v2125, %v3104
      %v3213 = vmul.f32 %v2128, %v3104
      %v3214 = vmul.f32 %v2133, %v3104
      %v3215 = vmul.f32 %v2136, %v3104
      %v3216 = vmul.f32 %v2141, %v3104
      %v3217 = vmul.f32 %v2144, %v3104
      %v3218 = vmul.f32 %v2149, %v3104
      %v3219 = vmul.f32 %v2152, %v3104
      %v3220 = vmul.f32 %v2157, %v3104
      %v3221 = vmul.f32 %v2160, %v3104
      %v3222 = vmul.f32 %v2165, %v3104
      %v3223 = vmul.f32 %v2168, %v3104
      %v3224 = vmul.f32 %v2173, %v3104
      %v3225 = vmul.f32 %v2176, %v3104
      %v3226 = vmul.f32 %v2181, %v3104
      %v3227 = vmul.f32 %v2184, %v3104
      %v3228 = vmul.f32 %v2189, %v3104
      %v3229 = vmul.f32 %v2192, %v3104
      %v3230 = vmul.f32 %v2197, %v3104
      %v3231 = vmul.f32 %v2200, %v3104
      %v3232 = vmul.f32 %v2205, %v3104
      %v3233 = vmul.f32 %v2208, %v3104
      %v3234 = vmul.f32 %v2213, %v3104
      %v3235 = vmul.f32 %v2216, %v3104
      %v3236 = vmul.f32 %v2221, %v3104
      %v3237 = vmul.f32 %v2224, %v3104
      %v3238 = vmul.f32 %v2229, %v3104
      %v3239 = vmul.f32 %v2232, %v3104
      %v3240 = vmul.f32 %v2237, %v3104
      %v3241 = vmul.f32 %v2240, %v3104
      %v3242 = vmul.f32 %v2245, %v3104
      %v3243 = vmul.f32 %v2248, %v3104
      %v3244 = vmul.f32 %v2253, %v3104
      %v3245 = vmul.f32 %v2256, %v3104
      %v3246 = vmul.f32 %v2261, %v3104
      %v3247 = vmul.f32 %v2264, %v3104
      %v3248 = vmul.f32 %v2269, %v3104
      %v3249 = vmul.f32 %v2272, %v3104
      %v3250 = vmul.f32 %v2277, %v3104
      %v3251 = vmul.f32 %v2280, %v3104
      %v3252 = vmul.f32 %v2285, %v3104
      %v3253 = vmul.f32 %v2288, %v3104
      %v3254 = vmul.f32 %v2293, %v3104
      %v3255 = vmul.f32 %v2296, %v3104
      %v3256 = vmul.f32 %v2301, %v3104
      %v3257 = vmul.f32 %v2304, %v3104
      %v3258 = vmul.f32 %v2309, %v3104
      %v3259 = vmul.f32 %v2312, %v3104
      %v3260 = vmul.f32 %v2317, %v3104
      %v3261 = vmul.f32 %v2320, %v3104
      %v3262 = vmul.f32 %v2325, %v3104
      %v3263 = vmul.f32 %v2328, %v3104
      %v3264 = vmul.f32 %v2333, %v3104
      %v3265 = vmul.f32 %v2336, %v3104
      %v3266 = vmul.f32 %v2341, %v3104
      %v3267 = vmul.f32 %v2344, %v3104
      %v3268 = vmul.f32 %v2349, %v3104
      %v3269 = vmul.f32 %v2352, %v3104
      %v3270 = vmul.f32 %v2357, %v3104
      %v3271 = vmul.f32 %v2360, %v3104
      %v3272 = vmul.f32 %v2365, %v3104
      %v3273 = vmul.f32 %v2368, %v3104
      %v3274 = vmul.f32 %v2373, %v3104
      %v3275 = vmul.f32 %v2376, %v3104
      %v3276 = vmul.f32 %v2381, %v3104
      %v3277 = vmul.f32 %v2384, %v3104
      %v3278 = vmul.f32 %v2389, %v3104
      %v3279 = vmul.f32 %v2392, %v3104
      %v3280 = vmul.f32 %v2397, %v3104
      %v3281 = vmul.f32 %v2400, %v3104
      %v3282 = vmul.f32 %v2405, %v3104
      %v3283 = vmul.f32 %v2408, %v3104
      %v3284 = vmul.f32 %v2413, %v3104
      %v3285 = vmul.f32 %v2416, %v3104
      %v3286 = vmul.f32 %v2421, %v3104
      %v3287 = vmul.f32 %v2424, %v3104
      %v3288 = vmul.f32 %v2429, %v3104
      %v3289 = vmul.f32 %v2432, %v3104
      %v3290 = vmul.f32 %v2437, %v3104
      %v3291 = vmul.f32 %v2440, %v3104
      %v3292 = vmul.f32 %v2445, %v3104
      %v3293 = vmul.f32 %v2448, %v3104
      %v3294 = vmul.f32 %v2453, %v3104
      %v3295 = vmul.f32 %v2456, %v3104
      %v3296 = vmul.f32 %v2461, %v3104
      %v3297 = vmul.f32 %v2464, %v3104
      %v3298 = vmul.f32 %v2469, %v3104
      %v3299 = vmul.f32 %v2472, %v3104
      %v3300 = vmul.f32 %v2477, %v3104
      %v3301 = vmul.f32 %v2480, %v3104
      %v3302 = vmul.f32 %v2485, %v3104
      %v3303 = vmul.f32 %v2488, %v3104
      %v3304 = vmul.f32 %v2493, %v3104
      %v3305 = vmul.f32 %v2496, %v3104
      %v3306 = vmul.f32 %v2501, %v3104
      %v3307 = vmul.f32 %v2504, %v3104
      %v3308 = vmul.f32 %v2509, %v3104
      %v3309 = vmul.f32 %v2512, %v3104
      %v3310 = vmul.f32 %v2517, %v3104
      %v3311 = vmul.f32 %v2520, %v3104
      %v3312 = vmul.f32 %v2525, %v3104
      %v3313 = vmul.f32 %v2528, %v3104
      %v3314 = vmul.f32 %v2533, %v3104
      %v3315 = vmul.f32 %v2536, %v3104
      %v3316 = vmul.f32 %v2541, %v3104
      %v3317 = vmul.f32 %v2544, %v3104
      %v3318 = vmul.f32 %v2549, %v3104
      %v3319 = vmul.f32 %v2552, %v3104
      %v3320 = vmul.f32 %v2557, %v3104
      %v3321 = vmul.f32 %v2560, %v3104
      %v3322 = vmul.f32 %v2565, %v3104
      %v3323 = vmul.f32 %v2568, %v3104
      %v3324 = vmul.f32 %v2573, %v3104
      %v3325 = vmul.f32 %v2576, %v3104
      %v3326 = vmul.f32 %v2581, %v3104
      %v3327 = vmul.f32 %v2584, %v3104
      %v3328 = vmul.f32 %v2589, %v3104
      %v3329 = vmul.f32 %v2592, %v3104
      %v3330 = vmul.f32 %v2597, %v3104
      %v3331 = vmul.f32 %v2600, %v3104
      %v3332 = vmul.f32 %v2605, %v3104
      %v3333 = vmul.f32 %v2608, %v3104
      %v3334 = vmul.f32 %v2613, %v3104
      %v3335 = vmul.f32 %v2616, %v3104
      %v3336 = vmul.f32 %v2621, %v3104
      %v3337 = vmul.f32 %v2624, %v3104
      %v3338 = vmul.f32 %v2629, %v3104
      %v3339 = vmul.f32 %v2632, %v3104
      %v3340 = vmul.f32 %v2637, %v3104
      %v3341 = vmul.f32 %v2640, %v3104
      %v3342 = vmul.f32 %v2645, %v3104
      %v3343 = vmul.f32 %v2648, %v3104
      %v3344 = vmul.f32 %v2653, %v3104
      %v3345 = vmul.f32 %v2656, %v3104
      %v3346 = vmul.f32 %v2661, %v3104
      %v3347 = vmul.f32 %v2664, %v3104
      %v3348 = vmul.f32 %v2669, %v3104
      %v3349 = vmul.f32 %v2672, %v3104
      %v3350 = vmul.f32 %v2677, %v3104
      %v3351 = vmul.f32 %v2680, %v3104
      %v3352 = vmul.f32 %v2685, %v3104
      %v3353 = vmul.f32 %v2688, %v3104
      %v3354 = vmul.f32 %v2693, %v3104
      %v3355 = vmul.f32 %v2696, %v3104
      %v3356 = vmul.f32 %v2701, %v3104
      %v3357 = vmul.f32 %v2704, %v3104
      %v3358 = vmul.f32 %v2709, %v3104
      %v3359 = vmul.f32 %v2712, %v3104
      %v3360 = vmul.f32 %v2717, %v3104
      %v3361 = vmul.f32 %v2720, %v3104
      %v3362 = vmul.f32 %v2725, %v3104
      %v3363 = vmul.f32 %v2728, %v3104
      %v3364 = vmul.f32 %v2733, %v3104
      %v3365 = vmul.f32 %v2736, %v3104
      %v3366 = vmul.f32 %v2741, %v3104
      %v3367 = vmul.f32 %v2744, %v3104
      %v3368 = vmul.f32 %v2749, %v3104
      %v3369 = vmul.f32 %v2752, %v3104
      %v3370 = vmul.f32 %v2757, %v3104
      %v3371 = vmul.f32 %v2760, %v3104
      %v3372 = vmul.f32 %v2765, %v3104
      %v3373 = vmul.f32 %v2768, %v3104
      %v3374 = vmul.f32 %v2773, %v3104
      %v3375 = vmul.f32 %v2776, %v3104
      %v3376 = vmul.f32 %v2781, %v3104
      %v3377 = vmul.f32 %v2784, %v3104
      %v3378 = vmul.f32 %v2789, %v3104
      %v3379 = vmul.f32 %v2792, %v3104
      %v3380 = vmul.f32 %v2797, %v3104
      %v3381 = vmul.f32 %v2800, %v3104
      %v3382 = vmul.f32 %v2805, %v3104
      %v3383 = vmul.f32 %v2808, %v3104
      %v3384 = vmul.f32 %v2813, %v3104
      %v3385 = vmul.f32 %v2816, %v3104
      %v3386 = vmul.f32 %v2821, %v3104
      %v3387 = vmul.f32 %v2824, %v3104
      %v3388 = vmul.f32 %v2829, %v3104
      %v3389 = vmul.f32 %v2832, %v3104
      %v3390 = vmul.f32 %v2837, %v3104
      %v3391 = vmul.f32 %v2840, %v3104
      %v3392 = vmul.f32 %v2845, %v3104
      %v3393 = vmul.f32 %v2848, %v3104
      %v3394 = vmul.f32 %v2853, %v3104
      %v3395 = vmul.f32 %v2856, %v3104
      %v3396 = vmul.f32 %v2861, %v3104
      %v3397 = vmul.f32 %v2864, %v3104
      %v3398 = vmul.f32 %v2869, %v3104
      %v3399 = vmul.f32 %v2872, %v3104
      %v3400 = vmul.f32 %v2877, %v3104
      %v3401 = vmul.f32 %v2880, %v3104
      %v3402 = vmul.f32 %v2885, %v3104
      %v3403 = vmul.f32 %v2888, %v3104
      %v3404 = vmul.f32 %v2893, %v3104
      %v3405 = vmul.f32 %v2896, %v3104
      %v3406 = vmul.f32 %v2901, %v3104
      %v3407 = vmul.f32 %v2904, %v3104
      %v3408 = vmul.f32 %v2909, %v3104
      %v3409 = vmul.f32 %v2912, %v3104
      %v3410 = vmul.f32 %v2917, %v3104
      %v3411 = vmul.f32 %v2920, %v3104
      %v3412 = vmul.f32 %v2925, %v3104
      %v3413 = vmul.f32 %v2928, %v3104
      %v3414 = vmul.f32 %v2933, %v3104
      %v3415 = vmul.f32 %v2936, %v3104
      %v3416 = vmul.f32 %v2941, %v3104
      %v3417 = vmul.f32 %v2944, %v3104
      %v3418 = vmul.f32 %v2949, %v3104
      %v3419 = vmul.f32 %v2952, %v3104
      %v3420 = vmul.f32 %v2957, %v3104
      %v3421 = vmul.f32 %v2960, %v3104
      %v3422 = vmul.f32 %v2965, %v3104
      %v3423 = vmul.f32 %v2968, %v3104
      %v3424 = vmul.f32 %v2973, %v3104
      %v3425 = vmul.f32 %v2976, %v3104
      %v3426 = vmul.f32 %v2981, %v3104
      %v3427 = vmul.f32 %v2984, %v3104
      %v3428 = vmul.f32 %v2989, %v3104
      %v3429 = vmul.f32 %v2992, %v3104
      %v3430 = vmul.f32 %v2997, %v3104
      %v3431 = vmul.f32 %v3000, %v3104
      %v3432 = vmul.f32 %v3005, %v3104
      %v3433 = vmul.f32 %v3008, %v3104
      %v3434 = vmul.f32 %v3013, %v3104
      %v3435 = vmul.f32 %v3016, %v3104
      %v3436 = vmul.f32 %v3021, %v3104
      %v3437 = vmul.f32 %v3024, %v3104
      %v3438 = vmul.f32 %v3029, %v3104
      %v3439 = vmul.f32 %v3032, %v3104
      %v3440 = vmul.f32 %v3037, %v3104
      %v3441 = vmul.f32 %v3040, %v3104
      %v3442 = vmul.f32 %v3045, %v3104
      %v3443 = vmul.f32 %v3048, %v3104
      %v3444 = vmul.f32 %v3053, %v3104
      %v3445 = vmul.f32 %v3056, %v3104
      %v3446 = vmul.f32 %v3061, %v3104
      %v3447 = vmul.f32 %v3064, %v3104
      %v3448 = vmul.f32 %v3069, %v3104
      %v3449 = vmul.f32 %v3072, %v3104
      %v3450 = vmul.f32 %v3077, %v3104
      %v3451 = vmul.f32 %v3080, %v3104
      %v3452 = vmul.f32 %v3085, %v3104
      %v3453 = vmul.f32 %v3088, %v3104
      %v3454 = vmul.f32 %v3093, %v3104
      %v3455 = vmul.f32 %v3096, %v3104
      %v3456 = vld [vmem:[%s3] sm:$0x1]
      %v3458 = vlaneseq
      %v3459 = vshrl.u32 %v3458, 7
      %v3460 = vsub.s32 0, %v3459
      %v3461 = vrot.slane %v3456, %v3460
      %v3463 = vadd.f32 %v3106, %v3461
      %v3464 = vadd.f32 %v3107, %v3461
      %v3465 = vadd.f32 %v3108, %v3461
      %v3466 = vadd.f32 %v3109, %v3461
      %v3467 = vadd.f32 %v3110, %v3461
      %v3468 = vadd.f32 %v3111, %v3461
      %v3469 = vadd.f32 %v3112, %v3461
      %v3470 = vadd.f32 %v3113, %v3461
      %v3471 = vadd.f32 %v3114, %v3461
      %v3472 = vadd.f32 %v3115, %v3461
      %v3473 = vadd.f32 %v3116, %v3461
      %v3474 = vadd.f32 %v3117, %v3461
      %v3475 = vadd.f32 %v3118, %v3461
      %v3476 = vadd.f32 %v3119, %v3461
      %v3477 = vadd.f32 %v3120, %v3461
      %v3478 = vadd.f32 %v3121, %v3461
      %v3479 = vadd.f32 %v3122, %v3461
      %v3480 = vadd.f32 %v3123, %v3461
      %v3481 = vadd.f32 %v3124, %v3461
      %v3482 = vadd.f32 %v3125, %v3461
      %v3483 = vadd.f32 %v3126, %v3461
      %v3484 = vadd.f32 %v3127, %v3461
      %v3485 = vadd.f32 %v3128, %v3461
      %v3486 = vadd.f32 %v3129, %v3461
      %v3487 = vadd.f32 %v3130, %v3461
      %v3488 = vadd.f32 %v3131, %v3461
      %v3489 = vadd.f32 %v3132, %v3461
      %v3490 = vadd.f32 %v3133, %v3461
      %v3491 = vadd.f32 %v3134, %v3461
      %v3492 = vadd.f32 %v3135, %v3461
      %v3493 = vadd.f32 %v3136, %v3461
      %v3494 = vadd.f32 %v3137, %v3461
      %v3495 = vadd.f32 %v3138, %v3461
      %v3496 = vadd.f32 %v3139, %v3461
      %v3497 = vadd.f32 %v3140, %v3461
      %v3498 = vadd.f32 %v3141, %v3461
      %v3499 = vadd.f32 %v3142, %v3461
      %v3500 = vadd.f32 %v3143, %v3461
      %v3501 = vadd.f32 %v3144, %v3461
      %v3502 = vadd.f32 %v3145, %v3461
      %v3503 = vadd.f32 %v3146, %v3461
      %v3504 = vadd.f32 %v3147, %v3461
      %v3505 = vadd.f32 %v3148, %v3461
      %v3506 = vadd.f32 %v3149, %v3461
      %v3507 = vadd.f32 %v3150, %v3461
      %v3508 = vadd.f32 %v3151, %v3461
      %v3509 = vadd.f32 %v3152, %v3461
      %v3510 = vadd.f32 %v3153, %v3461
      %v3511 = vadd.f32 %v3154, %v3461
      %v3512 = vadd.f32 %v3155, %v3461
      %v3513 = vadd.f32 %v3156, %v3461
      %v3514 = vadd.f32 %v3157, %v3461
      %v3515 = vadd.f32 %v3158, %v3461
      %v3516 = vadd.f32 %v3159, %v3461
      %v3517 = vadd.f32 %v3160, %v3461
      %v3518 = vadd.f32 %v3161, %v3461
      %v3519 = vadd.f32 %v3162, %v3461
      %v3520 = vadd.f32 %v3163, %v3461
      %v3521 = vadd.f32 %v3164, %v3461
      %v3522 = vadd.f32 %v3165, %v3461
      %v3523 = vadd.f32 %v3166, %v3461
      %v3524 = vadd.f32 %v3167, %v3461
      %v3525 = vadd.f32 %v3168, %v3461
      %v3526 = vadd.f32 %v3169, %v3461
      %v3527 = vadd.f32 %v3170, %v3461
      %v3528 = vadd.f32 %v3171, %v3461
      %v3529 = vadd.f32 %v3172, %v3461
      %v3530 = vadd.f32 %v3173, %v3461
      %v3531 = vadd.f32 %v3174, %v3461
      %v3532 = vadd.f32 %v3175, %v3461
      %v3533 = vadd.f32 %v3176, %v3461
      %v3534 = vadd.f32 %v3177, %v3461
      %v3535 = vadd.f32 %v3178, %v3461
      %v3536 = vadd.f32 %v3179, %v3461
      %v3537 = vadd.f32 %v3180, %v3461
      %v3538 = vadd.f32 %v3181, %v3461
      %v3539 = vadd.f32 %v3182, %v3461
      %v3540 = vadd.f32 %v3183, %v3461
      %v3541 = vadd.f32 %v3184, %v3461
      %v3542 = vadd.f32 %v3185, %v3461
      %v3543 = vadd.f32 %v3186, %v3461
      %v3544 = vadd.f32 %v3187, %v3461
      %v3545 = vadd.f32 %v3188, %v3461
      %v3546 = vadd.f32 %v3189, %v3461
      %v3547 = vadd.f32 %v3190, %v3461
      %v3548 = vadd.f32 %v3191, %v3461
      %v3549 = vadd.f32 %v3192, %v3461
      %v3550 = vadd.f32 %v3193, %v3461
      %v3551 = vadd.f32 %v3194, %v3461
      %v3552 = vadd.f32 %v3195, %v3461
      %v3553 = vadd.f32 %v3196, %v3461
      %v3554 = vadd.f32 %v3197, %v3461
      %v3555 = vadd.f32 %v3198, %v3461
      %v3556 = vadd.f32 %v3199, %v3461
      %v3557 = vadd.f32 %v3200, %v3461
      %v3558 = vadd.f32 %v3201, %v3461
      %v3559 = vadd.f32 %v3202, %v3461
      %v3560 = vadd.f32 %v3203, %v3461
      %v3561 = vadd.f32 %v3204, %v3461
      %v3562 = vadd.f32 %v3205, %v3461
      %v3563 = vadd.f32 %v3206, %v3461
      %v3564 = vadd.f32 %v3207, %v3461
      %v3565 = vadd.f32 %v3208, %v3461
      %v3566 = vadd.f32 %v3209, %v3461
      %v3567 = vadd.f32 %v3210, %v3461
      %v3568 = vadd.f32 %v3211, %v3461
      %v3569 = vadd.f32 %v3212, %v3461
      %v3570 = vadd.f32 %v3213, %v3461
      %v3571 = vadd.f32 %v3214, %v3461
      %v3572 = vadd.f32 %v3215, %v3461
      %v3573 = vadd.f32 %v3216, %v3461
      %v3574 = vadd.f32 %v3217, %v3461
      %v3575 = vadd.f32 %v3218, %v3461
      %v3576 = vadd.f32 %v3219, %v3461
      %v3577 = vadd.f32 %v3220, %v3461
      %v3578 = vadd.f32 %v3221, %v3461
      %v3579 = vadd.f32 %v3222, %v3461
      %v3580 = vadd.f32 %v3223, %v3461
      %v3581 = vadd.f32 %v3224, %v3461
      %v3582 = vadd.f32 %v3225, %v3461
      %v3583 = vadd.f32 %v3226, %v3461
      %v3584 = vadd.f32 %v3227, %v3461
      %v3585 = vadd.f32 %v3228, %v3461
      %v3586 = vadd.f32 %v3229, %v3461
      %v3587 = vadd.f32 %v3230, %v3461
      %v3588 = vadd.f32 %v3231, %v3461
      %v3589 = vadd.f32 %v3232, %v3461
      %v3590 = vadd.f32 %v3233, %v3461
      %v3591 = vadd.f32 %v3234, %v3461
      %v3592 = vadd.f32 %v3235, %v3461
      %v3593 = vadd.f32 %v3236, %v3461
      %v3594 = vadd.f32 %v3237, %v3461
      %v3595 = vadd.f32 %v3238, %v3461
      %v3596 = vadd.f32 %v3239, %v3461
      %v3597 = vadd.f32 %v3240, %v3461
      %v3598 = vadd.f32 %v3241, %v3461
      %v3599 = vadd.f32 %v3242, %v3461
      %v3600 = vadd.f32 %v3243, %v3461
      %v3601 = vadd.f32 %v3244, %v3461
      %v3602 = vadd.f32 %v3245, %v3461
      %v3603 = vadd.f32 %v3246, %v3461
      %v3604 = vadd.f32 %v3247, %v3461
      %v3605 = vadd.f32 %v3248, %v3461
      %v3606 = vadd.f32 %v3249, %v3461
      %v3607 = vadd.f32 %v3250, %v3461
      %v3608 = vadd.f32 %v3251, %v3461
      %v3609 = vadd.f32 %v3252, %v3461
      %v3610 = vadd.f32 %v3253, %v3461
      %v3611 = vadd.f32 %v3254, %v3461
      %v3612 = vadd.f32 %v3255, %v3461
      %v3613 = vadd.f32 %v3256, %v3461
      %v3614 = vadd.f32 %v3257, %v3461
      %v3615 = vadd.f32 %v3258, %v3461
      %v3616 = vadd.f32 %v3259, %v3461
      %v3617 = vadd.f32 %v3260, %v3461
      %v3618 = vadd.f32 %v3261, %v3461
      %v3619 = vadd.f32 %v3262, %v3461
      %v3620 = vadd.f32 %v3263, %v3461
      %v3621 = vadd.f32 %v3264, %v3461
      %v3622 = vadd.f32 %v3265, %v3461
      %v3623 = vadd.f32 %v3266, %v3461
      %v3624 = vadd.f32 %v3267, %v3461
      %v3625 = vadd.f32 %v3268, %v3461
      %v3626 = vadd.f32 %v3269, %v3461
      %v3627 = vadd.f32 %v3270, %v3461
      %v3628 = vadd.f32 %v3271, %v3461
      %v3629 = vadd.f32 %v3272, %v3461
      %v3630 = vadd.f32 %v3273, %v3461
      %v3631 = vadd.f32 %v3274, %v3461
      %v3632 = vadd.f32 %v3275, %v3461
      %v3633 = vadd.f32 %v3276, %v3461
      %v3634 = vadd.f32 %v3277, %v3461
      %v3635 = vadd.f32 %v3278, %v3461
      %v3636 = vadd.f32 %v3279, %v3461
      %v3637 = vadd.f32 %v3280, %v3461
      %v3638 = vadd.f32 %v3281, %v3461
      %v3639 = vadd.f32 %v3282, %v3461
      %v3640 = vadd.f32 %v3283, %v3461
      %v3641 = vadd.f32 %v3284, %v3461
      %v3642 = vadd.f32 %v3285, %v3461
      %v3643 = vadd.f32 %v3286, %v3461
      %v3644 = vadd.f32 %v3287, %v3461
      %v3645 = vadd.f32 %v3288, %v3461
      %v3646 = vadd.f32 %v3289, %v3461
      %v3647 = vadd.f32 %v3290, %v3461
      %v3648 = vadd.f32 %v3291, %v3461
      %v3649 = vadd.f32 %v3292, %v3461
      %v3650 = vadd.f32 %v3293, %v3461
      %v3651 = vadd.f32 %v3294, %v3461
      %v3652 = vadd.f32 %v3295, %v3461
      %v3653 = vadd.f32 %v3296, %v3461
      %v3654 = vadd.f32 %v3297, %v3461
      %v3655 = vadd.f32 %v3298, %v3461
      %v3656 = vadd.f32 %v3299, %v3461
      %v3657 = vadd.f32 %v3300, %v3461
      %v3658 = vadd.f32 %v3301, %v3461
      %v3659 = vadd.f32 %v3302, %v3461
      %v3660 = vadd.f32 %v3303, %v3461
      %v3661 = vadd.f32 %v3304, %v3461
      %v3662 = vadd.f32 %v3305, %v3461
      %v3663 = vadd.f32 %v3306, %v3461
      %v3664 = vadd.f32 %v3307, %v3461
      %v3665 = vadd.f32 %v3308, %v3461
      %v3666 = vadd.f32 %v3309, %v3461
      %v3667 = vadd.f32 %v3310, %v3461
      %v3668 = vadd.f32 %v3311, %v3461
      %v3669 = vadd.f32 %v3312, %v3461
      %v3670 = vadd.f32 %v3313, %v3461
      %v3671 = vadd.f32 %v3314, %v3461
      %v3672 = vadd.f32 %v3315, %v3461
      %v3673 = vadd.f32 %v3316, %v3461
      %v3674 = vadd.f32 %v3317, %v3461
      %v3675 = vadd.f32 %v3318, %v3461
      %v3676 = vadd.f32 %v3319, %v3461
      %v3677 = vadd.f32 %v3320, %v3461
      %v3678 = vadd.f32 %v3321, %v3461
      %v3679 = vadd.f32 %v3322, %v3461
      %v3680 = vadd.f32 %v3323, %v3461
      %v3681 = vadd.f32 %v3324, %v3461
      %v3682 = vadd.f32 %v3325, %v3461
      %v3683 = vadd.f32 %v3326, %v3461
      %v3684 = vadd.f32 %v3327, %v3461
      %v3685 = vadd.f32 %v3328, %v3461
      %v3686 = vadd.f32 %v3329, %v3461
      %v3687 = vadd.f32 %v3330, %v3461
      %v3688 = vadd.f32 %v3331, %v3461
      %v3689 = vadd.f32 %v3332, %v3461
      %v3690 = vadd.f32 %v3333, %v3461
      %v3691 = vadd.f32 %v3334, %v3461
      %v3692 = vadd.f32 %v3335, %v3461
      %v3693 = vadd.f32 %v3336, %v3461
      %v3694 = vadd.f32 %v3337, %v3461
      %v3695 = vadd.f32 %v3338, %v3461
      %v3696 = vadd.f32 %v3339, %v3461
      %v3697 = vadd.f32 %v3340, %v3461
      %v3698 = vadd.f32 %v3341, %v3461
      %v3699 = vadd.f32 %v3342, %v3461
      %v3700 = vadd.f32 %v3343, %v3461
      %v3701 = vadd.f32 %v3344, %v3461
      %v3702 = vadd.f32 %v3345, %v3461
      %v3703 = vadd.f32 %v3346, %v3461
      %v3704 = vadd.f32 %v3347, %v3461
      %v3705 = vadd.f32 %v3348, %v3461
      %v3706 = vadd.f32 %v3349, %v3461
      %v3707 = vadd.f32 %v3350, %v3461
      %v3708 = vadd.f32 %v3351, %v3461
      %v3709 = vadd.f32 %v3352, %v3461
      %v3710 = vadd.f32 %v3353, %v3461
      %v3711 = vadd.f32 %v3354, %v3461
      %v3712 = vadd.f32 %v3355, %v3461
      %v3713 = vadd.f32 %v3356, %v3461
      %v3714 = vadd.f32 %v3357, %v3461
      %v3715 = vadd.f32 %v3358, %v3461
      %v3716 = vadd.f32 %v3359, %v3461
      %v3717 = vadd.f32 %v3360, %v3461
      %v3718 = vadd.f32 %v3361, %v3461
      %v3719 = vadd.f32 %v3362, %v3461
      %v3720 = vadd.f32 %v3363, %v3461
      %v3721 = vadd.f32 %v3364, %v3461
      %v3722 = vadd.f32 %v3365, %v3461
      %v3723 = vadd.f32 %v3366, %v3461
      %v3724 = vadd.f32 %v3367, %v3461
      %v3725 = vadd.f32 %v3368, %v3461
      %v3726 = vadd.f32 %v3369, %v3461
      %v3727 = vadd.f32 %v3370, %v3461
      %v3728 = vadd.f32 %v3371, %v3461
      %v3729 = vadd.f32 %v3372, %v3461
      %v3730 = vadd.f32 %v3373, %v3461
      %v3731 = vadd.f32 %v3374, %v3461
      %v3732 = vadd.f32 %v3375, %v3461
      %v3733 = vadd.f32 %v3376, %v3461
      %v3734 = vadd.f32 %v3377, %v3461
      %v3735 = vadd.f32 %v3378, %v3461
      %v3736 = vadd.f32 %v3379, %v3461
      %v3737 = vadd.f32 %v3380, %v3461
      %v3738 = vadd.f32 %v3381, %v3461
      %v3739 = vadd.f32 %v3382, %v3461
      %v3740 = vadd.f32 %v3383, %v3461
      %v3741 = vadd.f32 %v3384, %v3461
      %v3742 = vadd.f32 %v3385, %v3461
      %v3743 = vadd.f32 %v3386, %v3461
      %v3744 = vadd.f32 %v3387, %v3461
      %v3745 = vadd.f32 %v3388, %v3461
      %v3746 = vadd.f32 %v3389, %v3461
      %v3747 = vadd.f32 %v3390, %v3461
      %v3748 = vadd.f32 %v3391, %v3461
      %v3749 = vadd.f32 %v3392, %v3461
      %v3750 = vadd.f32 %v3393, %v3461
      %v3751 = vadd.f32 %v3394, %v3461
      %v3752 = vadd.f32 %v3395, %v3461
      %v3753 = vadd.f32 %v3396, %v3461
      %v3754 = vadd.f32 %v3397, %v3461
      %v3755 = vadd.f32 %v3398, %v3461
      %v3756 = vadd.f32 %v3399, %v3461
      %v3757 = vadd.f32 %v3400, %v3461
      %v3758 = vadd.f32 %v3401, %v3461
      %v3759 = vadd.f32 %v3402, %v3461
      %v3760 = vadd.f32 %v3403, %v3461
      %v3761 = vadd.f32 %v3404, %v3461
      %v3762 = vadd.f32 %v3405, %v3461
      %v3763 = vadd.f32 %v3406, %v3461
      %v3764 = vadd.f32 %v3407, %v3461
      %v3765 = vadd.f32 %v3408, %v3461
      %v3766 = vadd.f32 %v3409, %v3461
      %v3767 = vadd.f32 %v3410, %v3461
      %v3768 = vadd.f32 %v3411, %v3461
      %v3769 = vadd.f32 %v3412, %v3461
      %v3770 = vadd.f32 %v3413, %v3461
      %v3771 = vadd.f32 %v3414, %v3461
      %v3772 = vadd.f32 %v3415, %v3461
      %v3773 = vadd.f32 %v3416, %v3461
      %v3774 = vadd.f32 %v3417, %v3461
      %v3775 = vadd.f32 %v3418, %v3461
      %v3776 = vadd.f32 %v3419, %v3461
      %v3777 = vadd.f32 %v3420, %v3461
      %v3778 = vadd.f32 %v3421, %v3461
      %v3779 = vadd.f32 %v3422, %v3461
      %v3780 = vadd.f32 %v3423, %v3461
      %v3781 = vadd.f32 %v3424, %v3461
      %v3782 = vadd.f32 %v3425, %v3461
      %v3783 = vadd.f32 %v3426, %v3461
      %v3784 = vadd.f32 %v3427, %v3461
      %v3785 = vadd.f32 %v3428, %v3461
      %v3786 = vadd.f32 %v3429, %v3461
      %v3787 = vadd.f32 %v3430, %v3461
      %v3788 = vadd.f32 %v3431, %v3461
      %v3789 = vadd.f32 %v3432, %v3461
      %v3790 = vadd.f32 %v3433, %v3461
      %v3791 = vadd.f32 %v3434, %v3461
      %v3792 = vadd.f32 %v3435, %v3461
      %v3793 = vadd.f32 %v3436, %v3461
      %v3794 = vadd.f32 %v3437, %v3461
      %v3795 = vadd.f32 %v3438, %v3461
      %v3796 = vadd.f32 %v3439, %v3461
      %v3797 = vadd.f32 %v3440, %v3461
      %v3798 = vadd.f32 %v3441, %v3461
      %v3799 = vadd.f32 %v3442, %v3461
      %v3800 = vadd.f32 %v3443, %v3461
      %v3801 = vadd.f32 %v3444, %v3461
      %v3802 = vadd.f32 %v3445, %v3461
      %v3803 = vadd.f32 %v3446, %v3461
      %v3804 = vadd.f32 %v3447, %v3461
      %v3805 = vadd.f32 %v3448, %v3461
      %v3806 = vadd.f32 %v3449, %v3461
      %v3807 = vadd.f32 %v3450, %v3461
      %v3808 = vadd.f32 %v3451, %v3461
      %v3809 = vadd.f32 %v3452, %v3461
      %v3810 = vadd.f32 %v3453, %v3461
      %v3811 = vadd.f32 %v3454, %v3461
      %v3812 = vadd.f32 %v3455, %v3461
      %v3813 = vmax.f32 %v3463, 0.0
      %v3814 = vmax.f32 %v3464, 0.0
      %v3815 = vmax.f32 %v3465, 0.0
      %v3816 = vmax.f32 %v3466, 0.0
      %v3817 = vmax.f32 %v3467, 0.0
      %v3818 = vmax.f32 %v3468, 0.0
      %v3819 = vmax.f32 %v3469, 0.0
      %v3820 = vmax.f32 %v3470, 0.0
      %v3821 = vmax.f32 %v3471, 0.0
      %v3822 = vmax.f32 %v3472, 0.0
      %v3823 = vmax.f32 %v3473, 0.0
      %v3824 = vmax.f32 %v3474, 0.0
      %v3825 = vmax.f32 %v3475, 0.0
      %v3826 = vmax.f32 %v3476, 0.0
      %v3827 = vmax.f32 %v3477, 0.0
      %v3828 = vmax.f32 %v3478, 0.0
      %v3829 = vmax.f32 %v3479, 0.0
      %v3830 = vmax.f32 %v3480, 0.0
      %v3831 = vmax.f32 %v3481, 0.0
      %v3832 = vmax.f32 %v3482, 0.0
      %v3833 = vmax.f32 %v3483, 0.0
      %v3834 = vmax.f32 %v3484, 0.0
      %v3835 = vmax.f32 %v3485, 0.0
      %v3836 = vmax.f32 %v3486, 0.0
      %v3837 = vmax.f32 %v3487, 0.0
      %v3838 = vmax.f32 %v3488, 0.0
      %v3839 = vmax.f32 %v3489, 0.0
      %v3840 = vmax.f32 %v3490, 0.0
      %v3841 = vmax.f32 %v3491, 0.0
      %v3842 = vmax.f32 %v3492, 0.0
      %v3843 = vmax.f32 %v3493, 0.0
      %v3844 = vmax.f32 %v3494, 0.0
      %v3845 = vmax.f32 %v3495, 0.0
      %v3846 = vmax.f32 %v3496, 0.0
      %v3847 = vmax.f32 %v3497, 0.0
      %v3848 = vmax.f32 %v3498, 0.0
      %v3849 = vmax.f32 %v3499, 0.0
      %v3850 = vmax.f32 %v3500, 0.0
      %v3851 = vmax.f32 %v3501, 0.0
      %v3852 = vmax.f32 %v3502, 0.0
      %v3853 = vmax.f32 %v3503, 0.0
      %v3854 = vmax.f32 %v3504, 0.0
      %v3855 = vmax.f32 %v3505, 0.0
      %v3856 = vmax.f32 %v3506, 0.0
      %v3857 = vmax.f32 %v3507, 0.0
      %v3858 = vmax.f32 %v3508, 0.0
      %v3859 = vmax.f32 %v3509, 0.0
      %v3860 = vmax.f32 %v3510, 0.0
      %v3861 = vmax.f32 %v3511, 0.0
      %v3862 = vmax.f32 %v3512, 0.0
      %v3863 = vmax.f32 %v3513, 0.0
      %v3864 = vmax.f32 %v3514, 0.0
      %v3865 = vmax.f32 %v3515, 0.0
      %v3866 = vmax.f32 %v3516, 0.0
      %v3867 = vmax.f32 %v3517, 0.0
      %v3868 = vmax.f32 %v3518, 0.0
      %v3869 = vmax.f32 %v3519, 0.0
      %v3870 = vmax.f32 %v3520, 0.0
      %v3871 = vmax.f32 %v3521, 0.0
      %v3872 = vmax.f32 %v3522, 0.0
      %v3873 = vmax.f32 %v3523, 0.0
      %v3874 = vmax.f32 %v3524, 0.0
      %v3875 = vmax.f32 %v3525, 0.0
      %v3876 = vmax.f32 %v3526, 0.0
      %v3877 = vmax.f32 %v3527, 0.0
      %v3878 = vmax.f32 %v3528, 0.0
      %v3879 = vmax.f32 %v3529, 0.0
      %v3880 = vmax.f32 %v3530, 0.0
      %v3881 = vmax.f32 %v3531, 0.0
      %v3882 = vmax.f32 %v3532, 0.0
      %v3883 = vmax.f32 %v3533, 0.0
      %v3884 = vmax.f32 %v3534, 0.0
      %v3885 = vmax.f32 %v3535, 0.0
      %v3886 = vmax.f32 %v3536, 0.0
      %v3887 = vmax.f32 %v3537, 0.0
      %v3888 = vmax.f32 %v3538, 0.0
      %v3889 = vmax.f32 %v3539, 0.0
      %v3890 = vmax.f32 %v3540, 0.0
      %v3891 = vmax.f32 %v3541, 0.0
      %v3892 = vmax.f32 %v3542, 0.0
      %v3893 = vmax.f32 %v3543, 0.0
      %v3894 = vmax.f32 %v3544, 0.0
      %v3895 = vmax.f32 %v3545, 0.0
      %v3896 = vmax.f32 %v3546, 0.0
      %v3897 = vmax.f32 %v3547, 0.0
      %v3898 = vmax.f32 %v3548, 0.0
      %v3899 = vmax.f32 %v3549, 0.0
      %v3900 = vmax.f32 %v3550, 0.0
      %v3901 = vmax.f32 %v3551, 0.0
      %v3902 = vmax.f32 %v3552, 0.0
      %v3903 = vmax.f32 %v3553, 0.0
      %v3904 = vmax.f32 %v3554, 0.0
      %v3905 = vmax.f32 %v3555, 0.0
      %v3906 = vmax.f32 %v3556, 0.0
      %v3907 = vmax.f32 %v3557, 0.0
      %v3908 = vmax.f32 %v3558, 0.0
      %v3909 = vmax.f32 %v3559, 0.0
      %v3910 = vmax.f32 %v3560, 0.0
      %v3911 = vmax.f32 %v3561, 0.0
      %v3912 = vmax.f32 %v3562, 0.0
      %v3913 = vmax.f32 %v3563, 0.0
      %v3914 = vmax.f32 %v3564, 0.0
      %v3915 = vmax.f32 %v3565, 0.0
      %v3916 = vmax.f32 %v3566, 0.0
      %v3917 = vmax.f32 %v3567, 0.0
      %v3918 = vmax.f32 %v3568, 0.0
      %v3919 = vmax.f32 %v3569, 0.0
      %v3920 = vmax.f32 %v3570, 0.0
      %v3921 = vmax.f32 %v3571, 0.0
      %v3922 = vmax.f32 %v3572, 0.0
      %v3923 = vmax.f32 %v3573, 0.0
      %v3924 = vmax.f32 %v3574, 0.0
      %v3925 = vmax.f32 %v3575, 0.0
      %v3926 = vmax.f32 %v3576, 0.0
      %v3927 = vmax.f32 %v3577, 0.0
      %v3928 = vmax.f32 %v3578, 0.0
      %v3929 = vmax.f32 %v3579, 0.0
      %v3930 = vmax.f32 %v3580, 0.0
      %v3931 = vmax.f32 %v3581, 0.0
      %v3932 = vmax.f32 %v3582, 0.0
      %v3933 = vmax.f32 %v3583, 0.0
      %v3934 = vmax.f32 %v3584, 0.0
      %v3935 = vmax.f32 %v3585, 0.0
      %v3936 = vmax.f32 %v3586, 0.0
      %v3937 = vmax.f32 %v3587, 0.0
      %v3938 = vmax.f32 %v3588, 0.0
      %v3939 = vmax.f32 %v3589, 0.0
      %v3940 = vmax.f32 %v3590, 0.0
      %v3941 = vmax.f32 %v3591, 0.0
      %v3942 = vmax.f32 %v3592, 0.0
      %v3943 = vmax.f32 %v3593, 0.0
      %v3944 = vmax.f32 %v3594, 0.0
      %v3945 = vmax.f32 %v3595, 0.0
      %v3946 = vmax.f32 %v3596, 0.0
      %v3947 = vmax.f32 %v3597, 0.0
      %v3948 = vmax.f32 %v3598, 0.0
      %v3949 = vmax.f32 %v3599, 0.0
      %v3950 = vmax.f32 %v3600, 0.0
      %v3951 = vmax.f32 %v3601, 0.0
      %v3952 = vmax.f32 %v3602, 0.0
      %v3953 = vmax.f32 %v3603, 0.0
      %v3954 = vmax.f32 %v3604, 0.0
      %v3955 = vmax.f32 %v3605, 0.0
      %v3956 = vmax.f32 %v3606, 0.0
      %v3957 = vmax.f32 %v3607, 0.0
      %v3958 = vmax.f32 %v3608, 0.0
      %v3959 = vmax.f32 %v3609, 0.0
      %v3960 = vmax.f32 %v3610, 0.0
      %v3961 = vmax.f32 %v3611, 0.0
      %v3962 = vmax.f32 %v3612, 0.0
      %v3963 = vmax.f32 %v3613, 0.0
      %v3964 = vmax.f32 %v3614, 0.0
      %v3965 = vmax.f32 %v3615, 0.0
      %v3966 = vmax.f32 %v3616, 0.0
      %v3967 = vmax.f32 %v3617, 0.0
      %v3968 = vmax.f32 %v3618, 0.0
      %v3969 = vmax.f32 %v3619, 0.0
      %v3970 = vmax.f32 %v3620, 0.0
      %v3971 = vmax.f32 %v3621, 0.0
      %v3972 = vmax.f32 %v3622, 0.0
      %v3973 = vmax.f32 %v3623, 0.0
      %v3974 = vmax.f32 %v3624, 0.0
      %v3975 = vmax.f32 %v3625, 0.0
      %v3976 = vmax.f32 %v3626, 0.0
      %v3977 = vmax.f32 %v3627, 0.0
      %v3978 = vmax.f32 %v3628, 0.0
      %v3979 = vmax.f32 %v3629, 0.0
      %v3980 = vmax.f32 %v3630, 0.0
      %v3981 = vmax.f32 %v3631, 0.0
      %v3982 = vmax.f32 %v3632, 0.0
      %v3983 = vmax.f32 %v3633, 0.0
      %v3984 = vmax.f32 %v3634, 0.0
      %v3985 = vmax.f32 %v3635, 0.0
      %v3986 = vmax.f32 %v3636, 0.0
      %v3987 = vmax.f32 %v3637, 0.0
      %v3988 = vmax.f32 %v3638, 0.0
      %v3989 = vmax.f32 %v3639, 0.0
      %v3990 = vmax.f32 %v3640, 0.0
      %v3991 = vmax.f32 %v3641, 0.0
      %v3992 = vmax.f32 %v3642, 0.0
      %v3993 = vmax.f32 %v3643, 0.0
      %v3994 = vmax.f32 %v3644, 0.0
      %v3995 = vmax.f32 %v3645, 0.0
      %v3996 = vmax.f32 %v3646, 0.0
      %v3997 = vmax.f32 %v3647, 0.0
      %v3998 = vmax.f32 %v3648, 0.0
      %v3999 = vmax.f32 %v3649, 0.0
      %v4000 = vmax.f32 %v3650, 0.0
      %v4001 = vmax.f32 %v3651, 0.0
      %v4002 = vmax.f32 %v3652, 0.0
      %v4003 = vmax.f32 %v3653, 0.0
      %v4004 = vmax.f32 %v3654, 0.0
      %v4005 = vmax.f32 %v3655, 0.0
      %v4006 = vmax.f32 %v3656, 0.0
      %v4007 = vmax.f32 %v3657, 0.0
      %v4008 = vmax.f32 %v3658, 0.0
      %v4009 = vmax.f32 %v3659, 0.0
      %v4010 = vmax.f32 %v3660, 0.0
      %v4011 = vmax.f32 %v3661, 0.0
      %v4012 = vmax.f32 %v3662, 0.0
      %v4013 = vmax.f32 %v3663, 0.0
      %v4014 = vmax.f32 %v3664, 0.0
      %v4015 = vmax.f32 %v3665, 0.0
      %v4016 = vmax.f32 %v3666, 0.0
      %v4017 = vmax.f32 %v3667, 0.0
      %v4018 = vmax.f32 %v3668, 0.0
      %v4019 = vmax.f32 %v3669, 0.0
      %v4020 = vmax.f32 %v3670, 0.0
      %v4021 = vmax.f32 %v3671, 0.0
      %v4022 = vmax.f32 %v3672, 0.0
      %v4023 = vmax.f32 %v3673, 0.0
      %v4024 = vmax.f32 %v3674, 0.0
      %v4025 = vmax.f32 %v3675, 0.0
      %v4026 = vmax.f32 %v3676, 0.0
      %v4027 = vmax.f32 %v3677, 0.0
      %v4028 = vmax.f32 %v3678, 0.0
      %v4029 = vmax.f32 %v3679, 0.0
      %v4030 = vmax.f32 %v3680, 0.0
      %v4031 = vmax.f32 %v3681, 0.0
      %v4032 = vmax.f32 %v3682, 0.0
      %v4033 = vmax.f32 %v3683, 0.0
      %v4034 = vmax.f32 %v3684, 0.0
      %v4035 = vmax.f32 %v3685, 0.0
      %v4036 = vmax.f32 %v3686, 0.0
      %v4037 = vmax.f32 %v3687, 0.0
      %v4038 = vmax.f32 %v3688, 0.0
      %v4039 = vmax.f32 %v3689, 0.0
      %v4040 = vmax.f32 %v3690, 0.0
      %v4041 = vmax.f32 %v3691, 0.0
      %v4042 = vmax.f32 %v3692, 0.0
      %v4043 = vmax.f32 %v3693, 0.0
      %v4044 = vmax.f32 %v3694, 0.0
      %v4045 = vmax.f32 %v3695, 0.0
      %v4046 = vmax.f32 %v3696, 0.0
      %v4047 = vmax.f32 %v3697, 0.0
      %v4048 = vmax.f32 %v3698, 0.0
      %v4049 = vmax.f32 %v3699, 0.0
      %v4050 = vmax.f32 %v3700, 0.0
      %v4051 = vmax.f32 %v3701, 0.0
      %v4052 = vmax.f32 %v3702, 0.0
      %v4053 = vmax.f32 %v3703, 0.0
      %v4054 = vmax.f32 %v3704, 0.0
      %v4055 = vmax.f32 %v3705, 0.0
      %v4056 = vmax.f32 %v3706, 0.0
      %v4057 = vmax.f32 %v3707, 0.0
      %v4058 = vmax.f32 %v3708, 0.0
      %v4059 = vmax.f32 %v3709, 0.0
      %v4060 = vmax.f32 %v3710, 0.0
      %v4061 = vmax.f32 %v3711, 0.0
      %v4062 = vmax.f32 %v3712, 0.0
      %v4063 = vmax.f32 %v3713, 0.0
      %v4064 = vmax.f32 %v3714, 0.0
      %v4065 = vmax.f32 %v3715, 0.0
      %v4066 = vmax.f32 %v3716, 0.0
      %v4067 = vmax.f32 %v3717, 0.0
      %v4068 = vmax.f32 %v3718, 0.0
      %v4069 = vmax.f32 %v3719, 0.0
      %v4070 = vmax.f32 %v3720, 0.0
      %v4071 = vmax.f32 %v3721, 0.0
      %v4072 = vmax.f32 %v3722, 0.0
      %v4073 = vmax.f32 %v3723, 0.0
      %v4074 = vmax.f32 %v3724, 0.0
      %v4075 = vmax.f32 %v3725, 0.0
      %v4076 = vmax.f32 %v3726, 0.0
      %v4077 = vmax.f32 %v3727, 0.0
      %v4078 = vmax.f32 %v3728, 0.0
      %v4079 = vmax.f32 %v3729, 0.0
      %v4080 = vmax.f32 %v3730, 0.0
      %v4081 = vmax.f32 %v3731, 0.0
      %v4082 = vmax.f32 %v3732, 0.0
      %v4083 = vmax.f32 %v3733, 0.0
      %v4084 = vmax.f32 %v3734, 0.0
      %v4085 = vmax.f32 %v3735, 0.0
      %v4086 = vmax.f32 %v3736, 0.0
      %v4087 = vmax.f32 %v3737, 0.0
      %v4088 = vmax.f32 %v3738, 0.0
      %v4089 = vmax.f32 %v3739, 0.0
      %v4090 = vmax.f32 %v3740, 0.0
      %v4091 = vmax.f32 %v3741, 0.0
      %v4092 = vmax.f32 %v3742, 0.0
      %v4093 = vmax.f32 %v3743, 0.0
      %v4094 = vmax.f32 %v3744, 0.0
      %v4095 = vmax.f32 %v3745, 0.0
      %v4096 = vmax.f32 %v3746, 0.0
      %v4097 = vmax.f32 %v3747, 0.0
      %v4098 = vmax.f32 %v3748, 0.0
      %v4099 = vmax.f32 %v3749, 0.0
      %v4100 = vmax.f32 %v3750, 0.0
      %v4101 = vmax.f32 %v3751, 0.0
      %v4102 = vmax.f32 %v3752, 0.0
      %v4103 = vmax.f32 %v3753, 0.0
      %v4104 = vmax.f32 %v3754, 0.0
      %v4105 = vmax.f32 %v3755, 0.0
      %v4106 = vmax.f32 %v3756, 0.0
      %v4107 = vmax.f32 %v3757, 0.0
      %v4108 = vmax.f32 %v3758, 0.0
      %v4109 = vmax.f32 %v3759, 0.0
      %v4110 = vmax.f32 %v3760, 0.0
      %v4111 = vmax.f32 %v3761, 0.0
      %v4112 = vmax.f32 %v3762, 0.0
      %v4113 = vmax.f32 %v3763, 0.0
      %v4114 = vmax.f32 %v3764, 0.0
      %v4115 = vmax.f32 %v3765, 0.0
      %v4116 = vmax.f32 %v3766, 0.0
      %v4117 = vmax.f32 %v3767, 0.0
      %v4118 = vmax.f32 %v3768, 0.0
      %v4119 = vmax.f32 %v3769, 0.0
      %v4120 = vmax.f32 %v3770, 0.0
      %v4121 = vmax.f32 %v3771, 0.0
      %v4122 = vmax.f32 %v3772, 0.0
      %v4123 = vmax.f32 %v3773, 0.0
      %v4124 = vmax.f32 %v3774, 0.0
      %v4125 = vmax.f32 %v3775, 0.0
      %v4126 = vmax.f32 %v3776, 0.0
      %v4127 = vmax.f32 %v3777, 0.0
      %v4128 = vmax.f32 %v3778, 0.0
      %v4129 = vmax.f32 %v3779, 0.0
      %v4130 = vmax.f32 %v3780, 0.0
      %v4131 = vmax.f32 %v3781, 0.0
      %v4132 = vmax.f32 %v3782, 0.0
      %v4133 = vmax.f32 %v3783, 0.0
      %v4134 = vmax.f32 %v3784, 0.0
      %v4135 = vmax.f32 %v3785, 0.0
      %v4136 = vmax.f32 %v3786, 0.0
      %v4137 = vmax.f32 %v3787, 0.0
      %v4138 = vmax.f32 %v3788, 0.0
      %v4139 = vmax.f32 %v3789, 0.0
      %v4140 = vmax.f32 %v3790, 0.0
      %v4141 = vmax.f32 %v3791, 0.0
      %v4142 = vmax.f32 %v3792, 0.0
      %v4143 = vmax.f32 %v3793, 0.0
      %v4144 = vmax.f32 %v3794, 0.0
      %v4145 = vmax.f32 %v3795, 0.0
      %v4146 = vmax.f32 %v3796, 0.0
      %v4147 = vmax.f32 %v3797, 0.0
      %v4148 = vmax.f32 %v3798, 0.0
      %v4149 = vmax.f32 %v3799, 0.0
      %v4150 = vmax.f32 %v3800, 0.0
      %v4151 = vmax.f32 %v3801, 0.0
      %v4152 = vmax.f32 %v3802, 0.0
      %v4153 = vmax.f32 %v3803, 0.0
      %v4154 = vmax.f32 %v3804, 0.0
      %v4155 = vmax.f32 %v3805, 0.0
      %v4156 = vmax.f32 %v3806, 0.0
      %v4157 = vmax.f32 %v3807, 0.0
      %v4158 = vmax.f32 %v3808, 0.0
      %v4159 = vmax.f32 %v3809, 0.0
      %v4160 = vmax.f32 %v3810, 0.0
      %v4161 = vmax.f32 %v3811, 0.0
      %v4162 = vmax.f32 %v3812, 0.0
      %v4163 = vpack.c.bf16 %v3814, %v3813
      %v4164 = vpack.c.bf16 %v3816, %v3815
      %v4165 = vpack.c.bf16 %v3818, %v3817
      %v4166 = vpack.c.bf16 %v3820, %v3819
      %v4167 = vpack.c.bf16 %v3822, %v3821
      %v4168 = vpack.c.bf16 %v3824, %v3823
      %v4169 = vpack.c.bf16 %v3826, %v3825
      %v4170 = vpack.c.bf16 %v3828, %v3827
      %v4171 = vpack.c.bf16 %v3830, %v3829
      %v4172 = vpack.c.bf16 %v3832, %v3831
      %v4173 = vpack.c.bf16 %v3834, %v3833
      %v4174 = vpack.c.bf16 %v3836, %v3835
      %v4175 = vpack.c.bf16 %v3838, %v3837
      %v4176 = vpack.c.bf16 %v3840, %v3839
      %v4177 = vpack.c.bf16 %v3842, %v3841
      %v4178 = vpack.c.bf16 %v3844, %v3843
      %v4179 = vpack.c.bf16 %v3846, %v3845
      %v4180 = vpack.c.bf16 %v3848, %v3847
      %v4181 = vpack.c.bf16 %v3850, %v3849
      %v4182 = vpack.c.bf16 %v3852, %v3851
      %v4183 = vpack.c.bf16 %v3854, %v3853
      %v4184 = vpack.c.bf16 %v3856, %v3855
      %v4185 = vpack.c.bf16 %v3858, %v3857
      %v4186 = vpack.c.bf16 %v3860, %v3859
      %v4187 = vpack.c.bf16 %v3862, %v3861
      %v4188 = vpack.c.bf16 %v3864, %v3863
      %v4189 = vpack.c.bf16 %v3866, %v3865
      %v4190 = vpack.c.bf16 %v3868, %v3867
      %v4191 = vpack.c.bf16 %v3870, %v3869
      %v4192 = vpack.c.bf16 %v3872, %v3871
      %v4193 = vpack.c.bf16 %v3874, %v3873
      %v4194 = vpack.c.bf16 %v3876, %v3875
      %v4195 = vpack.c.bf16 %v3878, %v3877
      %v4196 = vpack.c.bf16 %v3880, %v3879
      %v4197 = vpack.c.bf16 %v3882, %v3881
      %v4198 = vpack.c.bf16 %v3884, %v3883
      %v4199 = vpack.c.bf16 %v3886, %v3885
      %v4200 = vpack.c.bf16 %v3888, %v3887
      %v4201 = vpack.c.bf16 %v3890, %v3889
      %v4202 = vpack.c.bf16 %v3892, %v3891
      %v4203 = vpack.c.bf16 %v3894, %v3893
      %v4204 = vpack.c.bf16 %v3896, %v3895
      %v4205 = vpack.c.bf16 %v3898, %v3897
      %v4206 = vpack.c.bf16 %v3900, %v3899
      %v4207 = vpack.c.bf16 %v3902, %v3901
      %v4208 = vpack.c.bf16 %v3904, %v3903
      %v4209 = vpack.c.bf16 %v3906, %v3905
      %v4210 = vpack.c.bf16 %v3908, %v3907
      %v4211 = vpack.c.bf16 %v3910, %v3909
      %v4212 = vpack.c.bf16 %v3912, %v3911
      %v4213 = vpack.c.bf16 %v3914, %v3913
      %v4214 = vpack.c.bf16 %v3916, %v3915
      %v4215 = vpack.c.bf16 %v3918, %v3917
      %v4216 = vpack.c.bf16 %v3920, %v3919
      %v4217 = vpack.c.bf16 %v3922, %v3921
      %v4218 = vpack.c.bf16 %v3924, %v3923
      %v4219 = vpack.c.bf16 %v3926, %v3925
      %v4220 = vpack.c.bf16 %v3928, %v3927
      %v4221 = vpack.c.bf16 %v3930, %v3929
      %v4222 = vpack.c.bf16 %v3932, %v3931
      %v4223 = vpack.c.bf16 %v3934, %v3933
      %v4224 = vpack.c.bf16 %v3936, %v3935
      %v4225 = vpack.c.bf16 %v3938, %v3937
      %v4226 = vpack.c.bf16 %v3940, %v3939
      %v4227 = vpack.c.bf16 %v3942, %v3941
      %v4228 = vpack.c.bf16 %v3944, %v3943
      %v4229 = vpack.c.bf16 %v3946, %v3945
      %v4230 = vpack.c.bf16 %v3948, %v3947
      %v4231 = vpack.c.bf16 %v3950, %v3949
      %v4232 = vpack.c.bf16 %v3952, %v3951
      %v4233 = vpack.c.bf16 %v3954, %v3953
      %v4234 = vpack.c.bf16 %v3956, %v3955
      %v4235 = vpack.c.bf16 %v3958, %v3957
      %v4236 = vpack.c.bf16 %v3960, %v3959
      %v4237 = vpack.c.bf16 %v3962, %v3961
      %v4238 = vpack.c.bf16 %v3964, %v3963
      %v4239 = vpack.c.bf16 %v3966, %v3965
      %v4240 = vpack.c.bf16 %v3968, %v3967
      %v4241 = vpack.c.bf16 %v3970, %v3969
      %v4242 = vpack.c.bf16 %v3972, %v3971
      %v4243 = vpack.c.bf16 %v3974, %v3973
      %v4244 = vpack.c.bf16 %v3976, %v3975
      %v4245 = vpack.c.bf16 %v3978, %v3977
      %v4246 = vpack.c.bf16 %v3980, %v3979
      %v4247 = vpack.c.bf16 %v3982, %v3981
      %v4248 = vpack.c.bf16 %v3984, %v3983
      %v4249 = vpack.c.bf16 %v3986, %v3985
      %v4250 = vpack.c.bf16 %v3988, %v3987
      %v4251 = vpack.c.bf16 %v3990, %v3989
      %v4252 = vpack.c.bf16 %v3992, %v3991
      %v4253 = vpack.c.bf16 %v3994, %v3993
      %v4254 = vpack.c.bf16 %v3996, %v3995
      %v4255 = vpack.c.bf16 %v3998, %v3997
      %v4256 = vpack.c.bf16 %v4000, %v3999
      %v4257 = vpack.c.bf16 %v4002, %v4001
      %v4258 = vpack.c.bf16 %v4004, %v4003
      %v4259 = vpack.c.bf16 %v4006, %v4005
      %v4260 = vpack.c.bf16 %v4008, %v4007
      %v4261 = vpack.c.bf16 %v4010, %v4009
      %v4262 = vpack.c.bf16 %v4012, %v4011
      %v4263 = vpack.c.bf16 %v4014, %v4013
      %v4264 = vpack.c.bf16 %v4016, %v4015
      %v4265 = vpack.c.bf16 %v4018, %v4017
      %v4266 = vpack.c.bf16 %v4020, %v4019
      %v4267 = vpack.c.bf16 %v4022, %v4021
      %v4268 = vpack.c.bf16 %v4024, %v4023
      %v4269 = vpack.c.bf16 %v4026, %v4025
      %v4270 = vpack.c.bf16 %v4028, %v4027
      %v4271 = vpack.c.bf16 %v4030, %v4029
      %v4272 = vpack.c.bf16 %v4032, %v4031
      %v4273 = vpack.c.bf16 %v4034, %v4033
      %v4274 = vpack.c.bf16 %v4036, %v4035
      %v4275 = vpack.c.bf16 %v4038, %v4037
      %v4276 = vpack.c.bf16 %v4040, %v4039
      %v4277 = vpack.c.bf16 %v4042, %v4041
      %v4278 = vpack.c.bf16 %v4044, %v4043
      %v4279 = vpack.c.bf16 %v4046, %v4045
      %v4280 = vpack.c.bf16 %v4048, %v4047
      %v4281 = vpack.c.bf16 %v4050, %v4049
      %v4282 = vpack.c.bf16 %v4052, %v4051
      %v4283 = vpack.c.bf16 %v4054, %v4053
      %v4284 = vpack.c.bf16 %v4056, %v4055
      %v4285 = vpack.c.bf16 %v4058, %v4057
      %v4286 = vpack.c.bf16 %v4060, %v4059
      %v4287 = vpack.c.bf16 %v4062, %v4061
      %v4288 = vpack.c.bf16 %v4064, %v4063
      %v4289 = vpack.c.bf16 %v4066, %v4065
      %v4290 = vpack.c.bf16 %v4068, %v4067
      %v4291 = vpack.c.bf16 %v4070, %v4069
      %v4292 = vpack.c.bf16 %v4072, %v4071
      %v4293 = vpack.c.bf16 %v4074, %v4073
      %v4294 = vpack.c.bf16 %v4076, %v4075
      %v4295 = vpack.c.bf16 %v4078, %v4077
      %v4296 = vpack.c.bf16 %v4080, %v4079
      %v4297 = vpack.c.bf16 %v4082, %v4081
      %v4298 = vpack.c.bf16 %v4084, %v4083
      %v4299 = vpack.c.bf16 %v4086, %v4085
      %v4300 = vpack.c.bf16 %v4088, %v4087
      %v4301 = vpack.c.bf16 %v4090, %v4089
      %v4302 = vpack.c.bf16 %v4092, %v4091
      %v4303 = vpack.c.bf16 %v4094, %v4093
      %v4304 = vpack.c.bf16 %v4096, %v4095
      %v4305 = vpack.c.bf16 %v4098, %v4097
      %v4306 = vpack.c.bf16 %v4100, %v4099
      %v4307 = vpack.c.bf16 %v4102, %v4101
      %v4308 = vpack.c.bf16 %v4104, %v4103
      %v4309 = vpack.c.bf16 %v4106, %v4105
      %v4310 = vpack.c.bf16 %v4108, %v4107
      %v4311 = vpack.c.bf16 %v4110, %v4109
      %v4312 = vpack.c.bf16 %v4112, %v4111
      %v4313 = vpack.c.bf16 %v4114, %v4113
      %v4314 = vpack.c.bf16 %v4116, %v4115
      %v4315 = vpack.c.bf16 %v4118, %v4117
      %v4316 = vpack.c.bf16 %v4120, %v4119
      %v4317 = vpack.c.bf16 %v4122, %v4121
      %v4318 = vpack.c.bf16 %v4124, %v4123
      %v4319 = vpack.c.bf16 %v4126, %v4125
      %v4320 = vpack.c.bf16 %v4128, %v4127
      %v4321 = vpack.c.bf16 %v4130, %v4129
      %v4322 = vpack.c.bf16 %v4132, %v4131
      %v4323 = vpack.c.bf16 %v4134, %v4133
      %v4324 = vpack.c.bf16 %v4136, %v4135
      %v4325 = vpack.c.bf16 %v4138, %v4137
      %v4326 = vpack.c.bf16 %v4140, %v4139
      %v4327 = vpack.c.bf16 %v4142, %v4141
      %v4328 = vpack.c.bf16 %v4144, %v4143
      %v4329 = vpack.c.bf16 %v4146, %v4145
      %v4330 = vpack.c.bf16 %v4148, %v4147
      %v4331 = vpack.c.bf16 %v4150, %v4149
      %v4332 = vpack.c.bf16 %v4152, %v4151
      %v4333 = vpack.c.bf16 %v4154, %v4153
      %v4334 = vpack.c.bf16 %v4156, %v4155
      %v4335 = vpack.c.bf16 %v4158, %v4157
      %v4336 = vpack.c.bf16 %v4160, %v4159
      %v4337 = vpack.c.bf16 %v4162, %v4161
      %v4513 = vunpack.c.l.b16 %v4163
      %v4514 = vunpack.c.h.b16 %v4163
      %v4515 = vunpack.c.l.b16 %v4164
      %v4516 = vunpack.c.h.b16 %v4164
      %v4517 = vunpack.c.l.b16 %v4165
      %v4518 = vunpack.c.h.b16 %v4165
      %v4519 = vunpack.c.l.b16 %v4166
      %v4520 = vunpack.c.h.b16 %v4166
      %v4521 = vunpack.c.l.b16 %v4167
      %v4522 = vunpack.c.h.b16 %v4167
      %v4523 = vunpack.c.l.b16 %v4168
      %v4524 = vunpack.c.h.b16 %v4168
      %v4525 = vunpack.c.l.b16 %v4169
      %v4526 = vunpack.c.h.b16 %v4169
      %v4527 = vunpack.c.l.b16 %v4170
      %v4528 = vunpack.c.h.b16 %v4170
      %v4529 = vunpack.c.l.b16 %v4171
      %v4530 = vunpack.c.h.b16 %v4171
      %v4531 = vunpack.c.l.b16 %v4172
      %v4532 = vunpack.c.h.b16 %v4172
      %v4533 = vunpack.c.l.b16 %v4173
      %v4534 = vunpack.c.h.b16 %v4173
      %v4535 = vunpack.c.l.b16 %v4174
      %v4536 = vunpack.c.h.b16 %v4174
      %v4537 = vunpack.c.l.b16 %v4175
      %v4538 = vunpack.c.h.b16 %v4175
      %v4539 = vunpack.c.l.b16 %v4176
      %v4540 = vunpack.c.h.b16 %v4176
      %v4541 = vunpack.c.l.b16 %v4177
      %v4542 = vunpack.c.h.b16 %v4177
      %v4543 = vunpack.c.l.b16 %v4178
      %v4544 = vunpack.c.h.b16 %v4178
      %v4545 = vunpack.c.l.b16 %v4179
      %v4546 = vunpack.c.h.b16 %v4179
      %v4547 = vunpack.c.l.b16 %v4180
      %v4548 = vunpack.c.h.b16 %v4180
      %v4549 = vunpack.c.l.b16 %v4181
      %v4550 = vunpack.c.h.b16 %v4181
      %v4551 = vunpack.c.l.b16 %v4182
      %v4552 = vunpack.c.h.b16 %v4182
      %v4553 = vunpack.c.l.b16 %v4183
      %v4554 = vunpack.c.h.b16 %v4183
      %v4555 = vunpack.c.l.b16 %v4184
      %v4556 = vunpack.c.h.b16 %v4184
      %v4557 = vunpack.c.l.b16 %v4185
      %v4558 = vunpack.c.h.b16 %v4185
      %v4559 = vunpack.c.l.b16 %v4186
      %v4560 = vunpack.c.h.b16 %v4186
      %v4561 = vunpack.c.l.b16 %v4187
      %v4562 = vunpack.c.h.b16 %v4187
      %v4563 = vunpack.c.l.b16 %v4188
      %v4564 = vunpack.c.h.b16 %v4188
      %v4565 = vunpack.c.l.b16 %v4189
      %v4566 = vunpack.c.h.b16 %v4189
      %v4567 = vunpack.c.l.b16 %v4190
      %v4568 = vunpack.c.h.b16 %v4190
      %v4569 = vunpack.c.l.b16 %v4191
      %v4570 = vunpack.c.h.b16 %v4191
      %v4571 = vunpack.c.l.b16 %v4192
      %v4572 = vunpack.c.h.b16 %v4192
      %v4573 = vunpack.c.l.b16 %v4193
      %v4574 = vunpack.c.h.b16 %v4193
      %v4575 = vunpack.c.l.b16 %v4194
      %v4576 = vunpack.c.h.b16 %v4194
      %v4577 = vunpack.c.l.b16 %v4195
      %v4578 = vunpack.c.h.b16 %v4195
      %v4579 = vunpack.c.l.b16 %v4196
      %v4580 = vunpack.c.h.b16 %v4196
      %v4581 = vunpack.c.l.b16 %v4197
      %v4582 = vunpack.c.h.b16 %v4197
      %v4583 = vunpack.c.l.b16 %v4198
      %v4584 = vunpack.c.h.b16 %v4198
      %v4585 = vunpack.c.l.b16 %v4199
      %v4586 = vunpack.c.h.b16 %v4199
      %v4587 = vunpack.c.l.b16 %v4200
      %v4588 = vunpack.c.h.b16 %v4200
      %v4589 = vunpack.c.l.b16 %v4201
      %v4590 = vunpack.c.h.b16 %v4201
      %v4591 = vunpack.c.l.b16 %v4202
      %v4592 = vunpack.c.h.b16 %v4202
      %v4593 = vunpack.c.l.b16 %v4203
      %v4594 = vunpack.c.h.b16 %v4203
      %v4595 = vunpack.c.l.b16 %v4204
      %v4596 = vunpack.c.h.b16 %v4204
      %v4597 = vunpack.c.l.b16 %v4205
      %v4598 = vunpack.c.h.b16 %v4205
      %v4599 = vunpack.c.l.b16 %v4206
      %v4600 = vunpack.c.h.b16 %v4206
      %v4601 = vunpack.c.l.b16 %v4207
      %v4602 = vunpack.c.h.b16 %v4207
      %v4603 = vunpack.c.l.b16 %v4208
      %v4604 = vunpack.c.h.b16 %v4208
      %v4605 = vunpack.c.l.b16 %v4209
      %v4606 = vunpack.c.h.b16 %v4209
      %v4607 = vunpack.c.l.b16 %v4210
      %v4608 = vunpack.c.h.b16 %v4210
      %v4609 = vunpack.c.l.b16 %v4211
      %v4610 = vunpack.c.h.b16 %v4211
      %v4611 = vunpack.c.l.b16 %v4212
      %v4612 = vunpack.c.h.b16 %v4212
      %v4613 = vunpack.c.l.b16 %v4213
      %v4614 = vunpack.c.h.b16 %v4213
      %v4615 = vunpack.c.l.b16 %v4214
      %v4616 = vunpack.c.h.b16 %v4214
      %v4617 = vunpack.c.l.b16 %v4215
      %v4618 = vunpack.c.h.b16 %v4215
      %v4619 = vunpack.c.l.b16 %v4216
      %v4620 = vunpack.c.h.b16 %v4216
      %v4621 = vunpack.c.l.b16 %v4217
      %v4622 = vunpack.c.h.b16 %v4217
      %v4623 = vunpack.c.l.b16 %v4218
      %v4624 = vunpack.c.h.b16 %v4218
      %v4625 = vunpack.c.l.b16 %v4219
      %v4626 = vunpack.c.h.b16 %v4219
      %v4627 = vunpack.c.l.b16 %v4220
      %v4628 = vunpack.c.h.b16 %v4220
      %v4629 = vunpack.c.l.b16 %v4221
      %v4630 = vunpack.c.h.b16 %v4221
      %v4631 = vunpack.c.l.b16 %v4222
      %v4632 = vunpack.c.h.b16 %v4222
      %v4633 = vunpack.c.l.b16 %v4223
      %v4634 = vunpack.c.h.b16 %v4223
      %v4635 = vunpack.c.l.b16 %v4224
      %v4636 = vunpack.c.h.b16 %v4224
      %v4637 = vunpack.c.l.b16 %v4225
      %v4638 = vunpack.c.h.b16 %v4225
      %v4639 = vunpack.c.l.b16 %v4226
      %v4640 = vunpack.c.h.b16 %v4226
      %v4641 = vunpack.c.l.b16 %v4227
      %v4642 = vunpack.c.h.b16 %v4227
      %v4643 = vunpack.c.l.b16 %v4228
      %v4644 = vunpack.c.h.b16 %v4228
      %v4645 = vunpack.c.l.b16 %v4229
      %v4646 = vunpack.c.h.b16 %v4229
      %v4647 = vunpack.c.l.b16 %v4230
      %v4648 = vunpack.c.h.b16 %v4230
      %v4649 = vunpack.c.l.b16 %v4231
      %v4650 = vunpack.c.h.b16 %v4231
      %v4651 = vunpack.c.l.b16 %v4232
      %v4652 = vunpack.c.h.b16 %v4232
      %v4653 = vunpack.c.l.b16 %v4233
      %v4654 = vunpack.c.h.b16 %v4233
      %v4655 = vunpack.c.l.b16 %v4234
      %v4656 = vunpack.c.h.b16 %v4234
      %v4657 = vunpack.c.l.b16 %v4235
      %v4658 = vunpack.c.h.b16 %v4235
      %v4659 = vunpack.c.l.b16 %v4236
      %v4660 = vunpack.c.h.b16 %v4236
      %v4661 = vunpack.c.l.b16 %v4237
      %v4662 = vunpack.c.h.b16 %v4237
      %v4663 = vunpack.c.l.b16 %v4238
      %v4664 = vunpack.c.h.b16 %v4238
      %v4665 = vunpack.c.l.b16 %v4239
      %v4666 = vunpack.c.h.b16 %v4239
      %v4667 = vunpack.c.l.b16 %v4240
      %v4668 = vunpack.c.h.b16 %v4240
      %v4669 = vunpack.c.l.b16 %v4241
      %v4670 = vunpack.c.h.b16 %v4241
      %v4671 = vunpack.c.l.b16 %v4242
      %v4672 = vunpack.c.h.b16 %v4242
      %v4673 = vunpack.c.l.b16 %v4243
      %v4674 = vunpack.c.h.b16 %v4243
      %v4675 = vunpack.c.l.b16 %v4244
      %v4676 = vunpack.c.h.b16 %v4244
      %v4677 = vunpack.c.l.b16 %v4245
      %v4678 = vunpack.c.h.b16 %v4245
      %v4679 = vunpack.c.l.b16 %v4246
      %v4680 = vunpack.c.h.b16 %v4246
      %v4681 = vunpack.c.l.b16 %v4247
      %v4682 = vunpack.c.h.b16 %v4247
      %v4683 = vunpack.c.l.b16 %v4248
      %v4684 = vunpack.c.h.b16 %v4248
      %v4685 = vunpack.c.l.b16 %v4249
      %v4686 = vunpack.c.h.b16 %v4249
      %v4687 = vunpack.c.l.b16 %v4250
      %v4688 = vunpack.c.h.b16 %v4250
      %v4689 = vunpack.c.l.b16 %v4251
      %v4690 = vunpack.c.h.b16 %v4251
      %v4691 = vunpack.c.l.b16 %v4252
      %v4692 = vunpack.c.h.b16 %v4252
      %v4693 = vunpack.c.l.b16 %v4253
      %v4694 = vunpack.c.h.b16 %v4253
      %v4695 = vunpack.c.l.b16 %v4254
      %v4696 = vunpack.c.h.b16 %v4254
      %v4697 = vunpack.c.l.b16 %v4255
      %v4698 = vunpack.c.h.b16 %v4255
      %v4699 = vunpack.c.l.b16 %v4256
      %v4700 = vunpack.c.h.b16 %v4256
      %v4701 = vunpack.c.l.b16 %v4257
      %v4702 = vunpack.c.h.b16 %v4257
      %v4703 = vunpack.c.l.b16 %v4258
      %v4704 = vunpack.c.h.b16 %v4258
      %v4705 = vunpack.c.l.b16 %v4259
      %v4706 = vunpack.c.h.b16 %v4259
      %v4707 = vunpack.c.l.b16 %v4260
      %v4708 = vunpack.c.h.b16 %v4260
      %v4709 = vunpack.c.l.b16 %v4261
      %v4710 = vunpack.c.h.b16 %v4261
      %v4711 = vunpack.c.l.b16 %v4262
      %v4712 = vunpack.c.h.b16 %v4262
      %v4713 = vunpack.c.l.b16 %v4263
      %v4714 = vunpack.c.h.b16 %v4263
      %v4715 = vunpack.c.l.b16 %v4264
      %v4716 = vunpack.c.h.b16 %v4264
      %v4717 = vunpack.c.l.b16 %v4265
      %v4718 = vunpack.c.h.b16 %v4265
      %v4719 = vunpack.c.l.b16 %v4266
      %v4720 = vunpack.c.h.b16 %v4266
      %v4721 = vunpack.c.l.b16 %v4267
      %v4722 = vunpack.c.h.b16 %v4267
      %v4723 = vunpack.c.l.b16 %v4268
      %v4724 = vunpack.c.h.b16 %v4268
      %v4725 = vunpack.c.l.b16 %v4269
      %v4726 = vunpack.c.h.b16 %v4269
      %v4727 = vunpack.c.l.b16 %v4270
      %v4728 = vunpack.c.h.b16 %v4270
      %v4729 = vunpack.c.l.b16 %v4271
      %v4730 = vunpack.c.h.b16 %v4271
      %v4731 = vunpack.c.l.b16 %v4272
      %v4732 = vunpack.c.h.b16 %v4272
      %v4733 = vunpack.c.l.b16 %v4273
      %v4734 = vunpack.c.h.b16 %v4273
      %v4735 = vunpack.c.l.b16 %v4274
      %v4736 = vunpack.c.h.b16 %v4274
      %v4737 = vunpack.c.l.b16 %v4275
      %v4738 = vunpack.c.h.b16 %v4275
      %v4739 = vunpack.c.l.b16 %v4276
      %v4740 = vunpack.c.h.b16 %v4276
      %v4741 = vunpack.c.l.b16 %v4277
      %v4742 = vunpack.c.h.b16 %v4277
      %v4743 = vunpack.c.l.b16 %v4278
      %v4744 = vunpack.c.h.b16 %v4278
      %v4745 = vunpack.c.l.b16 %v4279
      %v4746 = vunpack.c.h.b16 %v4279
      %v4747 = vunpack.c.l.b16 %v4280
      %v4748 = vunpack.c.h.b16 %v4280
      %v4749 = vunpack.c.l.b16 %v4281
      %v4750 = vunpack.c.h.b16 %v4281
      %v4751 = vunpack.c.l.b16 %v4282
      %v4752 = vunpack.c.h.b16 %v4282
      %v4753 = vunpack.c.l.b16 %v4283
      %v4754 = vunpack.c.h.b16 %v4283
      %v4755 = vunpack.c.l.b16 %v4284
      %v4756 = vunpack.c.h.b16 %v4284
      %v4757 = vunpack.c.l.b16 %v4285
      %v4758 = vunpack.c.h.b16 %v4285
      %v4759 = vunpack.c.l.b16 %v4286
      %v4760 = vunpack.c.h.b16 %v4286
      %v4761 = vunpack.c.l.b16 %v4287
      %v4762 = vunpack.c.h.b16 %v4287
      %v4763 = vunpack.c.l.b16 %v4288
      %v4764 = vunpack.c.h.b16 %v4288
      %v4765 = vunpack.c.l.b16 %v4289
      %v4766 = vunpack.c.h.b16 %v4289
      %v4767 = vunpack.c.l.b16 %v4290
      %v4768 = vunpack.c.h.b16 %v4290
      %v4769 = vunpack.c.l.b16 %v4291
      %v4770 = vunpack.c.h.b16 %v4291
      %v4771 = vunpack.c.l.b16 %v4292
      %v4772 = vunpack.c.h.b16 %v4292
      %v4773 = vunpack.c.l.b16 %v4293
      %v4774 = vunpack.c.h.b16 %v4293
      %v4775 = vunpack.c.l.b16 %v4294
      %v4776 = vunpack.c.h.b16 %v4294
      %v4777 = vunpack.c.l.b16 %v4295
      %v4778 = vunpack.c.h.b16 %v4295
      %v4779 = vunpack.c.l.b16 %v4296
      %v4780 = vunpack.c.h.b16 %v4296
      %v4781 = vunpack.c.l.b16 %v4297
      %v4782 = vunpack.c.h.b16 %v4297
      %v4783 = vunpack.c.l.b16 %v4298
      %v4784 = vunpack.c.h.b16 %v4298
      %v4785 = vunpack.c.l.b16 %v4299
      %v4786 = vunpack.c.h.b16 %v4299
      %v4787 = vunpack.c.l.b16 %v4300
      %v4788 = vunpack.c.h.b16 %v4300
      %v4789 = vunpack.c.l.b16 %v4301
      %v4790 = vunpack.c.h.b16 %v4301
      %v4791 = vunpack.c.l.b16 %v4302
      %v4792 = vunpack.c.h.b16 %v4302
      %v4793 = vunpack.c.l.b16 %v4303
      %v4794 = vunpack.c.h.b16 %v4303
      %v4795 = vunpack.c.l.b16 %v4304
      %v4796 = vunpack.c.h.b16 %v4304
      %v4797 = vunpack.c.l.b16 %v4305
      %v4798 = vunpack.c.h.b16 %v4305
      %v4799 = vunpack.c.l.b16 %v4306
      %v4800 = vunpack.c.h.b16 %v4306
      %v4801 = vunpack.c.l.b16 %v4307
      %v4802 = vunpack.c.h.b16 %v4307
      %v4803 = vunpack.c.l.b16 %v4308
      %v4804 = vunpack.c.h.b16 %v4308
      %v4805 = vunpack.c.l.b16 %v4309
      %v4806 = vunpack.c.h.b16 %v4309
      %v4807 = vunpack.c.l.b16 %v4310
      %v4808 = vunpack.c.h.b16 %v4310
      %v4809 = vunpack.c.l.b16 %v4311
      %v4810 = vunpack.c.h.b16 %v4311
      %v4811 = vunpack.c.l.b16 %v4312
      %v4812 = vunpack.c.h.b16 %v4312
      %v4813 = vunpack.c.l.b16 %v4313
      %v4814 = vunpack.c.h.b16 %v4313
      %v4815 = vunpack.c.l.b16 %v4314
      %v4816 = vunpack.c.h.b16 %v4314
      %v4817 = vunpack.c.l.b16 %v4315
      %v4818 = vunpack.c.h.b16 %v4315
      %v4819 = vunpack.c.l.b16 %v4316
      %v4820 = vunpack.c.h.b16 %v4316
      %v4821 = vunpack.c.l.b16 %v4317
      %v4822 = vunpack.c.h.b16 %v4317
      %v4823 = vunpack.c.l.b16 %v4318
      %v4824 = vunpack.c.h.b16 %v4318
      %v4825 = vunpack.c.l.b16 %v4319
      %v4826 = vunpack.c.h.b16 %v4319
      %v4827 = vunpack.c.l.b16 %v4320
      %v4828 = vunpack.c.h.b16 %v4320
      %v4829 = vunpack.c.l.b16 %v4321
      %v4830 = vunpack.c.h.b16 %v4321
      %v4831 = vunpack.c.l.b16 %v4322
      %v4832 = vunpack.c.h.b16 %v4322
      %v4833 = vunpack.c.l.b16 %v4323
      %v4834 = vunpack.c.h.b16 %v4323
      %v4835 = vunpack.c.l.b16 %v4324
      %v4836 = vunpack.c.h.b16 %v4324
      %v4837 = vunpack.c.l.b16 %v4325
      %v4838 = vunpack.c.h.b16 %v4325
      %v4839 = vunpack.c.l.b16 %v4326
      %v4840 = vunpack.c.h.b16 %v4326
      %v4841 = vunpack.c.l.b16 %v4327
      %v4842 = vunpack.c.h.b16 %v4327
      %v4843 = vunpack.c.l.b16 %v4328
      %v4844 = vunpack.c.h.b16 %v4328
      %v4845 = vunpack.c.l.b16 %v4329
      %v4846 = vunpack.c.h.b16 %v4329
      %v4847 = vunpack.c.l.b16 %v4330
      %v4848 = vunpack.c.h.b16 %v4330
      %v4849 = vunpack.c.l.b16 %v4331
      %v4850 = vunpack.c.h.b16 %v4331
      %v4851 = vunpack.c.l.b16 %v4332
      %v4852 = vunpack.c.h.b16 %v4332
      %v4853 = vunpack.c.l.b16 %v4333
      %v4854 = vunpack.c.h.b16 %v4333
      %v4855 = vunpack.c.l.b16 %v4334
      %v4856 = vunpack.c.h.b16 %v4334
      %v4857 = vunpack.c.l.b16 %v4335
      %v4858 = vunpack.c.h.b16 %v4335
      %v4859 = vunpack.c.l.b16 %v4336
      %v4860 = vunpack.c.h.b16 %v4336
      %v4861 = vunpack.c.l.b16 %v4337
      %v4862 = vunpack.c.h.b16 %v4337
      %v4863 = vpack.c.b16 %v4513, %v4513
      %v4864 = vpack.c.b16 %v4514, %v4514
      %v4865 = vpack.c.b16 %v4515, %v4515
      %v4866 = vpack.c.b16 %v4516, %v4516
      %v4867 = vpack.c.b16 %v4517, %v4517
      %v4868 = vpack.c.b16 %v4518, %v4518
      %v4869 = vpack.c.b16 %v4519, %v4519
      %v4870 = vpack.c.b16 %v4520, %v4520
      %v4871 = vpack.c.b16 %v4521, %v4521
      %v4872 = vpack.c.b16 %v4522, %v4522
      %v4873 = vpack.c.b16 %v4523, %v4523
      %v4874 = vpack.c.b16 %v4524, %v4524
      %v4875 = vpack.c.b16 %v4525, %v4525
      %v4876 = vpack.c.b16 %v4526, %v4526
      %v4877 = vpack.c.b16 %v4527, %v4527
      %v4878 = vpack.c.b16 %v4528, %v4528
      %v4879 = vpack.c.b16 %v4529, %v4529
      %v4880 = vpack.c.b16 %v4530, %v4530
      %v4881 = vpack.c.b16 %v4531, %v4531
      %v4882 = vpack.c.b16 %v4532, %v4532
      %v4883 = vpack.c.b16 %v4533, %v4533
      %v4884 = vpack.c.b16 %v4534, %v4534
      %v4885 = vpack.c.b16 %v4535, %v4535
      %v4886 = vpack.c.b16 %v4536, %v4536
      %v4887 = vpack.c.b16 %v4537, %v4537
      %v4888 = vpack.c.b16 %v4538, %v4538
      %v4889 = vpack.c.b16 %v4539, %v4539
      %v4890 = vpack.c.b16 %v4540, %v4540
      %v4891 = vpack.c.b16 %v4541, %v4541
      %v4892 = vpack.c.b16 %v4542, %v4542
      %v4893 = vpack.c.b16 %v4543, %v4543
      %v4894 = vpack.c.b16 %v4544, %v4544
      %v4895 = vpack.c.b16 %v4545, %v4545
      %v4896 = vpack.c.b16 %v4546, %v4546
      %v4897 = vpack.c.b16 %v4547, %v4547
      %v4898 = vpack.c.b16 %v4548, %v4548
      %v4899 = vpack.c.b16 %v4549, %v4549
      %v4900 = vpack.c.b16 %v4550, %v4550
      %v4901 = vpack.c.b16 %v4551, %v4551
      %v4902 = vpack.c.b16 %v4552, %v4552
      %v4903 = vpack.c.b16 %v4553, %v4553
      %v4904 = vpack.c.b16 %v4554, %v4554
      %v4905 = vpack.c.b16 %v4555, %v4555
      %v4906 = vpack.c.b16 %v4556, %v4556
      %v4907 = vpack.c.b16 %v4557, %v4557
      %v4908 = vpack.c.b16 %v4558, %v4558
      %v4909 = vpack.c.b16 %v4559, %v4559
      %v4910 = vpack.c.b16 %v4560, %v4560
      %v4911 = vpack.c.b16 %v4561, %v4561
      %v4912 = vpack.c.b16 %v4562, %v4562
      %v4913 = vpack.c.b16 %v4563, %v4563
      %v4914 = vpack.c.b16 %v4564, %v4564
      %v4915 = vpack.c.b16 %v4565, %v4565
      %v4916 = vpack.c.b16 %v4566, %v4566
      %v4917 = vpack.c.b16 %v4567, %v4567
      %v4918 = vpack.c.b16 %v4568, %v4568
      %v4919 = vpack.c.b16 %v4569, %v4569
      %v4920 = vpack.c.b16 %v4570, %v4570
      %v4921 = vpack.c.b16 %v4571, %v4571
      %v4922 = vpack.c.b16 %v4572, %v4572
      %v4923 = vpack.c.b16 %v4573, %v4573
      %v4924 = vpack.c.b16 %v4574, %v4574
      %v4925 = vpack.c.b16 %v4575, %v4575
      %v4926 = vpack.c.b16 %v4576, %v4576
      %v4927 = vpack.c.b16 %v4577, %v4577
      %v4928 = vpack.c.b16 %v4578, %v4578
      %v4929 = vpack.c.b16 %v4579, %v4579
      %v4930 = vpack.c.b16 %v4580, %v4580
      %v4931 = vpack.c.b16 %v4581, %v4581
      %v4932 = vpack.c.b16 %v4582, %v4582
      %v4933 = vpack.c.b16 %v4583, %v4583
      %v4934 = vpack.c.b16 %v4584, %v4584
      %v4935 = vpack.c.b16 %v4585, %v4585
      %v4936 = vpack.c.b16 %v4586, %v4586
      %v4937 = vpack.c.b16 %v4587, %v4587
      %v4938 = vpack.c.b16 %v4588, %v4588
      %v4939 = vpack.c.b16 %v4589, %v4589
      %v4940 = vpack.c.b16 %v4590, %v4590
      %v4941 = vpack.c.b16 %v4591, %v4591
      %v4942 = vpack.c.b16 %v4592, %v4592
      %v4943 = vpack.c.b16 %v4593, %v4593
      %v4944 = vpack.c.b16 %v4594, %v4594
      %v4945 = vpack.c.b16 %v4595, %v4595
      %v4946 = vpack.c.b16 %v4596, %v4596
      %v4947 = vpack.c.b16 %v4597, %v4597
      %v4948 = vpack.c.b16 %v4598, %v4598
      %v4949 = vpack.c.b16 %v4599, %v4599
      %v4950 = vpack.c.b16 %v4600, %v4600
      %v4951 = vpack.c.b16 %v4601, %v4601
      %v4952 = vpack.c.b16 %v4602, %v4602
      %v4953 = vpack.c.b16 %v4603, %v4603
      %v4954 = vpack.c.b16 %v4604, %v4604
      %v4955 = vpack.c.b16 %v4605, %v4605
      %v4956 = vpack.c.b16 %v4606, %v4606
      %v4957 = vpack.c.b16 %v4607, %v4607
      %v4958 = vpack.c.b16 %v4608, %v4608
      %v4959 = vpack.c.b16 %v4609, %v4609
      %v4960 = vpack.c.b16 %v4610, %v4610
      %v4961 = vpack.c.b16 %v4611, %v4611
      %v4962 = vpack.c.b16 %v4612, %v4612
      %v4963 = vpack.c.b16 %v4613, %v4613
      %v4964 = vpack.c.b16 %v4614, %v4614
      %v4965 = vpack.c.b16 %v4615, %v4615
      %v4966 = vpack.c.b16 %v4616, %v4616
      %v4967 = vpack.c.b16 %v4617, %v4617
      %v4968 = vpack.c.b16 %v4618, %v4618
      %v4969 = vpack.c.b16 %v4619, %v4619
      %v4970 = vpack.c.b16 %v4620, %v4620
      %v4971 = vpack.c.b16 %v4621, %v4621
      %v4972 = vpack.c.b16 %v4622, %v4622
      %v4973 = vpack.c.b16 %v4623, %v4623
      %v4974 = vpack.c.b16 %v4624, %v4624
      %v4975 = vpack.c.b16 %v4625, %v4625
      %v4976 = vpack.c.b16 %v4626, %v4626
      %v4977 = vpack.c.b16 %v4627, %v4627
      %v4978 = vpack.c.b16 %v4628, %v4628
      %v4979 = vpack.c.b16 %v4629, %v4629
      %v4980 = vpack.c.b16 %v4630, %v4630
      %v4981 = vpack.c.b16 %v4631, %v4631
      %v4982 = vpack.c.b16 %v4632, %v4632
      %v4983 = vpack.c.b16 %v4633, %v4633
      %v4984 = vpack.c.b16 %v4634, %v4634
      %v4985 = vpack.c.b16 %v4635, %v4635
      %v4986 = vpack.c.b16 %v4636, %v4636
      %v4987 = vpack.c.b16 %v4637, %v4637
      %v4988 = vpack.c.b16 %v4638, %v4638
      %v4989 = vpack.c.b16 %v4639, %v4639
      %v4990 = vpack.c.b16 %v4640, %v4640
      %v4991 = vpack.c.b16 %v4641, %v4641
      %v4992 = vpack.c.b16 %v4642, %v4642
      %v4993 = vpack.c.b16 %v4643, %v4643
      %v4994 = vpack.c.b16 %v4644, %v4644
      %v4995 = vpack.c.b16 %v4645, %v4645
      %v4996 = vpack.c.b16 %v4646, %v4646
      %v4997 = vpack.c.b16 %v4647, %v4647
      %v4998 = vpack.c.b16 %v4648, %v4648
      %v4999 = vpack.c.b16 %v4649, %v4649
      %v5000 = vpack.c.b16 %v4650, %v4650
      %v5001 = vpack.c.b16 %v4651, %v4651
      %v5002 = vpack.c.b16 %v4652, %v4652
      %v5003 = vpack.c.b16 %v4653, %v4653
      %v5004 = vpack.c.b16 %v4654, %v4654
      %v5005 = vpack.c.b16 %v4655, %v4655
      %v5006 = vpack.c.b16 %v4656, %v4656
      %v5007 = vpack.c.b16 %v4657, %v4657
      %v5008 = vpack.c.b16 %v4658, %v4658
      %v5009 = vpack.c.b16 %v4659, %v4659
      %v5010 = vpack.c.b16 %v4660, %v4660
      %v5011 = vpack.c.b16 %v4661, %v4661
      %v5012 = vpack.c.b16 %v4662, %v4662
      %v5013 = vpack.c.b16 %v4663, %v4663
      %v5014 = vpack.c.b16 %v4664, %v4664
      %v5015 = vpack.c.b16 %v4665, %v4665
      %v5016 = vpack.c.b16 %v4666, %v4666
      %v5017 = vpack.c.b16 %v4667, %v4667
      %v5018 = vpack.c.b16 %v4668, %v4668
      %v5019 = vpack.c.b16 %v4669, %v4669
      %v5020 = vpack.c.b16 %v4670, %v4670
      %v5021 = vpack.c.b16 %v4671, %v4671
      %v5022 = vpack.c.b16 %v4672, %v4672
      %v5023 = vpack.c.b16 %v4673, %v4673
      %v5024 = vpack.c.b16 %v4674, %v4674
      %v5025 = vpack.c.b16 %v4675, %v4675
      %v5026 = vpack.c.b16 %v4676, %v4676
      %v5027 = vpack.c.b16 %v4677, %v4677
      %v5028 = vpack.c.b16 %v4678, %v4678
      %v5029 = vpack.c.b16 %v4679, %v4679
      %v5030 = vpack.c.b16 %v4680, %v4680
      %v5031 = vpack.c.b16 %v4681, %v4681
      %v5032 = vpack.c.b16 %v4682, %v4682
      %v5033 = vpack.c.b16 %v4683, %v4683
      %v5034 = vpack.c.b16 %v4684, %v4684
      %v5035 = vpack.c.b16 %v4685, %v4685
      %v5036 = vpack.c.b16 %v4686, %v4686
      %v5037 = vpack.c.b16 %v4687, %v4687
      %v5038 = vpack.c.b16 %v4688, %v4688
      %v5039 = vpack.c.b16 %v4689, %v4689
      %v5040 = vpack.c.b16 %v4690, %v4690
      %v5041 = vpack.c.b16 %v4691, %v4691
      %v5042 = vpack.c.b16 %v4692, %v4692
      %v5043 = vpack.c.b16 %v4693, %v4693
      %v5044 = vpack.c.b16 %v4694, %v4694
      %v5045 = vpack.c.b16 %v4695, %v4695
      %v5046 = vpack.c.b16 %v4696, %v4696
      %v5047 = vpack.c.b16 %v4697, %v4697
      %v5048 = vpack.c.b16 %v4698, %v4698
      %v5049 = vpack.c.b16 %v4699, %v4699
      %v5050 = vpack.c.b16 %v4700, %v4700
      %v5051 = vpack.c.b16 %v4701, %v4701
      %v5052 = vpack.c.b16 %v4702, %v4702
      %v5053 = vpack.c.b16 %v4703, %v4703
      %v5054 = vpack.c.b16 %v4704, %v4704
      %v5055 = vpack.c.b16 %v4705, %v4705
      %v5056 = vpack.c.b16 %v4706, %v4706
      %v5057 = vpack.c.b16 %v4707, %v4707
      %v5058 = vpack.c.b16 %v4708, %v4708
      %v5059 = vpack.c.b16 %v4709, %v4709
      %v5060 = vpack.c.b16 %v4710, %v4710
      %v5061 = vpack.c.b16 %v4711, %v4711
      %v5062 = vpack.c.b16 %v4712, %v4712
      %v5063 = vpack.c.b16 %v4713, %v4713
      %v5064 = vpack.c.b16 %v4714, %v4714
      %v5065 = vpack.c.b16 %v4715, %v4715
      %v5066 = vpack.c.b16 %v4716, %v4716
      %v5067 = vpack.c.b16 %v4717, %v4717
      %v5068 = vpack.c.b16 %v4718, %v4718
      %v5069 = vpack.c.b16 %v4719, %v4719
      %v5070 = vpack.c.b16 %v4720, %v4720
      %v5071 = vpack.c.b16 %v4721, %v4721
      %v5072 = vpack.c.b16 %v4722, %v4722
      %v5073 = vpack.c.b16 %v4723, %v4723
      %v5074 = vpack.c.b16 %v4724, %v4724
      %v5075 = vpack.c.b16 %v4725, %v4725
      %v5076 = vpack.c.b16 %v4726, %v4726
      %v5077 = vpack.c.b16 %v4727, %v4727
      %v5078 = vpack.c.b16 %v4728, %v4728
      %v5079 = vpack.c.b16 %v4729, %v4729
      %v5080 = vpack.c.b16 %v4730, %v4730
      %v5081 = vpack.c.b16 %v4731, %v4731
      %v5082 = vpack.c.b16 %v4732, %v4732
      %v5083 = vpack.c.b16 %v4733, %v4733
      %v5084 = vpack.c.b16 %v4734, %v4734
      %v5085 = vpack.c.b16 %v4735, %v4735
      %v5086 = vpack.c.b16 %v4736, %v4736
      %v5087 = vpack.c.b16 %v4737, %v4737
      %v5088 = vpack.c.b16 %v4738, %v4738
      %v5089 = vpack.c.b16 %v4739, %v4739
      %v5090 = vpack.c.b16 %v4740, %v4740
      %v5091 = vpack.c.b16 %v4741, %v4741
      %v5092 = vpack.c.b16 %v4742, %v4742
      %v5093 = vpack.c.b16 %v4743, %v4743
      %v5094 = vpack.c.b16 %v4744, %v4744
      %v5095 = vpack.c.b16 %v4745, %v4745
      %v5096 = vpack.c.b16 %v4746, %v4746
      %v5097 = vpack.c.b16 %v4747, %v4747
      %v5098 = vpack.c.b16 %v4748, %v4748
      %v5099 = vpack.c.b16 %v4749, %v4749
      %v5100 = vpack.c.b16 %v4750, %v4750
      %v5101 = vpack.c.b16 %v4751, %v4751
      %v5102 = vpack.c.b16 %v4752, %v4752
      %v5103 = vpack.c.b16 %v4753, %v4753
      %v5104 = vpack.c.b16 %v4754, %v4754
      %v5105 = vpack.c.b16 %v4755, %v4755
      %v5106 = vpack.c.b16 %v4756, %v4756
      %v5107 = vpack.c.b16 %v4757, %v4757
      %v5108 = vpack.c.b16 %v4758, %v4758
      %v5109 = vpack.c.b16 %v4759, %v4759
      %v5110 = vpack.c.b16 %v4760, %v4760
      %v5111 = vpack.c.b16 %v4761, %v4761
      %v5112 = vpack.c.b16 %v4762, %v4762
      %v5113 = vpack.c.b16 %v4763, %v4763
      %v5114 = vpack.c.b16 %v4764, %v4764
      %v5115 = vpack.c.b16 %v4765, %v4765
      %v5116 = vpack.c.b16 %v4766, %v4766
      %v5117 = vpack.c.b16 %v4767, %v4767
      %v5118 = vpack.c.b16 %v4768, %v4768
      %v5119 = vpack.c.b16 %v4769, %v4769
      %v5120 = vpack.c.b16 %v4770, %v4770
      %v5121 = vpack.c.b16 %v4771, %v4771
      %v5122 = vpack.c.b16 %v4772, %v4772
      %v5123 = vpack.c.b16 %v4773, %v4773
      %v5124 = vpack.c.b16 %v4774, %v4774
      %v5125 = vpack.c.b16 %v4775, %v4775
      %v5126 = vpack.c.b16 %v4776, %v4776
      %v5127 = vpack.c.b16 %v4777, %v4777
      %v5128 = vpack.c.b16 %v4778, %v4778
      %v5129 = vpack.c.b16 %v4779, %v4779
      %v5130 = vpack.c.b16 %v4780, %v4780
      %v5131 = vpack.c.b16 %v4781, %v4781
      %v5132 = vpack.c.b16 %v4782, %v4782
      %v5133 = vpack.c.b16 %v4783, %v4783
      %v5134 = vpack.c.b16 %v4784, %v4784
      %v5135 = vpack.c.b16 %v4785, %v4785
      %v5136 = vpack.c.b16 %v4786, %v4786
      %v5137 = vpack.c.b16 %v4787, %v4787
      %v5138 = vpack.c.b16 %v4788, %v4788
      %v5139 = vpack.c.b16 %v4789, %v4789
      %v5140 = vpack.c.b16 %v4790, %v4790
      %v5141 = vpack.c.b16 %v4791, %v4791
      %v5142 = vpack.c.b16 %v4792, %v4792
      %v5143 = vpack.c.b16 %v4793, %v4793
      %v5144 = vpack.c.b16 %v4794, %v4794
      %v5145 = vpack.c.b16 %v4795, %v4795
      %v5146 = vpack.c.b16 %v4796, %v4796
      %v5147 = vpack.c.b16 %v4797, %v4797
      %v5148 = vpack.c.b16 %v4798, %v4798
      %v5149 = vpack.c.b16 %v4799, %v4799
      %v5150 = vpack.c.b16 %v4800, %v4800
      %v5151 = vpack.c.b16 %v4801, %v4801
      %v5152 = vpack.c.b16 %v4802, %v4802
      %v5153 = vpack.c.b16 %v4803, %v4803
      %v5154 = vpack.c.b16 %v4804, %v4804
      %v5155 = vpack.c.b16 %v4805, %v4805
      %v5156 = vpack.c.b16 %v4806, %v4806
      %v5157 = vpack.c.b16 %v4807, %v4807
      %v5158 = vpack.c.b16 %v4808, %v4808
      %v5159 = vpack.c.b16 %v4809, %v4809
      %v5160 = vpack.c.b16 %v4810, %v4810
      %v5161 = vpack.c.b16 %v4811, %v4811
      %v5162 = vpack.c.b16 %v4812, %v4812
      %v5163 = vpack.c.b16 %v4813, %v4813
      %v5164 = vpack.c.b16 %v4814, %v4814
      %v5165 = vpack.c.b16 %v4815, %v4815
      %v5166 = vpack.c.b16 %v4816, %v4816
      %v5167 = vpack.c.b16 %v4817, %v4817
      %v5168 = vpack.c.b16 %v4818, %v4818
      %v5169 = vpack.c.b16 %v4819, %v4819
      %v5170 = vpack.c.b16 %v4820, %v4820
      %v5171 = vpack.c.b16 %v4821, %v4821
      %v5172 = vpack.c.b16 %v4822, %v4822
      %v5173 = vpack.c.b16 %v4823, %v4823
      %v5174 = vpack.c.b16 %v4824, %v4824
      %v5175 = vpack.c.b16 %v4825, %v4825
      %v5176 = vpack.c.b16 %v4826, %v4826
      %v5177 = vpack.c.b16 %v4827, %v4827
      %v5178 = vpack.c.b16 %v4828, %v4828
      %v5179 = vpack.c.b16 %v4829, %v4829
      %v5180 = vpack.c.b16 %v4830, %v4830
      %v5181 = vpack.c.b16 %v4831, %v4831
      %v5182 = vpack.c.b16 %v4832, %v4832
      %v5183 = vpack.c.b16 %v4833, %v4833
      %v5184 = vpack.c.b16 %v4834, %v4834
      %v5185 = vpack.c.b16 %v4835, %v4835
      %v5186 = vpack.c.b16 %v4836, %v4836
      %v5187 = vpack.c.b16 %v4837, %v4837
      %v5188 = vpack.c.b16 %v4838, %v4838
      %v5189 = vpack.c.b16 %v4839, %v4839
      %v5190 = vpack.c.b16 %v4840, %v4840
      %v5191 = vpack.c.b16 %v4841, %v4841
      %v5192 = vpack.c.b16 %v4842, %v4842
      %v5193 = vpack.c.b16 %v4843, %v4843
      %v5194 = vpack.c.b16 %v4844, %v4844
      %v5195 = vpack.c.b16 %v4845, %v4845
      %v5196 = vpack.c.b16 %v4846, %v4846
      %v5197 = vpack.c.b16 %v4847, %v4847
      %v5198 = vpack.c.b16 %v4848, %v4848
      %v5199 = vpack.c.b16 %v4849, %v4849
      %v5200 = vpack.c.b16 %v4850, %v4850
      %v5201 = vpack.c.b16 %v4851, %v4851
      %v5202 = vpack.c.b16 %v4852, %v4852
      %v5203 = vpack.c.b16 %v4853, %v4853
      %v5204 = vpack.c.b16 %v4854, %v4854
      %v5205 = vpack.c.b16 %v4855, %v4855
      %v5206 = vpack.c.b16 %v4856, %v4856
      %v5207 = vpack.c.b16 %v4857, %v4857
      %v5208 = vpack.c.b16 %v4858, %v4858
      %v5209 = vpack.c.b16 %v4859, %v4859
      %v5210 = vpack.c.b16 %v4860, %v4860
      %v5211 = vpack.c.b16 %v4861, %v4861
      %v5212 = vpack.c.b16 %v4862, %v4862
      %5563 = vst [vmem:[%s199] sm:$0xf] %v4863
      %5564 = vst [vmem:[%s199 + $0x4] sm:$0xf] %v4864
      %5565 = vst [vmem:[%s199 + $0x8] sm:$0xf] %v4865
      %5566 = vst [vmem:[%s199 + $0xc] sm:$0xf] %v4866
      %5567 = vst [vmem:[%s199 + $0x10] sm:$0xf] %v4867
      %5568 = vst [vmem:[%s199 + $0x14] sm:$0xf] %v4868
      %5569 = vst [vmem:[%s199 + $0x18] sm:$0xf] %v4869
      %5570 = vst [vmem:[%s199 + $0x1c] sm:$0xf] %v4870
      %5571 = vst [vmem:[%s199 + $0x20] sm:$0xf] %v4871
      %5572 = vst [vmem:[%s199 + $0x24] sm:$0xf] %v4872
      %5573 = vst [vmem:[%s199 + $0x28] sm:$0xf] %v4873
      %5574 = vst [vmem:[%s199 + $0x2c] sm:$0xf] %v4874
      %5575 = vst [vmem:[%s199 + $0x30] sm:$0xf] %v4875
      %5576 = vst [vmem:[%s199 + $0x34] sm:$0xf] %v4876
      %5577 = vst [vmem:[%s199 + $0x38] sm:$0xf] %v4877
      %5578 = vst [vmem:[%s199 + $0x3c] sm:$0xf] %v4878
      %5579 = vst [vmem:[%s199 + $0x40] sm:$0xf] %v4879
      %5580 = vst [vmem:[%s199 + $0x44] sm:$0xf] %v4880
      %5581 = vst [vmem:[%s199 + $0x48] sm:$0xf] %v4881
      %5582 = vst [vmem:[%s199 + $0x4c] sm:$0xf] %v4882
      %5583 = vst [vmem:[%s199 + $0x50] sm:$0xf] %v4883
      %5584 = vst [vmem:[%s199 + $0x54] sm:$0xf] %v4884
      %5585 = vst [vmem:[%s199 + $0x58] sm:$0xf] %v4885
      %5586 = vst [vmem:[%s199 + $0x5c] sm:$0xf] %v4886
      %5587 = vst [vmem:[%s199 + $0x60] sm:$0xf] %v4887
      %5588 = vst [vmem:[%s199 + $0x64] sm:$0xf] %v4888
      %5589 = vst [vmem:[%s199 + $0x68] sm:$0xf] %v4889
      %5590 = vst [vmem:[%s199 + $0x6c] sm:$0xf] %v4890
      %5591 = vst [vmem:[%s199 + $0x70] sm:$0xf] %v4891
      %5592 = vst [vmem:[%s199 + $0x74] sm:$0xf] %v4892
      %5593 = vst [vmem:[%s199 + $0x78] sm:$0xf] %v4893
      %5594 = vst [vmem:[%s199 + $0x7c] sm:$0xf] %v4894
      %5595 = vst [vmem:[%s199 + $0x80] sm:$0xf] %v4895
      %5596 = vst [vmem:[%s199 + $0x84] sm:$0xf] %v4896
      %5597 = vst [vmem:[%s199 + $0x88] sm:$0xf] %v4897
      %5598 = vst [vmem:[%s199 + $0x8c] sm:$0xf] %v4898
      %5599 = vst [vmem:[%s199 + $0x90] sm:$0xf] %v4899
      %5600 = vst [vmem:[%s199 + $0x94] sm:$0xf] %v4900
      %5601 = vst [vmem:[%s199 + $0x98] sm:$0xf] %v4901
      %5602 = vst [vmem:[%s199 + $0x9c] sm:$0xf] %v4902
      %5603 = vst [vmem:[%s199 + $0xa0] sm:$0xf] %v4903
      %5604 = vst [vmem:[%s199 + $0xa4] sm:$0xf] %v4904
      %5605 = vst [vmem:[%s199 + $0xa8] sm:$0xf] %v4905
      %5606 = vst [vmem:[%s199 + $0xac] sm:$0xf] %v4906
      %5607 = vst [vmem:[%s199 + $0xb0] sm:$0xf] %v4907
      %5608 = vst [vmem:[%s199 + $0xb4] sm:$0xf] %v4908
      %5609 = vst [vmem:[%s199 + $0xb8] sm:$0xf] %v4909
      %5610 = vst [vmem:[%s199 + $0xbc] sm:$0xf] %v4910
      %5611 = vst [vmem:[%s199 + $0xc0] sm:$0xf] %v4911
      %5612 = vst [vmem:[%s199 + $0xc4] sm:$0xf] %v4912
      %5613 = vst [vmem:[%s199 + $0xc8] sm:$0xf] %v4913
      %5614 = vst [vmem:[%s199 + $0xcc] sm:$0xf] %v4914
      %5615 = vst [vmem:[%s199 + $0xd0] sm:$0xf] %v4915
      %5616 = vst [vmem:[%s199 + $0xd4] sm:$0xf] %v4916
      %5617 = vst [vmem:[%s199 + $0xd8] sm:$0xf] %v4917
      %5618 = vst [vmem:[%s199 + $0xdc] sm:$0xf] %v4918
      %5619 = vst [vmem:[%s199 + $0xe0] sm:$0xf] %v4919
      %5620 = vst [vmem:[%s199 + $0xe4] sm:$0xf] %v4920
      %5621 = vst [vmem:[%s199 + $0xe8] sm:$0xf] %v4921
      %5622 = vst [vmem:[%s199 + $0xec] sm:$0xf] %v4922
      %5623 = vst [vmem:[%s199 + $0xf0] sm:$0xf] %v4923
      %5624 = vst [vmem:[%s199 + $0xf4] sm:$0xf] %v4924
      %5625 = vst [vmem:[%s199 + $0xf8] sm:$0xf] %v4925
      %5626 = vst [vmem:[%s199 + $0xfc] sm:$0xf] %v4926
      %5627 = vst [vmem:[%s199 + $0x100] sm:$0xf] %v4927
      %5628 = vst [vmem:[%s199 + $0x104] sm:$0xf] %v4928
      %5629 = vst [vmem:[%s199 + $0x108] sm:$0xf] %v4929
      %5630 = vst [vmem:[%s199 + $0x10c] sm:$0xf] %v4930
      %5631 = vst [vmem:[%s199 + $0x110] sm:$0xf] %v4931
      %5632 = vst [vmem:[%s199 + $0x114] sm:$0xf] %v4932
      %5633 = vst [vmem:[%s199 + $0x118] sm:$0xf] %v4933
      %5634 = vst [vmem:[%s199 + $0x11c] sm:$0xf] %v4934
      %5635 = vst [vmem:[%s199 + $0x120] sm:$0xf] %v4935
      %5636 = vst [vmem:[%s199 + $0x124] sm:$0xf] %v4936
      %5637 = vst [vmem:[%s199 + $0x128] sm:$0xf] %v4937
      %5638 = vst [vmem:[%s199 + $0x12c] sm:$0xf] %v4938
      %5639 = vst [vmem:[%s199 + $0x130] sm:$0xf] %v4939
      %5640 = vst [vmem:[%s199 + $0x134] sm:$0xf] %v4940
      %5641 = vst [vmem:[%s199 + $0x138] sm:$0xf] %v4941
      %5642 = vst [vmem:[%s199 + $0x13c] sm:$0xf] %v4942
      %5643 = vst [vmem:[%s199 + $0x140] sm:$0xf] %v4943
      %5644 = vst [vmem:[%s199 + $0x144] sm:$0xf] %v4944
      %5645 = vst [vmem:[%s199 + $0x148] sm:$0xf] %v4945
      %5646 = vst [vmem:[%s199 + $0x14c] sm:$0xf] %v4946
      %5647 = vst [vmem:[%s199 + $0x150] sm:$0xf] %v4947
      %5648 = vst [vmem:[%s199 + $0x154] sm:$0xf] %v4948
      %5649 = vst [vmem:[%s199 + $0x158] sm:$0xf] %v4949
      %5650 = vst [vmem:[%s199 + $0x15c] sm:$0xf] %v4950
      %5651 = vst [vmem:[%s199 + $0x160] sm:$0xf] %v4951
      %5652 = vst [vmem:[%s199 + $0x164] sm:$0xf] %v4952
      %5653 = vst [vmem:[%s199 + $0x168] sm:$0xf] %v4953
      %5654 = vst [vmem:[%s199 + $0x16c] sm:$0xf] %v4954
      %5655 = vst [vmem:[%s199 + $0x170] sm:$0xf] %v4955
      %5656 = vst [vmem:[%s199 + $0x174] sm:$0xf] %v4956
      %5657 = vst [vmem:[%s199 + $0x178] sm:$0xf] %v4957
      %5658 = vst [vmem:[%s199 + $0x17c] sm:$0xf] %v4958
      %5659 = vst [vmem:[%s199 + $0x180] sm:$0xf] %v4959
      %5660 = vst [vmem:[%s199 + $0x184] sm:$0xf] %v4960
      %5661 = vst [vmem:[%s199 + $0x188] sm:$0xf] %v4961
      %5662 = vst [vmem:[%s199 + $0x18c] sm:$0xf] %v4962
      %5663 = vst [vmem:[%s199 + $0x190] sm:$0xf] %v4963
      %5664 = vst [vmem:[%s199 + $0x194] sm:$0xf] %v4964
      %5665 = vst [vmem:[%s199 + $0x198] sm:$0xf] %v4965
      %5666 = vst [vmem:[%s199 + $0x19c] sm:$0xf] %v4966
      %5667 = vst [vmem:[%s199 + $0x1a0] sm:$0xf] %v4967
      %5668 = vst [vmem:[%s199 + $0x1a4] sm:$0xf] %v4968
      %5669 = vst [vmem:[%s199 + $0x1a8] sm:$0xf] %v4969
      %5670 = vst [vmem:[%s199 + $0x1ac] sm:$0xf] %v4970
      %5671 = vst [vmem:[%s199 + $0x1b0] sm:$0xf] %v4971
      %5672 = vst [vmem:[%s199 + $0x1b4] sm:$0xf] %v4972
      %5673 = vst [vmem:[%s199 + $0x1b8] sm:$0xf] %v4973
      %5674 = vst [vmem:[%s199 + $0x1bc] sm:$0xf] %v4974
      %5675 = vst [vmem:[%s199 + $0x1c0] sm:$0xf] %v4975
      %5676 = vst [vmem:[%s199 + $0x1c4] sm:$0xf] %v4976
      %5677 = vst [vmem:[%s199 + $0x1c8] sm:$0xf] %v4977
      %5678 = vst [vmem:[%s199 + $0x1cc] sm:$0xf] %v4978
      %5679 = vst [vmem:[%s199 + $0x1d0] sm:$0xf] %v4979
      %5680 = vst [vmem:[%s199 + $0x1d4] sm:$0xf] %v4980
      %5681 = vst [vmem:[%s199 + $0x1d8] sm:$0xf] %v4981
      %5682 = vst [vmem:[%s199 + $0x1dc] sm:$0xf] %v4982
      %5683 = vst [vmem:[%s199 + $0x1e0] sm:$0xf] %v4983
      %5684 = vst [vmem:[%s199 + $0x1e4] sm:$0xf] %v4984
      %5685 = vst [vmem:[%s199 + $0x1e8] sm:$0xf] %v4985
      %5686 = vst [vmem:[%s199 + $0x1ec] sm:$0xf] %v4986
      %5687 = vst [vmem:[%s199 + $0x1f0] sm:$0xf] %v4987
      %5688 = vst [vmem:[%s199 + $0x1f4] sm:$0xf] %v4988
      %5689 = vst [vmem:[%s199 + $0x1f8] sm:$0xf] %v4989
      %5690 = vst [vmem:[%s199 + $0x1fc] sm:$0xf] %v4990
      %5691 = vst [vmem:[%s199 + $0x200] sm:$0xf] %v4991
      %5692 = vst [vmem:[%s199 + $0x204] sm:$0xf] %v4992
      %5693 = vst [vmem:[%s199 + $0x208] sm:$0xf] %v4993
      %5694 = vst [vmem:[%s199 + $0x20c] sm:$0xf] %v4994
      %5695 = vst [vmem:[%s199 + $0x210] sm:$0xf] %v4995
      %5696 = vst [vmem:[%s199 + $0x214] sm:$0xf] %v4996
      %5697 = vst [vmem:[%s199 + $0x218] sm:$0xf] %v4997
      %5698 = vst [vmem:[%s199 + $0x21c] sm:$0xf] %v4998
      %5699 = vst [vmem:[%s199 + $0x220] sm:$0xf] %v4999
      %5700 = vst [vmem:[%s199 + $0x224] sm:$0xf] %v5000
      %5701 = vst [vmem:[%s199 + $0x228] sm:$0xf] %v5001
      %5702 = vst [vmem:[%s199 + $0x22c] sm:$0xf] %v5002
      %5703 = vst [vmem:[%s199 + $0x230] sm:$0xf] %v5003
      %5704 = vst [vmem:[%s199 + $0x234] sm:$0xf] %v5004
      %5705 = vst [vmem:[%s199 + $0x238] sm:$0xf] %v5005
      %5706 = vst [vmem:[%s199 + $0x23c] sm:$0xf] %v5006
      %5707 = vst [vmem:[%s199 + $0x240] sm:$0xf] %v5007
      %5708 = vst [vmem:[%s199 + $0x244] sm:$0xf] %v5008
      %5709 = vst [vmem:[%s199 + $0x248] sm:$0xf] %v5009
      %5710 = vst [vmem:[%s199 + $0x24c] sm:$0xf] %v5010
      %5711 = vst [vmem:[%s199 + $0x250] sm:$0xf] %v5011
      %5712 = vst [vmem:[%s199 + $0x254] sm:$0xf] %v5012
      %5713 = vst [vmem:[%s199 + $0x258] sm:$0xf] %v5013
      %5714 = vst [vmem:[%s199 + $0x25c] sm:$0xf] %v5014
      %5715 = vst [vmem:[%s199 + $0x260] sm:$0xf] %v5015
      %5716 = vst [vmem:[%s199 + $0x264] sm:$0xf] %v5016
      %5717 = vst [vmem:[%s199 + $0x268] sm:$0xf] %v5017
      %5718 = vst [vmem:[%s199 + $0x26c] sm:$0xf] %v5018
      %5719 = vst [vmem:[%s199 + $0x270] sm:$0xf] %v5019
      %5720 = vst [vmem:[%s199 + $0x274] sm:$0xf] %v5020
      %5721 = vst [vmem:[%s199 + $0x278] sm:$0xf] %v5021
      %5722 = vst [vmem:[%s199 + $0x27c] sm:$0xf] %v5022
      %5723 = vst [vmem:[%s199 + $0x280] sm:$0xf] %v5023
      %5724 = vst [vmem:[%s199 + $0x284] sm:$0xf] %v5024
      %5725 = vst [vmem:[%s199 + $0x288] sm:$0xf] %v5025
      %5726 = vst [vmem:[%s199 + $0x28c] sm:$0xf] %v5026
      %5727 = vst [vmem:[%s199 + $0x290] sm:$0xf] %v5027
      %5728 = vst [vmem:[%s199 + $0x294] sm:$0xf] %v5028
      %5729 = vst [vmem:[%s199 + $0x298] sm:$0xf] %v5029
      %5730 = vst [vmem:[%s199 + $0x29c] sm:$0xf] %v5030
      %5731 = vst [vmem:[%s199 + $0x2a0] sm:$0xf] %v5031
      %5732 = vst [vmem:[%s199 + $0x2a4] sm:$0xf] %v5032
      %5733 = vst [vmem:[%s199 + $0x2a8] sm:$0xf] %v5033
      %5734 = vst [vmem:[%s199 + $0x2ac] sm:$0xf] %v5034
      %5735 = vst [vmem:[%s199 + $0x2b0] sm:$0xf] %v5035
      %5736 = vst [vmem:[%s199 + $0x2b4] sm:$0xf] %v5036
      %5737 = vst [vmem:[%s199 + $0x2b8] sm:$0xf] %v5037
      %5738 = vst [vmem:[%s199 + $0x2bc] sm:$0xf] %v5038
      %5739 = vst [vmem:[%s199 + $0x2c0] sm:$0xf] %v5039
      %5740 = vst [vmem:[%s199 + $0x2c4] sm:$0xf] %v5040
      %5741 = vst [vmem:[%s199 + $0x2c8] sm:$0xf] %v5041
      %5742 = vst [vmem:[%s199 + $0x2cc] sm:$0xf] %v5042
      %5743 = vst [vmem:[%s199 + $0x2d0] sm:$0xf] %v5043
      %5744 = vst [vmem:[%s199 + $0x2d4] sm:$0xf] %v5044
      %5745 = vst [vmem:[%s199 + $0x2d8] sm:$0xf] %v5045
      %5746 = vst [vmem:[%s199 + $0x2dc] sm:$0xf] %v5046
      %5747 = vst [vmem:[%s199 + $0x2e0] sm:$0xf] %v5047
      %5748 = vst [vmem:[%s199 + $0x2e4] sm:$0xf] %v5048
      %5749 = vst [vmem:[%s199 + $0x2e8] sm:$0xf] %v5049
      %5750 = vst [vmem:[%s199 + $0x2ec] sm:$0xf] %v5050
      %5751 = vst [vmem:[%s199 + $0x2f0] sm:$0xf] %v5051
      %5752 = vst [vmem:[%s199 + $0x2f4] sm:$0xf] %v5052
      %5753 = vst [vmem:[%s199 + $0x2f8] sm:$0xf] %v5053
      %5754 = vst [vmem:[%s199 + $0x2fc] sm:$0xf] %v5054
      %5755 = vst [vmem:[%s199 + $0x300] sm:$0xf] %v5055
      %5756 = vst [vmem:[%s199 + $0x304] sm:$0xf] %v5056
      %5757 = vst [vmem:[%s199 + $0x308] sm:$0xf] %v5057
      %5758 = vst [vmem:[%s199 + $0x30c] sm:$0xf] %v5058
      %5759 = vst [vmem:[%s199 + $0x310] sm:$0xf] %v5059
      %5760 = vst [vmem:[%s199 + $0x314] sm:$0xf] %v5060
      %5761 = vst [vmem:[%s199 + $0x318] sm:$0xf] %v5061
      %5762 = vst [vmem:[%s199 + $0x31c] sm:$0xf] %v5062
      %5763 = vst [vmem:[%s199 + $0x320] sm:$0xf] %v5063
      %5764 = vst [vmem:[%s199 + $0x324] sm:$0xf] %v5064
      %5765 = vst [vmem:[%s199 + $0x328] sm:$0xf] %v5065
      %5766 = vst [vmem:[%s199 + $0x32c] sm:$0xf] %v5066
      %5767 = vst [vmem:[%s199 + $0x330] sm:$0xf] %v5067
      %5768 = vst [vmem:[%s199 + $0x334] sm:$0xf] %v5068
      %5769 = vst [vmem:[%s199 + $0x338] sm:$0xf] %v5069
      %5770 = vst [vmem:[%s199 + $0x33c] sm:$0xf] %v5070
      %5771 = vst [vmem:[%s199 + $0x340] sm:$0xf] %v5071
      %5772 = vst [vmem:[%s199 + $0x344] sm:$0xf] %v5072
      %5773 = vst [vmem:[%s199 + $0x348] sm:$0xf] %v5073
      %5774 = vst [vmem:[%s199 + $0x34c] sm:$0xf] %v5074
      %5775 = vst [vmem:[%s199 + $0x350] sm:$0xf] %v5075
      %5776 = vst [vmem:[%s199 + $0x354] sm:$0xf] %v5076
      %5777 = vst [vmem:[%s199 + $0x358] sm:$0xf] %v5077
      %5778 = vst [vmem:[%s199 + $0x35c] sm:$0xf] %v5078
      %5779 = vst [vmem:[%s199 + $0x360] sm:$0xf] %v5079
      %5780 = vst [vmem:[%s199 + $0x364] sm:$0xf] %v5080
      %5781 = vst [vmem:[%s199 + $0x368] sm:$0xf] %v5081
      %5782 = vst [vmem:[%s199 + $0x36c] sm:$0xf] %v5082
      %5783 = vst [vmem:[%s199 + $0x370] sm:$0xf] %v5083
      %5784 = vst [vmem:[%s199 + $0x374] sm:$0xf] %v5084
      %5785 = vst [vmem:[%s199 + $0x378] sm:$0xf] %v5085
      %5786 = vst [vmem:[%s199 + $0x37c] sm:$0xf] %v5086
      %5787 = vst [vmem:[%s199 + $0x380] sm:$0xf] %v5087
      %5788 = vst [vmem:[%s199 + $0x384] sm:$0xf] %v5088
      %5789 = vst [vmem:[%s199 + $0x388] sm:$0xf] %v5089
      %5790 = vst [vmem:[%s199 + $0x38c] sm:$0xf] %v5090
      %5791 = vst [vmem:[%s199 + $0x390] sm:$0xf] %v5091
      %5792 = vst [vmem:[%s199 + $0x394] sm:$0xf] %v5092
      %5793 = vst [vmem:[%s199 + $0x398] sm:$0xf] %v5093
      %5794 = vst [vmem:[%s199 + $0x39c] sm:$0xf] %v5094
      %5795 = vst [vmem:[%s199 + $0x3a0] sm:$0xf] %v5095
      %5796 = vst [vmem:[%s199 + $0x3a4] sm:$0xf] %v5096
      %5797 = vst [vmem:[%s199 + $0x3a8] sm:$0xf] %v5097
      %5798 = vst [vmem:[%s199 + $0x3ac] sm:$0xf] %v5098
      %5799 = vst [vmem:[%s199 + $0x3b0] sm:$0xf] %v5099
      %5800 = vst [vmem:[%s199 + $0x3b4] sm:$0xf] %v5100
      %5801 = vst [vmem:[%s199 + $0x3b8] sm:$0xf] %v5101
      %5802 = vst [vmem:[%s199 + $0x3bc] sm:$0xf] %v5102
      %5803 = vst [vmem:[%s199 + $0x3c0] sm:$0xf] %v5103
      %5804 = vst [vmem:[%s199 + $0x3c4] sm:$0xf] %v5104
      %5805 = vst [vmem:[%s199 + $0x3c8] sm:$0xf] %v5105
      %5806 = vst [vmem:[%s199 + $0x3cc] sm:$0xf] %v5106
      %5807 = vst [vmem:[%s199 + $0x3d0] sm:$0xf] %v5107
      %5808 = vst [vmem:[%s199 + $0x3d4] sm:$0xf] %v5108
      %5809 = vst [vmem:[%s199 + $0x3d8] sm:$0xf] %v5109
      %5810 = vst [vmem:[%s199 + $0x3dc] sm:$0xf] %v5110
      %5811 = vst [vmem:[%s199 + $0x3e0] sm:$0xf] %v5111
      %5812 = vst [vmem:[%s199 + $0x3e4] sm:$0xf] %v5112
      %5813 = vst [vmem:[%s199 + $0x3e8] sm:$0xf] %v5113
      %5814 = vst [vmem:[%s199 + $0x3ec] sm:$0xf] %v5114
      %5815 = vst [vmem:[%s199 + $0x3f0] sm:$0xf] %v5115
      %5816 = vst [vmem:[%s199 + $0x3f4] sm:$0xf] %v5116
      %5817 = vst [vmem:[%s199 + $0x3f8] sm:$0xf] %v5117
      %5818 = vst [vmem:[%s199 + $0x3fc] sm:$0xf] %v5118
      %5819 = vst [vmem:[%s199 + $0x400] sm:$0xf] %v5119
      %5820 = vst [vmem:[%s199 + $0x404] sm:$0xf] %v5120
      %5821 = vst [vmem:[%s199 + $0x408] sm:$0xf] %v5121
      %5822 = vst [vmem:[%s199 + $0x40c] sm:$0xf] %v5122
      %5823 = vst [vmem:[%s199 + $0x410] sm:$0xf] %v5123
      %5824 = vst [vmem:[%s199 + $0x414] sm:$0xf] %v5124
      %5825 = vst [vmem:[%s199 + $0x418] sm:$0xf] %v5125
      %5826 = vst [vmem:[%s199 + $0x41c] sm:$0xf] %v5126
      %5827 = vst [vmem:[%s199 + $0x420] sm:$0xf] %v5127
      %5828 = vst [vmem:[%s199 + $0x424] sm:$0xf] %v5128
      %5829 = vst [vmem:[%s199 + $0x428] sm:$0xf] %v5129
      %5830 = vst [vmem:[%s199 + $0x42c] sm:$0xf] %v5130
      %5831 = vst [vmem:[%s199 + $0x430] sm:$0xf] %v5131
      %5832 = vst [vmem:[%s199 + $0x434] sm:$0xf] %v5132
      %5833 = vst [vmem:[%s199 + $0x438] sm:$0xf] %v5133
      %5834 = vst [vmem:[%s199 + $0x43c] sm:$0xf] %v5134
      %5835 = vst [vmem:[%s199 + $0x440] sm:$0xf] %v5135
      %5836 = vst [vmem:[%s199 + $0x444] sm:$0xf] %v5136
      %5837 = vst [vmem:[%s199 + $0x448] sm:$0xf] %v5137
      %5838 = vst [vmem:[%s199 + $0x44c] sm:$0xf] %v5138
      %5839 = vst [vmem:[%s199 + $0x450] sm:$0xf] %v5139
      %5840 = vst [vmem:[%s199 + $0x454] sm:$0xf] %v5140
      %5841 = vst [vmem:[%s199 + $0x458] sm:$0xf] %v5141
      %5842 = vst [vmem:[%s199 + $0x45c] sm:$0xf] %v5142
      %5843 = vst [vmem:[%s199 + $0x460] sm:$0xf] %v5143
      %5844 = vst [vmem:[%s199 + $0x464] sm:$0xf] %v5144
      %5845 = vst [vmem:[%s199 + $0x468] sm:$0xf] %v5145
      %5846 = vst [vmem:[%s199 + $0x46c] sm:$0xf] %v5146
      %5847 = vst [vmem:[%s199 + $0x470] sm:$0xf] %v5147
      %5848 = vst [vmem:[%s199 + $0x474] sm:$0xf] %v5148
      %5849 = vst [vmem:[%s199 + $0x478] sm:$0xf] %v5149
      %5850 = vst [vmem:[%s199 + $0x47c] sm:$0xf] %v5150
      %5851 = vst [vmem:[%s199 + $0x480] sm:$0xf] %v5151
      %5852 = vst [vmem:[%s199 + $0x484] sm:$0xf] %v5152
      %5853 = vst [vmem:[%s199 + $0x488] sm:$0xf] %v5153
      %5854 = vst [vmem:[%s199 + $0x48c] sm:$0xf] %v5154
      %5855 = vst [vmem:[%s199 + $0x490] sm:$0xf] %v5155
      %5856 = vst [vmem:[%s199 + $0x494] sm:$0xf] %v5156
      %5857 = vst [vmem:[%s199 + $0x498] sm:$0xf] %v5157
      %5858 = vst [vmem:[%s199 + $0x49c] sm:$0xf] %v5158
      %5859 = vst [vmem:[%s199 + $0x4a0] sm:$0xf] %v5159
      %5860 = vst [vmem:[%s199 + $0x4a4] sm:$0xf] %v5160
      %5861 = vst [vmem:[%s199 + $0x4a8] sm:$0xf] %v5161
      %5862 = vst [vmem:[%s199 + $0x4ac] sm:$0xf] %v5162
      %5863 = vst [vmem:[%s199 + $0x4b0] sm:$0xf] %v5163
      %5864 = vst [vmem:[%s199 + $0x4b4] sm:$0xf] %v5164
      %5865 = vst [vmem:[%s199 + $0x4b8] sm:$0xf] %v5165
      %5866 = vst [vmem:[%s199 + $0x4bc] sm:$0xf] %v5166
      %5867 = vst [vmem:[%s199 + $0x4c0] sm:$0xf] %v5167
      %5868 = vst [vmem:[%s199 + $0x4c4] sm:$0xf] %v5168
      %5869 = vst [vmem:[%s199 + $0x4c8] sm:$0xf] %v5169
      %5870 = vst [vmem:[%s199 + $0x4cc] sm:$0xf] %v5170
      %5871 = vst [vmem:[%s199 + $0x4d0] sm:$0xf] %v5171
      %5872 = vst [vmem:[%s199 + $0x4d4] sm:$0xf] %v5172
      %5873 = vst [vmem:[%s199 + $0x4d8] sm:$0xf] %v5173
      %5874 = vst [vmem:[%s199 + $0x4dc] sm:$0xf] %v5174
      %5875 = vst [vmem:[%s199 + $0x4e0] sm:$0xf] %v5175
      %5876 = vst [vmem:[%s199 + $0x4e4] sm:$0xf] %v5176
      %5877 = vst [vmem:[%s199 + $0x4e8] sm:$0xf] %v5177
      %5878 = vst [vmem:[%s199 + $0x4ec] sm:$0xf] %v5178
      %5879 = vst [vmem:[%s199 + $0x4f0] sm:$0xf] %v5179
      %5880 = vst [vmem:[%s199 + $0x4f4] sm:$0xf] %v5180
      %5881 = vst [vmem:[%s199 + $0x4f8] sm:$0xf] %v5181
      %5882 = vst [vmem:[%s199 + $0x4fc] sm:$0xf] %v5182
      %5883 = vst [vmem:[%s199 + $0x500] sm:$0xf] %v5183
      %5884 = vst [vmem:[%s199 + $0x504] sm:$0xf] %v5184
      %5885 = vst [vmem:[%s199 + $0x508] sm:$0xf] %v5185
      %5886 = vst [vmem:[%s199 + $0x50c] sm:$0xf] %v5186
      %5887 = vst [vmem:[%s199 + $0x510] sm:$0xf] %v5187
      %5888 = vst [vmem:[%s199 + $0x514] sm:$0xf] %v5188
      %5889 = vst [vmem:[%s199 + $0x518] sm:$0xf] %v5189
      %5890 = vst [vmem:[%s199 + $0x51c] sm:$0xf] %v5190
      %5891 = vst [vmem:[%s199 + $0x520] sm:$0xf] %v5191
      %5892 = vst [vmem:[%s199 + $0x524] sm:$0xf] %v5192
      %5893 = vst [vmem:[%s199 + $0x528] sm:$0xf] %v5193
      %5894 = vst [vmem:[%s199 + $0x52c] sm:$0xf] %v5194
      %5895 = vst [vmem:[%s199 + $0x530] sm:$0xf] %v5195
      %5896 = vst [vmem:[%s199 + $0x534] sm:$0xf] %v5196
      %5897 = vst [vmem:[%s199 + $0x538] sm:$0xf] %v5197
      %5898 = vst [vmem:[%s199 + $0x53c] sm:$0xf] %v5198
      %5899 = vst [vmem:[%s199 + $0x540] sm:$0xf] %v5199
      %5900 = vst [vmem:[%s199 + $0x544] sm:$0xf] %v5200
      %5901 = vst [vmem:[%s199 + $0x548] sm:$0xf] %v5201
      %5902 = vst [vmem:[%s199 + $0x54c] sm:$0xf] %v5202
      %5903 = vst [vmem:[%s199 + $0x550] sm:$0xf] %v5203
      %5904 = vst [vmem:[%s199 + $0x554] sm:$0xf] %v5204
      %5905 = vst [vmem:[%s199 + $0x558] sm:$0xf] %v5205
      %5906 = vst [vmem:[%s199 + $0x55c] sm:$0xf] %v5206
      %5907 = vst [vmem:[%s199 + $0x560] sm:$0xf] %v5207
      %5908 = vst [vmem:[%s199 + $0x564] sm:$0xf] %v5208
      %5909 = vst [vmem:[%s199 + $0x568] sm:$0xf] %v5209
      %5910 = vst [vmem:[%s199 + $0x56c] sm:$0xf] %v5210
      %5911 = vst [vmem:[%s199 + $0x570] sm:$0xf] %v5211
      %5912 = vst [vmem:[%s199 + $0x574] sm:$0xf] %v5212
      %s5913 = smul.u32 350, %s15
      %p5914 = scmp.lt.s32.totalorder %s5913, 699
      %s5915 = scalar_select %p5914, %s5913, 699
      %s5916 = smul.addr %s5915, 4
      %s5917 = scalar_lea.vmem %s4, %s5916
      // Predicated region
      $region37: #{scicnn_forward.3} parent=35 // pred_check
        %p5918 = pneg %p122
      $region38: #{scicnn_forward.3} parent=35 // pred_check_branch
        %5920 = sbr.rel (%p5918) target = $region40
      $region39: #{scicnn_forward.3} parent=35 // pred_region
        %s5921 = smul.u32 350, %s15
      $region40: #{scicnn_forward.3} parent=35 // pred_fallthru
        _
    $region36: #{scicnn_forward.3} parent=5 // pred_fallthru
      _
    %p5922 = scmp.le.s32.totalorder 2, %s10
    // Predicated region
    $region41: #{scicnn_forward.3} parent=5 // pred_check
      %p5923 = pneg %p5922
    $region42: #{scicnn_forward.3} parent=5 // pred_check_branch
      %5925 = sbr.rel (%p5923) target = $region44
    $region43: #{scicnn_forward.3} parent=5 // pred_region
      %s5926 = ssub.s32 %s10, 2
      // Predicated region
      $region45: #{scicnn_forward.3} parent=43 // pred_check
        %p5927 = pneg %p128
      $region46: #{scicnn_forward.3} parent=43 // pred_check_branch
        %5929 = sbr.rel (%p5927) target = $region48
      $region47: #{scicnn_forward.3} parent=43 // pred_region
        %s5930 = smul.u32 350, %s16
        %p5931 = scmp.lt.s32.totalorder %s5930, 699
        %s5932 = scalar_select %p5931, %s5930, 699
        %s5933 = smul.addr %s5932, 4
        %s5934 = scalar_lea.vmem %s4, %s5933
      $region48: #{scicnn_forward.3} parent=43 // pred_fallthru
        _
    $region44: #{scicnn_forward.3} parent=5 // pred_fallthru
      _
  $region6: #{scicnn_forward.3} parent=0 // loop_footer
    %s14 = sadd.s32 1, %s10
  $region7: #{scicnn_forward.3} parent=0 // loop_footer_branch
    %9 = sbr.rel target = $region3
  $region8: #{scicnn_forward.3} parent=0 // loop_exit
    _

// kernel: scicnn_forward.4
$region0: #{scicnn_forward.4}
  #allocation0 [shape = 'u32[]', space=smem, size = 0x4, offset = 0x4, fixed_abs, tag = 'smem constant byte address 0x4 - core index']
  #allocation1 [shape = 'u32[144,128]{1,0:T(1,128)}', space=vmem, size = 0x12000, scoped, tag = 'internal scratch']
  %s0 = inlined_call_operand.vmem [shape: bf16[1376,128], index: 0, kind: input, shape index: {}]
  %s1 = inlined_call_operand.vmem [shape: bf16[128,128], index: 1, kind: input, shape index: {}]
  %s2 = inlined_call_operand.vmem [shape: f32[1,128], index: 2, kind: input, shape index: {}]
  %s3 = inlined_call_operand.vmem [shape: f32[1,128], index: 3, kind: input, shape index: {}]
  %s4 = inlined_call_operand.vmem [shape: bf16[1376,128], index: 4, kind: output, shape index: {}]
  %s5 = sld [smem:[#allocation0]]
  $region49: #{scicnn_forward.4} parent=0
    _
  %s7 = ssub.s32 1, %s5
  %s8 = scalar_select 0, %s7, %s5
  loop: start=0, step=1, limit=4
  $region2: #{scicnn_forward.4} parent=0 // loop_pre_header
    _
  $region3: #{scicnn_forward.4} parent=0 // loop_header
    %s10 = sphi 0, %s14
    %p11 = scmp.ge.s32.totalorder %s10, 4
    %s20 = sphi 0, %s22
    %s23 = sphi 0, %s20
    %s24 = sphi 0, %s23
    %s40 = sphi 0, %s24
    %s44 = sphi 0, %s44
    %s46 = sphi 0, %s44
    %s47 = sphi 0, %s46
    %s61 = sphi 0, %s47
    %s65 = sphi 0, %s65
    %s67 = sphi 0, %s65
    %s68 = sphi 0, %s67
    %s82 = sphi 0, %s68
    %s86 = sphi 0, %s86
    %s88 = sphi 0, %s86
    %s89 = sphi 0, %s88
    %s103 = sphi 0, %s89
    %s109 = sphi 0, %s111
    %s112 = sphi 0, %s109
    %s113 = sphi 0, %s112
    %s129 = sphi 0, %s113
  $region4: #{scicnn_forward.4} parent=0 // loop_header_branch
    %13 = sbr.rel (%p11) target = $region8
  $region5: #{scicnn_forward.4} parent=0 // loop_body
    %s15 = ssub.s32 %s10, 1
    %s16 = ssub.s32 %s10, 2
    %s17 = sadd.s32 %s10, 1
    %s18 = ssub.s32 %s10, %s17
    %p19 = scmp.eq.s32.totalorder %s18, 0
    %s21 = sadd.s32 %s20, 1
    %s22 = scalar_select %p19, %s20, %s21
    %p25 = pneg %p19
    %p26 = scmp.eq.s32.totalorder %s10, 1
    %p27 = por %p25, %p26
    %p28 = scmp.ne.s32.totalorder %s20, %s23
    %p29 = scmp.eq.s32.totalorder %s10, 0
    %p30 = por %p28, %p29
    %p31 = scmp.ne.s32.totalorder %s20, %s23
    %p32 = scmp.eq.s32.totalorder %s15, 1
    %p33 = por %p31, %p32
    %p34 = scmp.ne.s32.totalorder %s23, %s24
    %p35 = scmp.eq.s32.totalorder %s15, 0
    %p36 = por %p34, %p35
    %p37 = scmp.ne.s32.totalorder %s23, %s24
    %p38 = scmp.eq.s32.totalorder %s16, 1
    %p39 = por %p37, %p38
    %p41 = scmp.ne.s32.totalorder %s24, %s40
    %p42 = scmp.eq.s32.totalorder %s16, 0
    %p43 = por %p41, %p42
    %s45 = sadd.s32 %s44, 1
    %p48 = scmp.eq.s32.totalorder %s10, 1
    %p49 = scmp.ne.s32.totalorder %s44, %s46
    %p50 = scmp.eq.s32.totalorder %s10, 0
    %p51 = por %p49, %p50
    %p52 = scmp.ne.s32.totalorder %s44, %s46
    %p53 = scmp.eq.s32.totalorder %s15, 1
    %p54 = por %p52, %p53
    %p55 = scmp.ne.s32.totalorder %s46, %s47
    %p56 = scmp.eq.s32.totalorder %s15, 0
    %p57 = por %p55, %p56
    %p58 = scmp.ne.s32.totalorder %s46, %s47
    %p59 = scmp.eq.s32.totalorder %s16, 1
    %p60 = por %p58, %p59
    %p62 = scmp.ne.s32.totalorder %s47, %s61
    %p63 = scmp.eq.s32.totalorder %s16, 0
    %p64 = por %p62, %p63
    %s66 = sadd.s32 %s65, 1
    %p69 = scmp.eq.s32.totalorder %s10, 1
    %p70 = scmp.ne.s32.totalorder %s65, %s67
    %p71 = scmp.eq.s32.totalorder %s10, 0
    %p72 = por %p70, %p71
    %p73 = scmp.ne.s32.totalorder %s65, %s67
    %p74 = scmp.eq.s32.totalorder %s15, 1
    %p75 = por %p73, %p74
    %p76 = scmp.ne.s32.totalorder %s67, %s68
    %p77 = scmp.eq.s32.totalorder %s15, 0
    %p78 = por %p76, %p77
    %p79 = scmp.ne.s32.totalorder %s67, %s68
    %p80 = scmp.eq.s32.totalorder %s16, 1
    %p81 = por %p79, %p80
    %p83 = scmp.ne.s32.totalorder %s68, %s82
    %p84 = scmp.eq.s32.totalorder %s16, 0
    %p85 = por %p83, %p84
    %s87 = sadd.s32 %s86, 1
    %p90 = scmp.eq.s32.totalorder %s10, 1
    %p91 = scmp.ne.s32.totalorder %s86, %s88
    %p92 = scmp.eq.s32.totalorder %s10, 0
    %p93 = por %p91, %p92
    %p94 = scmp.ne.s32.totalorder %s86, %s88
    %p95 = scmp.eq.s32.totalorder %s15, 1
    %p96 = por %p94, %p95
    %p97 = scmp.ne.s32.totalorder %s88, %s89
    %p98 = scmp.eq.s32.totalorder %s15, 0
    %p99 = por %p97, %p98
    %p100 = scmp.ne.s32.totalorder %s88, %s89
    %p101 = scmp.eq.s32.totalorder %s16, 1
    %p102 = por %p100, %p101
    %p104 = scmp.ne.s32.totalorder %s89, %s103
    %p105 = scmp.eq.s32.totalorder %s16, 0
    %p106 = por %p104, %p105
    %s107 = ssub.s32 %s10, %s17
    %p108 = scmp.eq.s32.totalorder %s107, 0
    %s110 = sadd.s32 %s109, 1
    %s111 = scalar_select %p108, %s109, %s110
    %p114 = pneg %p108
    %p115 = scmp.eq.s32.totalorder %s10, 1
    %p116 = por %p114, %p115
    %p117 = scmp.ne.s32.totalorder %s109, %s112
    %p118 = scmp.eq.s32.totalorder %s10, 0
    %p119 = por %p117, %p118
    %p120 = scmp.ne.s32.totalorder %s109, %s112
    %p121 = scmp.eq.s32.totalorder %s15, 1
    %p122 = por %p120, %p121
    %p123 = scmp.ne.s32.totalorder %s112, %s113
    %p124 = scmp.eq.s32.totalorder %s15, 0
    %p125 = por %p123, %p124
    %p126 = scmp.ne.s32.totalorder %s112, %s113
    %p127 = scmp.eq.s32.totalorder %s16, 1
    %p128 = por %p126, %p127
    %p130 = scmp.ne.s32.totalorder %s113, %s129
    %p131 = scmp.eq.s32.totalorder %s16, 0
    %p132 = por %p130, %p131
    %p133 = scmp.le.s32.totalorder 1, %s10
    %p134 = scmp.lt.s32.totalorder %s10, 3
    %p135 = pnand %p133, %p134
    %p136 = pneg %p135
    // Predicated region
    $region9: #{scicnn_forward.4} parent=5 // pred_check
      _
    $region10: #{scicnn_forward.4} parent=5 // pred_check_branch
      %138 = sbr.rel (%p135) target = $region12
    $region11: #{scicnn_forward.4} parent=5 // pred_region
      %s139 = ssub.s32 %s10, 1
      // Predicated region
      $region13: #{scicnn_forward.4} parent=11 // pred_check
        %p140 = pneg %p57
      $region14: #{scicnn_forward.4} parent=11 // pred_check_branch
        %142 = sbr.rel (%p140) target = $region16
      $region15: #{scicnn_forward.4} parent=11 // pred_region
        _
      $region16: #{scicnn_forward.4} parent=11 // pred_fallthru
        _
      // Predicated region
      $region17: #{scicnn_forward.4} parent=11 // pred_check
        %p143 = pneg %p78
      $region18: #{scicnn_forward.4} parent=11 // pred_check_branch
        %145 = sbr.rel (%p143) target = $region20
      $region19: #{scicnn_forward.4} parent=11 // pred_region
        _
      $region20: #{scicnn_forward.4} parent=11 // pred_fallthru
        _
      // Predicated region
      $region21: #{scicnn_forward.4} parent=11 // pred_check
        %p146 = pneg %p99
      $region22: #{scicnn_forward.4} parent=11 // pred_check_branch
        %148 = sbr.rel (%p146) target = $region24
      $region23: #{scicnn_forward.4} parent=11 // pred_region
        _
      $region24: #{scicnn_forward.4} parent=11 // pred_fallthru
        _
    $region12: #{scicnn_forward.4} parent=5 // pred_fallthru
      _
    %p149 = scmp.lt.s32.totalorder %s10, 2
    // Predicated region
    $region25: #{scicnn_forward.4} parent=5 // pred_check
      %p150 = pneg %p149
    $region26: #{scicnn_forward.4} parent=5 // pred_check_branch
      %152 = sbr.rel (%p150) target = $region28
    $region27: #{scicnn_forward.4} parent=5 // pred_region
      // Predicated region
      $region29: #{scicnn_forward.4} parent=27 // pred_check
        %p153 = pneg %p30
      $region30: #{scicnn_forward.4} parent=27 // pred_check_branch
        %155 = sbr.rel (%p153) target = $region32
      $region31: #{scicnn_forward.4} parent=27 // pred_region
        %s156 = smul.u32 86, %s10
        %p157 = scmp.lt.s32.totalorder %s156, 171
        %s158 = scalar_select %p157, %s156, 171
        %s159 = smul.addr %s158, 4
        %s160 = scalar_lea.vmem %s0, %s159
        %s161 = smul.u32 86, %s10
      $region32: #{scicnn_forward.4} parent=27 // pred_fallthru
        _
    $region28: #{scicnn_forward.4} parent=5 // pred_fallthru
      _
    %p162 = scmp.le.s32.totalorder 1, %s10
    %p163 = scmp.lt.s32.totalorder %s10, 3
    %p164 = pnand %p162, %p163
    %p165 = pneg %p164
    // Predicated region
    $region33: #{scicnn_forward.4} parent=5 // pred_check
      _
    $region34: #{scicnn_forward.4} parent=5 // pred_check_branch
      %167 = sbr.rel (%p164) target = $region36
    $region35: #{scicnn_forward.4} parent=5 // pred_region
      %s168 = ssub.s32 %s10, 1
      %s169 = smul.u32 86, %s15
      %p170 = scmp.lt.s32.totalorder %s169, 171
      %s171 = scalar_select %p170, %s169, 171
      %s172 = smul.addr %s171, 4
      %s173 = scalar_lea.vmem %s0, %s172
      %p174 = pneg %p36
      %p175 = pneg %p33
      %p176 = pneg %p57
      %p177 = pneg %p54
      %p178 = pneg %p78
      %p179 = pneg %p75
      %p180 = pneg %p99
      %p181 = pneg %p96
      %p182 = pneg %p125
      %p183 = pneg %p122
      %s184 = smul.u32 86, %s15
      %p185 = scmp.lt.s32.totalorder %s184, 171
      %s186 = scalar_select %p185, %s184, 171
      %s187 = smul.addr %s186, 4
      %s188 = scalar_lea.vmem %s4, %s187
      %s189 = smul.u32 86, %s15
      %p190 = scmp.lt.s32.totalorder %s189, 171
      %s191 = scalar_select %p190, %s189, 171
      %s192 = smul.addr %s191, 4
      %s193 = scalar_lea.vmem %s0, %s192
      %s194 = smul.u32 86, %s15
      %s195 = smul.u32 86, %s15
      %p196 = scmp.lt.s32.totalorder %s195, 171
      %s197 = scalar_select %p196, %s195, 171
      %s198 = smul.addr %s197, 4
      %s199 = scalar_lea.vmem %s4, %s198
      %s200 = smul.u32 86, %s15
      %v202 = vld [vmem:[%s193] sm:$0xf]
      %v203 = vld [vmem:[%s193 + $0x4] sm:$0xf]
      %v204 = vld [vmem:[%s193 + $0x8] sm:$0xf]
      %v205 = vld [vmem:[%s193 + $0xc] sm:$0xf]
      %v206 = vld [vmem:[%s193 + $0x10] sm:$0xf]
      %v207 = vld [vmem:[%s193 + $0x14] sm:$0xf]
      %v208 = vld [vmem:[%s193 + $0x18] sm:$0xf]
      %v209 = vld [vmem:[%s193 + $0x1c] sm:$0xf]
      %v210 = vld [vmem:[%s193 + $0x20] sm:$0xf]
      %v211 = vld [vmem:[%s193 + $0x24] sm:$0xf]
      %v212 = vld [vmem:[%s193 + $0x28] sm:$0xf]
      %v213 = vld [vmem:[%s193 + $0x2c] sm:$0xf]
      %v214 = vld [vmem:[%s193 + $0x30] sm:$0xf]
      %v215 = vld [vmem:[%s193 + $0x34] sm:$0xf]
      %v216 = vld [vmem:[%s193 + $0x38] sm:$0xf]
      %v217 = vld [vmem:[%s193 + $0x3c] sm:$0xf]
      %v218 = vld [vmem:[%s193 + $0x40] sm:$0xf]
      %v219 = vld [vmem:[%s193 + $0x44] sm:$0xf]
      %v220 = vld [vmem:[%s193 + $0x48] sm:$0xf]
      %v221 = vld [vmem:[%s193 + $0x4c] sm:$0xf]
      %v222 = vld [vmem:[%s193 + $0x50] sm:$0xf]
      %v223 = vld [vmem:[%s193 + $0x54] sm:$0xf]
      %v224 = vld [vmem:[%s193 + $0x58] sm:$0xf]
      %v225 = vld [vmem:[%s193 + $0x5c] sm:$0xf]
      %v226 = vld [vmem:[%s193 + $0x60] sm:$0xf]
      %v227 = vld [vmem:[%s193 + $0x64] sm:$0xf]
      %v228 = vld [vmem:[%s193 + $0x68] sm:$0xf]
      %v229 = vld [vmem:[%s193 + $0x6c] sm:$0xf]
      %v230 = vld [vmem:[%s193 + $0x70] sm:$0xf]
      %v231 = vld [vmem:[%s193 + $0x74] sm:$0xf]
      %v232 = vld [vmem:[%s193 + $0x78] sm:$0xf]
      %v233 = vld [vmem:[%s193 + $0x7c] sm:$0xf]
      %v234 = vld [vmem:[%s193 + $0x80] sm:$0xf]
      %v235 = vld [vmem:[%s193 + $0x84] sm:$0xf]
      %v236 = vld [vmem:[%s193 + $0x88] sm:$0xf]
      %v237 = vld [vmem:[%s193 + $0x8c] sm:$0xf]
      %v238 = vld [vmem:[%s193 + $0x90] sm:$0xf]
      %v239 = vld [vmem:[%s193 + $0x94] sm:$0xf]
      %v240 = vld [vmem:[%s193 + $0x98] sm:$0xf]
      %v241 = vld [vmem:[%s193 + $0x9c] sm:$0xf]
      %v242 = vld [vmem:[%s193 + $0xa0] sm:$0xf]
      %v243 = vld [vmem:[%s193 + $0xa4] sm:$0xf]
      %v244 = vld [vmem:[%s193 + $0xa8] sm:$0xf]
      %v245 = vld [vmem:[%s193 + $0xac] sm:$0xf]
      %v246 = vld [vmem:[%s193 + $0xb0] sm:$0xf]
      %v247 = vld [vmem:[%s193 + $0xb4] sm:$0xf]
      %v248 = vld [vmem:[%s193 + $0xb8] sm:$0xf]
      %v249 = vld [vmem:[%s193 + $0xbc] sm:$0xf]
      %v250 = vld [vmem:[%s193 + $0xc0] sm:$0xf]
      %v251 = vld [vmem:[%s193 + $0xc4] sm:$0xf]
      %v252 = vld [vmem:[%s193 + $0xc8] sm:$0xf]
      %v253 = vld [vmem:[%s193 + $0xcc] sm:$0xf]
      %v254 = vld [vmem:[%s193 + $0xd0] sm:$0xf]
      %v255 = vld [vmem:[%s193 + $0xd4] sm:$0xf]
      %v256 = vld [vmem:[%s193 + $0xd8] sm:$0xf]
      %v257 = vld [vmem:[%s193 + $0xdc] sm:$0xf]
      %v258 = vld [vmem:[%s193 + $0xe0] sm:$0xf]
      %v259 = vld [vmem:[%s193 + $0xe4] sm:$0xf]
      %v260 = vld [vmem:[%s193 + $0xe8] sm:$0xf]
      %v261 = vld [vmem:[%s193 + $0xec] sm:$0xf]
      %v262 = vld [vmem:[%s193 + $0xf0] sm:$0xf]
      %v263 = vld [vmem:[%s193 + $0xf4] sm:$0xf]
      %v264 = vld [vmem:[%s193 + $0xf8] sm:$0xf]
      %v265 = vld [vmem:[%s193 + $0xfc] sm:$0xf]
      %v266 = vld [vmem:[%s193 + $0x100] sm:$0xf]
      %v267 = vld [vmem:[%s193 + $0x104] sm:$0xf]
      %v268 = vld [vmem:[%s193 + $0x108] sm:$0xf]
      %v269 = vld [vmem:[%s193 + $0x10c] sm:$0xf]
      %v270 = vld [vmem:[%s193 + $0x110] sm:$0xf]
      %v271 = vld [vmem:[%s193 + $0x114] sm:$0xf]
      %v272 = vld [vmem:[%s193 + $0x118] sm:$0xf]
      %v273 = vld [vmem:[%s193 + $0x11c] sm:$0xf]
      %v274 = vld [vmem:[%s193 + $0x120] sm:$0xf]
      %v275 = vld [vmem:[%s193 + $0x124] sm:$0xf]
      %v276 = vld [vmem:[%s193 + $0x128] sm:$0xf]
      %v277 = vld [vmem:[%s193 + $0x12c] sm:$0xf]
      %v278 = vld [vmem:[%s193 + $0x130] sm:$0xf]
      %v279 = vld [vmem:[%s193 + $0x134] sm:$0xf]
      %v280 = vld [vmem:[%s193 + $0x138] sm:$0xf]
      %v281 = vld [vmem:[%s193 + $0x13c] sm:$0xf]
      %v282 = vld [vmem:[%s193 + $0x140] sm:$0xf]
      %v283 = vld [vmem:[%s193 + $0x144] sm:$0xf]
      %v284 = vld [vmem:[%s193 + $0x148] sm:$0xf]
      %v285 = vld [vmem:[%s193 + $0x14c] sm:$0xf]
      %v286 = vld [vmem:[%s193 + $0x150] sm:$0xf]
      %v287 = vld [vmem:[%s193 + $0x154] sm:$0xf]
      %v288 = vld [vmem:[%s1] sm:$0xf]
      %v289 = vld [vmem:[%s1 + $0x4] sm:$0xf]
      %v290 = vld [vmem:[%s1 + $0x8] sm:$0xf]
      %v291 = vld [vmem:[%s1 + $0xc] sm:$0xf]
      %v292 = vld [vmem:[%s1 + $0x10] sm:$0xf]
      %v293 = vld [vmem:[%s1 + $0x14] sm:$0xf]
      %v294 = vld [vmem:[%s1 + $0x18] sm:$0xf]
      %v295 = vld [vmem:[%s1 + $0x1c] sm:$0xf]
      %v296 = vld [vmem:[%s1 + $0x20] sm:$0xf]
      %v297 = vld [vmem:[%s1 + $0x24] sm:$0xf]
      %v298 = vld [vmem:[%s1 + $0x28] sm:$0xf]
      %v299 = vld [vmem:[%s1 + $0x2c] sm:$0xf]
      %v300 = vld [vmem:[%s1 + $0x30] sm:$0xf]
      %v301 = vld [vmem:[%s1 + $0x34] sm:$0xf]
      %v302 = vld [vmem:[%s1 + $0x38] sm:$0xf]
      %v303 = vld [vmem:[%s1 + $0x3c] sm:$0xf]
      %v390 = vunpack.c.l.b16 %v202
      %v391 = vunpack.c.l.b16 %v203
      %v392 = vunpack.c.l.b16 %v204
      %v393 = vunpack.c.l.b16 %v205
      %v394 = vunpack.c.l.b16 %v206
      %v395 = vunpack.c.l.b16 %v207
      %v396 = vunpack.c.l.b16 %v208
      %v397 = vunpack.c.l.b16 %v209
      %v398 = vunpack.c.l.b16 %v210
      %v399 = vunpack.c.l.b16 %v211
      %v400 = vunpack.c.l.b16 %v212
      %v401 = vunpack.c.l.b16 %v213
      %v402 = vunpack.c.l.b16 %v214
      %v403 = vunpack.c.l.b16 %v215
      %v404 = vunpack.c.l.b16 %v216
      %v405 = vunpack.c.l.b16 %v217
      %v406 = vunpack.c.l.b16 %v218
      %v407 = vunpack.c.l.b16 %v219
      %v408 = vunpack.c.l.b16 %v220
      %v409 = vunpack.c.l.b16 %v221
      %v410 = vunpack.c.l.b16 %v222
      %v411 = vunpack.c.l.b16 %v223
      %v412 = vunpack.c.l.b16 %v224
      %v413 = vunpack.c.l.b16 %v225
      %v414 = vunpack.c.l.b16 %v226
      %v415 = vunpack.c.l.b16 %v227
      %v416 = vunpack.c.l.b16 %v228
      %v417 = vunpack.c.l.b16 %v229
      %v418 = vunpack.c.l.b16 %v230
      %v419 = vunpack.c.l.b16 %v231
      %v420 = vunpack.c.l.b16 %v232
      %v421 = vunpack.c.l.b16 %v233
      %v422 = vunpack.c.l.b16 %v234
      %v423 = vunpack.c.l.b16 %v235
      %v424 = vunpack.c.l.b16 %v236
      %v425 = vunpack.c.l.b16 %v237
      %v426 = vunpack.c.l.b16 %v238
      %v427 = vunpack.c.l.b16 %v239
      %v428 = vunpack.c.l.b16 %v240
      %v429 = vunpack.c.l.b16 %v241
      %v430 = vunpack.c.l.b16 %v242
      %v431 = vunpack.c.l.b16 %v243
      %v432 = vunpack.c.l.b16 %v244
      %v433 = vunpack.c.l.b16 %v245
      %v434 = vunpack.c.l.b16 %v246
      %v435 = vunpack.c.l.b16 %v247
      %v436 = vunpack.c.l.b16 %v248
      %v437 = vunpack.c.l.b16 %v249
      %v438 = vunpack.c.l.b16 %v250
      %v439 = vunpack.c.l.b16 %v251
      %v440 = vunpack.c.l.b16 %v252
      %v441 = vunpack.c.l.b16 %v253
      %v442 = vunpack.c.l.b16 %v254
      %v443 = vunpack.c.l.b16 %v255
      %v444 = vunpack.c.l.b16 %v256
      %v445 = vunpack.c.l.b16 %v257
      %v446 = vunpack.c.l.b16 %v258
      %v447 = vunpack.c.l.b16 %v259
      %v448 = vunpack.c.l.b16 %v260
      %v449 = vunpack.c.l.b16 %v261
      %v450 = vunpack.c.l.b16 %v262
      %v451 = vunpack.c.l.b16 %v263
      %v452 = vunpack.c.l.b16 %v264
      %v453 = vunpack.c.l.b16 %v265
      %v454 = vunpack.c.l.b16 %v266
      %v455 = vunpack.c.l.b16 %v267
      %v456 = vunpack.c.l.b16 %v268
      %v457 = vunpack.c.l.b16 %v269
      %v458 = vunpack.c.l.b16 %v270
      %v459 = vunpack.c.l.b16 %v271
      %v460 = vunpack.c.l.b16 %v272
      %v461 = vunpack.c.l.b16 %v273
      %v462 = vunpack.c.l.b16 %v274
      %v463 = vunpack.c.l.b16 %v275
      %v464 = vunpack.c.l.b16 %v276
      %v465 = vunpack.c.l.b16 %v277
      %v466 = vunpack.c.l.b16 %v278
      %v467 = vunpack.c.l.b16 %v279
      %v468 = vunpack.c.l.b16 %v280
      %v469 = vunpack.c.l.b16 %v281
      %v470 = vunpack.c.l.b16 %v282
      %v471 = vunpack.c.l.b16 %v283
      %v472 = vunpack.c.l.b16 %v284
      %v473 = vunpack.c.l.b16 %v285
      %v474 = vunpack.c.l.b16 %v286
      %v475 = vunpack.c.l.b16 %v287
      %v476 = vpack.c.b16 %v391, %v390
      %v477 = vpack.c.b16 %v393, %v392
      %v478 = vpack.c.b16 %v395, %v394
      %v479 = vpack.c.b16 %v397, %v396
      %v480 = vpack.c.b16 %v399, %v398
      %v481 = vpack.c.b16 %v401, %v400
      %v482 = vpack.c.b16 %v403, %v402
      %v483 = vpack.c.b16 %v405, %v404
      %v484 = vpack.c.b16 %v407, %v406
      %v485 = vpack.c.b16 %v409, %v408
      %v486 = vpack.c.b16 %v411, %v410
      %v487 = vpack.c.b16 %v413, %v412
      %v488 = vpack.c.b16 %v415, %v414
      %v489 = vpack.c.b16 %v417, %v416
      %v490 = vpack.c.b16 %v419, %v418
      %v491 = vpack.c.b16 %v421, %v420
      %v492 = vpack.c.b16 %v423, %v422
      %v493 = vpack.c.b16 %v425, %v424
      %v494 = vpack.c.b16 %v427, %v426
      %v495 = vpack.c.b16 %v429, %v428
      %v496 = vpack.c.b16 %v431, %v430
      %v497 = vpack.c.b16 %v433, %v432
      %v498 = vpack.c.b16 %v435, %v434
      %v499 = vpack.c.b16 %v437, %v436
      %v500 = vpack.c.b16 %v439, %v438
      %v501 = vpack.c.b16 %v441, %v440
      %v502 = vpack.c.b16 %v443, %v442
      %v503 = vpack.c.b16 %v445, %v444
      %v504 = vpack.c.b16 %v447, %v446
      %v505 = vpack.c.b16 %v449, %v448
      %v506 = vpack.c.b16 %v451, %v450
      %v507 = vpack.c.b16 %v453, %v452
      %v508 = vpack.c.b16 %v455, %v454
      %v509 = vpack.c.b16 %v457, %v456
      %v510 = vpack.c.b16 %v459, %v458
      %v511 = vpack.c.b16 %v461, %v460
      %v512 = vpack.c.b16 %v463, %v462
      %v513 = vpack.c.b16 %v465, %v464
      %v514 = vpack.c.b16 %v467, %v466
      %v515 = vpack.c.b16 %v469, %v468
      %v516 = vpack.c.b16 %v471, %v470
      %v517 = vpack.c.b16 %v473, %v472
      %v518 = vpack.c.b16 %v475, %v474
      %v578 = vunpack.c.l.b16 %v288
      %v579 = vunpack.c.l.b16 %v289
      %v580 = vunpack.c.l.b16 %v290
      %v581 = vunpack.c.l.b16 %v291
      %v582 = vunpack.c.l.b16 %v292
      %v583 = vunpack.c.l.b16 %v293
      %v584 = vunpack.c.l.b16 %v294
      %v585 = vunpack.c.l.b16 %v295
      %v586 = vunpack.c.l.b16 %v296
      %v587 = vunpack.c.l.b16 %v297
      %v588 = vunpack.c.l.b16 %v298
      %v589 = vunpack.c.l.b16 %v299
      %v590 = vunpack.c.l.b16 %v300
      %v591 = vunpack.c.l.b16 %v301
      %v592 = vunpack.c.l.b16 %v302
      %v593 = vunpack.c.l.b16 %v303
      %v594 = vpack.c.b16 %v579, %v578
      %v595 = vpack.c.b16 %v581, %v580
      %v596 = vpack.c.b16 %v583, %v582
      %v597 = vpack.c.b16 %v585, %v584
      %v598 = vpack.c.b16 %v587, %v586
      %v599 = vpack.c.b16 %v589, %v588
      %v600 = vpack.c.b16 %v591, %v590
      %v601 = vpack.c.b16 %v593, %v592
      %610 = vmatprep.subr.bf16.mxu0 0
      %611 = vmatpush1.bf16.msra.mxu0 %v594
      %612 = vmatprep.subr.bf16.mxu0 0
      %613 = vmatpush1.bf16.msra.mxu0 %v595
      %614 = vmatprep.subr.bf16.mxu0 0
      %615 = vmatpush1.bf16.msra.mxu0 %v596
      %616 = vmatprep.subr.bf16.mxu0 0
      %617 = vmatpush1.bf16.msra.mxu0 %v597
      %618 = vmatprep.subr.bf16.mxu0 0
      %619 = vmatpush1.bf16.msra.mxu0 %v598
      %620 = vmatprep.subr.bf16.mxu0 0
      %621 = vmatpush1.bf16.msra.mxu0 %v599
      %622 = vmatprep.subr.bf16.mxu0 0
      %623 = vmatpush1.bf16.msra.mxu0 %v600
      %624 = vmatprep.subr.bf16.mxu0 0
      %625 = vmatpush1.bf16.msra.mxu0 %v601
      %626 = vmatprep.subr.bf16.mxu0 0
      %627 = vmatpush1.bf16.msra.mxu0 0
      %628 = vmatprep.subr.bf16.mxu0 0
      %629 = vmatpush1.bf16.msra.mxu0 0
      %630 = vmatprep.subr.bf16.mxu0 0
      %631 = vmatpush1.bf16.msra.mxu0 0
      %632 = vmatprep.subr.bf16.mxu0 0
      %633 = vmatpush1.bf16.msra.mxu0 0
      %634 = vmatprep.subr.bf16.mxu0 0
      %635 = vmatpush1.bf16.msra.mxu0 0
      %636 = vmatprep.subr.bf16.mxu0 0
      %637 = vmatpush1.bf16.msra.mxu0 0
      %638 = vmatprep.subr.bf16.mxu0 0
      %639 = vmatpush1.bf16.msra.mxu0 0
      %640 = vmatprep.subr.bf16.mxu0 0
      %641 = vmatpush1.bf16.msra.mxu0 0
      %642 = vmatprep.mubr.bf16.mxu0 0
      %643 = vmatmul.mubr.bf16.gmra.mrb[0].mxu0 %v476
      %v644 = vpop.f32.mrb[0].mxu0
      %v645 = vadd.f32 0.0, %v644
      %v646 = vpop.f32.mrb[0].mxu0
      %v647 = vpop.f32.mrb[0].mxu0
      %v648 = vadd.f32 0.0, %v647
      %v649 = vpop.f32.mrb[0].mxu0
      %650 = vmatprep.mubr.bf16.mxu0 0
      %651 = vmatmul.mubr.bf16.gmra.mrb[0].mxu0 %v477
      %v652 = vpop.f32.mrb[0].mxu0
      %v653 = vadd.f32 0.0, %v652
      %v654 = vpop.f32.mrb[0].mxu0
      %v655 = vpop.f32.mrb[0].mxu0
      %v656 = vadd.f32 0.0, %v655
      %v657 = vpop.f32.mrb[0].mxu0
      %658 = vmatprep.mubr.bf16.mxu0 0
      %659 = vmatmul.mubr.bf16.gmra.mrb[0].mxu0 %v478
      %v660 = vpop.f32.mrb[0].mxu0
      %v661 = vadd.f32 0.0, %v660
      %v662 = vpop.f32.mrb[0].mxu0
      %v663 = vpop.f32.mrb[0].mxu0
      %v664 = vadd.f32 0.0, %v663
      %v665 = vpop.f32.mrb[0].mxu0
      %666 = vmatprep.mubr.bf16.mxu0 0
      %667 = vmatmul.mubr.bf16.gmra.mrb[0].mxu0 %v479
      %v668 = vpop.f32.mrb[0].mxu0
      %v669 = vadd.f32 0.0, %v668
      %v670 = vpop.f32.mrb[0].mxu0
      %v671 = vpop.f32.mrb[0].mxu0
      %v672 = vadd.f32 0.0, %v671
      %v673 = vpop.f32.mrb[0].mxu0
      %674 = vmatprep.mubr.bf16.mxu0 0
      %675 = vmatmul.mubr.bf16.gmra.mrb[0].mxu0 %v480
      %v676 = vpop.f32.mrb[0].mxu0
      %v677 = vadd.f32 0.0, %v676
      %v678 = vpop.f32.mrb[0].mxu0
      %v679 = vpop.f32.mrb[0].mxu0
      %v680 = vadd.f32 0.0, %v679
      %v681 = vpop.f32.mrb[0].mxu0
      %682 = vmatprep.mubr.bf16.mxu0 0
      %683 = vmatmul.mubr.bf16.gmra.mrb[0].mxu0 %v481
      %v684 = vpop.f32.mrb[0].mxu0
      %v685 = vadd.f32 0.0, %v684
      %v686 = vpop.f32.mrb[0].mxu0
      %v687 = vpop.f32.mrb[0].mxu0
      %v688 = vadd.f32 0.0, %v687
      %v689 = vpop.f32.mrb[0].mxu0
      %690 = vmatprep.mubr.bf16.mxu0 0
      %691 = vmatmul.mubr.bf16.gmra.mrb[0].mxu0 %v482
      %v692 = vpop.f32.mrb[0].mxu0
      %v693 = vadd.f32 0.0, %v692
      %v694 = vpop.f32.mrb[0].mxu0
      %v695 = vpop.f32.mrb[0].mxu0
      %v696 = vadd.f32 0.0, %v695
      %v697 = vpop.f32.mrb[0].mxu0
      %698 = vmatprep.mubr.bf16.mxu0 0
      %699 = vmatmul.mubr.bf16.gmra.mrb[0].mxu0 %v483
      %v700 = vpop.f32.mrb[0].mxu0
      %v701 = vadd.f32 0.0, %v700
      %v702 = vpop.f32.mrb[0].mxu0
      %v703 = vpop.f32.mrb[0].mxu0
      %v704 = vadd.f32 0.0, %v703
      %v705 = vpop.f32.mrb[0].mxu0
      %706 = vmatprep.mubr.bf16.mxu0 0
      %707 = vmatmul.mubr.bf16.gmra.mrb[0].mxu0 %v484
      %v708 = vpop.f32.mrb[0].mxu0
      %v709 = vadd.f32 0.0, %v708
      %v710 = vpop.f32.mrb[0].mxu0
      %v711 = vpop.f32.mrb[0].mxu0
      %v712 = vadd.f32 0.0, %v711
      %v713 = vpop.f32.mrb[0].mxu0
      %714 = vmatprep.mubr.bf16.mxu0 0
      %715 = vmatmul.mubr.bf16.gmra.mrb[0].mxu0 %v485
      %v716 = vpop.f32.mrb[0].mxu0
      %v717 = vadd.f32 0.0, %v716
      %v718 = vpop.f32.mrb[0].mxu0
      %v719 = vpop.f32.mrb[0].mxu0
      %v720 = vadd.f32 0.0, %v719
      %v721 = vpop.f32.mrb[0].mxu0
      %722 = vmatprep.mubr.bf16.mxu0 0
      %723 = vmatmul.mubr.bf16.gmra.mrb[0].mxu0 %v486
      %v724 = vpop.f32.mrb[0].mxu0
      %v725 = vadd.f32 0.0, %v724
      %v726 = vpop.f32.mrb[0].mxu0
      %v727 = vpop.f32.mrb[0].mxu0
      %v728 = vadd.f32 0.0, %v727
      %v729 = vpop.f32.mrb[0].mxu0
      %730 = vmatprep.mubr.bf16.mxu0 0
      %731 = vmatmul.mubr.bf16.gmra.mrb[0].mxu0 %v487
      %v732 = vpop.f32.mrb[0].mxu0
      %v733 = vadd.f32 0.0, %v732
      %v734 = vpop.f32.mrb[0].mxu0
      %v735 = vpop.f32.mrb[0].mxu0
      %v736 = vadd.f32 0.0, %v735
      %v737 = vpop.f32.mrb[0].mxu0
      %738 = vmatprep.mubr.bf16.mxu0 0
      %739 = vmatmul.mubr.bf16.gmra.mrb[0].mxu0 %v488
      %v740 = vpop.f32.mrb[0].mxu0
      %v741 = vadd.f32 0.0, %v740
      %v742 = vpop.f32.mrb[0].mxu0
      %v743 = vpop.f32.mrb[0].mxu0
      %v744 = vadd.f32 0.0, %v743
      %v745 = vpop.f32.mrb[0].mxu0
      %746 = vmatprep.mubr.bf16.mxu0 0
      %747 = vmatmul.mubr.bf16.gmra.mrb[0].mxu0 %v489
      %v748 = vpop.f32.mrb[0].mxu0
      %v749 = vadd.f32 0.0, %v748
      %v750 = vpop.f32.mrb[0].mxu0
      %v751 = vpop.f32.mrb[0].mxu0
      %v752 = vadd.f32 0.0, %v751
      %v753 = vpop.f32.mrb[0].mxu0
      %754 = vmatprep.mubr.bf16.mxu0 0
      %755 = vmatmul.mubr.bf16.gmra.mrb[0].mxu0 %v490
      %v756 = vpop.f32.mrb[0].mxu0
      %v757 = vadd.f32 0.0, %v756
      %v758 = vpop.f32.mrb[0].mxu0
      %v759 = vpop.f32.mrb[0].mxu0
      %v760 = vadd.f32 0.0, %v759
      %v761 = vpop.f32.mrb[0].mxu0
      %762 = vmatprep.mubr.bf16.mxu0 0
      %763 = vmatmul.mubr.bf16.gmra.mrb[0].mxu0 %v491
      %v764 = vpop.f32.mrb[0].mxu0
      %v765 = vadd.f32 0.0, %v764
      %v766 = vpop.f32.mrb[0].mxu0
      %v767 = vpop.f32.mrb[0].mxu0
      %v768 = vadd.f32 0.0, %v767
      %v769 = vpop.f32.mrb[0].mxu0
      %770 = vmatprep.mubr.bf16.mxu0 0
      %771 = vmatmul.mubr.bf16.gmra.mrb[0].mxu0 %v492
      %v772 = vpop.f32.mrb[0].mxu0
      %v773 = vadd.f32 0.0, %v772
      %v774 = vpop.f32.mrb[0].mxu0
      %v775 = vpop.f32.mrb[0].mxu0
      %v776 = vadd.f32 0.0, %v775
      %v777 = vpop.f32.mrb[0].mxu0
      %778 = vmatprep.mubr.bf16.mxu0 0
      %779 = vmatmul.mubr.bf16.gmra.mrb[0].mxu0 %v493
      %v780 = vpop.f32.mrb[0].mxu0
      %v781 = vadd.f32 0.0, %v780
      %v782 = vpop.f32.mrb[0].mxu0
      %v783 = vpop.f32.mrb[0].mxu0
      %v784 = vadd.f32 0.0, %v783
      %v785 = vpop.f32.mrb[0].mxu0
      %786 = vmatprep.mubr.bf16.mxu0 0
      %787 = vmatmul.mubr.bf16.gmra.mrb[0].mxu0 %v494
      %v788 = vpop.f32.mrb[0].mxu0
      %v789 = vadd.f32 0.0, %v788
      %v790 = vpop.f32.mrb[0].mxu0
      %v791 = vpop.f32.mrb[0].mxu0
      %v792 = vadd.f32 0.0, %v791
      %v793 = vpop.f32.mrb[0].mxu0
      %794 = vmatprep.mubr.bf16.mxu0 0
      %795 = vmatmul.mubr.bf16.gmra.mrb[0].mxu0 %v495
      %v796 = vpop.f32.mrb[0].mxu0
      %v797 = vadd.f32 0.0, %v796
      %v798 = vpop.f32.mrb[0].mxu0
      %v799 = vpop.f32.mrb[0].mxu0
      %v800 = vadd.f32 0.0, %v799
      %v801 = vpop.f32.mrb[0].mxu0
      %802 = vmatprep.mubr.bf16.mxu0 0
      %803 = vmatmul.mubr.bf16.gmra.mrb[0].mxu0 %v496
      %v804 = vpop.f32.mrb[0].mxu0
      %v805 = vadd.f32 0.0, %v804
      %v806 = vpop.f32.mrb[0].mxu0
      %v807 = vpop.f32.mrb[0].mxu0
      %v808 = vadd.f32 0.0, %v807
      %v809 = vpop.f32.mrb[0].mxu0
      %810 = vmatprep.mubr.bf16.mxu0 0
      %811 = vmatmul.mubr.bf16.gmra.mrb[0].mxu0 %v497
      %v812 = vpop.f32.mrb[0].mxu0
      %v813 = vadd.f32 0.0, %v812
      %v814 = vpop.f32.mrb[0].mxu0
      %v815 = vpop.f32.mrb[0].mxu0
      %v816 = vadd.f32 0.0, %v815
      %v817 = vpop.f32.mrb[0].mxu0
      %818 = vmatprep.mubr.bf16.mxu0 0
      %819 = vmatmul.mubr.bf16.gmra.mrb[0].mxu0 %v498
      %v820 = vpop.f32.mrb[0].mxu0
      %v821 = vadd.f32 0.0, %v820
      %v822 = vpop.f32.mrb[0].mxu0
      %v823 = vpop.f32.mrb[0].mxu0
      %v824 = vadd.f32 0.0, %v823
      %v825 = vpop.f32.mrb[0].mxu0
      %826 = vmatprep.mubr.bf16.mxu0 0
      %827 = vmatmul.mubr.bf16.gmra.mrb[0].mxu0 %v499
      %v828 = vpop.f32.mrb[0].mxu0
      %v829 = vadd.f32 0.0, %v828
      %v830 = vpop.f32.mrb[0].mxu0
      %v831 = vpop.f32.mrb[0].mxu0
      %v832 = vadd.f32 0.0, %v831
      %v833 = vpop.f32.mrb[0].mxu0
      %834 = vmatprep.mubr.bf16.mxu0 0
      %835 = vmatmul.mubr.bf16.gmra.mrb[0].mxu0 %v500
      %v836 = vpop.f32.mrb[0].mxu0
      %v837 = vadd.f32 0.0, %v836
      %v838 = vpop.f32.mrb[0].mxu0
      %v839 = vpop.f32.mrb[0].mxu0
      %v840 = vadd.f32 0.0, %v839
      %v841 = vpop.f32.mrb[0].mxu0
      %842 = vmatprep.mubr.bf16.mxu0 0
      %843 = vmatmul.mubr.bf16.gmra.mrb[0].mxu0 %v501
      %v844 = vpop.f32.mrb[0].mxu0
      %v845 = vadd.f32 0.0, %v844
      %v846 = vpop.f32.mrb[0].mxu0
      %v847 = vpop.f32.mrb[0].mxu0
      %v848 = vadd.f32 0.0, %v847
      %v849 = vpop.f32.mrb[0].mxu0
      %850 = vmatprep.mubr.bf16.mxu0 0
      %851 = vmatmul.mubr.bf16.gmra.mrb[0].mxu0 %v502
      %v852 = vpop.f32.mrb[0].mxu0
      %v853 = vadd.f32 0.0, %v852
      %v854 = vpop.f32.mrb[0].mxu0
      %v855 = vpop.f32.mrb[0].mxu0
      %v856 = vadd.f32 0.0, %v855
      %v857 = vpop.f32.mrb[0].mxu0
      %858 = vmatprep.mubr.bf16.mxu0 0
      %859 = vmatmul.mubr.bf16.gmra.mrb[0].mxu0 %v503
      %v860 = vpop.f32.mrb[0].mxu0
      %v861 = vadd.f32 0.0, %v860
      %v862 = vpop.f32.mrb[0].mxu0
      %v863 = vpop.f32.mrb[0].mxu0
      %v864 = vadd.f32 0.0, %v863
      %v865 = vpop.f32.mrb[0].mxu0
      %866 = vmatprep.mubr.bf16.mxu0 0
      %867 = vmatmul.mubr.bf16.gmra.mrb[0].mxu0 %v504
      %v868 = vpop.f32.mrb[0].mxu0
      %v869 = vadd.f32 0.0, %v868
      %v870 = vpop.f32.mrb[0].mxu0
      %v871 = vpop.f32.mrb[0].mxu0
      %v872 = vadd.f32 0.0, %v871
      %v873 = vpop.f32.mrb[0].mxu0
      %874 = vmatprep.mubr.bf16.mxu0 0
      %875 = vmatmul.mubr.bf16.gmra.mrb[0].mxu0 %v505
      %v876 = vpop.f32.mrb[0].mxu0
      %v877 = vadd.f32 0.0, %v876
      %v878 = vpop.f32.mrb[0].mxu0
      %v879 = vpop.f32.mrb[0].mxu0
      %v880 = vadd.f32 0.0, %v879
      %v881 = vpop.f32.mrb[0].mxu0
      %882 = vmatprep.mubr.bf16.mxu0 0
      %883 = vmatmul.mubr.bf16.gmra.mrb[0].mxu0 %v506
      %v884 = vpop.f32.mrb[0].mxu0
      %v885 = vadd.f32 0.0, %v884
      %v886 = vpop.f32.mrb[0].mxu0
      %v887 = vpop.f32.mrb[0].mxu0
      %v888 = vadd.f32 0.0, %v887
      %v889 = vpop.f32.mrb[0].mxu0
      %890 = vmatprep.mubr.bf16.mxu0 0
      %891 = vmatmul.mubr.bf16.gmra.mrb[0].mxu0 %v507
      %v892 = vpop.f32.mrb[0].mxu0
      %v893 = vadd.f32 0.0, %v892
      %v894 = vpop.f32.mrb[0].mxu0
      %v895 = vpop.f32.mrb[0].mxu0
      %v896 = vadd.f32 0.0, %v895
      %v897 = vpop.f32.mrb[0].mxu0
      %898 = vmatprep.mubr.bf16.mxu0 0
      %899 = vmatmul.mubr.bf16.gmra.mrb[0].mxu0 %v508
      %v900 = vpop.f32.mrb[0].mxu0
      %v901 = vadd.f32 0.0, %v900
      %v902 = vpop.f32.mrb[0].mxu0
      %v903 = vpop.f32.mrb[0].mxu0
      %v904 = vadd.f32 0.0, %v903
      %v905 = vpop.f32.mrb[0].mxu0
      %906 = vmatprep.mubr.bf16.mxu0 0
      %907 = vmatmul.mubr.bf16.gmra.mrb[0].mxu0 %v509
      %v908 = vpop.f32.mrb[0].mxu0
      %v909 = vadd.f32 0.0, %v908
      %v910 = vpop.f32.mrb[0].mxu0
      %v911 = vpop.f32.mrb[0].mxu0
      %v912 = vadd.f32 0.0, %v911
      %v913 = vpop.f32.mrb[0].mxu0
      %914 = vmatprep.mubr.bf16.mxu0 0
      %915 = vmatmul.mubr.bf16.gmra.mrb[0].mxu0 %v510
      %v916 = vpop.f32.mrb[0].mxu0
      %v917 = vadd.f32 0.0, %v916
      %v918 = vpop.f32.mrb[0].mxu0
      %v919 = vpop.f32.mrb[0].mxu0
      %v920 = vadd.f32 0.0, %v919
      %v921 = vpop.f32.mrb[0].mxu0
      %922 = vmatprep.mubr.bf16.mxu0 0
      %923 = vmatmul.mubr.bf16.gmra.mrb[0].mxu0 %v511
      %v924 = vpop.f32.mrb[0].mxu0
      %v925 = vadd.f32 0.0, %v924
      %v926 = vpop.f32.mrb[0].mxu0
      %v927 = vpop.f32.mrb[0].mxu0
      %v928 = vadd.f32 0.0, %v927
      %v929 = vpop.f32.mrb[0].mxu0
      %930 = vmatprep.mubr.bf16.mxu0 0
      %931 = vmatmul.mubr.bf16.gmra.mrb[0].mxu0 %v512
      %v932 = vpop.f32.mrb[0].mxu0
      %v933 = vadd.f32 0.0, %v932
      %v934 = vpop.f32.mrb[0].mxu0
      %v935 = vpop.f32.mrb[0].mxu0
      %v936 = vadd.f32 0.0, %v935
      %v937 = vpop.f32.mrb[0].mxu0
      %938 = vmatprep.mubr.bf16.mxu0 0
      %939 = vmatmul.mubr.bf16.gmra.mrb[0].mxu0 %v513
      %v940 = vpop.f32.mrb[0].mxu0
      %v941 = vadd.f32 0.0, %v940
      %v942 = vpop.f32.mrb[0].mxu0
      %v943 = vpop.f32.mrb[0].mxu0
      %v944 = vadd.f32 0.0, %v943
      %v945 = vpop.f32.mrb[0].mxu0
      %946 = vmatprep.mubr.bf16.mxu0 0
      %947 = vmatmul.mubr.bf16.gmra.mrb[0].mxu0 %v514
      %v948 = vpop.f32.mrb[0].mxu0
      %v949 = vadd.f32 0.0, %v948
      %v950 = vpop.f32.mrb[0].mxu0
      %v951 = vpop.f32.mrb[0].mxu0
      %v952 = vadd.f32 0.0, %v951
      %v953 = vpop.f32.mrb[0].mxu0
      %954 = vmatprep.mubr.bf16.mxu0 0
      %955 = vmatmul.mubr.bf16.gmra.mrb[0].mxu0 %v515
      %v956 = vpop.f32.mrb[0].mxu0
      %v957 = vadd.f32 0.0, %v956
      %v958 = vpop.f32.mrb[0].mxu0
      %v959 = vpop.f32.mrb[0].mxu0
      %v960 = vadd.f32 0.0, %v959
      %v961 = vpop.f32.mrb[0].mxu0
      %962 = vmatprep.mubr.bf16.mxu0 0
      %963 = vmatmul.mubr.bf16.gmra.mrb[0].mxu0 %v516
      %v964 = vpop.f32.mrb[0].mxu0
      %v965 = vadd.f32 0.0, %v964
      %v966 = vpop.f32.mrb[0].mxu0
      %v967 = vpop.f32.mrb[0].mxu0
      %v968 = vadd.f32 0.0, %v967
      %v969 = vpop.f32.mrb[0].mxu0
      %970 = vmatprep.mubr.bf16.mxu0 0
      %971 = vmatmul.mubr.bf16.gmra.mrb[0].mxu0 %v517
      %v972 = vpop.f32.mrb[0].mxu0
      %v973 = vadd.f32 0.0, %v972
      %v974 = vpop.f32.mrb[0].mxu0
      %v975 = vpop.f32.mrb[0].mxu0
      %v976 = vadd.f32 0.0, %v975
      %v977 = vpop.f32.mrb[0].mxu0
      %978 = vmatprep.mubr.bf16.mxu0 0
      %979 = vmatmul.mubr.bf16.gmra.mrb[0].mxu0 %v518
      %v980 = vpop.f32.mrb[0].mxu0
      %v981 = vadd.f32 0.0, %v980
      %v982 = vpop.f32.mrb[0].mxu0
      %v983 = vpop.f32.mrb[0].mxu0
      %v984 = vadd.f32 0.0, %v983
      %v985 = vpop.f32.mrb[0].mxu0
      %986 = vdwg.mxu0
      %v987 = vld [vmem:[%s2] sm:$0x1]
      %v989 = vlaneseq
      %v990 = vshrl.u32 %v989, 7
      %v991 = vsub.s32 0, %v990
      %v992 = vrot.slane %v987, %v991
      %v994 = vmul.f32 %v645, %v992
      %v995 = vmul.f32 %v648, %v992
      %v996 = vmul.f32 %v653, %v992
      %v997 = vmul.f32 %v656, %v992
      %v998 = vmul.f32 %v661, %v992
      %v999 = vmul.f32 %v664, %v992
      %v1000 = vmul.f32 %v669, %v992
      %v1001 = vmul.f32 %v672, %v992
      %v1002 = vmul.f32 %v677, %v992
      %v1003 = vmul.f32 %v680, %v992
      %v1004 = vmul.f32 %v685, %v992
      %v1005 = vmul.f32 %v688, %v992
      %v1006 = vmul.f32 %v693, %v992
      %v1007 = vmul.f32 %v696, %v992
      %v1008 = vmul.f32 %v701, %v992
      %v1009 = vmul.f32 %v704, %v992
      %v1010 = vmul.f32 %v709, %v992
      %v1011 = vmul.f32 %v712, %v992
      %v1012 = vmul.f32 %v717, %v992
      %v1013 = vmul.f32 %v720, %v992
      %v1014 = vmul.f32 %v725, %v992
      %v1015 = vmul.f32 %v728, %v992
      %v1016 = vmul.f32 %v733, %v992
      %v1017 = vmul.f32 %v736, %v992
      %v1018 = vmul.f32 %v741, %v992
      %v1019 = vmul.f32 %v744, %v992
      %v1020 = vmul.f32 %v749, %v992
      %v1021 = vmul.f32 %v752, %v992
      %v1022 = vmul.f32 %v757, %v992
      %v1023 = vmul.f32 %v760, %v992
      %v1024 = vmul.f32 %v765, %v992
      %v1025 = vmul.f32 %v768, %v992
      %v1026 = vmul.f32 %v773, %v992
      %v1027 = vmul.f32 %v776, %v992
      %v1028 = vmul.f32 %v781, %v992
      %v1029 = vmul.f32 %v784, %v992
      %v1030 = vmul.f32 %v789, %v992
      %v1031 = vmul.f32 %v792, %v992
      %v1032 = vmul.f32 %v797, %v992
      %v1033 = vmul.f32 %v800, %v992
      %v1034 = vmul.f32 %v805, %v992
      %v1035 = vmul.f32 %v808, %v992
      %v1036 = vmul.f32 %v813, %v992
      %v1037 = vmul.f32 %v816, %v992
      %v1038 = vmul.f32 %v821, %v992
      %v1039 = vmul.f32 %v824, %v992
      %v1040 = vmul.f32 %v829, %v992
      %v1041 = vmul.f32 %v832, %v992
      %v1042 = vmul.f32 %v837, %v992
      %v1043 = vmul.f32 %v840, %v992
      %v1044 = vmul.f32 %v845, %v992
      %v1045 = vmul.f32 %v848, %v992
      %v1046 = vmul.f32 %v853, %v992
      %v1047 = vmul.f32 %v856, %v992
      %v1048 = vmul.f32 %v861, %v992
      %v1049 = vmul.f32 %v864, %v992
      %v1050 = vmul.f32 %v869, %v992
      %v1051 = vmul.f32 %v872, %v992
      %v1052 = vmul.f32 %v877, %v992
      %v1053 = vmul.f32 %v880, %v992
      %v1054 = vmul.f32 %v885, %v992
      %v1055 = vmul.f32 %v888, %v992
      %v1056 = vmul.f32 %v893, %v992
      %v1057 = vmul.f32 %v896, %v992
      %v1058 = vmul.f32 %v901, %v992
      %v1059 = vmul.f32 %v904, %v992
      %v1060 = vmul.f32 %v909, %v992
      %v1061 = vmul.f32 %v912, %v992
      %v1062 = vmul.f32 %v917, %v992
      %v1063 = vmul.f32 %v920, %v992
      %v1064 = vmul.f32 %v925, %v992
      %v1065 = vmul.f32 %v928, %v992
      %v1066 = vmul.f32 %v933, %v992
      %v1067 = vmul.f32 %v936, %v992
      %v1068 = vmul.f32 %v941, %v992
      %v1069 = vmul.f32 %v944, %v992
      %v1070 = vmul.f32 %v949, %v992
      %v1071 = vmul.f32 %v952, %v992
      %v1072 = vmul.f32 %v957, %v992
      %v1073 = vmul.f32 %v960, %v992
      %v1074 = vmul.f32 %v965, %v992
      %v1075 = vmul.f32 %v968, %v992
      %v1076 = vmul.f32 %v973, %v992
      %v1077 = vmul.f32 %v976, %v992
      %v1078 = vmul.f32 %v981, %v992
      %v1079 = vmul.f32 %v984, %v992
      %v1080 = vld [vmem:[%s3] sm:$0x1]
      %v1082 = vlaneseq
      %v1083 = vshrl.u32 %v1082, 7
      %v1084 = vsub.s32 0, %v1083
      %v1085 = vrot.slane %v1080, %v1084
      %v1087 = vadd.f32 %v994, %v1085
      %v1088 = vadd.f32 %v995, %v1085
      %v1089 = vadd.f32 %v996, %v1085
      %v1090 = vadd.f32 %v997, %v1085
      %v1091 = vadd.f32 %v998, %v1085
      %v1092 = vadd.f32 %v999, %v1085
      %v1093 = vadd.f32 %v1000, %v1085
      %v1094 = vadd.f32 %v1001, %v1085
      %v1095 = vadd.f32 %v1002, %v1085
      %v1096 = vadd.f32 %v1003, %v1085
      %v1097 = vadd.f32 %v1004, %v1085
      %v1098 = vadd.f32 %v1005, %v1085
      %v1099 = vadd.f32 %v1006, %v1085
      %v1100 = vadd.f32 %v1007, %v1085
      %v1101 = vadd.f32 %v1008, %v1085
      %v1102 = vadd.f32 %v1009, %v1085
      %v1103 = vadd.f32 %v1010, %v1085
      %v1104 = vadd.f32 %v1011, %v1085
      %v1105 = vadd.f32 %v1012, %v1085
      %v1106 = vadd.f32 %v1013, %v1085
      %v1107 = vadd.f32 %v1014, %v1085
      %v1108 = vadd.f32 %v1015, %v1085
      %v1109 = vadd.f32 %v1016, %v1085
      %v1110 = vadd.f32 %v1017, %v1085
      %v1111 = vadd.f32 %v1018, %v1085
      %v1112 = vadd.f32 %v1019, %v1085
      %v1113 = vadd.f32 %v1020, %v1085
      %v1114 = vadd.f32 %v1021, %v1085
      %v1115 = vadd.f32 %v1022, %v1085
      %v1116 = vadd.f32 %v1023, %v1085
      %v1117 = vadd.f32 %v1024, %v1085
      %v1118 = vadd.f32 %v1025, %v1085
      %v1119 = vadd.f32 %v1026, %v1085
      %v1120 = vadd.f32 %v1027, %v1085
      %v1121 = vadd.f32 %v1028, %v1085
      %v1122 = vadd.f32 %v1029, %v1085
      %v1123 = vadd.f32 %v1030, %v1085
      %v1124 = vadd.f32 %v1031, %v1085
      %v1125 = vadd.f32 %v1032, %v1085
      %v1126 = vadd.f32 %v1033, %v1085
      %v1127 = vadd.f32 %v1034, %v1085
      %v1128 = vadd.f32 %v1035, %v1085
      %v1129 = vadd.f32 %v1036, %v1085
      %v1130 = vadd.f32 %v1037, %v1085
      %v1131 = vadd.f32 %v1038, %v1085
      %v1132 = vadd.f32 %v1039, %v1085
      %v1133 = vadd.f32 %v1040, %v1085
      %v1134 = vadd.f32 %v1041, %v1085
      %v1135 = vadd.f32 %v1042, %v1085
      %v1136 = vadd.f32 %v1043, %v1085
      %v1137 = vadd.f32 %v1044, %v1085
      %v1138 = vadd.f32 %v1045, %v1085
      %v1139 = vadd.f32 %v1046, %v1085
      %v1140 = vadd.f32 %v1047, %v1085
      %v1141 = vadd.f32 %v1048, %v1085
      %v1142 = vadd.f32 %v1049, %v1085
      %v1143 = vadd.f32 %v1050, %v1085
      %v1144 = vadd.f32 %v1051, %v1085
      %v1145 = vadd.f32 %v1052, %v1085
      %v1146 = vadd.f32 %v1053, %v1085
      %v1147 = vadd.f32 %v1054, %v1085
      %v1148 = vadd.f32 %v1055, %v1085
      %v1149 = vadd.f32 %v1056, %v1085
      %v1150 = vadd.f32 %v1057, %v1085
      %v1151 = vadd.f32 %v1058, %v1085
      %v1152 = vadd.f32 %v1059, %v1085
      %v1153 = vadd.f32 %v1060, %v1085
      %v1154 = vadd.f32 %v1061, %v1085
      %v1155 = vadd.f32 %v1062, %v1085
      %v1156 = vadd.f32 %v1063, %v1085
      %v1157 = vadd.f32 %v1064, %v1085
      %v1158 = vadd.f32 %v1065, %v1085
      %v1159 = vadd.f32 %v1066, %v1085
      %v1160 = vadd.f32 %v1067, %v1085
      %v1161 = vadd.f32 %v1068, %v1085
      %v1162 = vadd.f32 %v1069, %v1085
      %v1163 = vadd.f32 %v1070, %v1085
      %v1164 = vadd.f32 %v1071, %v1085
      %v1165 = vadd.f32 %v1072, %v1085
      %v1166 = vadd.f32 %v1073, %v1085
      %v1167 = vadd.f32 %v1074, %v1085
      %v1168 = vadd.f32 %v1075, %v1085
      %v1169 = vadd.f32 %v1076, %v1085
      %v1170 = vadd.f32 %v1077, %v1085
      %v1171 = vadd.f32 %v1078, %v1085
      %v1172 = vadd.f32 %v1079, %v1085
      %v1173 = vmax.f32 %v1087, 0.0
      %v1174 = vmax.f32 %v1088, 0.0
      %v1175 = vmax.f32 %v1089, 0.0
      %v1176 = vmax.f32 %v1090, 0.0
      %v1177 = vmax.f32 %v1091, 0.0
      %v1178 = vmax.f32 %v1092, 0.0
      %v1179 = vmax.f32 %v1093, 0.0
      %v1180 = vmax.f32 %v1094, 0.0
      %v1181 = vmax.f32 %v1095, 0.0
      %v1182 = vmax.f32 %v1096, 0.0
      %v1183 = vmax.f32 %v1097, 0.0
      %v1184 = vmax.f32 %v1098, 0.0
      %v1185 = vmax.f32 %v1099, 0.0
      %v1186 = vmax.f32 %v1100, 0.0
      %v1187 = vmax.f32 %v1101, 0.0
      %v1188 = vmax.f32 %v1102, 0.0
      %v1189 = vmax.f32 %v1103, 0.0
      %v1190 = vmax.f32 %v1104, 0.0
      %v1191 = vmax.f32 %v1105, 0.0
      %v1192 = vmax.f32 %v1106, 0.0
      %v1193 = vmax.f32 %v1107, 0.0
      %v1194 = vmax.f32 %v1108, 0.0
      %v1195 = vmax.f32 %v1109, 0.0
      %v1196 = vmax.f32 %v1110, 0.0
      %v1197 = vmax.f32 %v1111, 0.0
      %v1198 = vmax.f32 %v1112, 0.0
      %v1199 = vmax.f32 %v1113, 0.0
      %v1200 = vmax.f32 %v1114, 0.0
      %v1201 = vmax.f32 %v1115, 0.0
      %v1202 = vmax.f32 %v1116, 0.0
      %v1203 = vmax.f32 %v1117, 0.0
      %v1204 = vmax.f32 %v1118, 0.0
      %v1205 = vmax.f32 %v1119, 0.0
      %v1206 = vmax.f32 %v1120, 0.0
      %v1207 = vmax.f32 %v1121, 0.0
      %v1208 = vmax.f32 %v1122, 0.0
      %v1209 = vmax.f32 %v1123, 0.0
      %v1210 = vmax.f32 %v1124, 0.0
      %v1211 = vmax.f32 %v1125, 0.0
      %v1212 = vmax.f32 %v1126, 0.0
      %v1213 = vmax.f32 %v1127, 0.0
      %v1214 = vmax.f32 %v1128, 0.0
      %v1215 = vmax.f32 %v1129, 0.0
      %v1216 = vmax.f32 %v1130, 0.0
      %v1217 = vmax.f32 %v1131, 0.0
      %v1218 = vmax.f32 %v1132, 0.0
      %v1219 = vmax.f32 %v1133, 0.0
      %v1220 = vmax.f32 %v1134, 0.0
      %v1221 = vmax.f32 %v1135, 0.0
      %v1222 = vmax.f32 %v1136, 0.0
      %v1223 = vmax.f32 %v1137, 0.0
      %v1224 = vmax.f32 %v1138, 0.0
      %v1225 = vmax.f32 %v1139, 0.0
      %v1226 = vmax.f32 %v1140, 0.0
      %v1227 = vmax.f32 %v1141, 0.0
      %v1228 = vmax.f32 %v1142, 0.0
      %v1229 = vmax.f32 %v1143, 0.0
      %v1230 = vmax.f32 %v1144, 0.0
      %v1231 = vmax.f32 %v1145, 0.0
      %v1232 = vmax.f32 %v1146, 0.0
      %v1233 = vmax.f32 %v1147, 0.0
      %v1234 = vmax.f32 %v1148, 0.0
      %v1235 = vmax.f32 %v1149, 0.0
      %v1236 = vmax.f32 %v1150, 0.0
      %v1237 = vmax.f32 %v1151, 0.0
      %v1238 = vmax.f32 %v1152, 0.0
      %v1239 = vmax.f32 %v1153, 0.0
      %v1240 = vmax.f32 %v1154, 0.0
      %v1241 = vmax.f32 %v1155, 0.0
      %v1242 = vmax.f32 %v1156, 0.0
      %v1243 = vmax.f32 %v1157, 0.0
      %v1244 = vmax.f32 %v1158, 0.0
      %v1245 = vmax.f32 %v1159, 0.0
      %v1246 = vmax.f32 %v1160, 0.0
      %v1247 = vmax.f32 %v1161, 0.0
      %v1248 = vmax.f32 %v1162, 0.0
      %v1249 = vmax.f32 %v1163, 0.0
      %v1250 = vmax.f32 %v1164, 0.0
      %v1251 = vmax.f32 %v1165, 0.0
      %v1252 = vmax.f32 %v1166, 0.0
      %v1253 = vmax.f32 %v1167, 0.0
      %v1254 = vmax.f32 %v1168, 0.0
      %v1255 = vmax.f32 %v1169, 0.0
      %v1256 = vmax.f32 %v1170, 0.0
      %v1257 = vmax.f32 %v1171, 0.0
      %v1258 = vmax.f32 %v1172, 0.0
      %v1259 = vpack.c.bf16 %v1174, %v1173
      %v1260 = vpack.c.bf16 %v1176, %v1175
      %v1261 = vpack.c.bf16 %v1178, %v1177
      %v1262 = vpack.c.bf16 %v1180, %v1179
      %v1263 = vpack.c.bf16 %v1182, %v1181
      %v1264 = vpack.c.bf16 %v1184, %v1183
      %v1265 = vpack.c.bf16 %v1186, %v1185
      %v1266 = vpack.c.bf16 %v1188, %v1187
      %v1267 = vpack.c.bf16 %v1190, %v1189
      %v1268 = vpack.c.bf16 %v1192, %v1191
      %v1269 = vpack.c.bf16 %v1194, %v1193
      %v1270 = vpack.c.bf16 %v1196, %v1195
      %v1271 = vpack.c.bf16 %v1198, %v1197
      %v1272 = vpack.c.bf16 %v1200, %v1199
      %v1273 = vpack.c.bf16 %v1202, %v1201
      %v1274 = vpack.c.bf16 %v1204, %v1203
      %v1275 = vpack.c.bf16 %v1206, %v1205
      %v1276 = vpack.c.bf16 %v1208, %v1207
      %v1277 = vpack.c.bf16 %v1210, %v1209
      %v1278 = vpack.c.bf16 %v1212, %v1211
      %v1279 = vpack.c.bf16 %v1214, %v1213
      %v1280 = vpack.c.bf16 %v1216, %v1215
      %v1281 = vpack.c.bf16 %v1218, %v1217
      %v1282 = vpack.c.bf16 %v1220, %v1219
      %v1283 = vpack.c.bf16 %v1222, %v1221
      %v1284 = vpack.c.bf16 %v1224, %v1223
      %v1285 = vpack.c.bf16 %v1226, %v1225
      %v1286 = vpack.c.bf16 %v1228, %v1227
      %v1287 = vpack.c.bf16 %v1230, %v1229
      %v1288 = vpack.c.bf16 %v1232, %v1231
      %v1289 = vpack.c.bf16 %v1234, %v1233
      %v1290 = vpack.c.bf16 %v1236, %v1235
      %v1291 = vpack.c.bf16 %v1238, %v1237
      %v1292 = vpack.c.bf16 %v1240, %v1239
      %v1293 = vpack.c.bf16 %v1242, %v1241
      %v1294 = vpack.c.bf16 %v1244, %v1243
      %v1295 = vpack.c.bf16 %v1246, %v1245
      %v1296 = vpack.c.bf16 %v1248, %v1247
      %v1297 = vpack.c.bf16 %v1250, %v1249
      %v1298 = vpack.c.bf16 %v1252, %v1251
      %v1299 = vpack.c.bf16 %v1254, %v1253
      %v1300 = vpack.c.bf16 %v1256, %v1255
      %v1301 = vpack.c.bf16 %v1258, %v1257
      %v1345 = vunpack.c.l.b16 %v1259
      %v1346 = vunpack.c.h.b16 %v1259
      %v1347 = vunpack.c.l.b16 %v1260
      %v1348 = vunpack.c.h.b16 %v1260
      %v1349 = vunpack.c.l.b16 %v1261
      %v1350 = vunpack.c.h.b16 %v1261
      %v1351 = vunpack.c.l.b16 %v1262
      %v1352 = vunpack.c.h.b16 %v1262
      %v1353 = vunpack.c.l.b16 %v1263
      %v1354 = vunpack.c.h.b16 %v1263
      %v1355 = vunpack.c.l.b16 %v1264
      %v1356 = vunpack.c.h.b16 %v1264
      %v1357 = vunpack.c.l.b16 %v1265
      %v1358 = vunpack.c.h.b16 %v1265
      %v1359 = vunpack.c.l.b16 %v1266
      %v1360 = vunpack.c.h.b16 %v1266
      %v1361 = vunpack.c.l.b16 %v1267
      %v1362 = vunpack.c.h.b16 %v1267
      %v1363 = vunpack.c.l.b16 %v1268
      %v1364 = vunpack.c.h.b16 %v1268
      %v1365 = vunpack.c.l.b16 %v1269
      %v1366 = vunpack.c.h.b16 %v1269
      %v1367 = vunpack.c.l.b16 %v1270
      %v1368 = vunpack.c.h.b16 %v1270
      %v1369 = vunpack.c.l.b16 %v1271
      %v1370 = vunpack.c.h.b16 %v1271
      %v1371 = vunpack.c.l.b16 %v1272
      %v1372 = vunpack.c.h.b16 %v1272
      %v1373 = vunpack.c.l.b16 %v1273
      %v1374 = vunpack.c.h.b16 %v1273
      %v1375 = vunpack.c.l.b16 %v1274
      %v1376 = vunpack.c.h.b16 %v1274
      %v1377 = vunpack.c.l.b16 %v1275
      %v1378 = vunpack.c.h.b16 %v1275
      %v1379 = vunpack.c.l.b16 %v1276
      %v1380 = vunpack.c.h.b16 %v1276
      %v1381 = vunpack.c.l.b16 %v1277
      %v1382 = vunpack.c.h.b16 %v1277
      %v1383 = vunpack.c.l.b16 %v1278
      %v1384 = vunpack.c.h.b16 %v1278
      %v1385 = vunpack.c.l.b16 %v1279
      %v1386 = vunpack.c.h.b16 %v1279
      %v1387 = vunpack.c.l.b16 %v1280
      %v1388 = vunpack.c.h.b16 %v1280
      %v1389 = vunpack.c.l.b16 %v1281
      %v1390 = vunpack.c.h.b16 %v1281
      %v1391 = vunpack.c.l.b16 %v1282
      %v1392 = vunpack.c.h.b16 %v1282
      %v1393 = vunpack.c.l.b16 %v1283
      %v1394 = vunpack.c.h.b16 %v1283
      %v1395 = vunpack.c.l.b16 %v1284
      %v1396 = vunpack.c.h.b16 %v1284
      %v1397 = vunpack.c.l.b16 %v1285
      %v1398 = vunpack.c.h.b16 %v1285
      %v1399 = vunpack.c.l.b16 %v1286
      %v1400 = vunpack.c.h.b16 %v1286
      %v1401 = vunpack.c.l.b16 %v1287
      %v1402 = vunpack.c.h.b16 %v1287
      %v1403 = vunpack.c.l.b16 %v1288
      %v1404 = vunpack.c.h.b16 %v1288
      %v1405 = vunpack.c.l.b16 %v1289
      %v1406 = vunpack.c.h.b16 %v1289
      %v1407 = vunpack.c.l.b16 %v1290
      %v1408 = vunpack.c.h.b16 %v1290
      %v1409 = vunpack.c.l.b16 %v1291
      %v1410 = vunpack.c.h.b16 %v1291
      %v1411 = vunpack.c.l.b16 %v1292
      %v1412 = vunpack.c.h.b16 %v1292
      %v1413 = vunpack.c.l.b16 %v1293
      %v1414 = vunpack.c.h.b16 %v1293
      %v1415 = vunpack.c.l.b16 %v1294
      %v1416 = vunpack.c.h.b16 %v1294
      %v1417 = vunpack.c.l.b16 %v1295
      %v1418 = vunpack.c.h.b16 %v1295
      %v1419 = vunpack.c.l.b16 %v1296
      %v1420 = vunpack.c.h.b16 %v1296
      %v1421 = vunpack.c.l.b16 %v1297
      %v1422 = vunpack.c.h.b16 %v1297
      %v1423 = vunpack.c.l.b16 %v1298
      %v1424 = vunpack.c.h.b16 %v1298
      %v1425 = vunpack.c.l.b16 %v1299
      %v1426 = vunpack.c.h.b16 %v1299
      %v1427 = vunpack.c.l.b16 %v1300
      %v1428 = vunpack.c.h.b16 %v1300
      %v1429 = vunpack.c.l.b16 %v1301
      %v1430 = vunpack.c.h.b16 %v1301
      %v1431 = vpack.c.b16 %v1345, %v1345
      %v1432 = vpack.c.b16 %v1346, %v1346
      %v1433 = vpack.c.b16 %v1347, %v1347
      %v1434 = vpack.c.b16 %v1348, %v1348
      %v1435 = vpack.c.b16 %v1349, %v1349
      %v1436 = vpack.c.b16 %v1350, %v1350
      %v1437 = vpack.c.b16 %v1351, %v1351
      %v1438 = vpack.c.b16 %v1352, %v1352
      %v1439 = vpack.c.b16 %v1353, %v1353
      %v1440 = vpack.c.b16 %v1354, %v1354
      %v1441 = vpack.c.b16 %v1355, %v1355
      %v1442 = vpack.c.b16 %v1356, %v1356
      %v1443 = vpack.c.b16 %v1357, %v1357
      %v1444 = vpack.c.b16 %v1358, %v1358
      %v1445 = vpack.c.b16 %v1359, %v1359
      %v1446 = vpack.c.b16 %v1360, %v1360
      %v1447 = vpack.c.b16 %v1361, %v1361
      %v1448 = vpack.c.b16 %v1362, %v1362
      %v1449 = vpack.c.b16 %v1363, %v1363
      %v1450 = vpack.c.b16 %v1364, %v1364
      %v1451 = vpack.c.b16 %v1365, %v1365
      %v1452 = vpack.c.b16 %v1366, %v1366
      %v1453 = vpack.c.b16 %v1367, %v1367
      %v1454 = vpack.c.b16 %v1368, %v1368
      %v1455 = vpack.c.b16 %v1369, %v1369
      %v1456 = vpack.c.b16 %v1370, %v1370
      %v1457 = vpack.c.b16 %v1371, %v1371
      %v1458 = vpack.c.b16 %v1372, %v1372
      %v1459 = vpack.c.b16 %v1373, %v1373
      %v1460 = vpack.c.b16 %v1374, %v1374
      %v1461 = vpack.c.b16 %v1375, %v1375
      %v1462 = vpack.c.b16 %v1376, %v1376
      %v1463 = vpack.c.b16 %v1377, %v1377
      %v1464 = vpack.c.b16 %v1378, %v1378
      %v1465 = vpack.c.b16 %v1379, %v1379
      %v1466 = vpack.c.b16 %v1380, %v1380
      %v1467 = vpack.c.b16 %v1381, %v1381
      %v1468 = vpack.c.b16 %v1382, %v1382
      %v1469 = vpack.c.b16 %v1383, %v1383
      %v1470 = vpack.c.b16 %v1384, %v1384
      %v1471 = vpack.c.b16 %v1385, %v1385
      %v1472 = vpack.c.b16 %v1386, %v1386
      %v1473 = vpack.c.b16 %v1387, %v1387
      %v1474 = vpack.c.b16 %v1388, %v1388
      %v1475 = vpack.c.b16 %v1389, %v1389
      %v1476 = vpack.c.b16 %v1390, %v1390
      %v1477 = vpack.c.b16 %v1391, %v1391
      %v1478 = vpack.c.b16 %v1392, %v1392
      %v1479 = vpack.c.b16 %v1393, %v1393
      %v1480 = vpack.c.b16 %v1394, %v1394
      %v1481 = vpack.c.b16 %v1395, %v1395
      %v1482 = vpack.c.b16 %v1396, %v1396
      %v1483 = vpack.c.b16 %v1397, %v1397
      %v1484 = vpack.c.b16 %v1398, %v1398
      %v1485 = vpack.c.b16 %v1399, %v1399
      %v1486 = vpack.c.b16 %v1400, %v1400
      %v1487 = vpack.c.b16 %v1401, %v1401
      %v1488 = vpack.c.b16 %v1402, %v1402
      %v1489 = vpack.c.b16 %v1403, %v1403
      %v1490 = vpack.c.b16 %v1404, %v1404
      %v1491 = vpack.c.b16 %v1405, %v1405
      %v1492 = vpack.c.b16 %v1406, %v1406
      %v1493 = vpack.c.b16 %v1407, %v1407
      %v1494 = vpack.c.b16 %v1408, %v1408
      %v1495 = vpack.c.b16 %v1409, %v1409
      %v1496 = vpack.c.b16 %v1410, %v1410
      %v1497 = vpack.c.b16 %v1411, %v1411
      %v1498 = vpack.c.b16 %v1412, %v1412
      %v1499 = vpack.c.b16 %v1413, %v1413
      %v1500 = vpack.c.b16 %v1414, %v1414
      %v1501 = vpack.c.b16 %v1415, %v1415
      %v1502 = vpack.c.b16 %v1416, %v1416
      %v1503 = vpack.c.b16 %v1417, %v1417
      %v1504 = vpack.c.b16 %v1418, %v1418
      %v1505 = vpack.c.b16 %v1419, %v1419
      %v1506 = vpack.c.b16 %v1420, %v1420
      %v1507 = vpack.c.b16 %v1421, %v1421
      %v1508 = vpack.c.b16 %v1422, %v1422
      %v1509 = vpack.c.b16 %v1423, %v1423
      %v1510 = vpack.c.b16 %v1424, %v1424
      %v1511 = vpack.c.b16 %v1425, %v1425
      %v1512 = vpack.c.b16 %v1426, %v1426
      %v1513 = vpack.c.b16 %v1427, %v1427
      %v1514 = vpack.c.b16 %v1428, %v1428
      %v1515 = vpack.c.b16 %v1429, %v1429
      %v1516 = vpack.c.b16 %v1430, %v1430
      %1603 = vst [vmem:[%s199] sm:$0xf] %v1431
      %1604 = vst [vmem:[%s199 + $0x4] sm:$0xf] %v1432
      %1605 = vst [vmem:[%s199 + $0x8] sm:$0xf] %v1433
      %1606 = vst [vmem:[%s199 + $0xc] sm:$0xf] %v1434
      %1607 = vst [vmem:[%s199 + $0x10] sm:$0xf] %v1435
      %1608 = vst [vmem:[%s199 + $0x14] sm:$0xf] %v1436
      %1609 = vst [vmem:[%s199 + $0x18] sm:$0xf] %v1437
      %1610 = vst [vmem:[%s199 + $0x1c] sm:$0xf] %v1438
      %1611 = vst [vmem:[%s199 + $0x20] sm:$0xf] %v1439
      %1612 = vst [vmem:[%s199 + $0x24] sm:$0xf] %v1440
      %1613 = vst [vmem:[%s199 + $0x28] sm:$0xf] %v1441
      %1614 = vst [vmem:[%s199 + $0x2c] sm:$0xf] %v1442
      %1615 = vst [vmem:[%s199 + $0x30] sm:$0xf] %v1443
      %1616 = vst [vmem:[%s199 + $0x34] sm:$0xf] %v1444
      %1617 = vst [vmem:[%s199 + $0x38] sm:$0xf] %v1445
      %1618 = vst [vmem:[%s199 + $0x3c] sm:$0xf] %v1446
      %1619 = vst [vmem:[%s199 + $0x40] sm:$0xf] %v1447
      %1620 = vst [vmem:[%s199 + $0x44] sm:$0xf] %v1448
      %1621 = vst [vmem:[%s199 + $0x48] sm:$0xf] %v1449
      %1622 = vst [vmem:[%s199 + $0x4c] sm:$0xf] %v1450
      %1623 = vst [vmem:[%s199 + $0x50] sm:$0xf] %v1451
      %1624 = vst [vmem:[%s199 + $0x54] sm:$0xf] %v1452
      %1625 = vst [vmem:[%s199 + $0x58] sm:$0xf] %v1453
      %1626 = vst [vmem:[%s199 + $0x5c] sm:$0xf] %v1454
      %1627 = vst [vmem:[%s199 + $0x60] sm:$0xf] %v1455
      %1628 = vst [vmem:[%s199 + $0x64] sm:$0xf] %v1456
      %1629 = vst [vmem:[%s199 + $0x68] sm:$0xf] %v1457
      %1630 = vst [vmem:[%s199 + $0x6c] sm:$0xf] %v1458
      %1631 = vst [vmem:[%s199 + $0x70] sm:$0xf] %v1459
      %1632 = vst [vmem:[%s199 + $0x74] sm:$0xf] %v1460
      %1633 = vst [vmem:[%s199 + $0x78] sm:$0xf] %v1461
      %1634 = vst [vmem:[%s199 + $0x7c] sm:$0xf] %v1462
      %1635 = vst [vmem:[%s199 + $0x80] sm:$0xf] %v1463
      %1636 = vst [vmem:[%s199 + $0x84] sm:$0xf] %v1464
      %1637 = vst [vmem:[%s199 + $0x88] sm:$0xf] %v1465
      %1638 = vst [vmem:[%s199 + $0x8c] sm:$0xf] %v1466
      %1639 = vst [vmem:[%s199 + $0x90] sm:$0xf] %v1467
      %1640 = vst [vmem:[%s199 + $0x94] sm:$0xf] %v1468
      %1641 = vst [vmem:[%s199 + $0x98] sm:$0xf] %v1469
      %1642 = vst [vmem:[%s199 + $0x9c] sm:$0xf] %v1470
      %1643 = vst [vmem:[%s199 + $0xa0] sm:$0xf] %v1471
      %1644 = vst [vmem:[%s199 + $0xa4] sm:$0xf] %v1472
      %1645 = vst [vmem:[%s199 + $0xa8] sm:$0xf] %v1473
      %1646 = vst [vmem:[%s199 + $0xac] sm:$0xf] %v1474
      %1647 = vst [vmem:[%s199 + $0xb0] sm:$0xf] %v1475
      %1648 = vst [vmem:[%s199 + $0xb4] sm:$0xf] %v1476
      %1649 = vst [vmem:[%s199 + $0xb8] sm:$0xf] %v1477
      %1650 = vst [vmem:[%s199 + $0xbc] sm:$0xf] %v1478
      %1651 = vst [vmem:[%s199 + $0xc0] sm:$0xf] %v1479
      %1652 = vst [vmem:[%s199 + $0xc4] sm:$0xf] %v1480
      %1653 = vst [vmem:[%s199 + $0xc8] sm:$0xf] %v1481
      %1654 = vst [vmem:[%s199 + $0xcc] sm:$0xf] %v1482
      %1655 = vst [vmem:[%s199 + $0xd0] sm:$0xf] %v1483
      %1656 = vst [vmem:[%s199 + $0xd4] sm:$0xf] %v1484
      %1657 = vst [vmem:[%s199 + $0xd8] sm:$0xf] %v1485
      %1658 = vst [vmem:[%s199 + $0xdc] sm:$0xf] %v1486
      %1659 = vst [vmem:[%s199 + $0xe0] sm:$0xf] %v1487
      %1660 = vst [vmem:[%s199 + $0xe4] sm:$0xf] %v1488
      %1661 = vst [vmem:[%s199 + $0xe8] sm:$0xf] %v1489
      %1662 = vst [vmem:[%s199 + $0xec] sm:$0xf] %v1490
      %1663 = vst [vmem:[%s199 + $0xf0] sm:$0xf] %v1491
      %1664 = vst [vmem:[%s199 + $0xf4] sm:$0xf] %v1492
      %1665 = vst [vmem:[%s199 + $0xf8] sm:$0xf] %v1493
      %1666 = vst [vmem:[%s199 + $0xfc] sm:$0xf] %v1494
      %1667 = vst [vmem:[%s199 + $0x100] sm:$0xf] %v1495
      %1668 = vst [vmem:[%s199 + $0x104] sm:$0xf] %v1496
      %1669 = vst [vmem:[%s199 + $0x108] sm:$0xf] %v1497
      %1670 = vst [vmem:[%s199 + $0x10c] sm:$0xf] %v1498
      %1671 = vst [vmem:[%s199 + $0x110] sm:$0xf] %v1499
      %1672 = vst [vmem:[%s199 + $0x114] sm:$0xf] %v1500
      %1673 = vst [vmem:[%s199 + $0x118] sm:$0xf] %v1501
      %1674 = vst [vmem:[%s199 + $0x11c] sm:$0xf] %v1502
      %1675 = vst [vmem:[%s199 + $0x120] sm:$0xf] %v1503
      %1676 = vst [vmem:[%s199 + $0x124] sm:$0xf] %v1504
      %1677 = vst [vmem:[%s199 + $0x128] sm:$0xf] %v1505
      %1678 = vst [vmem:[%s199 + $0x12c] sm:$0xf] %v1506
      %1679 = vst [vmem:[%s199 + $0x130] sm:$0xf] %v1507
      %1680 = vst [vmem:[%s199 + $0x134] sm:$0xf] %v1508
      %1681 = vst [vmem:[%s199 + $0x138] sm:$0xf] %v1509
      %1682 = vst [vmem:[%s199 + $0x13c] sm:$0xf] %v1510
      %1683 = vst [vmem:[%s199 + $0x140] sm:$0xf] %v1511
      %1684 = vst [vmem:[%s199 + $0x144] sm:$0xf] %v1512
      %1685 = vst [vmem:[%s199 + $0x148] sm:$0xf] %v1513
      %1686 = vst [vmem:[%s199 + $0x14c] sm:$0xf] %v1514
      %1687 = vst [vmem:[%s199 + $0x150] sm:$0xf] %v1515
      %1688 = vst [vmem:[%s199 + $0x154] sm:$0xf] %v1516
      %s1689 = smul.u32 86, %s15
      %p1690 = scmp.lt.s32.totalorder %s1689, 171
      %s1691 = scalar_select %p1690, %s1689, 171
      %s1692 = smul.addr %s1691, 4
      %s1693 = scalar_lea.vmem %s4, %s1692
      // Predicated region
      $region37: #{scicnn_forward.4} parent=35 // pred_check
        %p1694 = pneg %p122
      $region38: #{scicnn_forward.4} parent=35 // pred_check_branch
        %1696 = sbr.rel (%p1694) target = $region40
      $region39: #{scicnn_forward.4} parent=35 // pred_region
        %s1697 = smul.u32 86, %s15
      $region40: #{scicnn_forward.4} parent=35 // pred_fallthru
        _
    $region36: #{scicnn_forward.4} parent=5 // pred_fallthru
      _
    %p1698 = scmp.le.s32.totalorder 2, %s10
    // Predicated region
    $region41: #{scicnn_forward.4} parent=5 // pred_check
      %p1699 = pneg %p1698
    $region42: #{scicnn_forward.4} parent=5 // pred_check_branch
      %1701 = sbr.rel (%p1699) target = $region44
    $region43: #{scicnn_forward.4} parent=5 // pred_region
      %s1702 = ssub.s32 %s10, 2
      // Predicated region
      $region45: #{scicnn_forward.4} parent=43 // pred_check
        %p1703 = pneg %p128
      $region46: #{scicnn_forward.4} parent=43 // pred_check_branch
        %1705 = sbr.rel (%p1703) target = $region48
      $region47: #{scicnn_forward.4} parent=43 // pred_region
        %s1706 = smul.u32 86, %s16
        %p1707 = scmp.lt.s32.totalorder %s1706, 171
        %s1708 = scalar_select %p1707, %s1706, 171
        %s1709 = smul.addr %s1708, 4
        %s1710 = scalar_lea.vmem %s4, %s1709
      $region48: #{scicnn_forward.4} parent=43 // pred_fallthru
        _
    $region44: #{scicnn_forward.4} parent=5 // pred_fallthru
      _
  $region6: #{scicnn_forward.4} parent=0 // loop_footer
    %s14 = sadd.s32 1, %s10
  $region7: #{scicnn_forward.4} parent=0 // loop_footer_branch
    %9 = sbr.rel target = $region3
  $region8: #{scicnn_forward.4} parent=0 // loop_exit
    _

// kernel: scicnn_forward.5
$region0: #{scicnn_forward.5}
  #allocation0 [shape = 'u32[]', space=smem, size = 0x4, offset = 0x4, fixed_abs, tag = 'smem constant byte address 0x4 - core index']
  #allocation1 [shape = 'u32[144,128]{1,0:T(1,128)}', space=vmem, size = 0x12000, scoped, tag = 'internal scratch']
  %s0 = inlined_call_operand.vmem [shape: bf16[320,128], index: 0, kind: input, shape index: {}]
  %s1 = inlined_call_operand.vmem [shape: bf16[128,128], index: 1, kind: input, shape index: {}]
  %s2 = inlined_call_operand.vmem [shape: f32[1,128], index: 2, kind: input, shape index: {}]
  %s3 = inlined_call_operand.vmem [shape: f32[1,128], index: 3, kind: input, shape index: {}]
  %s4 = inlined_call_operand.vmem [shape: bf16[320,128], index: 4, kind: output, shape index: {}]
  %s5 = sld [smem:[#allocation0]]
  $region49: #{scicnn_forward.5} parent=0
    _
  %s7 = ssub.s32 1, %s5
  %s8 = scalar_select 0, %s7, %s5
  loop: start=0, step=1, limit=4
  $region2: #{scicnn_forward.5} parent=0 // loop_pre_header
    _
  $region3: #{scicnn_forward.5} parent=0 // loop_header
    %s10 = sphi 0, %s14
    %p11 = scmp.ge.s32.totalorder %s10, 4
    %s20 = sphi 0, %s22
    %s23 = sphi 0, %s20
    %s24 = sphi 0, %s23
    %s40 = sphi 0, %s24
    %s44 = sphi 0, %s44
    %s46 = sphi 0, %s44
    %s47 = sphi 0, %s46
    %s61 = sphi 0, %s47
    %s65 = sphi 0, %s65
    %s67 = sphi 0, %s65
    %s68 = sphi 0, %s67
    %s82 = sphi 0, %s68
    %s86 = sphi 0, %s86
    %s88 = sphi 0, %s86
    %s89 = sphi 0, %s88
    %s103 = sphi 0, %s89
    %s109 = sphi 0, %s111
    %s112 = sphi 0, %s109
    %s113 = sphi 0, %s112
    %s129 = sphi 0, %s113
  $region4: #{scicnn_forward.5} parent=0 // loop_header_branch
    %13 = sbr.rel (%p11) target = $region8
  $region5: #{scicnn_forward.5} parent=0 // loop_body
    %s15 = ssub.s32 %s10, 1
    %s16 = ssub.s32 %s10, 2
    %s17 = sadd.s32 %s10, 1
    %s18 = ssub.s32 %s10, %s17
    %p19 = scmp.eq.s32.totalorder %s18, 0
    %s21 = sadd.s32 %s20, 1
    %s22 = scalar_select %p19, %s20, %s21
    %p25 = pneg %p19
    %p26 = scmp.eq.s32.totalorder %s10, 1
    %p27 = por %p25, %p26
    %p28 = scmp.ne.s32.totalorder %s20, %s23
    %p29 = scmp.eq.s32.totalorder %s10, 0
    %p30 = por %p28, %p29
    %p31 = scmp.ne.s32.totalorder %s20, %s23
    %p32 = scmp.eq.s32.totalorder %s15, 1
    %p33 = por %p31, %p32
    %p34 = scmp.ne.s32.totalorder %s23, %s24
    %p35 = scmp.eq.s32.totalorder %s15, 0
    %p36 = por %p34, %p35
    %p37 = scmp.ne.s32.totalorder %s23, %s24
    %p38 = scmp.eq.s32.totalorder %s16, 1
    %p39 = por %p37, %p38
    %p41 = scmp.ne.s32.totalorder %s24, %s40
    %p42 = scmp.eq.s32.totalorder %s16, 0
    %p43 = por %p41, %p42
    %s45 = sadd.s32 %s44, 1
    %p48 = scmp.eq.s32.totalorder %s10, 1
    %p49 = scmp.ne.s32.totalorder %s44, %s46
    %p50 = scmp.eq.s32.totalorder %s10, 0
    %p51 = por %p49, %p50
    %p52 = scmp.ne.s32.totalorder %s44, %s46
    %p53 = scmp.eq.s32.totalorder %s15, 1
    %p54 = por %p52, %p53
    %p55 = scmp.ne.s32.totalorder %s46, %s47
    %p56 = scmp.eq.s32.totalorder %s15, 0
    %p57 = por %p55, %p56
    %p58 = scmp.ne.s32.totalorder %s46, %s47
    %p59 = scmp.eq.s32.totalorder %s16, 1
    %p60 = por %p58, %p59
    %p62 = scmp.ne.s32.totalorder %s47, %s61
    %p63 = scmp.eq.s32.totalorder %s16, 0
    %p64 = por %p62, %p63
    %s66 = sadd.s32 %s65, 1
    %p69 = scmp.eq.s32.totalorder %s10, 1
    %p70 = scmp.ne.s32.totalorder %s65, %s67
    %p71 = scmp.eq.s32.totalorder %s10, 0
    %p72 = por %p70, %p71
    %p73 = scmp.ne.s32.totalorder %s65, %s67
    %p74 = scmp.eq.s32.totalorder %s15, 1
    %p75 = por %p73, %p74
    %p76 = scmp.ne.s32.totalorder %s67, %s68
    %p77 = scmp.eq.s32.totalorder %s15, 0
    %p78 = por %p76, %p77
    %p79 = scmp.ne.s32.totalorder %s67, %s68
    %p80 = scmp.eq.s32.totalorder %s16, 1
    %p81 = por %p79, %p80
    %p83 = scmp.ne.s32.totalorder %s68, %s82
    %p84 = scmp.eq.s32.totalorder %s16, 0
    %p85 = por %p83, %p84
    %s87 = sadd.s32 %s86, 1
    %p90 = scmp.eq.s32.totalorder %s10, 1
    %p91 = scmp.ne.s32.totalorder %s86, %s88
    %p92 = scmp.eq.s32.totalorder %s10, 0
    %p93 = por %p91, %p92
    %p94 = scmp.ne.s32.totalorder %s86, %s88
    %p95 = scmp.eq.s32.totalorder %s15, 1
    %p96 = por %p94, %p95
    %p97 = scmp.ne.s32.totalorder %s88, %s89
    %p98 = scmp.eq.s32.totalorder %s15, 0
    %p99 = por %p97, %p98
    %p100 = scmp.ne.s32.totalorder %s88, %s89
    %p101 = scmp.eq.s32.totalorder %s16, 1
    %p102 = por %p100, %p101
    %p104 = scmp.ne.s32.totalorder %s89, %s103
    %p105 = scmp.eq.s32.totalorder %s16, 0
    %p106 = por %p104, %p105
    %s107 = ssub.s32 %s10, %s17
    %p108 = scmp.eq.s32.totalorder %s107, 0
    %s110 = sadd.s32 %s109, 1
    %s111 = scalar_select %p108, %s109, %s110
    %p114 = pneg %p108
    %p115 = scmp.eq.s32.totalorder %s10, 1
    %p116 = por %p114, %p115
    %p117 = scmp.ne.s32.totalorder %s109, %s112
    %p118 = scmp.eq.s32.totalorder %s10, 0
    %p119 = por %p117, %p118
    %p120 = scmp.ne.s32.totalorder %s109, %s112
    %p121 = scmp.eq.s32.totalorder %s15, 1
    %p122 = por %p120, %p121
    %p123 = scmp.ne.s32.totalorder %s112, %s113
    %p124 = scmp.eq.s32.totalorder %s15, 0
    %p125 = por %p123, %p124
    %p126 = scmp.ne.s32.totalorder %s112, %s113
    %p127 = scmp.eq.s32.totalorder %s16, 1
    %p128 = por %p126, %p127
    %p130 = scmp.ne.s32.totalorder %s113, %s129
    %p131 = scmp.eq.s32.totalorder %s16, 0
    %p132 = por %p130, %p131
    %p133 = scmp.le.s32.totalorder 1, %s10
    %p134 = scmp.lt.s32.totalorder %s10, 3
    %p135 = pnand %p133, %p134
    %p136 = pneg %p135
    // Predicated region
    $region9: #{scicnn_forward.5} parent=5 // pred_check
      _
    $region10: #{scicnn_forward.5} parent=5 // pred_check_branch
      %138 = sbr.rel (%p135) target = $region12
    $region11: #{scicnn_forward.5} parent=5 // pred_region
      %s139 = ssub.s32 %s10, 1
      // Predicated region
      $region13: #{scicnn_forward.5} parent=11 // pred_check
        %p140 = pneg %p57
      $region14: #{scicnn_forward.5} parent=11 // pred_check_branch
        %142 = sbr.rel (%p140) target = $region16
      $region15: #{scicnn_forward.5} parent=11 // pred_region
        _
      $region16: #{scicnn_forward.5} parent=11 // pred_fallthru
        _
      // Predicated region
      $region17: #{scicnn_forward.5} parent=11 // pred_check
        %p143 = pneg %p78
      $region18: #{scicnn_forward.5} parent=11 // pred_check_branch
        %145 = sbr.rel (%p143) target = $region20
      $region19: #{scicnn_forward.5} parent=11 // pred_region
        _
      $region20: #{scicnn_forward.5} parent=11 // pred_fallthru
        _
      // Predicated region
      $region21: #{scicnn_forward.5} parent=11 // pred_check
        %p146 = pneg %p99
      $region22: #{scicnn_forward.5} parent=11 // pred_check_branch
        %148 = sbr.rel (%p146) target = $region24
      $region23: #{scicnn_forward.5} parent=11 // pred_region
        _
      $region24: #{scicnn_forward.5} parent=11 // pred_fallthru
        _
    $region12: #{scicnn_forward.5} parent=5 // pred_fallthru
      _
    %p149 = scmp.lt.s32.totalorder %s10, 2
    // Predicated region
    $region25: #{scicnn_forward.5} parent=5 // pred_check
      %p150 = pneg %p149
    $region26: #{scicnn_forward.5} parent=5 // pred_check_branch
      %152 = sbr.rel (%p150) target = $region28
    $region27: #{scicnn_forward.5} parent=5 // pred_region
      // Predicated region
      $region29: #{scicnn_forward.5} parent=27 // pred_check
        %p153 = pneg %p30
      $region30: #{scicnn_forward.5} parent=27 // pred_check_branch
        %155 = sbr.rel (%p153) target = $region32
      $region31: #{scicnn_forward.5} parent=27 // pred_region
        %s156 = smul.u32 20, %s10
        %p157 = scmp.lt.s32.totalorder %s156, 39
        %s158 = scalar_select %p157, %s156, 39
        %s159 = smul.addr %s158, 4
        %s160 = scalar_lea.vmem %s0, %s159
        %s161 = smul.u32 20, %s10
      $region32: #{scicnn_forward.5} parent=27 // pred_fallthru
        _
    $region28: #{scicnn_forward.5} parent=5 // pred_fallthru
      _
    %p162 = scmp.le.s32.totalorder 1, %s10
    %p163 = scmp.lt.s32.totalorder %s10, 3
    %p164 = pnand %p162, %p163
    %p165 = pneg %p164
    // Predicated region
    $region33: #{scicnn_forward.5} parent=5 // pred_check
      _
    $region34: #{scicnn_forward.5} parent=5 // pred_check_branch
      %167 = sbr.rel (%p164) target = $region36
    $region35: #{scicnn_forward.5} parent=5 // pred_region
      %s168 = ssub.s32 %s10, 1
      %s169 = smul.u32 20, %s15
      %p170 = scmp.lt.s32.totalorder %s169, 39
      %s171 = scalar_select %p170, %s169, 39
      %s172 = smul.addr %s171, 4
      %s173 = scalar_lea.vmem %s0, %s172
      %p174 = pneg %p36
      %p175 = pneg %p33
      %p176 = pneg %p57
      %p177 = pneg %p54
      %p178 = pneg %p78
      %p179 = pneg %p75
      %p180 = pneg %p99
      %p181 = pneg %p96
      %p182 = pneg %p125
      %p183 = pneg %p122
      %s184 = smul.u32 20, %s15
      %p185 = scmp.lt.s32.totalorder %s184, 39
      %s186 = scalar_select %p185, %s184, 39
      %s187 = smul.addr %s186, 4
      %s188 = scalar_lea.vmem %s4, %s187
      %s189 = smul.u32 20, %s15
      %p190 = scmp.lt.s32.totalorder %s189, 39
      %s191 = scalar_select %p190, %s189, 39
      %s192 = smul.addr %s191, 4
      %s193 = scalar_lea.vmem %s0, %s192
      %s194 = smul.u32 20, %s15
      %s195 = smul.u32 20, %s15
      %p196 = scmp.lt.s32.totalorder %s195, 39
      %s197 = scalar_select %p196, %s195, 39
      %s198 = smul.addr %s197, 4
      %s199 = scalar_lea.vmem %s4, %s198
      %s200 = smul.u32 20, %s15
      %v202 = vld [vmem:[%s193] sm:$0xf]
      %v203 = vld [vmem:[%s193 + $0x4] sm:$0xf]
      %v204 = vld [vmem:[%s193 + $0x8] sm:$0xf]
      %v205 = vld [vmem:[%s193 + $0xc] sm:$0xf]
      %v206 = vld [vmem:[%s193 + $0x10] sm:$0xf]
      %v207 = vld [vmem:[%s193 + $0x14] sm:$0xf]
      %v208 = vld [vmem:[%s193 + $0x18] sm:$0xf]
      %v209 = vld [vmem:[%s193 + $0x1c] sm:$0xf]
      %v210 = vld [vmem:[%s193 + $0x20] sm:$0xf]
      %v211 = vld [vmem:[%s193 + $0x24] sm:$0xf]
      %v212 = vld [vmem:[%s193 + $0x28] sm:$0xf]
      %v213 = vld [vmem:[%s193 + $0x2c] sm:$0xf]
      %v214 = vld [vmem:[%s193 + $0x30] sm:$0xf]
      %v215 = vld [vmem:[%s193 + $0x34] sm:$0xf]
      %v216 = vld [vmem:[%s193 + $0x38] sm:$0xf]
      %v217 = vld [vmem:[%s193 + $0x3c] sm:$0xf]
      %v218 = vld [vmem:[%s193 + $0x40] sm:$0xf]
      %v219 = vld [vmem:[%s193 + $0x44] sm:$0xf]
      %v220 = vld [vmem:[%s193 + $0x48] sm:$0xf]
      %v221 = vld [vmem:[%s193 + $0x4c] sm:$0xf]
      %v222 = vld [vmem:[%s1] sm:$0xf]
      %v223 = vld [vmem:[%s1 + $0x4] sm:$0xf]
      %v224 = vld [vmem:[%s1 + $0x8] sm:$0xf]
      %v225 = vld [vmem:[%s1 + $0xc] sm:$0xf]
      %v226 = vld [vmem:[%s1 + $0x10] sm:$0xf]
      %v227 = vld [vmem:[%s1 + $0x14] sm:$0xf]
      %v228 = vld [vmem:[%s1 + $0x18] sm:$0xf]
      %v229 = vld [vmem:[%s1 + $0x1c] sm:$0xf]
      %v230 = vld [vmem:[%s1 + $0x20] sm:$0xf]
      %v231 = vld [vmem:[%s1 + $0x24] sm:$0xf]
      %v232 = vld [vmem:[%s1 + $0x28] sm:$0xf]
      %v233 = vld [vmem:[%s1 + $0x2c] sm:$0xf]
      %v234 = vld [vmem:[%s1 + $0x30] sm:$0xf]
      %v235 = vld [vmem:[%s1 + $0x34] sm:$0xf]
      %v236 = vld [vmem:[%s1 + $0x38] sm:$0xf]
      %v237 = vld [vmem:[%s1 + $0x3c] sm:$0xf]
      %v258 = vunpack.c.l.b16 %v202
      %v259 = vunpack.c.l.b16 %v203
      %v260 = vunpack.c.l.b16 %v204
      %v261 = vunpack.c.l.b16 %v205
      %v262 = vunpack.c.l.b16 %v206
      %v263 = vunpack.c.l.b16 %v207
      %v264 = vunpack.c.l.b16 %v208
      %v265 = vunpack.c.l.b16 %v209
      %v266 = vunpack.c.l.b16 %v210
      %v267 = vunpack.c.l.b16 %v211
      %v268 = vunpack.c.l.b16 %v212
      %v269 = vunpack.c.l.b16 %v213
      %v270 = vunpack.c.l.b16 %v214
      %v271 = vunpack.c.l.b16 %v215
      %v272 = vunpack.c.l.b16 %v216
      %v273 = vunpack.c.l.b16 %v217
      %v274 = vunpack.c.l.b16 %v218
      %v275 = vunpack.c.l.b16 %v219
      %v276 = vunpack.c.l.b16 %v220
      %v277 = vunpack.c.l.b16 %v221
      %v278 = vpack.c.b16 %v259, %v258
      %v279 = vpack.c.b16 %v261, %v260
      %v280 = vpack.c.b16 %v263, %v262
      %v281 = vpack.c.b16 %v265, %v264
      %v282 = vpack.c.b16 %v267, %v266
      %v283 = vpack.c.b16 %v269, %v268
      %v284 = vpack.c.b16 %v271, %v270
      %v285 = vpack.c.b16 %v273, %v272
      %v286 = vpack.c.b16 %v275, %v274
      %v287 = vpack.c.b16 %v277, %v276
      %v314 = vunpack.c.l.b16 %v222
      %v315 = vunpack.c.l.b16 %v223
      %v316 = vunpack.c.l.b16 %v224
      %v317 = vunpack.c.l.b16 %v225
      %v318 = vunpack.c.l.b16 %v226
      %v319 = vunpack.c.l.b16 %v227
      %v320 = vunpack.c.l.b16 %v228
      %v321 = vunpack.c.l.b16 %v229
      %v322 = vunpack.c.l.b16 %v230
      %v323 = vunpack.c.l.b16 %v231
      %v324 = vunpack.c.l.b16 %v232
      %v325 = vunpack.c.l.b16 %v233
      %v326 = vunpack.c.l.b16 %v234
      %v327 = vunpack.c.l.b16 %v235
      %v328 = vunpack.c.l.b16 %v236
      %v329 = vunpack.c.l.b16 %v237
      %v330 = vpack.c.b16 %v315, %v314
      %v331 = vpack.c.b16 %v317, %v316
      %v332 = vpack.c.b16 %v319, %v318
      %v333 = vpack.c.b16 %v321, %v320
      %v334 = vpack.c.b16 %v323, %v322
      %v335 = vpack.c.b16 %v325, %v324
      %v336 = vpack.c.b16 %v327, %v326
      %v337 = vpack.c.b16 %v329, %v328
      %346 = vmatprep.subr.bf16.mxu0 0
      %347 = vmatpush1.bf16.msra.mxu0 %v330
      %348 = vmatprep.subr.bf16.mxu0 0
      %349 = vmatpush1.bf16.msra.mxu0 %v331
      %350 = vmatprep.subr.bf16.mxu0 0
      %351 = vmatpush1.bf16.msra.mxu0 %v332
      %352 = vmatprep.subr.bf16.mxu0 0
      %353 = vmatpush1.bf16.msra.mxu0 %v333
      %354 = vmatprep.subr.bf16.mxu0 0
      %355 = vmatpush1.bf16.msra.mxu0 %v334
      %356 = vmatprep.subr.bf16.mxu0 0
      %357 = vmatpush1.bf16.msra.mxu0 %v335
      %358 = vmatprep.subr.bf16.mxu0 0
      %359 = vmatpush1.bf16.msra.mxu0 %v336
      %360 = vmatprep.subr.bf16.mxu0 0
      %361 = vmatpush1.bf16.msra.mxu0 %v337
      %362 = vmatprep.subr.bf16.mxu0 0
      %363 = vmatpush1.bf16.msra.mxu0 0
      %364 = vmatprep.subr.bf16.mxu0 0
      %365 = vmatpush1.bf16.msra.mxu0 0
      %366 = vmatprep.subr.bf16.mxu0 0
      %367 = vmatpush1.bf16.msra.mxu0 0
      %368 = vmatprep.subr.bf16.mxu0 0
      %369 = vmatpush1.bf16.msra.mxu0 0
      %370 = vmatprep.subr.bf16.mxu0 0
      %371 = vmatpush1.bf16.msra.mxu0 0
      %372 = vmatprep.subr.bf16.mxu0 0
      %373 = vmatpush1.bf16.msra.mxu0 0
      %374 = vmatprep.subr.bf16.mxu0 0
      %375 = vmatpush1.bf16.msra.mxu0 0
      %376 = vmatprep.subr.bf16.mxu0 0
      %377 = vmatpush1.bf16.msra.mxu0 0
      %378 = vmatprep.mubr.bf16.mxu0 0
      %379 = vmatmul.mubr.bf16.gmra.mrb[0].mxu0 %v278
      %v380 = vpop.f32.mrb[0].mxu0
      %v381 = vadd.f32 0.0, %v380
      %v382 = vpop.f32.mrb[0].mxu0
      %v383 = vpop.f32.mrb[0].mxu0
      %v384 = vadd.f32 0.0, %v383
      %v385 = vpop.f32.mrb[0].mxu0
      %386 = vmatprep.mubr.bf16.mxu0 0
      %387 = vmatmul.mubr.bf16.gmra.mrb[0].mxu0 %v279
      %v388 = vpop.f32.mrb[0].mxu0
      %v389 = vadd.f32 0.0, %v388
      %v390 = vpop.f32.mrb[0].mxu0
      %v391 = vpop.f32.mrb[0].mxu0
      %v392 = vadd.f32 0.0, %v391
      %v393 = vpop.f32.mrb[0].mxu0
      %394 = vmatprep.mubr.bf16.mxu0 0
      %395 = vmatmul.mubr.bf16.gmra.mrb[0].mxu0 %v280
      %v396 = vpop.f32.mrb[0].mxu0
      %v397 = vadd.f32 0.0, %v396
      %v398 = vpop.f32.mrb[0].mxu0
      %v399 = vpop.f32.mrb[0].mxu0
      %v400 = vadd.f32 0.0, %v399
      %v401 = vpop.f32.mrb[0].mxu0
      %402 = vmatprep.mubr.bf16.mxu0 0
      %403 = vmatmul.mubr.bf16.gmra.mrb[0].mxu0 %v281
      %v404 = vpop.f32.mrb[0].mxu0
      %v405 = vadd.f32 0.0, %v404
      %v406 = vpop.f32.mrb[0].mxu0
      %v407 = vpop.f32.mrb[0].mxu0
      %v408 = vadd.f32 0.0, %v407
      %v409 = vpop.f32.mrb[0].mxu0
      %410 = vmatprep.mubr.bf16.mxu0 0
      %411 = vmatmul.mubr.bf16.gmra.mrb[0].mxu0 %v282
      %v412 = vpop.f32.mrb[0].mxu0
      %v413 = vadd.f32 0.0, %v412
      %v414 = vpop.f32.mrb[0].mxu0
      %v415 = vpop.f32.mrb[0].mxu0
      %v416 = vadd.f32 0.0, %v415
      %v417 = vpop.f32.mrb[0].mxu0
      %418 = vmatprep.mubr.bf16.mxu0 0
      %419 = vmatmul.mubr.bf16.gmra.mrb[0].mxu0 %v283
      %v420 = vpop.f32.mrb[0].mxu0
      %v421 = vadd.f32 0.0, %v420
      %v422 = vpop.f32.mrb[0].mxu0
      %v423 = vpop.f32.mrb[0].mxu0
      %v424 = vadd.f32 0.0, %v423
      %v425 = vpop.f32.mrb[0].mxu0
      %426 = vmatprep.mubr.bf16.mxu0 0
      %427 = vmatmul.mubr.bf16.gmra.mrb[0].mxu0 %v284
      %v428 = vpop.f32.mrb[0].mxu0
      %v429 = vadd.f32 0.0, %v428
      %v430 = vpop.f32.mrb[0].mxu0
      %v431 = vpop.f32.mrb[0].mxu0
      %v432 = vadd.f32 0.0, %v431
      %v433 = vpop.f32.mrb[0].mxu0
      %434 = vmatprep.mubr.bf16.mxu0 0
      %435 = vmatmul.mubr.bf16.gmra.mrb[0].mxu0 %v285
      %v436 = vpop.f32.mrb[0].mxu0
      %v437 = vadd.f32 0.0, %v436
      %v438 = vpop.f32.mrb[0].mxu0
      %v439 = vpop.f32.mrb[0].mxu0
      %v440 = vadd.f32 0.0, %v439
      %v441 = vpop.f32.mrb[0].mxu0
      %442 = vmatprep.mubr.bf16.mxu0 0
      %443 = vmatmul.mubr.bf16.gmra.mrb[0].mxu0 %v286
      %v444 = vpop.f32.mrb[0].mxu0
      %v445 = vadd.f32 0.0, %v444
      %v446 = vpop.f32.mrb[0].mxu0
      %v447 = vpop.f32.mrb[0].mxu0
      %v448 = vadd.f32 0.0, %v447
      %v449 = vpop.f32.mrb[0].mxu0
      %450 = vmatprep.mubr.bf16.mxu0 0
      %451 = vmatmul.mubr.bf16.gmra.mrb[0].mxu0 %v287
      %v452 = vpop.f32.mrb[0].mxu0
      %v453 = vadd.f32 0.0, %v452
      %v454 = vpop.f32.mrb[0].mxu0
      %v455 = vpop.f32.mrb[0].mxu0
      %v456 = vadd.f32 0.0, %v455
      %v457 = vpop.f32.mrb[0].mxu0
      %458 = vdwg.mxu0
      %v459 = vld [vmem:[%s2] sm:$0x1]
      %v461 = vlaneseq
      %v462 = vshrl.u32 %v461, 7
      %v463 = vsub.s32 0, %v462
      %v464 = vrot.slane %v459, %v463
      %v466 = vmul.f32 %v381, %v464
      %v467 = vmul.f32 %v384, %v464
      %v468 = vmul.f32 %v389, %v464
      %v469 = vmul.f32 %v392, %v464
      %v470 = vmul.f32 %v397, %v464
      %v471 = vmul.f32 %v400, %v464
      %v472 = vmul.f32 %v405, %v464
      %v473 = vmul.f32 %v408, %v464
      %v474 = vmul.f32 %v413, %v464
      %v475 = vmul.f32 %v416, %v464
      %v476 = vmul.f32 %v421, %v464
      %v477 = vmul.f32 %v424, %v464
      %v478 = vmul.f32 %v429, %v464
      %v479 = vmul.f32 %v432, %v464
      %v480 = vmul.f32 %v437, %v464
      %v481 = vmul.f32 %v440, %v464
      %v482 = vmul.f32 %v445, %v464
      %v483 = vmul.f32 %v448, %v464
      %v484 = vmul.f32 %v453, %v464
      %v485 = vmul.f32 %v456, %v464
      %v486 = vld [vmem:[%s3] sm:$0x1]
      %v488 = vlaneseq
      %v489 = vshrl.u32 %v488, 7
      %v490 = vsub.s32 0, %v489
      %v491 = vrot.slane %v486, %v490
      %v493 = vadd.f32 %v466, %v491
      %v494 = vadd.f32 %v467, %v491
      %v495 = vadd.f32 %v468, %v491
      %v496 = vadd.f32 %v469, %v491
      %v497 = vadd.f32 %v470, %v491
      %v498 = vadd.f32 %v471, %v491
      %v499 = vadd.f32 %v472, %v491
      %v500 = vadd.f32 %v473, %v491
      %v501 = vadd.f32 %v474, %v491
      %v502 = vadd.f32 %v475, %v491
      %v503 = vadd.f32 %v476, %v491
      %v504 = vadd.f32 %v477, %v491
      %v505 = vadd.f32 %v478, %v491
      %v506 = vadd.f32 %v479, %v491
      %v507 = vadd.f32 %v480, %v491
      %v508 = vadd.f32 %v481, %v491
      %v509 = vadd.f32 %v482, %v491
      %v510 = vadd.f32 %v483, %v491
      %v511 = vadd.f32 %v484, %v491
      %v512 = vadd.f32 %v485, %v491
      %v513 = vmax.f32 %v493, 0.0
      %v514 = vmax.f32 %v494, 0.0
      %v515 = vmax.f32 %v495, 0.0
      %v516 = vmax.f32 %v496, 0.0
      %v517 = vmax.f32 %v497, 0.0
      %v518 = vmax.f32 %v498, 0.0
      %v519 = vmax.f32 %v499, 0.0
      %v520 = vmax.f32 %v500, 0.0
      %v521 = vmax.f32 %v501, 0.0
      %v522 = vmax.f32 %v502, 0.0
      %v523 = vmax.f32 %v503, 0.0
      %v524 = vmax.f32 %v504, 0.0
      %v525 = vmax.f32 %v505, 0.0
      %v526 = vmax.f32 %v506, 0.0
      %v527 = vmax.f32 %v507, 0.0
      %v528 = vmax.f32 %v508, 0.0
      %v529 = vmax.f32 %v509, 0.0
      %v530 = vmax.f32 %v510, 0.0
      %v531 = vmax.f32 %v511, 0.0
      %v532 = vmax.f32 %v512, 0.0
      %v533 = vpack.c.bf16 %v514, %v513
      %v534 = vpack.c.bf16 %v516, %v515
      %v535 = vpack.c.bf16 %v518, %v517
      %v536 = vpack.c.bf16 %v520, %v519
      %v537 = vpack.c.bf16 %v522, %v521
      %v538 = vpack.c.bf16 %v524, %v523
      %v539 = vpack.c.bf16 %v526, %v525
      %v540 = vpack.c.bf16 %v528, %v527
      %v541 = vpack.c.bf16 %v530, %v529
      %v542 = vpack.c.bf16 %v532, %v531
      %v553 = vunpack.c.l.b16 %v533
      %v554 = vunpack.c.h.b16 %v533
      %v555 = vunpack.c.l.b16 %v534
      %v556 = vunpack.c.h.b16 %v534
      %v557 = vunpack.c.l.b16 %v535
      %v558 = vunpack.c.h.b16 %v535
      %v559 = vunpack.c.l.b16 %v536
      %v560 = vunpack.c.h.b16 %v536
      %v561 = vunpack.c.l.b16 %v537
      %v562 = vunpack.c.h.b16 %v537
      %v563 = vunpack.c.l.b16 %v538
      %v564 = vunpack.c.h.b16 %v538
      %v565 = vunpack.c.l.b16 %v539
      %v566 = vunpack.c.h.b16 %v539
      %v567 = vunpack.c.l.b16 %v540
      %v568 = vunpack.c.h.b16 %v540
      %v569 = vunpack.c.l.b16 %v541
      %v570 = vunpack.c.h.b16 %v541
      %v571 = vunpack.c.l.b16 %v542
      %v572 = vunpack.c.h.b16 %v542
      %v573 = vpack.c.b16 %v553, %v553
      %v574 = vpack.c.b16 %v554, %v554
      %v575 = vpack.c.b16 %v555, %v555
      %v576 = vpack.c.b16 %v556, %v556
      %v577 = vpack.c.b16 %v557, %v557
      %v578 = vpack.c.b16 %v558, %v558
      %v579 = vpack.c.b16 %v559, %v559
      %v580 = vpack.c.b16 %v560, %v560
      %v581 = vpack.c.b16 %v561, %v561
      %v582 = vpack.c.b16 %v562, %v562
      %v583 = vpack.c.b16 %v563, %v563
      %v584 = vpack.c.b16 %v564, %v564
      %v585 = vpack.c.b16 %v565, %v565
      %v586 = vpack.c.b16 %v566, %v566
      %v587 = vpack.c.b16 %v567, %v567
      %v588 = vpack.c.b16 %v568, %v568
      %v589 = vpack.c.b16 %v569, %v569
      %v590 = vpack.c.b16 %v570, %v570
      %v591 = vpack.c.b16 %v571, %v571
      %v592 = vpack.c.b16 %v572, %v572
      %613 = vst [vmem:[%s199] sm:$0xf] %v573
      %614 = vst [vmem:[%s199 + $0x4] sm:$0xf] %v574
      %615 = vst [vmem:[%s199 + $0x8] sm:$0xf] %v575
      %616 = vst [vmem:[%s199 + $0xc] sm:$0xf] %v576
      %617 = vst [vmem:[%s199 + $0x10] sm:$0xf] %v577
      %618 = vst [vmem:[%s199 + $0x14] sm:$0xf] %v578
      %619 = vst [vmem:[%s199 + $0x18] sm:$0xf] %v579
      %620 = vst [vmem:[%s199 + $0x1c] sm:$0xf] %v580
      %621 = vst [vmem:[%s199 + $0x20] sm:$0xf] %v581
      %622 = vst [vmem:[%s199 + $0x24] sm:$0xf] %v582
      %623 = vst [vmem:[%s199 + $0x28] sm:$0xf] %v583
      %624 = vst [vmem:[%s199 + $0x2c] sm:$0xf] %v584
      %625 = vst [vmem:[%s199 + $0x30] sm:$0xf] %v585
      %626 = vst [vmem:[%s199 + $0x34] sm:$0xf] %v586
      %627 = vst [vmem:[%s199 + $0x38] sm:$0xf] %v587
      %628 = vst [vmem:[%s199 + $0x3c] sm:$0xf] %v588
      %629 = vst [vmem:[%s199 + $0x40] sm:$0xf] %v589
      %630 = vst [vmem:[%s199 + $0x44] sm:$0xf] %v590
      %631 = vst [vmem:[%s199 + $0x48] sm:$0xf] %v591
      %632 = vst [vmem:[%s199 + $0x4c] sm:$0xf] %v592
      %s633 = smul.u32 20, %s15
      %p634 = scmp.lt.s32.totalorder %s633, 39
      %s635 = scalar_select %p634, %s633, 39
      %s636 = smul.addr %s635, 4
      %s637 = scalar_lea.vmem %s4, %s636
      // Predicated region
      $region37: #{scicnn_forward.5} parent=35 // pred_check
        %p638 = pneg %p122
      $region38: #{scicnn_forward.5} parent=35 // pred_check_branch
        %640 = sbr.rel (%p638) target = $region40
      $region39: #{scicnn_forward.5} parent=35 // pred_region
        %s641 = smul.u32 20, %s15
      $region40: #{scicnn_forward.5} parent=35 // pred_fallthru
        _
    $region36: #{scicnn_forward.5} parent=5 // pred_fallthru
      _
    %p642 = scmp.le.s32.totalorder 2, %s10
    // Predicated region
    $region41: #{scicnn_forward.5} parent=5 // pred_check
      %p643 = pneg %p642
    $region42: #{scicnn_forward.5} parent=5 // pred_check_branch
      %645 = sbr.rel (%p643) target = $region44
    $region43: #{scicnn_forward.5} parent=5 // pred_region
      %s646 = ssub.s32 %s10, 2
      // Predicated region
      $region45: #{scicnn_forward.5} parent=43 // pred_check
        %p647 = pneg %p128
      $region46: #{scicnn_forward.5} parent=43 // pred_check_branch
        %649 = sbr.rel (%p647) target = $region48
      $region47: #{scicnn_forward.5} parent=43 // pred_region
        %s650 = smul.u32 20, %s16
        %p651 = scmp.lt.s32.totalorder %s650, 39
        %s652 = scalar_select %p651, %s650, 39
        %s653 = smul.addr %s652, 4
        %s654 = scalar_lea.vmem %s4, %s653
      $region48: #{scicnn_forward.5} parent=43 // pred_fallthru
        _
    $region44: #{scicnn_forward.5} parent=5 // pred_fallthru
      _
  $region6: #{scicnn_forward.5} parent=0 // loop_footer
    %s14 = sadd.s32 1, %s10
  $region7: #{scicnn_forward.5} parent=0 // loop_footer_branch
    %9 = sbr.rel target = $region3
  $region8: #{scicnn_forward.5} parent=0 // loop_exit
    _

</llo_original>
